<compile_context>
chip_gen: v7x
topology: tpu7x:2x2x1
jax: 0.10.0
libtpu: 0.0.40
codegen_flags: <defaults>
</compile_context>

<pallas_src>
import math

import jax
import jax.numpy as jnp
from jax import lax
from jax.experimental import pallas as pl
from jax.experimental.pallas import tpu as pltpu

EPS = 1e-5
MXU_DTYPE = jnp.bfloat16          # MXU operand dtype; accumulation is always f32.

# Stencil tap offsets (di, dj), enumerated ki-major so they match the
# (KH, KW, Cin, Cout) weight reshape order.
TAPS3 = tuple((di, dj) for di in (-1, 0, 1) for dj in (-1, 0, 1))
TAPS2 = ((0, 0), (0, 1), (1, 0), (1, 1))
TAPS1 = ((0, 0),)
MASK_ROW = {t: i for i, t in enumerate(TAPS3)}   # row index in the (9, P) mask table


# ---------------------------------------------------------------------------
# Module configuration (mirrors the PyTorch DenseNet wiring)
# ---------------------------------------------------------------------------
def densenet_config(n_layers=6):
    """(kernel_size, sources) per DenseNet layer.  `sources` index the running
    `outputs` list in PyTorch concat order (None => the DenseNet input)."""
    factors = math.ceil(math.log2(n_layers))
    cfg = []
    for i in range(1, n_layers + 1):
        residual = [i - 2 ** k for k in range(factors) if i - 2 ** k > 0]
        k = 1 if (i == 1 or i == n_layers) else 3
        sources = None if i == 1 else [i - 2] + [j - 1 for j in residual[1:]]
        cfg.append((k, sources))
    return cfg


# ---------------------------------------------------------------------------
# Host-side shape constants (review: hoist out of the kernel)
# ---------------------------------------------------------------------------
def _make_tap_masks(N, H, W):
    """(9, N*H*W) f32 table, one row per 3x3-stencil tap: 1 where (h+di, w+dj)
    stays inside the HxW image (also zeroes pltpu.roll wrap across images)."""
    P = N * H * W
    p = jnp.arange(P)
    h = (p % (H * W)) // W
    w = p % W
    rows = []
    for (di, dj) in TAPS3:
        ok = (h + di >= 0) & (h + di < H) & (w + dj >= 0) & (w + dj < W)
        rows.append(ok)
    return jnp.stack(rows, axis=0).astype(jnp.float32)


def _make_stride2_sel(N, H, W):
    """(P, Pq) one-hot selector: column q=(n,ho,wo) picks flat input position
    (n, 2*ho, 2*wo).  Pure shape constant -> precomputed host-side."""
    Ho, Wo = H // 2, W // 2
    P, Pq = N * H * W, N * Ho * Wo
    q = jnp.arange(Pq)
    n = q // (Ho * Wo)
    r = q % (Ho * Wo)
    tgt = n * (H * W) + (r // Wo) * (2 * W) + (r % Wo) * 2
    return (jnp.arange(P)[:, None] == tgt[None, :]).astype(jnp.float32)


def _prep_conv_weight(w, chunk_channels):
    """(KH,KW,Cin,Cout) -> (Cout, KH*KW*Cin) with column order (chunk, ki, kj, c)
    matching the in-kernel im2col row order (weight split along Cin per chunk)."""
    k = w.shape[0]
    cout = w.shape[3]
    cols, s = [], 0
    for cc in chunk_channels:
        cols.append(w[:, :, s:s + cc, :].reshape(k * k * cc, cout).T)
        s += cc
    return cols[0] if len(cols) == 1 else jnp.concatenate(cols, axis=1)


# ---------------------------------------------------------------------------
# Parameter init (PyTorch-equivalent layouts) + packing for the fused kernel
# ---------------------------------------------------------------------------
def init_downblock_params(key, c_in, c_out, n_layers=6):
    dense_cfg = densenet_config(n_layers)
    keys = iter(jax.random.split(key, 64))

    def conv_init(k, ci, co):
        fan_in = ci * k * k
        bound = 1.0 / math.sqrt(fan_in)
        w = jax.random.uniform(next(keys), (k, k, ci, co), jnp.float32, -bound, bound)
        b = jax.random.uniform(next(keys), (co,), jnp.float32, -bound, bound)
        return w, b

    def bn_init(c):
        gamma = 1.0 + 0.1 * jax.random.normal(next(keys), (c,), jnp.float32)
        beta = 0.1 * jax.random.normal(next(keys), (c,), jnp.float32)
        return gamma, beta

    raw = {"dense_cfg": dense_cfg}
    raw["bn1"] = bn_init(c_in)
    raw["conv1"] = conv_init(3, c_in, c_out)
    raw["dense_bn"], raw["dense_conv"] = [], []
    for (k, sources) in dense_cfg:
        n_chunks = 1 if sources is None else len(sources)
        raw["dense_bn"].append(bn_init(c_out * n_chunks))
        raw["dense_conv"].append(conv_init(k, c_out * n_chunks, c_out))
    raw["bn2"] = bn_init(c_out)
    raw["conv2"] = conv_init(2, c_out, c_out)        # 2x2 on the (0,1,0,1)-padded map
    raw["conv3"] = conv_init(2, c_out, c_out)        # 2x2, stride 2, pad_fn(2,2) == 0
    # nn.PReLU() default: one shared alpha per PReLU module, init 0.25.
    raw["alphas"] = jnp.full((n_layers + 2,), 0.25, jnp.float32)
    return raw


def prep_downblock_params(raw, N, H, W, c_in, c_out):
    """Pack per-layer params into a few tables + pre-reshaped bf16 weights."""
    dense_cfg = raw["dense_cfg"]
    n_dense = len(dense_cfg)
    n_bn = n_dense + 2
    chunk_counts = [1 if s is None else len(s) for (_, s) in dense_cfg]
    c_max = max([c_in, c_out] + [c_out * n for n in chunk_counts])

    bn_list = [raw["bn1"]] + raw["dense_bn"] + [raw["bn2"]]
    gamma_tab = jnp.ones((c_max, n_bn), jnp.float32)
    beta_tab = jnp.zeros((c_max, n_bn), jnp.float32)
    for i, (g, b) in enumerate(bn_list):
        gamma_tab = gamma_tab.at[: g.shape[0], i].set(g)
        beta_tab = beta_tab.at[: b.shape[0], i].set(b)

    conv_list = ([(raw["conv1"], [c_in])]
                 + [(raw["dense_conv"][j], [c_out] * chunk_counts[j])
                    for j in range(n_dense)]
                 + [(raw["conv2"], [c_out]), (raw["conv3"], [c_out])])
    weights = [_prep_conv_weight(w, chunks).astype(MXU_DTYPE)
               for ((w, _), chunks) in conv_list]
    bias_tab = jnp.stack([b for ((_, b), _) in conv_list], axis=1)   # (c_out, 9)

    return {"gamma_tab": gamma_tab, "beta_tab": beta_tab,
            "alphas": raw["alphas"].astype(jnp.float32),
            "bias_tab": bias_tab,
            "masks": _make_tap_masks(N, H, W),
            "weights": weights,
            "sel": _make_stride2_sel(N, H, W)}


# ---------------------------------------------------------------------------
# The fused DownBlock kernel
# ---------------------------------------------------------------------------
def _make_downblock_kernel(N, H, W, c_in, c_out, dense_cfg):
    P = N * H * W
    n_dense = len(dense_cfg)
    nw = n_dense + 3                 # conv1, 6 dense convs, conv2, conv3

    def kernel(*refs):
        (x_ref, gam_ref, bet_ref, alpha_ref, bias_ref, mask_ref) = refs[0:6]
        w_all = refs[6:6 + nw]
        wc1_ref = w_all[0]
        wd_refs = w_all[1:1 + n_dense]
        wc2_ref = w_all[1 + n_dense]
        wc3_ref = w_all[2 + n_dense]
        sel_ref = refs[6 + nw]
        res_ref = refs[7 + nw]
        out_ref = refs[8 + nw]
        acts_ref = refs[9 + nw]      # (1 + n_dense, c_out, P) f32 layer activations
        pmat_ref = refs[10 + nw]     # (max_rows, P) bf16 im2col patch matrix

        def bn_prelu(x, c0, bn_col):
            """Train-mode BatchNorm2d (biased batch stats over N*H*W) + PReLU.

            x: (C, P) f32; gamma/beta come from rows [c0, c0+C) of column
            `bn_col` of the packed tables; alpha is the (shared) PReLU slope.
            """
            cc = x.shape[0]
            gamma = gam_ref[c0:c0 + cc, bn_col:bn_col + 1]
            beta = bet_ref[c0:c0 + cc, bn_col:bn_col + 1]
            alpha = alpha_ref[bn_col]
            mean = jnp.mean(x, axis=1, keepdims=True)
            var = jnp.mean(jnp.square(x - mean), axis=1, keepdims=True)
            y = (x - mean) * lax.rsqrt(var + EPS) * gamma + beta
            return jnp.where(y >= 0.0, y, alpha * y)

        def shifted(y, di, dj, use_mask):
            """y[c, n, h+di, w+dj] (zero outside the HxW image) in flat layout,
            built with a cheap XLU lane roll + a precomputed boundary mask."""
            off = di * W + dj
            p = y if off == 0 else pltpu.roll(y, (-off) % P, 1)
            if use_mask and (di, dj) != (0, 0):
                r = MASK_ROW[(di, dj)]
                p = p * mask_ref[r:r + 1, :]
            return p

        def conv(ys, taps, w_ref, conv_col, use_mask=True):
            """im2col: stream shifted+masked pieces into the bf16 patch-matrix
            scratch in 16-row (tile-aligned) blocks, then ONE MXU matmul."""
            rows_total = sum(y.shape[0] for y in ys) * len(taps)
            row, buf, buf_rows = 0, [], 0
            for y in ys:
                for (di, dj) in taps:
                    buf.append(shifted(y, di, dj, use_mask))
                    buf_rows += y.shape[0]
                    if buf_rows >= 16:
                        blk = buf[0] if len(buf) == 1 else jnp.concatenate(buf, axis=0)
                        pmat_ref[row:row + buf_rows, :] = blk.astype(MXU_DTYPE)
                        row += buf_rows
                        buf, buf_rows = [], 0
            if buf_rows:
                blk = buf[0] if len(buf) == 1 else jnp.concatenate(buf, axis=0)
                pmat_ref[row:row + buf_rows, :] = blk.astype(MXU_DTYPE)
                row += buf_rows
            assert row == rows_total
            acc = jnp.dot(w_ref[...], pmat_ref[0:rows_total, :],
                          preferred_element_type=jnp.float32)
            return acc + bias_ref[:, conv_col:conv_col + 1]

        # ---- stage 1: norm1 -> PReLU -> conv1 (3x3, pad 1) -----------------
        acts_ref[0] = conv([bn_prelu(x_ref[...], 0, 0)], TAPS3, wc1_ref, 0)

        # ---- DenseNet: BN + PReLU on the (virtual) concat of skip inputs,
        #      then 1x1/3x3 conv.  Concats are never materialized: the conv
        #      weight was split along Cin per source chunk host-side. ---------
        for j, (k, sources) in enumerate(dense_cfg):
            slots = [0] if sources is None else [1 + s for s in sources]
            ys = [bn_prelu(acts_ref[s], ci * c_out, 1 + j)
                  for ci, s in enumerate(slots)]
            acts_ref[1 + j] = conv(ys, TAPS3 if k == 3 else TAPS1,
                                   wd_refs[j], 1 + j)

        # ---- tail: norm2 -> PReLU -> F.pad(0,1,0,1) + conv2 (2x2) -> residual
        y_t = bn_prelu(acts_ref[n_dense], 0, 1 + n_dense)
        residual = conv([y_t], TAPS2, wc2_ref, 1 + n_dense)
        res_ref[...] = residual

        # ---- conv3 (2x2, stride 2, no pad), reassociated:
        #      full = w3 @ im2col(residual) at every position, then the host-
        #      precomputed one-hot stride-2 selector picks the (h,w)-even
        #      columns.  No boundary masks: selected columns never sample a
        #      rolled-around / out-of-image position, and the one-hot selection
        #      zeroes the (finite) garbage in unselected columns exactly.
        #      Adding the bias before selection is exact (each column of sel
        #      sums to 1). ----------------------------------------------------
        full = conv([residual], TAPS2, wc3_ref, 2 + n_dense, use_mask=False)
        out_ref[...] = jnp.dot(full, sel_ref[...],
                               preferred_element_type=jnp.float32)

    return kernel


def _downblock_pallas(prepped, x_flat, N, H, W, c_in, c_out, dense_cfg):
    P = N * H * W
    Pq = N * (H // 2) * (W // 2)
    n_dense = len(dense_cfg)

    rows_per_layer = [9 * c_in]                                   # conv1
    for (k, s) in dense_cfg:                                      # dense layers
        rows_per_layer.append(k * k * c_out * (1 if s is None else len(s)))
    rows_per_layer += [4 * c_out, 4 * c_out]                      # conv2, conv3
    max_rows = max(rows_per_layer)

    vmem = pl.BlockSpec(memory_space=pltpu.MemorySpace.VMEM)
    smem = pl.BlockSpec(memory_space=pltpu.MemorySpace.SMEM)

    residual, out = pl.pallas_call(
        _make_downblock_kernel(N, H, W, c_in, c_out, dense_cfg),
        out_shape=(jax.ShapeDtypeStruct((c_out, P), jnp.float32),    # residual
                   jax.ShapeDtypeStruct((c_out, Pq), jnp.float32)),  # downsampled out
        in_specs=[vmem, vmem, vmem, smem, vmem, vmem]    # x, gamma, beta, alpha, bias, masks
                 + [vmem] * (n_dense + 3)                # reshaped conv weights
                 + [vmem],                               # stride-2 selector
        out_specs=(vmem, vmem),
        scratch_shapes=[
            pltpu.VMEM((1 + n_dense, c_out, P), jnp.float32),   # layer activations
            pltpu.VMEM((max_rows, P), MXU_DTYPE),               # im2col patch matrix
        ],
        # Total resident state is ~1 MiB -> default scoped VMEM is plenty on all
        # generations; set pltpu.CompilerParams(vmem_limit_bytes=...) when scaling.
    )(x_flat, prepped["gamma_tab"], prepped["beta_tab"], prepped["alphas"],
      prepped["bias_tab"], prepped["masks"], *prepped["weights"], prepped["sel"])
    return out, residual


def downblock_forward(prepped, dense_cfg, x_nchw, c_out, return_residual=True):
    """PyTorch-style interface: NCHW in, (out, residual) NCHW out."""
    N, c_in, H, W = x_nchw.shape
    x_flat = jnp.transpose(x_nchw, (1, 0, 2, 3)).reshape(c_in, N * H * W)
    out_flat, res_flat = _downblock_pallas(prepped, x_flat, N, H, W,
                                           c_in, c_out, dense_cfg)
    out = jnp.transpose(out_flat.reshape(c_out, N, H // 2, W // 2), (1, 0, 2, 3))
    residual = jnp.transpose(res_flat.reshape(c_out, N, H, W), (1, 0, 2, 3))
    return (out, residual) if return_residual else out


# ---------------------------------------------------------------------------
# Pure-JAX f32 reference (for in-script correctness verification)
# ---------------------------------------------------------------------------
def _bn_prelu_ref(x, gamma, beta, alpha):
    mean = jnp.mean(x, axis=(0, 2, 3), keepdims=True)
    var = jnp.mean(jnp.square(x - mean), axis=(0, 2, 3), keepdims=True)
    y = (x - mean) * lax.rsqrt(var + EPS) * gamma.reshape(1, -1, 1, 1) \
        + beta.reshape(1, -1, 1, 1)
    return jnp.where(y >= 0.0, y, alpha * y)


def _conv_ref(x, wb, padding, stride=1):
    w, b = wb
    y = lax.conv_general_dilated(x, w, (stride, stride), padding,
                                 dimension_numbers=("NCHW", "HWIO", "NCHW"),
                                 precision=lax.Precision.HIGHEST)
    return y + b.reshape(1, -1, 1, 1)


def downblock_reference(raw, x):
    dense_cfg = raw["dense_cfg"]
    a = raw["alphas"]
    out = _conv_ref(_bn_prelu_ref(x, *raw["bn1"], a[0]), raw["conv1"],
                    [(1, 1), (1, 1)])
    outs = []
    for j, (k, sources) in enumerate(dense_cfg):
        feats = out if sources is None else jnp.concatenate(
            [outs[s] for s in sources], axis=1)
        y = _bn_prelu_ref(feats, *raw["dense_bn"][j], a[1 + j])
        pad = [(1, 1), (1, 1)] if k == 3 else [(0, 0), (0, 0)]
        outs.append(_conv_ref(y, raw["dense_conv"][j], pad))
    y = _bn_prelu_ref(outs[-1], *raw["bn2"], a[1 + len(dense_cfg)])
    residual = _conv_ref(y, raw["conv2"], [(0, 1), (0, 1)])             # F.pad(0,1,0,1)
    out = _conv_ref(residual, raw["conv3"], [(0, 0), (0, 0)], stride=2)  # 2x2, stride 2
    return out, residual


# ---------------------------------------------------------------------------
if __name__ == "__main__":
    N, CIN, COUT, H, W = 2, 4, 8, 16, 16

    key = jax.random.PRNGKey(0)
    k_params, k_x = jax.random.split(key)

    raw = init_downblock_params(k_params, CIN, COUT)
    dense_cfg = raw["dense_cfg"]
    prepped = prep_downblock_params(raw, N, H, W, CIN, COUT)

    x = jax.random.normal(k_x, (N, CIN, H, W), jnp.float32)

    fwd = jax.jit(lambda xx: downblock_forward(prepped, dense_cfg, xx, COUT))
    out, residual = fwd(x)
    jax.block_until_ready((out, residual))

    assert out.shape == (N, COUT, H // 2, W // 2), out.shape
    assert residual.shape == (N, COUT, H, W), residual.shape
    assert bool(jnp.isfinite(out).all()) and bool(jnp.isfinite(residual).all())

    # Verify against the pure-JAX f32 reference (tolerance sized for the bf16
    # MXU operands used inside the kernel).
    out_want, res_want = jax.jit(lambda xx: downblock_reference(raw, xx))(x)
    for name, got, want in (("out", out, out_want), ("residual", residual, res_want)):
        err = float(jnp.max(jnp.abs(got - want)))
        scale = float(jnp.max(jnp.abs(want))) + 1e-6
        assert err <= 0.1 * scale, f"{name}: max|err|={err:.4g}, scale={scale:.4g}"

    print("KERNEL_OK")
</pallas_src>

<mosaic_0001>
module attributes {stable_mosaic.version = 11 : i64} {
  func.func @kernel(%arg0: memref<4x512xf32, #tpu.memory_space<vmem>>, %arg1: memref<24x8xf32, #tpu.memory_space<vmem>>, %arg2: memref<24x8xf32, #tpu.memory_space<vmem>>, %arg3: memref<8xf32, #tpu.memory_space<smem>>, %arg4: memref<8x9xf32, #tpu.memory_space<vmem>>, %arg5: memref<9x512xf32, #tpu.memory_space<vmem>>, %arg6: memref<8x36xbf16, #tpu.memory_space<vmem>>, %arg7: memref<8x8xbf16, #tpu.memory_space<vmem>>, %arg8: memref<8x72xbf16, #tpu.memory_space<vmem>>, %arg9: memref<8x144xbf16, #tpu.memory_space<vmem>>, %arg10: memref<8x144xbf16, #tpu.memory_space<vmem>>, %arg11: memref<8x216xbf16, #tpu.memory_space<vmem>>, %arg12: memref<8x24xbf16, #tpu.memory_space<vmem>>, %arg13: memref<8x32xbf16, #tpu.memory_space<vmem>>, %arg14: memref<8x32xbf16, #tpu.memory_space<vmem>>, %arg15: memref<512x128xf32, #tpu.memory_space<vmem>>, %arg16: memref<8x512xf32, #tpu.memory_space<vmem>>, %arg17: memref<8x128xf32, #tpu.memory_space<vmem>>, %arg18: memref<7x8x512xf32, #tpu.memory_space<vmem>>, %arg19: memref<216x512xbf16, #tpu.memory_space<vmem>>) attributes {dimension_semantics = [], scalar_prefetch = 0 : i64, scratch_operands = 2 : i64, tpu.core_type = #tpu.core_type<tc>} {
    %c0 = arith.constant 0 : index
    %c0_0 = arith.constant 0 : index
    %0 = vector.load %arg0[%c0, %c0_0] : memref<4x512xf32, #tpu.memory_space<vmem>>, vector<4x512xf32>
    %c0_1 = arith.constant 0 : index
    %c0_2 = arith.constant 0 : index
    %1 = vector.load %arg1[%c0_1, %c0_2] : memref<24x8xf32, #tpu.memory_space<vmem>>, vector<4x1xf32>
    %c0_3 = arith.constant 0 : index
    %c0_4 = arith.constant 0 : index
    %2 = vector.load %arg2[%c0_3, %c0_4] : memref<24x8xf32, #tpu.memory_space<vmem>>, vector<4x1xf32>
    %c0_5 = arith.constant 0 : index
    %3 = memref.load %arg3[%c0_5] : memref<8xf32, #tpu.memory_space<smem>>
    %cst = arith.constant dense<0.000000e+00> : vector<4xf32>
    %4 = vector.multi_reduction <add>, %0, %cst [1] : vector<4x512xf32> to vector<4xf32>
    %5 = vector.shape_cast %4 : vector<4xf32> to vector<4x1xf32>
    %cst_6 = arith.constant 5.120000e+02 : f32
    %6 = vector.broadcast %cst_6 : f32 to vector<4x1xf32>
    %7 = arith.divf %5, %6 : vector<4x1xf32>
    %8 = vector.broadcast %7 : vector<4x1xf32> to vector<4x512xf32>
    %9 = arith.subf %0, %8 : vector<4x512xf32>
    %10 = arith.mulf %9, %9 : vector<4x512xf32>
    %cst_7 = arith.constant dense<0.000000e+00> : vector<4xf32>
    %11 = vector.multi_reduction <add>, %10, %cst_7 [1] : vector<4x512xf32> to vector<4xf32>
    %12 = vector.shape_cast %11 : vector<4xf32> to vector<4x1xf32>
    %cst_8 = arith.constant 5.120000e+02 : f32
    %13 = vector.broadcast %cst_8 : f32 to vector<4x1xf32>
    %14 = arith.divf %12, %13 : vector<4x1xf32>
    %15 = vector.broadcast %7 : vector<4x1xf32> to vector<4x512xf32>
    %16 = arith.subf %0, %15 : vector<4x512xf32>
    %cst_9 = arith.constant 9.99999974E-6 : f32
    %17 = vector.broadcast %cst_9 : f32 to vector<4x1xf32>
    %18 = arith.addf %14, %17 : vector<4x1xf32>
    %19 = math.rsqrt %18 : vector<4x1xf32>
    %20 = vector.broadcast %19 : vector<4x1xf32> to vector<4x512xf32>
    %21 = arith.mulf %16, %20 : vector<4x512xf32>
    %22 = vector.broadcast %1 : vector<4x1xf32> to vector<4x512xf32>
    %23 = arith.mulf %21, %22 : vector<4x512xf32>
    %24 = vector.broadcast %2 : vector<4x1xf32> to vector<4x512xf32>
    %25 = arith.addf %23, %24 : vector<4x512xf32>
    %cst_10 = arith.constant 0.000000e+00 : f32
    %26 = vector.broadcast %cst_10 : f32 to vector<4x512xf32>
    %27 = arith.cmpf oge, %25, %26 : vector<4x512xf32>
    %28 = vector.broadcast %3 : f32 to vector<4x512xf32>
    %29 = arith.mulf %28, %25 : vector<4x512xf32>
    %30 = arith.select %27, %25, %29 : vector<4x512xi1>, vector<4x512xf32>
    %c17_i32 = arith.constant 17 : i32
    %31 = tpu.dynamic_rotate %30 by %c17_i32 dim 1 : vector<4x512xf32>, i32 -> vector<4x512xf32>
    %c0_11 = arith.constant 0 : index
    %c0_12 = arith.constant 0 : index
    %32 = vector.load %arg5[%c0_11, %c0_12] : memref<9x512xf32, #tpu.memory_space<vmem>>, vector<1x512xf32>
    %33 = vector.broadcast %32 : vector<1x512xf32> to vector<4x512xf32>
    %34 = arith.mulf %31, %33 : vector<4x512xf32>
    %c16_i32 = arith.constant 16 : i32
    %35 = tpu.dynamic_rotate %30 by %c16_i32 dim 1 : vector<4x512xf32>, i32 -> vector<4x512xf32>
    %c1 = arith.constant 1 : index
    %c0_13 = arith.constant 0 : index
    %36 = vector.load %arg5[%c1, %c0_13] : memref<9x512xf32, #tpu.memory_space<vmem>>, vector<1x512xf32>
    %37 = vector.broadcast %36 : vector<1x512xf32> to vector<4x512xf32>
    %38 = arith.mulf %35, %37 : vector<4x512xf32>
    %c15_i32 = arith.constant 15 : i32
    %39 = tpu.dynamic_rotate %30 by %c15_i32 dim 1 : vector<4x512xf32>, i32 -> vector<4x512xf32>
    %c2 = arith.constant 2 : index
    %c0_14 = arith.constant 0 : index
    %40 = vector.load %arg5[%c2, %c0_14] : memref<9x512xf32, #tpu.memory_space<vmem>>, vector<1x512xf32>
    %41 = vector.broadcast %40 : vector<1x512xf32> to vector<4x512xf32>
    %42 = arith.mulf %39, %41 : vector<4x512xf32>
    %c1_i32 = arith.constant 1 : i32
    %43 = tpu.dynamic_rotate %30 by %c1_i32 dim 1 : vector<4x512xf32>, i32 -> vector<4x512xf32>
    %c3 = arith.constant 3 : index
    %c0_15 = arith.constant 0 : index
    %44 = vector.load %arg5[%c3, %c0_15] : memref<9x512xf32, #tpu.memory_space<vmem>>, vector<1x512xf32>
    %45 = vector.broadcast %44 : vector<1x512xf32> to vector<4x512xf32>
    %46 = arith.mulf %43, %45 : vector<4x512xf32>
    %47 = tpu.concatenate %34, %38, %42, %46 in 0 : vector<4x512xf32>, vector<4x512xf32>, vector<4x512xf32>, vector<4x512xf32> -> vector<16x512xf32>
    %48 = arith.truncf %47 : vector<16x512xf32> to vector<16x512xbf16>
    %c0_16 = arith.constant 0 : index
    %c0_17 = arith.constant 0 : index
    %49 = vector.load %arg19[%c0_16, %c0_17] : memref<216x512xbf16, #tpu.memory_space<vmem>>, vector<16x512xbf16>
    tpu.vector_store %arg19[%c0_16, %c0_17], %48 {strides = array<i32>} : memref<216x512xbf16, #tpu.memory_space<vmem>>, vector<16x512xbf16>,
    %c511_i32 = arith.constant 511 : i32
    %50 = tpu.dynamic_rotate %30 by %c511_i32 dim 1 : vector<4x512xf32>, i32 -> vector<4x512xf32>
    %c5 = arith.constant 5 : index
    %c0_18 = arith.constant 0 : index
    %51 = vector.load %arg5[%c5, %c0_18] : memref<9x512xf32, #tpu.memory_space<vmem>>, vector<1x512xf32>
    %52 = vector.broadcast %51 : vector<1x512xf32> to vector<4x512xf32>
    %53 = arith.mulf %50, %52 : vector<4x512xf32>
    %c497_i32 = arith.constant 497 : i32
    %54 = tpu.dynamic_rotate %30 by %c497_i32 dim 1 : vector<4x512xf32>, i32 -> vector<4x512xf32>
    %c6 = arith.constant 6 : index
    %c0_19 = arith.constant 0 : index
    %55 = vector.load %arg5[%c6, %c0_19] : memref<9x512xf32, #tpu.memory_space<vmem>>, vector<1x512xf32>
    %56 = vector.broadcast %55 : vector<1x512xf32> to vector<4x512xf32>
    %57 = arith.mulf %54, %56 : vector<4x512xf32>
    %c496_i32 = arith.constant 496 : i32
    %58 = tpu.dynamic_rotate %30 by %c496_i32 dim 1 : vector<4x512xf32>, i32 -> vector<4x512xf32>
    %c7 = arith.constant 7 : index
    %c0_20 = arith.constant 0 : index
    %59 = vector.load %arg5[%c7, %c0_20] : memref<9x512xf32, #tpu.memory_space<vmem>>, vector<1x512xf32>
    %60 = vector.broadcast %59 : vector<1x512xf32> to vector<4x512xf32>
    %61 = arith.mulf %58, %60 : vector<4x512xf32>
    %62 = tpu.concatenate %30, %53, %57, %61 in 0 : vector<4x512xf32>, vector<4x512xf32>, vector<4x512xf32>, vector<4x512xf32> -> vector<16x512xf32>
    %63 = arith.truncf %62 : vector<16x512xf32> to vector<16x512xbf16>
    %c16 = arith.constant 16 : index
    %c0_21 = arith.constant 0 : index
    %64 = vector.load %arg19[%c16, %c0_21] : memref<216x512xbf16, #tpu.memory_space<vmem>>, vector<16x512xbf16>
    tpu.vector_store %arg19[%c16, %c0_21], %63 {strides = array<i32>} : memref<216x512xbf16, #tpu.memory_space<vmem>>, vector<16x512xbf16>,
    %c495_i32 = arith.constant 495 : i32
    %65 = tpu.dynamic_rotate %30 by %c495_i32 dim 1 : vector<4x512xf32>, i32 -> vector<4x512xf32>
    %c8 = arith.constant 8 : index
    %c0_22 = arith.constant 0 : index
    %66 = vector.load %arg5[%c8, %c0_22] : memref<9x512xf32, #tpu.memory_space<vmem>>, vector<1x512xf32>
    %67 = vector.broadcast %66 : vector<1x512xf32> to vector<4x512xf32>
    %68 = arith.mulf %65, %67 : vector<4x512xf32>
    %69 = arith.truncf %68 : vector<4x512xf32> to vector<4x512xbf16>
    %c32 = arith.constant 32 : index
    %c0_23 = arith.constant 0 : index
    %70 = vector.load %arg19[%c32, %c0_23] : memref<216x512xbf16, #tpu.memory_space<vmem>>, vector<4x512xbf16>
    tpu.vector_store %arg19[%c32, %c0_23], %69 {strides = array<i32>} : memref<216x512xbf16, #tpu.memory_space<vmem>>, vector<4x512xbf16>,
    %c0_24 = arith.constant 0 : index
    %c0_25 = arith.constant 0 : index
    %71 = vector.load %arg6[%c0_24, %c0_25] : memref<8x36xbf16, #tpu.memory_space<vmem>>, vector<8x36xbf16>
    %c0_26 = arith.constant 0 : index
    %c0_27 = arith.constant 0 : index
    %72 = vector.load %arg19[%c0_26, %c0_27] : memref<216x512xbf16, #tpu.memory_space<vmem>>, vector<36x512xbf16>
    %cst_28 = arith.constant dense<0.000000e+00> : vector<8x512xf32>
    %73 = tpu.matmul %71, %72, %cst_28 {dimension_numbers = #tpu.dot_dimension_numbers<[1], [0], [0], [1], [0, 0, 1, 1], [], []>} : vector<8x36xbf16>, vector<36x512xbf16>, vector<8x512xf32> -> vector<8x512xf32>
    %c0_29 = arith.constant 0 : index
    %c0_30 = arith.constant 0 : index
    %74 = vector.load %arg4[%c0_29, %c0_30] : memref<8x9xf32, #tpu.memory_space<vmem>>, vector<8x1xf32>
    %75 = vector.broadcast %74 : vector<8x1xf32> to vector<8x512xf32>
    %76 = arith.addf %73, %75 : vector<8x512xf32>
    %c0_31 = arith.constant 0 : index
    %c0_32 = arith.constant 0 : index
    %c0_33 = arith.constant 0 : index
    %77 = vector.load %arg18[%c0_31, %c0_32, %c0_33] : memref<7x8x512xf32, #tpu.memory_space<vmem>>, vector<1x8x512xf32>
    %78 = vector.shape_cast %77 : vector<1x8x512xf32> to vector<8x512xf32>
    %79 = vector.shape_cast %76 : vector<8x512xf32> to vector<1x8x512xf32>
    tpu.vector_store %arg18[%c0_31, %c0_32, %c0_33], %79 {strides = array<i32>} : memref<7x8x512xf32, #tpu.memory_space<vmem>>, vector<1x8x512xf32>,
    %c0_34 = arith.constant 0 : index
    %c0_35 = arith.constant 0 : index
    %c0_36 = arith.constant 0 : index
    %80 = vector.load %arg18[%c0_34, %c0_35, %c0_36] : memref<7x8x512xf32, #tpu.memory_space<vmem>>, vector<1x8x512xf32>
    %81 = vector.shape_cast %80 : vector<1x8x512xf32> to vector<8x512xf32>
    %c0_37 = arith.constant 0 : index
    %c1_38 = arith.constant 1 : index
    %82 = vector.load %arg1[%c0_37, %c1_38] : memref<24x8xf32, #tpu.memory_space<vmem>>, vector<8x1xf32>
    %c0_39 = arith.constant 0 : index
    %c1_40 = arith.constant 1 : index
    %83 = vector.load %arg2[%c0_39, %c1_40] : memref<24x8xf32, #tpu.memory_space<vmem>>, vector<8x1xf32>
    %c1_41 = arith.constant 1 : index
    %84 = memref.load %arg3[%c1_41] : memref<8xf32, #tpu.memory_space<smem>>
    %cst_42 = arith.constant dense<0.000000e+00> : vector<8xf32>
    %85 = vector.multi_reduction <add>, %81, %cst_42 [1] : vector<8x512xf32> to vector<8xf32>
    %86 = vector.shape_cast %85 : vector<8xf32> to vector<8x1xf32>
    %cst_43 = arith.constant 5.120000e+02 : f32
    %87 = vector.broadcast %cst_43 : f32 to vector<8x1xf32>
    %88 = arith.divf %86, %87 : vector<8x1xf32>
    %89 = vector.broadcast %88 : vector<8x1xf32> to vector<8x512xf32>
    %90 = arith.subf %81, %89 : vector<8x512xf32>
    %91 = arith.mulf %90, %90 : vector<8x512xf32>
    %cst_44 = arith.constant dense<0.000000e+00> : vector<8xf32>
    %92 = vector.multi_reduction <add>, %91, %cst_44 [1] : vector<8x512xf32> to vector<8xf32>
    %93 = vector.shape_cast %92 : vector<8xf32> to vector<8x1xf32>
    %cst_45 = arith.constant 5.120000e+02 : f32
    %94 = vector.broadcast %cst_45 : f32 to vector<8x1xf32>
    %95 = arith.divf %93, %94 : vector<8x1xf32>
    %96 = vector.broadcast %88 : vector<8x1xf32> to vector<8x512xf32>
    %97 = arith.subf %81, %96 : vector<8x512xf32>
    %cst_46 = arith.constant 9.99999974E-6 : f32
    %98 = vector.broadcast %cst_46 : f32 to vector<8x1xf32>
    %99 = arith.addf %95, %98 : vector<8x1xf32>
    %100 = math.rsqrt %99 : vector<8x1xf32>
    %101 = vector.broadcast %100 : vector<8x1xf32> to vector<8x512xf32>
    %102 = arith.mulf %97, %101 : vector<8x512xf32>
    %103 = vector.broadcast %82 : vector<8x1xf32> to vector<8x512xf32>
    %104 = arith.mulf %102, %103 : vector<8x512xf32>
    %105 = vector.broadcast %83 : vector<8x1xf32> to vector<8x512xf32>
    %106 = arith.addf %104, %105 : vector<8x512xf32>
    %cst_47 = arith.constant 0.000000e+00 : f32
    %107 = vector.broadcast %cst_47 : f32 to vector<8x512xf32>
    %108 = arith.cmpf oge, %106, %107 : vector<8x512xf32>
    %109 = vector.broadcast %84 : f32 to vector<8x512xf32>
    %110 = arith.mulf %109, %106 : vector<8x512xf32>
    %111 = arith.select %108, %106, %110 : vector<8x512xi1>, vector<8x512xf32>
    %112 = arith.truncf %111 : vector<8x512xf32> to vector<8x512xbf16>
    %c0_48 = arith.constant 0 : index
    %c0_49 = arith.constant 0 : index
    %113 = vector.load %arg19[%c0_48, %c0_49] : memref<216x512xbf16, #tpu.memory_space<vmem>>, vector<8x512xbf16>
    tpu.vector_store %arg19[%c0_48, %c0_49], %112 {strides = array<i32>} : memref<216x512xbf16, #tpu.memory_space<vmem>>, vector<8x512xbf16>,
    %c0_50 = arith.constant 0 : index
    %c0_51 = arith.constant 0 : index
    %114 = vector.load %arg7[%c0_50, %c0_51] : memref<8x8xbf16, #tpu.memory_space<vmem>>, vector<8x8xbf16>
    %c0_52 = arith.constant 0 : index
    %c0_53 = arith.constant 0 : index
    %115 = vector.load %arg19[%c0_52, %c0_53] : memref<216x512xbf16, #tpu.memory_space<vmem>>, vector<8x512xbf16>
    %cst_54 = arith.constant dense<0.000000e+00> : vector<8x512xf32>
    %116 = tpu.matmul %114, %115, %cst_54 {dimension_numbers = #tpu.dot_dimension_numbers<[1], [0], [0], [1], [0, 0, 1, 1], [], []>} : vector<8x8xbf16>, vector<8x512xbf16>, vector<8x512xf32> -> vector<8x512xf32>
    %c0_55 = arith.constant 0 : index
    %c1_56 = arith.constant 1 : index
    %117 = vector.load %arg4[%c0_55, %c1_56] : memref<8x9xf32, #tpu.memory_space<vmem>>, vector<8x1xf32>
    %118 = vector.broadcast %117 : vector<8x1xf32> to vector<8x512xf32>
    %119 = arith.addf %116, %118 : vector<8x512xf32>
    %c1_57 = arith.constant 1 : index
    %c0_58 = arith.constant 0 : index
    %c0_59 = arith.constant 0 : index
    %120 = vector.load %arg18[%c1_57, %c0_58, %c0_59] : memref<7x8x512xf32, #tpu.memory_space<vmem>>, vector<1x8x512xf32>
    %121 = vector.shape_cast %120 : vector<1x8x512xf32> to vector<8x512xf32>
    %122 = vector.shape_cast %119 : vector<8x512xf32> to vector<1x8x512xf32>
    tpu.vector_store %arg18[%c1_57, %c0_58, %c0_59], %122 {strides = array<i32>} : memref<7x8x512xf32, #tpu.memory_space<vmem>>, vector<1x8x512xf32>,
    %c1_60 = arith.constant 1 : index
    %c0_61 = arith.constant 0 : index
    %c0_62 = arith.constant 0 : index
    %123 = vector.load %arg18[%c1_60, %c0_61, %c0_62] : memref<7x8x512xf32, #tpu.memory_space<vmem>>, vector<1x8x512xf32>
    %124 = vector.shape_cast %123 : vector<1x8x512xf32> to vector<8x512xf32>
    %c0_63 = arith.constant 0 : index
    %c2_64 = arith.constant 2 : index
    %125 = vector.load %arg1[%c0_63, %c2_64] : memref<24x8xf32, #tpu.memory_space<vmem>>, vector<8x1xf32>
    %c0_65 = arith.constant 0 : index
    %c2_66 = arith.constant 2 : index
    %126 = vector.load %arg2[%c0_65, %c2_66] : memref<24x8xf32, #tpu.memory_space<vmem>>, vector<8x1xf32>
    %c2_67 = arith.constant 2 : index
    %127 = memref.load %arg3[%c2_67] : memref<8xf32, #tpu.memory_space<smem>>
    %cst_68 = arith.constant dense<0.000000e+00> : vector<8xf32>
    %128 = vector.multi_reduction <add>, %124, %cst_68 [1] : vector<8x512xf32> to vector<8xf32>
    %129 = vector.shape_cast %128 : vector<8xf32> to vector<8x1xf32>
    %cst_69 = arith.constant 5.120000e+02 : f32
    %130 = vector.broadcast %cst_69 : f32 to vector<8x1xf32>
    %131 = arith.divf %129, %130 : vector<8x1xf32>
    %132 = vector.broadcast %131 : vector<8x1xf32> to vector<8x512xf32>
    %133 = arith.subf %124, %132 : vector<8x512xf32>
    %134 = arith.mulf %133, %133 : vector<8x512xf32>
    %cst_70 = arith.constant dense<0.000000e+00> : vector<8xf32>
    %135 = vector.multi_reduction <add>, %134, %cst_70 [1] : vector<8x512xf32> to vector<8xf32>
    %136 = vector.shape_cast %135 : vector<8xf32> to vector<8x1xf32>
    %cst_71 = arith.constant 5.120000e+02 : f32
    %137 = vector.broadcast %cst_71 : f32 to vector<8x1xf32>
    %138 = arith.divf %136, %137 : vector<8x1xf32>
    %139 = vector.broadcast %131 : vector<8x1xf32> to vector<8x512xf32>
    %140 = arith.subf %124, %139 : vector<8x512xf32>
    %cst_72 = arith.constant 9.99999974E-6 : f32
    %141 = vector.broadcast %cst_72 : f32 to vector<8x1xf32>
    %142 = arith.addf %138, %141 : vector<8x1xf32>
    %143 = math.rsqrt %142 : vector<8x1xf32>
    %144 = vector.broadcast %143 : vector<8x1xf32> to vector<8x512xf32>
    %145 = arith.mulf %140, %144 : vector<8x512xf32>
    %146 = vector.broadcast %125 : vector<8x1xf32> to vector<8x512xf32>
    %147 = arith.mulf %145, %146 : vector<8x512xf32>
    %148 = vector.broadcast %126 : vector<8x1xf32> to vector<8x512xf32>
    %149 = arith.addf %147, %148 : vector<8x512xf32>
    %cst_73 = arith.constant 0.000000e+00 : f32
    %150 = vector.broadcast %cst_73 : f32 to vector<8x512xf32>
    %151 = arith.cmpf oge, %149, %150 : vector<8x512xf32>
    %152 = vector.broadcast %127 : f32 to vector<8x512xf32>
    %153 = arith.mulf %152, %149 : vector<8x512xf32>
    %154 = arith.select %151, %149, %153 : vector<8x512xi1>, vector<8x512xf32>
    %c17_i32_74 = arith.constant 17 : i32
    %155 = tpu.dynamic_rotate %154 by %c17_i32_74 dim 1 : vector<8x512xf32>, i32 -> vector<8x512xf32>
    %c0_75 = arith.constant 0 : index
    %c0_76 = arith.constant 0 : index
    %156 = vector.load %arg5[%c0_75, %c0_76] : memref<9x512xf32, #tpu.memory_space<vmem>>, vector<1x512xf32>
    %157 = vector.broadcast %156 : vector<1x512xf32> to vector<8x512xf32>
    %158 = arith.mulf %155, %157 : vector<8x512xf32>
    %c16_i32_77 = arith.constant 16 : i32
    %159 = tpu.dynamic_rotate %154 by %c16_i32_77 dim 1 : vector<8x512xf32>, i32 -> vector<8x512xf32>
    %c1_78 = arith.constant 1 : index
    %c0_79 = arith.constant 0 : index
    %160 = vector.load %arg5[%c1_78, %c0_79] : memref<9x512xf32, #tpu.memory_space<vmem>>, vector<1x512xf32>
    %161 = vector.broadcast %160 : vector<1x512xf32> to vector<8x512xf32>
    %162 = arith.mulf %159, %161 : vector<8x512xf32>
    %163 = tpu.concatenate %158, %162 in 0 : vector<8x512xf32>, vector<8x512xf32> -> vector<16x512xf32>
    %164 = arith.truncf %163 : vector<16x512xf32> to vector<16x512xbf16>
    %c0_80 = arith.constant 0 : index
    %c0_81 = arith.constant 0 : index
    %165 = vector.load %arg19[%c0_80, %c0_81] : memref<216x512xbf16, #tpu.memory_space<vmem>>, vector<16x512xbf16>
    tpu.vector_store %arg19[%c0_80, %c0_81], %164 {strides = array<i32>} : memref<216x512xbf16, #tpu.memory_space<vmem>>, vector<16x512xbf16>,
    %c15_i32_82 = arith.constant 15 : i32
    %166 = tpu.dynamic_rotate %154 by %c15_i32_82 dim 1 : vector<8x512xf32>, i32 -> vector<8x512xf32>
    %c2_83 = arith.constant 2 : index
    %c0_84 = arith.constant 0 : index
    %167 = vector.load %arg5[%c2_83, %c0_84] : memref<9x512xf32, #tpu.memory_space<vmem>>, vector<1x512xf32>
    %168 = vector.broadcast %167 : vector<1x512xf32> to vector<8x512xf32>
    %169 = arith.mulf %166, %168 : vector<8x512xf32>
    %c1_i32_85 = arith.constant 1 : i32
    %170 = tpu.dynamic_rotate %154 by %c1_i32_85 dim 1 : vector<8x512xf32>, i32 -> vector<8x512xf32>
    %c3_86 = arith.constant 3 : index
    %c0_87 = arith.constant 0 : index
    %171 = vector.load %arg5[%c3_86, %c0_87] : memref<9x512xf32, #tpu.memory_space<vmem>>, vector<1x512xf32>
    %172 = vector.broadcast %171 : vector<1x512xf32> to vector<8x512xf32>
    %173 = arith.mulf %170, %172 : vector<8x512xf32>
    %174 = tpu.concatenate %169, %173 in 0 : vector<8x512xf32>, vector<8x512xf32> -> vector<16x512xf32>
    %175 = arith.truncf %174 : vector<16x512xf32> to vector<16x512xbf16>
    %c16_88 = arith.constant 16 : index
    %c0_89 = arith.constant 0 : index
    %176 = vector.load %arg19[%c16_88, %c0_89] : memref<216x512xbf16, #tpu.memory_space<vmem>>, vector<16x512xbf16>
    tpu.vector_store %arg19[%c16_88, %c0_89], %175 {strides = array<i32>} : memref<216x512xbf16, #tpu.memory_space<vmem>>, vector<16x512xbf16>,
    %c511_i32_90 = arith.constant 511 : i32
    %177 = tpu.dynamic_rotate %154 by %c511_i32_90 dim 1 : vector<8x512xf32>, i32 -> vector<8x512xf32>
    %c5_91 = arith.constant 5 : index
    %c0_92 = arith.constant 0 : index
    %178 = vector.load %arg5[%c5_91, %c0_92] : memref<9x512xf32, #tpu.memory_space<vmem>>, vector<1x512xf32>
    %179 = vector.broadcast %178 : vector<1x512xf32> to vector<8x512xf32>
    %180 = arith.mulf %177, %179 : vector<8x512xf32>
    %181 = tpu.concatenate %154, %180 in 0 : vector<8x512xf32>, vector<8x512xf32> -> vector<16x512xf32>
    %182 = arith.truncf %181 : vector<16x512xf32> to vector<16x512xbf16>
    %c32_93 = arith.constant 32 : index
    %c0_94 = arith.constant 0 : index
    %183 = vector.load %arg19[%c32_93, %c0_94] : memref<216x512xbf16, #tpu.memory_space<vmem>>, vector<16x512xbf16>
    tpu.vector_store %arg19[%c32_93, %c0_94], %182 {strides = array<i32>} : memref<216x512xbf16, #tpu.memory_space<vmem>>, vector<16x512xbf16>,
    %c497_i32_95 = arith.constant 497 : i32
    %184 = tpu.dynamic_rotate %154 by %c497_i32_95 dim 1 : vector<8x512xf32>, i32 -> vector<8x512xf32>
    %c6_96 = arith.constant 6 : index
    %c0_97 = arith.constant 0 : index
    %185 = vector.load %arg5[%c6_96, %c0_97] : memref<9x512xf32, #tpu.memory_space<vmem>>, vector<1x512xf32>
    %186 = vector.broadcast %185 : vector<1x512xf32> to vector<8x512xf32>
    %187 = arith.mulf %184, %186 : vector<8x512xf32>
    %c496_i32_98 = arith.constant 496 : i32
    %188 = tpu.dynamic_rotate %154 by %c496_i32_98 dim 1 : vector<8x512xf32>, i32 -> vector<8x512xf32>
    %c7_99 = arith.constant 7 : index
    %c0_100 = arith.constant 0 : index
    %189 = vector.load %arg5[%c7_99, %c0_100] : memref<9x512xf32, #tpu.memory_space<vmem>>, vector<1x512xf32>
    %190 = vector.broadcast %189 : vector<1x512xf32> to vector<8x512xf32>
    %191 = arith.mulf %188, %190 : vector<8x512xf32>
    %192 = tpu.concatenate %187, %191 in 0 : vector<8x512xf32>, vector<8x512xf32> -> vector<16x512xf32>
    %193 = arith.truncf %192 : vector<16x512xf32> to vector<16x512xbf16>
    %c48 = arith.constant 48 : index
    %c0_101 = arith.constant 0 : index
    %194 = vector.load %arg19[%c48, %c0_101] : memref<216x512xbf16, #tpu.memory_space<vmem>>, vector<16x512xbf16>
    tpu.vector_store %arg19[%c48, %c0_101], %193 {strides = array<i32>} : memref<216x512xbf16, #tpu.memory_space<vmem>>, vector<16x512xbf16>,
    %c495_i32_102 = arith.constant 495 : i32
    %195 = tpu.dynamic_rotate %154 by %c495_i32_102 dim 1 : vector<8x512xf32>, i32 -> vector<8x512xf32>
    %c8_103 = arith.constant 8 : index
    %c0_104 = arith.constant 0 : index
    %196 = vector.load %arg5[%c8_103, %c0_104] : memref<9x512xf32, #tpu.memory_space<vmem>>, vector<1x512xf32>
    %197 = vector.broadcast %196 : vector<1x512xf32> to vector<8x512xf32>
    %198 = arith.mulf %195, %197 : vector<8x512xf32>
    %199 = arith.truncf %198 : vector<8x512xf32> to vector<8x512xbf16>
    %c64 = arith.constant 64 : index
    %c0_105 = arith.constant 0 : index
    %200 = vector.load %arg19[%c64, %c0_105] : memref<216x512xbf16, #tpu.memory_space<vmem>>, vector<8x512xbf16>
    tpu.vector_store %arg19[%c64, %c0_105], %199 {strides = array<i32>} : memref<216x512xbf16, #tpu.memory_space<vmem>>, vector<8x512xbf16>,
    %c0_106 = arith.constant 0 : index
    %c0_107 = arith.constant 0 : index
    %201 = vector.load %arg8[%c0_106, %c0_107] : memref<8x72xbf16, #tpu.memory_space<vmem>>, vector<8x72xbf16>
    %c0_108 = arith.constant 0 : index
    %c0_109 = arith.constant 0 : index
    %202 = vector.load %arg19[%c0_108, %c0_109] : memref<216x512xbf16, #tpu.memory_space<vmem>>, vector<72x512xbf16>
    %cst_110 = arith.constant dense<0.000000e+00> : vector<8x512xf32>
    %203 = tpu.matmul %201, %202, %cst_110 {dimension_numbers = #tpu.dot_dimension_numbers<[1], [0], [0], [1], [0, 0, 1, 1], [], []>} : vector<8x72xbf16>, vector<72x512xbf16>, vector<8x512xf32> -> vector<8x512xf32>
    %c0_111 = arith.constant 0 : index
    %c2_112 = arith.constant 2 : index
    %204 = vector.load %arg4[%c0_111, %c2_112] : memref<8x9xf32, #tpu.memory_space<vmem>>, vector<8x1xf32>
    %205 = vector.broadcast %204 : vector<8x1xf32> to vector<8x512xf32>
    %206 = arith.addf %203, %205 : vector<8x512xf32>
    %c2_113 = arith.constant 2 : index
    %c0_114 = arith.constant 0 : index
    %c0_115 = arith.constant 0 : index
    %207 = vector.load %arg18[%c2_113, %c0_114, %c0_115] : memref<7x8x512xf32, #tpu.memory_space<vmem>>, vector<1x8x512xf32>
    %208 = vector.shape_cast %207 : vector<1x8x512xf32> to vector<8x512xf32>
    %209 = vector.shape_cast %206 : vector<8x512xf32> to vector<1x8x512xf32>
    tpu.vector_store %arg18[%c2_113, %c0_114, %c0_115], %209 {strides = array<i32>} : memref<7x8x512xf32, #tpu.memory_space<vmem>>, vector<1x8x512xf32>,
    %c2_116 = arith.constant 2 : index
    %c0_117 = arith.constant 0 : index
    %c0_118 = arith.constant 0 : index
    %210 = vector.load %arg18[%c2_116, %c0_117, %c0_118] : memref<7x8x512xf32, #tpu.memory_space<vmem>>, vector<1x8x512xf32>
    %211 = vector.shape_cast %210 : vector<1x8x512xf32> to vector<8x512xf32>
    %c0_119 = arith.constant 0 : index
    %c3_120 = arith.constant 3 : index
    %212 = vector.load %arg1[%c0_119, %c3_120] : memref<24x8xf32, #tpu.memory_space<vmem>>, vector<8x1xf32>
    %c0_121 = arith.constant 0 : index
    %c3_122 = arith.constant 3 : index
    %213 = vector.load %arg2[%c0_121, %c3_122] : memref<24x8xf32, #tpu.memory_space<vmem>>, vector<8x1xf32>
    %c3_123 = arith.constant 3 : index
    %214 = memref.load %arg3[%c3_123] : memref<8xf32, #tpu.memory_space<smem>>
    %cst_124 = arith.constant dense<0.000000e+00> : vector<8xf32>
    %215 = vector.multi_reduction <add>, %211, %cst_124 [1] : vector<8x512xf32> to vector<8xf32>
    %216 = vector.shape_cast %215 : vector<8xf32> to vector<8x1xf32>
    %cst_125 = arith.constant 5.120000e+02 : f32
    %217 = vector.broadcast %cst_125 : f32 to vector<8x1xf32>
    %218 = arith.divf %216, %217 : vector<8x1xf32>
    %219 = vector.broadcast %218 : vector<8x1xf32> to vector<8x512xf32>
    %220 = arith.subf %211, %219 : vector<8x512xf32>
    %221 = arith.mulf %220, %220 : vector<8x512xf32>
    %cst_126 = arith.constant dense<0.000000e+00> : vector<8xf32>
    %222 = vector.multi_reduction <add>, %221, %cst_126 [1] : vector<8x512xf32> to vector<8xf32>
    %223 = vector.shape_cast %222 : vector<8xf32> to vector<8x1xf32>
    %cst_127 = arith.constant 5.120000e+02 : f32
    %224 = vector.broadcast %cst_127 : f32 to vector<8x1xf32>
    %225 = arith.divf %223, %224 : vector<8x1xf32>
    %226 = vector.broadcast %218 : vector<8x1xf32> to vector<8x512xf32>
    %227 = arith.subf %211, %226 : vector<8x512xf32>
    %cst_128 = arith.constant 9.99999974E-6 : f32
    %228 = vector.broadcast %cst_128 : f32 to vector<8x1xf32>
    %229 = arith.addf %225, %228 : vector<8x1xf32>
    %230 = math.rsqrt %229 : vector<8x1xf32>
    %231 = vector.broadcast %230 : vector<8x1xf32> to vector<8x512xf32>
    %232 = arith.mulf %227, %231 : vector<8x512xf32>
    %233 = vector.broadcast %212 : vector<8x1xf32> to vector<8x512xf32>
    %234 = arith.mulf %232, %233 : vector<8x512xf32>
    %235 = vector.broadcast %213 : vector<8x1xf32> to vector<8x512xf32>
    %236 = arith.addf %234, %235 : vector<8x512xf32>
    %cst_129 = arith.constant 0.000000e+00 : f32
    %237 = vector.broadcast %cst_129 : f32 to vector<8x512xf32>
    %238 = arith.cmpf oge, %236, %237 : vector<8x512xf32>
    %239 = vector.broadcast %214 : f32 to vector<8x512xf32>
    %240 = arith.mulf %239, %236 : vector<8x512xf32>
    %241 = arith.select %238, %236, %240 : vector<8x512xi1>, vector<8x512xf32>
    %c1_130 = arith.constant 1 : index
    %c0_131 = arith.constant 0 : index
    %c0_132 = arith.constant 0 : index
    %242 = vector.load %arg18[%c1_130, %c0_131, %c0_132] : memref<7x8x512xf32, #tpu.memory_space<vmem>>, vector<1x8x512xf32>
    %243 = vector.shape_cast %242 : vector<1x8x512xf32> to vector<8x512xf32>
    %c8_133 = arith.constant 8 : index
    %c3_134 = arith.constant 3 : index
    %244 = vector.load %arg1[%c8_133, %c3_134] : memref<24x8xf32, #tpu.memory_space<vmem>>, vector<8x1xf32>
    %c8_135 = arith.constant 8 : index
    %c3_136 = arith.constant 3 : index
    %245 = vector.load %arg2[%c8_135, %c3_136] : memref<24x8xf32, #tpu.memory_space<vmem>>, vector<8x1xf32>
    %c3_137 = arith.constant 3 : index
    %246 = memref.load %arg3[%c3_137] : memref<8xf32, #tpu.memory_space<smem>>
    %cst_138 = arith.constant dense<0.000000e+00> : vector<8xf32>
    %247 = vector.multi_reduction <add>, %243, %cst_138 [1] : vector<8x512xf32> to vector<8xf32>
    %248 = vector.shape_cast %247 : vector<8xf32> to vector<8x1xf32>
    %cst_139 = arith.constant 5.120000e+02 : f32
    %249 = vector.broadcast %cst_139 : f32 to vector<8x1xf32>
    %250 = arith.divf %248, %249 : vector<8x1xf32>
    %251 = vector.broadcast %250 : vector<8x1xf32> to vector<8x512xf32>
    %252 = arith.subf %243, %251 : vector<8x512xf32>
    %253 = arith.mulf %252, %252 : vector<8x512xf32>
    %cst_140 = arith.constant dense<0.000000e+00> : vector<8xf32>
    %254 = vector.multi_reduction <add>, %253, %cst_140 [1] : vector<8x512xf32> to vector<8xf32>
    %255 = vector.shape_cast %254 : vector<8xf32> to vector<8x1xf32>
    %cst_141 = arith.constant 5.120000e+02 : f32
    %256 = vector.broadcast %cst_141 : f32 to vector<8x1xf32>
    %257 = arith.divf %255, %256 : vector<8x1xf32>
    %258 = vector.broadcast %250 : vector<8x1xf32> to vector<8x512xf32>
    %259 = arith.subf %243, %258 : vector<8x512xf32>
    %cst_142 = arith.constant 9.99999974E-6 : f32
    %260 = vector.broadcast %cst_142 : f32 to vector<8x1xf32>
    %261 = arith.addf %257, %260 : vector<8x1xf32>
    %262 = math.rsqrt %261 : vector<8x1xf32>
    %263 = vector.broadcast %262 : vector<8x1xf32> to vector<8x512xf32>
    %264 = arith.mulf %259, %263 : vector<8x512xf32>
    %265 = vector.broadcast %244 : vector<8x1xf32> to vector<8x512xf32>
    %266 = arith.mulf %264, %265 : vector<8x512xf32>
    %267 = vector.broadcast %245 : vector<8x1xf32> to vector<8x512xf32>
    %268 = arith.addf %266, %267 : vector<8x512xf32>
    %cst_143 = arith.constant 0.000000e+00 : f32
    %269 = vector.broadcast %cst_143 : f32 to vector<8x512xf32>
    %270 = arith.cmpf oge, %268, %269 : vector<8x512xf32>
    %271 = vector.broadcast %246 : f32 to vector<8x512xf32>
    %272 = arith.mulf %271, %268 : vector<8x512xf32>
    %273 = arith.select %270, %268, %272 : vector<8x512xi1>, vector<8x512xf32>
    %c17_i32_144 = arith.constant 17 : i32
    %274 = tpu.dynamic_rotate %241 by %c17_i32_144 dim 1 : vector<8x512xf32>, i32 -> vector<8x512xf32>
    %c0_145 = arith.constant 0 : index
    %c0_146 = arith.constant 0 : index
    %275 = vector.load %arg5[%c0_145, %c0_146] : memref<9x512xf32, #tpu.memory_space<vmem>>, vector<1x512xf32>
    %276 = vector.broadcast %275 : vector<1x512xf32> to vector<8x512xf32>
    %277 = arith.mulf %274, %276 : vector<8x512xf32>
    %c16_i32_147 = arith.constant 16 : i32
    %278 = tpu.dynamic_rotate %241 by %c16_i32_147 dim 1 : vector<8x512xf32>, i32 -> vector<8x512xf32>
    %c1_148 = arith.constant 1 : index
    %c0_149 = arith.constant 0 : index
    %279 = vector.load %arg5[%c1_148, %c0_149] : memref<9x512xf32, #tpu.memory_space<vmem>>, vector<1x512xf32>
    %280 = vector.broadcast %279 : vector<1x512xf32> to vector<8x512xf32>
    %281 = arith.mulf %278, %280 : vector<8x512xf32>
    %282 = tpu.concatenate %277, %281 in 0 : vector<8x512xf32>, vector<8x512xf32> -> vector<16x512xf32>
    %283 = arith.truncf %282 : vector<16x512xf32> to vector<16x512xbf16>
    %c0_150 = arith.constant 0 : index
    %c0_151 = arith.constant 0 : index
    %284 = vector.load %arg19[%c0_150, %c0_151] : memref<216x512xbf16, #tpu.memory_space<vmem>>, vector<16x512xbf16>
    tpu.vector_store %arg19[%c0_150, %c0_151], %283 {strides = array<i32>} : memref<216x512xbf16, #tpu.memory_space<vmem>>, vector<16x512xbf16>,
    %c15_i32_152 = arith.constant 15 : i32
    %285 = tpu.dynamic_rotate %241 by %c15_i32_152 dim 1 : vector<8x512xf32>, i32 -> vector<8x512xf32>
    %c2_153 = arith.constant 2 : index
    %c0_154 = arith.constant 0 : index
    %286 = vector.load %arg5[%c2_153, %c0_154] : memref<9x512xf32, #tpu.memory_space<vmem>>, vector<1x512xf32>
    %287 = vector.broadcast %286 : vector<1x512xf32> to vector<8x512xf32>
    %288 = arith.mulf %285, %287 : vector<8x512xf32>
    %c1_i32_155 = arith.constant 1 : i32
    %289 = tpu.dynamic_rotate %241 by %c1_i32_155 dim 1 : vector<8x512xf32>, i32 -> vector<8x512xf32>
    %c3_156 = arith.constant 3 : index
    %c0_157 = arith.constant 0 : index
    %290 = vector.load %arg5[%c3_156, %c0_157] : memref<9x512xf32, #tpu.memory_space<vmem>>, vector<1x512xf32>
    %291 = vector.broadcast %290 : vector<1x512xf32> to vector<8x512xf32>
    %292 = arith.mulf %289, %291 : vector<8x512xf32>
    %293 = tpu.concatenate %288, %292 in 0 : vector<8x512xf32>, vector<8x512xf32> -> vector<16x512xf32>
    %294 = arith.truncf %293 : vector<16x512xf32> to vector<16x512xbf16>
    %c16_158 = arith.constant 16 : index
    %c0_159 = arith.constant 0 : index
    %295 = vector.load %arg19[%c16_158, %c0_159] : memref<216x512xbf16, #tpu.memory_space<vmem>>, vector<16x512xbf16>
    tpu.vector_store %arg19[%c16_158, %c0_159], %294 {strides = array<i32>} : memref<216x512xbf16, #tpu.memory_space<vmem>>, vector<16x512xbf16>,
    %c511_i32_160 = arith.constant 511 : i32
    %296 = tpu.dynamic_rotate %241 by %c511_i32_160 dim 1 : vector<8x512xf32>, i32 -> vector<8x512xf32>
    %c5_161 = arith.constant 5 : index
    %c0_162 = arith.constant 0 : index
    %297 = vector.load %arg5[%c5_161, %c0_162] : memref<9x512xf32, #tpu.memory_space<vmem>>, vector<1x512xf32>
    %298 = vector.broadcast %297 : vector<1x512xf32> to vector<8x512xf32>
    %299 = arith.mulf %296, %298 : vector<8x512xf32>
    %300 = tpu.concatenate %241, %299 in 0 : vector<8x512xf32>, vector<8x512xf32> -> vector<16x512xf32>
    %301 = arith.truncf %300 : vector<16x512xf32> to vector<16x512xbf16>
    %c32_163 = arith.constant 32 : index
    %c0_164 = arith.constant 0 : index
    %302 = vector.load %arg19[%c32_163, %c0_164] : memref<216x512xbf16, #tpu.memory_space<vmem>>, vector<16x512xbf16>
    tpu.vector_store %arg19[%c32_163, %c0_164], %301 {strides = array<i32>} : memref<216x512xbf16, #tpu.memory_space<vmem>>, vector<16x512xbf16>,
    %c497_i32_165 = arith.constant 497 : i32
    %303 = tpu.dynamic_rotate %241 by %c497_i32_165 dim 1 : vector<8x512xf32>, i32 -> vector<8x512xf32>
    %c6_166 = arith.constant 6 : index
    %c0_167 = arith.constant 0 : index
    %304 = vector.load %arg5[%c6_166, %c0_167] : memref<9x512xf32, #tpu.memory_space<vmem>>, vector<1x512xf32>
    %305 = vector.broadcast %304 : vector<1x512xf32> to vector<8x512xf32>
    %306 = arith.mulf %303, %305 : vector<8x512xf32>
    %c496_i32_168 = arith.constant 496 : i32
    %307 = tpu.dynamic_rotate %241 by %c496_i32_168 dim 1 : vector<8x512xf32>, i32 -> vector<8x512xf32>
    %c7_169 = arith.constant 7 : index
    %c0_170 = arith.constant 0 : index
    %308 = vector.load %arg5[%c7_169, %c0_170] : memref<9x512xf32, #tpu.memory_space<vmem>>, vector<1x512xf32>
    %309 = vector.broadcast %308 : vector<1x512xf32> to vector<8x512xf32>
    %310 = arith.mulf %307, %309 : vector<8x512xf32>
    %311 = tpu.concatenate %306, %310 in 0 : vector<8x512xf32>, vector<8x512xf32> -> vector<16x512xf32>
    %312 = arith.truncf %311 : vector<16x512xf32> to vector<16x512xbf16>
    %c48_171 = arith.constant 48 : index
    %c0_172 = arith.constant 0 : index
    %313 = vector.load %arg19[%c48_171, %c0_172] : memref<216x512xbf16, #tpu.memory_space<vmem>>, vector<16x512xbf16>
    tpu.vector_store %arg19[%c48_171, %c0_172], %312 {strides = array<i32>} : memref<216x512xbf16, #tpu.memory_space<vmem>>, vector<16x512xbf16>,
    %c495_i32_173 = arith.constant 495 : i32
    %314 = tpu.dynamic_rotate %241 by %c495_i32_173 dim 1 : vector<8x512xf32>, i32 -> vector<8x512xf32>
    %c8_174 = arith.constant 8 : index
    %c0_175 = arith.constant 0 : index
    %315 = vector.load %arg5[%c8_174, %c0_175] : memref<9x512xf32, #tpu.memory_space<vmem>>, vector<1x512xf32>
    %316 = vector.broadcast %315 : vector<1x512xf32> to vector<8x512xf32>
    %317 = arith.mulf %314, %316 : vector<8x512xf32>
    %c17_i32_176 = arith.constant 17 : i32
    %318 = tpu.dynamic_rotate %273 by %c17_i32_176 dim 1 : vector<8x512xf32>, i32 -> vector<8x512xf32>
    %c0_177 = arith.constant 0 : index
    %c0_178 = arith.constant 0 : index
    %319 = vector.load %arg5[%c0_177, %c0_178] : memref<9x512xf32, #tpu.memory_space<vmem>>, vector<1x512xf32>
    %320 = vector.broadcast %319 : vector<1x512xf32> to vector<8x512xf32>
    %321 = arith.mulf %318, %320 : vector<8x512xf32>
    %322 = tpu.concatenate %317, %321 in 0 : vector<8x512xf32>, vector<8x512xf32> -> vector<16x512xf32>
    %323 = arith.truncf %322 : vector<16x512xf32> to vector<16x512xbf16>
    %c64_179 = arith.constant 64 : index
    %c0_180 = arith.constant 0 : index
    %324 = vector.load %arg19[%c64_179, %c0_180] : memref<216x512xbf16, #tpu.memory_space<vmem>>, vector<16x512xbf16>
    tpu.vector_store %arg19[%c64_179, %c0_180], %323 {strides = array<i32>} : memref<216x512xbf16, #tpu.memory_space<vmem>>, vector<16x512xbf16>,
    %c16_i32_181 = arith.constant 16 : i32
    %325 = tpu.dynamic_rotate %273 by %c16_i32_181 dim 1 : vector<8x512xf32>, i32 -> vector<8x512xf32>
    %c1_182 = arith.constant 1 : index
    %c0_183 = arith.constant 0 : index
    %326 = vector.load %arg5[%c1_182, %c0_183] : memref<9x512xf32, #tpu.memory_space<vmem>>, vector<1x512xf32>
    %327 = vector.broadcast %326 : vector<1x512xf32> to vector<8x512xf32>
    %328 = arith.mulf %325, %327 : vector<8x512xf32>
    %c15_i32_184 = arith.constant 15 : i32
    %329 = tpu.dynamic_rotate %273 by %c15_i32_184 dim 1 : vector<8x512xf32>, i32 -> vector<8x512xf32>
    %c2_185 = arith.constant 2 : index
    %c0_186 = arith.constant 0 : index
    %330 = vector.load %arg5[%c2_185, %c0_186] : memref<9x512xf32, #tpu.memory_space<vmem>>, vector<1x512xf32>
    %331 = vector.broadcast %330 : vector<1x512xf32> to vector<8x512xf32>
    %332 = arith.mulf %329, %331 : vector<8x512xf32>
    %333 = tpu.concatenate %328, %332 in 0 : vector<8x512xf32>, vector<8x512xf32> -> vector<16x512xf32>
    %334 = arith.truncf %333 : vector<16x512xf32> to vector<16x512xbf16>
    %c80 = arith.constant 80 : index
    %c0_187 = arith.constant 0 : index
    %335 = vector.load %arg19[%c80, %c0_187] : memref<216x512xbf16, #tpu.memory_space<vmem>>, vector<16x512xbf16>
    tpu.vector_store %arg19[%c80, %c0_187], %334 {strides = array<i32>} : memref<216x512xbf16, #tpu.memory_space<vmem>>, vector<16x512xbf16>,
    %c1_i32_188 = arith.constant 1 : i32
    %336 = tpu.dynamic_rotate %273 by %c1_i32_188 dim 1 : vector<8x512xf32>, i32 -> vector<8x512xf32>
    %c3_189 = arith.constant 3 : index
    %c0_190 = arith.constant 0 : index
    %337 = vector.load %arg5[%c3_189, %c0_190] : memref<9x512xf32, #tpu.memory_space<vmem>>, vector<1x512xf32>
    %338 = vector.broadcast %337 : vector<1x512xf32> to vector<8x512xf32>
    %339 = arith.mulf %336, %338 : vector<8x512xf32>
    %340 = tpu.concatenate %339, %273 in 0 : vector<8x512xf32>, vector<8x512xf32> -> vector<16x512xf32>
    %341 = arith.truncf %340 : vector<16x512xf32> to vector<16x512xbf16>
    %c96 = arith.constant 96 : index
    %c0_191 = arith.constant 0 : index
    %342 = vector.load %arg19[%c96, %c0_191] : memref<216x512xbf16, #tpu.memory_space<vmem>>, vector<16x512xbf16>
    tpu.vector_store %arg19[%c96, %c0_191], %341 {strides = array<i32>} : memref<216x512xbf16, #tpu.memory_space<vmem>>, vector<16x512xbf16>,
    %c511_i32_192 = arith.constant 511 : i32
    %343 = tpu.dynamic_rotate %273 by %c511_i32_192 dim 1 : vector<8x512xf32>, i32 -> vector<8x512xf32>
    %c5_193 = arith.constant 5 : index
    %c0_194 = arith.constant 0 : index
    %344 = vector.load %arg5[%c5_193, %c0_194] : memref<9x512xf32, #tpu.memory_space<vmem>>, vector<1x512xf32>
    %345 = vector.broadcast %344 : vector<1x512xf32> to vector<8x512xf32>
    %346 = arith.mulf %343, %345 : vector<8x512xf32>
    %c497_i32_195 = arith.constant 497 : i32
    %347 = tpu.dynamic_rotate %273 by %c497_i32_195 dim 1 : vector<8x512xf32>, i32 -> vector<8x512xf32>
    %c6_196 = arith.constant 6 : index
    %c0_197 = arith.constant 0 : index
    %348 = vector.load %arg5[%c6_196, %c0_197] : memref<9x512xf32, #tpu.memory_space<vmem>>, vector<1x512xf32>
    %349 = vector.broadcast %348 : vector<1x512xf32> to vector<8x512xf32>
    %350 = arith.mulf %347, %349 : vector<8x512xf32>
    %351 = tpu.concatenate %346, %350 in 0 : vector<8x512xf32>, vector<8x512xf32> -> vector<16x512xf32>
    %352 = arith.truncf %351 : vector<16x512xf32> to vector<16x512xbf16>
    %c112 = arith.constant 112 : index
    %c0_198 = arith.constant 0 : index
    %353 = vector.load %arg19[%c112, %c0_198] : memref<216x512xbf16, #tpu.memory_space<vmem>>, vector<16x512xbf16>
    tpu.vector_store %arg19[%c112, %c0_198], %352 {strides = array<i32>} : memref<216x512xbf16, #tpu.memory_space<vmem>>, vector<16x512xbf16>,
    %c496_i32_199 = arith.constant 496 : i32
    %354 = tpu.dynamic_rotate %273 by %c496_i32_199 dim 1 : vector<8x512xf32>, i32 -> vector<8x512xf32>
    %c7_200 = arith.constant 7 : index
    %c0_201 = arith.constant 0 : index
    %355 = vector.load %arg5[%c7_200, %c0_201] : memref<9x512xf32, #tpu.memory_space<vmem>>, vector<1x512xf32>
    %356 = vector.broadcast %355 : vector<1x512xf32> to vector<8x512xf32>
    %357 = arith.mulf %354, %356 : vector<8x512xf32>
    %c495_i32_202 = arith.constant 495 : i32
    %358 = tpu.dynamic_rotate %273 by %c495_i32_202 dim 1 : vector<8x512xf32>, i32 -> vector<8x512xf32>
    %c8_203 = arith.constant 8 : index
    %c0_204 = arith.constant 0 : index
    %359 = vector.load %arg5[%c8_203, %c0_204] : memref<9x512xf32, #tpu.memory_space<vmem>>, vector<1x512xf32>
    %360 = vector.broadcast %359 : vector<1x512xf32> to vector<8x512xf32>
    %361 = arith.mulf %358, %360 : vector<8x512xf32>
    %362 = tpu.concatenate %357, %361 in 0 : vector<8x512xf32>, vector<8x512xf32> -> vector<16x512xf32>
    %363 = arith.truncf %362 : vector<16x512xf32> to vector<16x512xbf16>
    %c128 = arith.constant 128 : index
    %c0_205 = arith.constant 0 : index
    %364 = vector.load %arg19[%c128, %c0_205] : memref<216x512xbf16, #tpu.memory_space<vmem>>, vector<16x512xbf16>
    tpu.vector_store %arg19[%c128, %c0_205], %363 {strides = array<i32>} : memref<216x512xbf16, #tpu.memory_space<vmem>>, vector<16x512xbf16>,
    %c0_206 = arith.constant 0 : index
    %c0_207 = arith.constant 0 : index
    %365 = vector.load %arg9[%c0_206, %c0_207] : memref<8x144xbf16, #tpu.memory_space<vmem>>, vector<8x144xbf16>
    %c0_208 = arith.constant 0 : index
    %c0_209 = arith.constant 0 : index
    %366 = vector.load %arg19[%c0_208, %c0_209] : memref<216x512xbf16, #tpu.memory_space<vmem>>, vector<144x512xbf16>
    %cst_210 = arith.constant dense<0.000000e+00> : vector<8x512xf32>
    %367 = tpu.matmul %365, %366, %cst_210 {dimension_numbers = #tpu.dot_dimension_numbers<[1], [0], [0], [1], [0, 0, 1, 1], [], []>} : vector<8x144xbf16>, vector<144x512xbf16>, vector<8x512xf32> -> vector<8x512xf32>
    %c0_211 = arith.constant 0 : index
    %c3_212 = arith.constant 3 : index
    %368 = vector.load %arg4[%c0_211, %c3_212] : memref<8x9xf32, #tpu.memory_space<vmem>>, vector<8x1xf32>
    %369 = vector.broadcast %368 : vector<8x1xf32> to vector<8x512xf32>
    %370 = arith.addf %367, %369 : vector<8x512xf32>
    %c3_213 = arith.constant 3 : index
    %c0_214 = arith.constant 0 : index
    %c0_215 = arith.constant 0 : index
    %371 = vector.load %arg18[%c3_213, %c0_214, %c0_215] : memref<7x8x512xf32, #tpu.memory_space<vmem>>, vector<1x8x512xf32>
    %372 = vector.shape_cast %371 : vector<1x8x512xf32> to vector<8x512xf32>
    %373 = vector.shape_cast %370 : vector<8x512xf32> to vector<1x8x512xf32>
    tpu.vector_store %arg18[%c3_213, %c0_214, %c0_215], %373 {strides = array<i32>} : memref<7x8x512xf32, #tpu.memory_space<vmem>>, vector<1x8x512xf32>,
    %c3_216 = arith.constant 3 : index
    %c0_217 = arith.constant 0 : index
    %c0_218 = arith.constant 0 : index
    %374 = vector.load %arg18[%c3_216, %c0_217, %c0_218] : memref<7x8x512xf32, #tpu.memory_space<vmem>>, vector<1x8x512xf32>
    %375 = vector.shape_cast %374 : vector<1x8x512xf32> to vector<8x512xf32>
    %c0_219 = arith.constant 0 : index
    %c4 = arith.constant 4 : index
    %376 = vector.load %arg1[%c0_219, %c4] : memref<24x8xf32, #tpu.memory_space<vmem>>, vector<8x1xf32>
    %c0_220 = arith.constant 0 : index
    %c4_221 = arith.constant 4 : index
    %377 = vector.load %arg2[%c0_220, %c4_221] : memref<24x8xf32, #tpu.memory_space<vmem>>, vector<8x1xf32>
    %c4_222 = arith.constant 4 : index
    %378 = memref.load %arg3[%c4_222] : memref<8xf32, #tpu.memory_space<smem>>
    %cst_223 = arith.constant dense<0.000000e+00> : vector<8xf32>
    %379 = vector.multi_reduction <add>, %375, %cst_223 [1] : vector<8x512xf32> to vector<8xf32>
    %380 = vector.shape_cast %379 : vector<8xf32> to vector<8x1xf32>
    %cst_224 = arith.constant 5.120000e+02 : f32
    %381 = vector.broadcast %cst_224 : f32 to vector<8x1xf32>
    %382 = arith.divf %380, %381 : vector<8x1xf32>
    %383 = vector.broadcast %382 : vector<8x1xf32> to vector<8x512xf32>
    %384 = arith.subf %375, %383 : vector<8x512xf32>
    %385 = arith.mulf %384, %384 : vector<8x512xf32>
    %cst_225 = arith.constant dense<0.000000e+00> : vector<8xf32>
    %386 = vector.multi_reduction <add>, %385, %cst_225 [1] : vector<8x512xf32> to vector<8xf32>
    %387 = vector.shape_cast %386 : vector<8xf32> to vector<8x1xf32>
    %cst_226 = arith.constant 5.120000e+02 : f32
    %388 = vector.broadcast %cst_226 : f32 to vector<8x1xf32>
    %389 = arith.divf %387, %388 : vector<8x1xf32>
    %390 = vector.broadcast %382 : vector<8x1xf32> to vector<8x512xf32>
    %391 = arith.subf %375, %390 : vector<8x512xf32>
    %cst_227 = arith.constant 9.99999974E-6 : f32
    %392 = vector.broadcast %cst_227 : f32 to vector<8x1xf32>
    %393 = arith.addf %389, %392 : vector<8x1xf32>
    %394 = math.rsqrt %393 : vector<8x1xf32>
    %395 = vector.broadcast %394 : vector<8x1xf32> to vector<8x512xf32>
    %396 = arith.mulf %391, %395 : vector<8x512xf32>
    %397 = vector.broadcast %376 : vector<8x1xf32> to vector<8x512xf32>
    %398 = arith.mulf %396, %397 : vector<8x512xf32>
    %399 = vector.broadcast %377 : vector<8x1xf32> to vector<8x512xf32>
    %400 = arith.addf %398, %399 : vector<8x512xf32>
    %cst_228 = arith.constant 0.000000e+00 : f32
    %401 = vector.broadcast %cst_228 : f32 to vector<8x512xf32>
    %402 = arith.cmpf oge, %400, %401 : vector<8x512xf32>
    %403 = vector.broadcast %378 : f32 to vector<8x512xf32>
    %404 = arith.mulf %403, %400 : vector<8x512xf32>
    %405 = arith.select %402, %400, %404 : vector<8x512xi1>, vector<8x512xf32>
    %c2_229 = arith.constant 2 : index
    %c0_230 = arith.constant 0 : index
    %c0_231 = arith.constant 0 : index
    %406 = vector.load %arg18[%c2_229, %c0_230, %c0_231] : memref<7x8x512xf32, #tpu.memory_space<vmem>>, vector<1x8x512xf32>
    %407 = vector.shape_cast %406 : vector<1x8x512xf32> to vector<8x512xf32>
    %c8_232 = arith.constant 8 : index
    %c4_233 = arith.constant 4 : index
    %408 = vector.load %arg1[%c8_232, %c4_233] : memref<24x8xf32, #tpu.memory_space<vmem>>, vector<8x1xf32>
    %c8_234 = arith.constant 8 : index
    %c4_235 = arith.constant 4 : index
    %409 = vector.load %arg2[%c8_234, %c4_235] : memref<24x8xf32, #tpu.memory_space<vmem>>, vector<8x1xf32>
    %c4_236 = arith.constant 4 : index
    %410 = memref.load %arg3[%c4_236] : memref<8xf32, #tpu.memory_space<smem>>
    %cst_237 = arith.constant dense<0.000000e+00> : vector<8xf32>
    %411 = vector.multi_reduction <add>, %407, %cst_237 [1] : vector<8x512xf32> to vector<8xf32>
    %412 = vector.shape_cast %411 : vector<8xf32> to vector<8x1xf32>
    %cst_238 = arith.constant 5.120000e+02 : f32
    %413 = vector.broadcast %cst_238 : f32 to vector<8x1xf32>
    %414 = arith.divf %412, %413 : vector<8x1xf32>
    %415 = vector.broadcast %414 : vector<8x1xf32> to vector<8x512xf32>
    %416 = arith.subf %407, %415 : vector<8x512xf32>
    %417 = arith.mulf %416, %416 : vector<8x512xf32>
    %cst_239 = arith.constant dense<0.000000e+00> : vector<8xf32>
    %418 = vector.multi_reduction <add>, %417, %cst_239 [1] : vector<8x512xf32> to vector<8xf32>
    %419 = vector.shape_cast %418 : vector<8xf32> to vector<8x1xf32>
    %cst_240 = arith.constant 5.120000e+02 : f32
    %420 = vector.broadcast %cst_240 : f32 to vector<8x1xf32>
    %421 = arith.divf %419, %420 : vector<8x1xf32>
    %422 = vector.broadcast %414 : vector<8x1xf32> to vector<8x512xf32>
    %423 = arith.subf %407, %422 : vector<8x512xf32>
    %cst_241 = arith.constant 9.99999974E-6 : f32
    %424 = vector.broadcast %cst_241 : f32 to vector<8x1xf32>
    %425 = arith.addf %421, %424 : vector<8x1xf32>
    %426 = math.rsqrt %425 : vector<8x1xf32>
    %427 = vector.broadcast %426 : vector<8x1xf32> to vector<8x512xf32>
    %428 = arith.mulf %423, %427 : vector<8x512xf32>
    %429 = vector.broadcast %408 : vector<8x1xf32> to vector<8x512xf32>
    %430 = arith.mulf %428, %429 : vector<8x512xf32>
    %431 = vector.broadcast %409 : vector<8x1xf32> to vector<8x512xf32>
    %432 = arith.addf %430, %431 : vector<8x512xf32>
    %cst_242 = arith.constant 0.000000e+00 : f32
    %433 = vector.broadcast %cst_242 : f32 to vector<8x512xf32>
    %434 = arith.cmpf oge, %432, %433 : vector<8x512xf32>
    %435 = vector.broadcast %410 : f32 to vector<8x512xf32>
    %436 = arith.mulf %435, %432 : vector<8x512xf32>
    %437 = arith.select %434, %432, %436 : vector<8x512xi1>, vector<8x512xf32>
    %c17_i32_243 = arith.constant 17 : i32
    %438 = tpu.dynamic_rotate %405 by %c17_i32_243 dim 1 : vector<8x512xf32>, i32 -> vector<8x512xf32>
    %c0_244 = arith.constant 0 : index
    %c0_245 = arith.constant 0 : index
    %439 = vector.load %arg5[%c0_244, %c0_245] : memref<9x512xf32, #tpu.memory_space<vmem>>, vector<1x512xf32>
    %440 = vector.broadcast %439 : vector<1x512xf32> to vector<8x512xf32>
    %441 = arith.mulf %438, %440 : vector<8x512xf32>
    %c16_i32_246 = arith.constant 16 : i32
    %442 = tpu.dynamic_rotate %405 by %c16_i32_246 dim 1 : vector<8x512xf32>, i32 -> vector<8x512xf32>
    %c1_247 = arith.constant 1 : index
    %c0_248 = arith.constant 0 : index
    %443 = vector.load %arg5[%c1_247, %c0_248] : memref<9x512xf32, #tpu.memory_space<vmem>>, vector<1x512xf32>
    %444 = vector.broadcast %443 : vector<1x512xf32> to vector<8x512xf32>
    %445 = arith.mulf %442, %444 : vector<8x512xf32>
    %446 = tpu.concatenate %441, %445 in 0 : vector<8x512xf32>, vector<8x512xf32> -> vector<16x512xf32>
    %447 = arith.truncf %446 : vector<16x512xf32> to vector<16x512xbf16>
    %c0_249 = arith.constant 0 : index
    %c0_250 = arith.constant 0 : index
    %448 = vector.load %arg19[%c0_249, %c0_250] : memref<216x512xbf16, #tpu.memory_space<vmem>>, vector<16x512xbf16>
    tpu.vector_store %arg19[%c0_249, %c0_250], %447 {strides = array<i32>} : memref<216x512xbf16, #tpu.memory_space<vmem>>, vector<16x512xbf16>,
    %c15_i32_251 = arith.constant 15 : i32
    %449 = tpu.dynamic_rotate %405 by %c15_i32_251 dim 1 : vector<8x512xf32>, i32 -> vector<8x512xf32>
    %c2_252 = arith.constant 2 : index
    %c0_253 = arith.constant 0 : index
    %450 = vector.load %arg5[%c2_252, %c0_253] : memref<9x512xf32, #tpu.memory_space<vmem>>, vector<1x512xf32>
    %451 = vector.broadcast %450 : vector<1x512xf32> to vector<8x512xf32>
    %452 = arith.mulf %449, %451 : vector<8x512xf32>
    %c1_i32_254 = arith.constant 1 : i32
    %453 = tpu.dynamic_rotate %405 by %c1_i32_254 dim 1 : vector<8x512xf32>, i32 -> vector<8x512xf32>
    %c3_255 = arith.constant 3 : index
    %c0_256 = arith.constant 0 : index
    %454 = vector.load %arg5[%c3_255, %c0_256] : memref<9x512xf32, #tpu.memory_space<vmem>>, vector<1x512xf32>
    %455 = vector.broadcast %454 : vector<1x512xf32> to vector<8x512xf32>
    %456 = arith.mulf %453, %455 : vector<8x512xf32>
    %457 = tpu.concatenate %452, %456 in 0 : vector<8x512xf32>, vector<8x512xf32> -> vector<16x512xf32>
    %458 = arith.truncf %457 : vector<16x512xf32> to vector<16x512xbf16>
    %c16_257 = arith.constant 16 : index
    %c0_258 = arith.constant 0 : index
    %459 = vector.load %arg19[%c16_257, %c0_258] : memref<216x512xbf16, #tpu.memory_space<vmem>>, vector<16x512xbf16>
    tpu.vector_store %arg19[%c16_257, %c0_258], %458 {strides = array<i32>} : memref<216x512xbf16, #tpu.memory_space<vmem>>, vector<16x512xbf16>,
    %c511_i32_259 = arith.constant 511 : i32
    %460 = tpu.dynamic_rotate %405 by %c511_i32_259 dim 1 : vector<8x512xf32>, i32 -> vector<8x512xf32>
    %c5_260 = arith.constant 5 : index
    %c0_261 = arith.constant 0 : index
    %461 = vector.load %arg5[%c5_260, %c0_261] : memref<9x512xf32, #tpu.memory_space<vmem>>, vector<1x512xf32>
    %462 = vector.broadcast %461 : vector<1x512xf32> to vector<8x512xf32>
    %463 = arith.mulf %460, %462 : vector<8x512xf32>
    %464 = tpu.concatenate %405, %463 in 0 : vector<8x512xf32>, vector<8x512xf32> -> vector<16x512xf32>
    %465 = arith.truncf %464 : vector<16x512xf32> to vector<16x512xbf16>
    %c32_262 = arith.constant 32 : index
    %c0_263 = arith.constant 0 : index
    %466 = vector.load %arg19[%c32_262, %c0_263] : memref<216x512xbf16, #tpu.memory_space<vmem>>, vector<16x512xbf16>
    tpu.vector_store %arg19[%c32_262, %c0_263], %465 {strides = array<i32>} : memref<216x512xbf16, #tpu.memory_space<vmem>>, vector<16x512xbf16>,
    %c497_i32_264 = arith.constant 497 : i32
    %467 = tpu.dynamic_rotate %405 by %c497_i32_264 dim 1 : vector<8x512xf32>, i32 -> vector<8x512xf32>
    %c6_265 = arith.constant 6 : index
    %c0_266 = arith.constant 0 : index
    %468 = vector.load %arg5[%c6_265, %c0_266] : memref<9x512xf32, #tpu.memory_space<vmem>>, vector<1x512xf32>
    %469 = vector.broadcast %468 : vector<1x512xf32> to vector<8x512xf32>
    %470 = arith.mulf %467, %469 : vector<8x512xf32>
    %c496_i32_267 = arith.constant 496 : i32
    %471 = tpu.dynamic_rotate %405 by %c496_i32_267 dim 1 : vector<8x512xf32>, i32 -> vector<8x512xf32>
    %c7_268 = arith.constant 7 : index
    %c0_269 = arith.constant 0 : index
    %472 = vector.load %arg5[%c7_268, %c0_269] : memref<9x512xf32, #tpu.memory_space<vmem>>, vector<1x512xf32>
    %473 = vector.broadcast %472 : vector<1x512xf32> to vector<8x512xf32>
    %474 = arith.mulf %471, %473 : vector<8x512xf32>
    %475 = tpu.concatenate %470, %474 in 0 : vector<8x512xf32>, vector<8x512xf32> -> vector<16x512xf32>
    %476 = arith.truncf %475 : vector<16x512xf32> to vector<16x512xbf16>
    %c48_270 = arith.constant 48 : index
    %c0_271 = arith.constant 0 : index
    %477 = vector.load %arg19[%c48_270, %c0_271] : memref<216x512xbf16, #tpu.memory_space<vmem>>, vector<16x512xbf16>
    tpu.vector_store %arg19[%c48_270, %c0_271], %476 {strides = array<i32>} : memref<216x512xbf16, #tpu.memory_space<vmem>>, vector<16x512xbf16>,
    %c495_i32_272 = arith.constant 495 : i32
    %478 = tpu.dynamic_rotate %405 by %c495_i32_272 dim 1 : vector<8x512xf32>, i32 -> vector<8x512xf32>
    %c8_273 = arith.constant 8 : index
    %c0_274 = arith.constant 0 : index
    %479 = vector.load %arg5[%c8_273, %c0_274] : memref<9x512xf32, #tpu.memory_space<vmem>>, vector<1x512xf32>
    %480 = vector.broadcast %479 : vector<1x512xf32> to vector<8x512xf32>
    %481 = arith.mulf %478, %480 : vector<8x512xf32>
    %c17_i32_275 = arith.constant 17 : i32
    %482 = tpu.dynamic_rotate %437 by %c17_i32_275 dim 1 : vector<8x512xf32>, i32 -> vector<8x512xf32>
    %c0_276 = arith.constant 0 : index
    %c0_277 = arith.constant 0 : index
    %483 = vector.load %arg5[%c0_276, %c0_277] : memref<9x512xf32, #tpu.memory_space<vmem>>, vector<1x512xf32>
    %484 = vector.broadcast %483 : vector<1x512xf32> to vector<8x512xf32>
    %485 = arith.mulf %482, %484 : vector<8x512xf32>
    %486 = tpu.concatenate %481, %485 in 0 : vector<8x512xf32>, vector<8x512xf32> -> vector<16x512xf32>
    %487 = arith.truncf %486 : vector<16x512xf32> to vector<16x512xbf16>
    %c64_278 = arith.constant 64 : index
    %c0_279 = arith.constant 0 : index
    %488 = vector.load %arg19[%c64_278, %c0_279] : memref<216x512xbf16, #tpu.memory_space<vmem>>, vector<16x512xbf16>
    tpu.vector_store %arg19[%c64_278, %c0_279], %487 {strides = array<i32>} : memref<216x512xbf16, #tpu.memory_space<vmem>>, vector<16x512xbf16>,
    %c16_i32_280 = arith.constant 16 : i32
    %489 = tpu.dynamic_rotate %437 by %c16_i32_280 dim 1 : vector<8x512xf32>, i32 -> vector<8x512xf32>
    %c1_281 = arith.constant 1 : index
    %c0_282 = arith.constant 0 : index
    %490 = vector.load %arg5[%c1_281, %c0_282] : memref<9x512xf32, #tpu.memory_space<vmem>>, vector<1x512xf32>
    %491 = vector.broadcast %490 : vector<1x512xf32> to vector<8x512xf32>
    %492 = arith.mulf %489, %491 : vector<8x512xf32>
    %c15_i32_283 = arith.constant 15 : i32
    %493 = tpu.dynamic_rotate %437 by %c15_i32_283 dim 1 : vector<8x512xf32>, i32 -> vector<8x512xf32>
    %c2_284 = arith.constant 2 : index
    %c0_285 = arith.constant 0 : index
    %494 = vector.load %arg5[%c2_284, %c0_285] : memref<9x512xf32, #tpu.memory_space<vmem>>, vector<1x512xf32>
    %495 = vector.broadcast %494 : vector<1x512xf32> to vector<8x512xf32>
    %496 = arith.mulf %493, %495 : vector<8x512xf32>
    %497 = tpu.concatenate %492, %496 in 0 : vector<8x512xf32>, vector<8x512xf32> -> vector<16x512xf32>
    %498 = arith.truncf %497 : vector<16x512xf32> to vector<16x512xbf16>
    %c80_286 = arith.constant 80 : index
    %c0_287 = arith.constant 0 : index
    %499 = vector.load %arg19[%c80_286, %c0_287] : memref<216x512xbf16, #tpu.memory_space<vmem>>, vector<16x512xbf16>
    tpu.vector_store %arg19[%c80_286, %c0_287], %498 {strides = array<i32>} : memref<216x512xbf16, #tpu.memory_space<vmem>>, vector<16x512xbf16>,
    %c1_i32_288 = arith.constant 1 : i32
    %500 = tpu.dynamic_rotate %437 by %c1_i32_288 dim 1 : vector<8x512xf32>, i32 -> vector<8x512xf32>
    %c3_289 = arith.constant 3 : index
    %c0_290 = arith.constant 0 : index
    %501 = vector.load %arg5[%c3_289, %c0_290] : memref<9x512xf32, #tpu.memory_space<vmem>>, vector<1x512xf32>
    %502 = vector.broadcast %501 : vector<1x512xf32> to vector<8x512xf32>
    %503 = arith.mulf %500, %502 : vector<8x512xf32>
    %504 = tpu.concatenate %503, %437 in 0 : vector<8x512xf32>, vector<8x512xf32> -> vector<16x512xf32>
    %505 = arith.truncf %504 : vector<16x512xf32> to vector<16x512xbf16>
    %c96_291 = arith.constant 96 : index
    %c0_292 = arith.constant 0 : index
    %506 = vector.load %arg19[%c96_291, %c0_292] : memref<216x512xbf16, #tpu.memory_space<vmem>>, vector<16x512xbf16>
    tpu.vector_store %arg19[%c96_291, %c0_292], %505 {strides = array<i32>} : memref<216x512xbf16, #tpu.memory_space<vmem>>, vector<16x512xbf16>,
    %c511_i32_293 = arith.constant 511 : i32
    %507 = tpu.dynamic_rotate %437 by %c511_i32_293 dim 1 : vector<8x512xf32>, i32 -> vector<8x512xf32>
    %c5_294 = arith.constant 5 : index
    %c0_295 = arith.constant 0 : index
    %508 = vector.load %arg5[%c5_294, %c0_295] : memref<9x512xf32, #tpu.memory_space<vmem>>, vector<1x512xf32>
    %509 = vector.broadcast %508 : vector<1x512xf32> to vector<8x512xf32>
    %510 = arith.mulf %507, %509 : vector<8x512xf32>
    %c497_i32_296 = arith.constant 497 : i32
    %511 = tpu.dynamic_rotate %437 by %c497_i32_296 dim 1 : vector<8x512xf32>, i32 -> vector<8x512xf32>
    %c6_297 = arith.constant 6 : index
    %c0_298 = arith.constant 0 : index
    %512 = vector.load %arg5[%c6_297, %c0_298] : memref<9x512xf32, #tpu.memory_space<vmem>>, vector<1x512xf32>
    %513 = vector.broadcast %512 : vector<1x512xf32> to vector<8x512xf32>
    %514 = arith.mulf %511, %513 : vector<8x512xf32>
    %515 = tpu.concatenate %510, %514 in 0 : vector<8x512xf32>, vector<8x512xf32> -> vector<16x512xf32>
    %516 = arith.truncf %515 : vector<16x512xf32> to vector<16x512xbf16>
    %c112_299 = arith.constant 112 : index
    %c0_300 = arith.constant 0 : index
    %517 = vector.load %arg19[%c112_299, %c0_300] : memref<216x512xbf16, #tpu.memory_space<vmem>>, vector<16x512xbf16>
    tpu.vector_store %arg19[%c112_299, %c0_300], %516 {strides = array<i32>} : memref<216x512xbf16, #tpu.memory_space<vmem>>, vector<16x512xbf16>,
    %c496_i32_301 = arith.constant 496 : i32
    %518 = tpu.dynamic_rotate %437 by %c496_i32_301 dim 1 : vector<8x512xf32>, i32 -> vector<8x512xf32>
    %c7_302 = arith.constant 7 : index
    %c0_303 = arith.constant 0 : index
    %519 = vector.load %arg5[%c7_302, %c0_303] : memref<9x512xf32, #tpu.memory_space<vmem>>, vector<1x512xf32>
    %520 = vector.broadcast %519 : vector<1x512xf32> to vector<8x512xf32>
    %521 = arith.mulf %518, %520 : vector<8x512xf32>
    %c495_i32_304 = arith.constant 495 : i32
    %522 = tpu.dynamic_rotate %437 by %c495_i32_304 dim 1 : vector<8x512xf32>, i32 -> vector<8x512xf32>
    %c8_305 = arith.constant 8 : index
    %c0_306 = arith.constant 0 : index
    %523 = vector.load %arg5[%c8_305, %c0_306] : memref<9x512xf32, #tpu.memory_space<vmem>>, vector<1x512xf32>
    %524 = vector.broadcast %523 : vector<1x512xf32> to vector<8x512xf32>
    %525 = arith.mulf %522, %524 : vector<8x512xf32>
    %526 = tpu.concatenate %521, %525 in 0 : vector<8x512xf32>, vector<8x512xf32> -> vector<16x512xf32>
    %527 = arith.truncf %526 : vector<16x512xf32> to vector<16x512xbf16>
    %c128_307 = arith.constant 128 : index
    %c0_308 = arith.constant 0 : index
    %528 = vector.load %arg19[%c128_307, %c0_308] : memref<216x512xbf16, #tpu.memory_space<vmem>>, vector<16x512xbf16>
    tpu.vector_store %arg19[%c128_307, %c0_308], %527 {strides = array<i32>} : memref<216x512xbf16, #tpu.memory_space<vmem>>, vector<16x512xbf16>,
    %c0_309 = arith.constant 0 : index
    %c0_310 = arith.constant 0 : index
    %529 = vector.load %arg10[%c0_309, %c0_310] : memref<8x144xbf16, #tpu.memory_space<vmem>>, vector<8x144xbf16>
    %c0_311 = arith.constant 0 : index
    %c0_312 = arith.constant 0 : index
    %530 = vector.load %arg19[%c0_311, %c0_312] : memref<216x512xbf16, #tpu.memory_space<vmem>>, vector<144x512xbf16>
    %cst_313 = arith.constant dense<0.000000e+00> : vector<8x512xf32>
    %531 = tpu.matmul %529, %530, %cst_313 {dimension_numbers = #tpu.dot_dimension_numbers<[1], [0], [0], [1], [0, 0, 1, 1], [], []>} : vector<8x144xbf16>, vector<144x512xbf16>, vector<8x512xf32> -> vector<8x512xf32>
    %c0_314 = arith.constant 0 : index
    %c4_315 = arith.constant 4 : index
    %532 = vector.load %arg4[%c0_314, %c4_315] : memref<8x9xf32, #tpu.memory_space<vmem>>, vector<8x1xf32>
    %533 = vector.broadcast %532 : vector<8x1xf32> to vector<8x512xf32>
    %534 = arith.addf %531, %533 : vector<8x512xf32>
    %c4_316 = arith.constant 4 : index
    %c0_317 = arith.constant 0 : index
    %c0_318 = arith.constant 0 : index
    %535 = vector.load %arg18[%c4_316, %c0_317, %c0_318] : memref<7x8x512xf32, #tpu.memory_space<vmem>>, vector<1x8x512xf32>
    %536 = vector.shape_cast %535 : vector<1x8x512xf32> to vector<8x512xf32>
    %537 = vector.shape_cast %534 : vector<8x512xf32> to vector<1x8x512xf32>
    tpu.vector_store %arg18[%c4_316, %c0_317, %c0_318], %537 {strides = array<i32>} : memref<7x8x512xf32, #tpu.memory_space<vmem>>, vector<1x8x512xf32>,
    %c4_319 = arith.constant 4 : index
    %c0_320 = arith.constant 0 : index
    %c0_321 = arith.constant 0 : index
    %538 = vector.load %arg18[%c4_319, %c0_320, %c0_321] : memref<7x8x512xf32, #tpu.memory_space<vmem>>, vector<1x8x512xf32>
    %539 = vector.shape_cast %538 : vector<1x8x512xf32> to vector<8x512xf32>
    %c0_322 = arith.constant 0 : index
    %c5_323 = arith.constant 5 : index
    %540 = vector.load %arg1[%c0_322, %c5_323] : memref<24x8xf32, #tpu.memory_space<vmem>>, vector<8x1xf32>
    %c0_324 = arith.constant 0 : index
    %c5_325 = arith.constant 5 : index
    %541 = vector.load %arg2[%c0_324, %c5_325] : memref<24x8xf32, #tpu.memory_space<vmem>>, vector<8x1xf32>
    %c5_326 = arith.constant 5 : index
    %542 = memref.load %arg3[%c5_326] : memref<8xf32, #tpu.memory_space<smem>>
    %cst_327 = arith.constant dense<0.000000e+00> : vector<8xf32>
    %543 = vector.multi_reduction <add>, %539, %cst_327 [1] : vector<8x512xf32> to vector<8xf32>
    %544 = vector.shape_cast %543 : vector<8xf32> to vector<8x1xf32>
    %cst_328 = arith.constant 5.120000e+02 : f32
    %545 = vector.broadcast %cst_328 : f32 to vector<8x1xf32>
    %546 = arith.divf %544, %545 : vector<8x1xf32>
    %547 = vector.broadcast %546 : vector<8x1xf32> to vector<8x512xf32>
    %548 = arith.subf %539, %547 : vector<8x512xf32>
    %549 = arith.mulf %548, %548 : vector<8x512xf32>
    %cst_329 = arith.constant dense<0.000000e+00> : vector<8xf32>
    %550 = vector.multi_reduction <add>, %549, %cst_329 [1] : vector<8x512xf32> to vector<8xf32>
    %551 = vector.shape_cast %550 : vector<8xf32> to vector<8x1xf32>
    %cst_330 = arith.constant 5.120000e+02 : f32
    %552 = vector.broadcast %cst_330 : f32 to vector<8x1xf32>
    %553 = arith.divf %551, %552 : vector<8x1xf32>
    %554 = vector.broadcast %546 : vector<8x1xf32> to vector<8x512xf32>
    %555 = arith.subf %539, %554 : vector<8x512xf32>
    %cst_331 = arith.constant 9.99999974E-6 : f32
    %556 = vector.broadcast %cst_331 : f32 to vector<8x1xf32>
    %557 = arith.addf %553, %556 : vector<8x1xf32>
    %558 = math.rsqrt %557 : vector<8x1xf32>
    %559 = vector.broadcast %558 : vector<8x1xf32> to vector<8x512xf32>
    %560 = arith.mulf %555, %559 : vector<8x512xf32>
    %561 = vector.broadcast %540 : vector<8x1xf32> to vector<8x512xf32>
    %562 = arith.mulf %560, %561 : vector<8x512xf32>
    %563 = vector.broadcast %541 : vector<8x1xf32> to vector<8x512xf32>
    %564 = arith.addf %562, %563 : vector<8x512xf32>
    %cst_332 = arith.constant 0.000000e+00 : f32
    %565 = vector.broadcast %cst_332 : f32 to vector<8x512xf32>
    %566 = arith.cmpf oge, %564, %565 : vector<8x512xf32>
    %567 = vector.broadcast %542 : f32 to vector<8x512xf32>
    %568 = arith.mulf %567, %564 : vector<8x512xf32>
    %569 = arith.select %566, %564, %568 : vector<8x512xi1>, vector<8x512xf32>
    %c3_333 = arith.constant 3 : index
    %c0_334 = arith.constant 0 : index
    %c0_335 = arith.constant 0 : index
    %570 = vector.load %arg18[%c3_333, %c0_334, %c0_335] : memref<7x8x512xf32, #tpu.memory_space<vmem>>, vector<1x8x512xf32>
    %571 = vector.shape_cast %570 : vector<1x8x512xf32> to vector<8x512xf32>
    %c8_336 = arith.constant 8 : index
    %c5_337 = arith.constant 5 : index
    %572 = vector.load %arg1[%c8_336, %c5_337] : memref<24x8xf32, #tpu.memory_space<vmem>>, vector<8x1xf32>
    %c8_338 = arith.constant 8 : index
    %c5_339 = arith.constant 5 : index
    %573 = vector.load %arg2[%c8_338, %c5_339] : memref<24x8xf32, #tpu.memory_space<vmem>>, vector<8x1xf32>
    %c5_340 = arith.constant 5 : index
    %574 = memref.load %arg3[%c5_340] : memref<8xf32, #tpu.memory_space<smem>>
    %cst_341 = arith.constant dense<0.000000e+00> : vector<8xf32>
    %575 = vector.multi_reduction <add>, %571, %cst_341 [1] : vector<8x512xf32> to vector<8xf32>
    %576 = vector.shape_cast %575 : vector<8xf32> to vector<8x1xf32>
    %cst_342 = arith.constant 5.120000e+02 : f32
    %577 = vector.broadcast %cst_342 : f32 to vector<8x1xf32>
    %578 = arith.divf %576, %577 : vector<8x1xf32>
    %579 = vector.broadcast %578 : vector<8x1xf32> to vector<8x512xf32>
    %580 = arith.subf %571, %579 : vector<8x512xf32>
    %581 = arith.mulf %580, %580 : vector<8x512xf32>
    %cst_343 = arith.constant dense<0.000000e+00> : vector<8xf32>
    %582 = vector.multi_reduction <add>, %581, %cst_343 [1] : vector<8x512xf32> to vector<8xf32>
    %583 = vector.shape_cast %582 : vector<8xf32> to vector<8x1xf32>
    %cst_344 = arith.constant 5.120000e+02 : f32
    %584 = vector.broadcast %cst_344 : f32 to vector<8x1xf32>
    %585 = arith.divf %583, %584 : vector<8x1xf32>
    %586 = vector.broadcast %578 : vector<8x1xf32> to vector<8x512xf32>
    %587 = arith.subf %571, %586 : vector<8x512xf32>
    %cst_345 = arith.constant 9.99999974E-6 : f32
    %588 = vector.broadcast %cst_345 : f32 to vector<8x1xf32>
    %589 = arith.addf %585, %588 : vector<8x1xf32>
    %590 = math.rsqrt %589 : vector<8x1xf32>
    %591 = vector.broadcast %590 : vector<8x1xf32> to vector<8x512xf32>
    %592 = arith.mulf %587, %591 : vector<8x512xf32>
    %593 = vector.broadcast %572 : vector<8x1xf32> to vector<8x512xf32>
    %594 = arith.mulf %592, %593 : vector<8x512xf32>
    %595 = vector.broadcast %573 : vector<8x1xf32> to vector<8x512xf32>
    %596 = arith.addf %594, %595 : vector<8x512xf32>
    %cst_346 = arith.constant 0.000000e+00 : f32
    %597 = vector.broadcast %cst_346 : f32 to vector<8x512xf32>
    %598 = arith.cmpf oge, %596, %597 : vector<8x512xf32>
    %599 = vector.broadcast %574 : f32 to vector<8x512xf32>
    %600 = arith.mulf %599, %596 : vector<8x512xf32>
    %601 = arith.select %598, %596, %600 : vector<8x512xi1>, vector<8x512xf32>
    %c1_347 = arith.constant 1 : index
    %c0_348 = arith.constant 0 : index
    %c0_349 = arith.constant 0 : index
    %602 = vector.load %arg18[%c1_347, %c0_348, %c0_349] : memref<7x8x512xf32, #tpu.memory_space<vmem>>, vector<1x8x512xf32>
    %603 = vector.shape_cast %602 : vector<1x8x512xf32> to vector<8x512xf32>
    %c16_350 = arith.constant 16 : index
    %c5_351 = arith.constant 5 : index
    %604 = vector.load %arg1[%c16_350, %c5_351] : memref<24x8xf32, #tpu.memory_space<vmem>>, vector<8x1xf32>
    %c16_352 = arith.constant 16 : index
    %c5_353 = arith.constant 5 : index
    %605 = vector.load %arg2[%c16_352, %c5_353] : memref<24x8xf32, #tpu.memory_space<vmem>>, vector<8x1xf32>
    %c5_354 = arith.constant 5 : index
    %606 = memref.load %arg3[%c5_354] : memref<8xf32, #tpu.memory_space<smem>>
    %cst_355 = arith.constant dense<0.000000e+00> : vector<8xf32>
    %607 = vector.multi_reduction <add>, %603, %cst_355 [1] : vector<8x512xf32> to vector<8xf32>
    %608 = vector.shape_cast %607 : vector<8xf32> to vector<8x1xf32>
    %cst_356 = arith.constant 5.120000e+02 : f32
    %609 = vector.broadcast %cst_356 : f32 to vector<8x1xf32>
    %610 = arith.divf %608, %609 : vector<8x1xf32>
    %611 = vector.broadcast %610 : vector<8x1xf32> to vector<8x512xf32>
    %612 = arith.subf %603, %611 : vector<8x512xf32>
    %613 = arith.mulf %612, %612 : vector<8x512xf32>
    %cst_357 = arith.constant dense<0.000000e+00> : vector<8xf32>
    %614 = vector.multi_reduction <add>, %613, %cst_357 [1] : vector<8x512xf32> to vector<8xf32>
    %615 = vector.shape_cast %614 : vector<8xf32> to vector<8x1xf32>
    %cst_358 = arith.constant 5.120000e+02 : f32
    %616 = vector.broadcast %cst_358 : f32 to vector<8x1xf32>
    %617 = arith.divf %615, %616 : vector<8x1xf32>
    %618 = vector.broadcast %610 : vector<8x1xf32> to vector<8x512xf32>
    %619 = arith.subf %603, %618 : vector<8x512xf32>
    %cst_359 = arith.constant 9.99999974E-6 : f32
    %620 = vector.broadcast %cst_359 : f32 to vector<8x1xf32>
    %621 = arith.addf %617, %620 : vector<8x1xf32>
    %622 = math.rsqrt %621 : vector<8x1xf32>
    %623 = vector.broadcast %622 : vector<8x1xf32> to vector<8x512xf32>
    %624 = arith.mulf %619, %623 : vector<8x512xf32>
    %625 = vector.broadcast %604 : vector<8x1xf32> to vector<8x512xf32>
    %626 = arith.mulf %624, %625 : vector<8x512xf32>
    %627 = vector.broadcast %605 : vector<8x1xf32> to vector<8x512xf32>
    %628 = arith.addf %626, %627 : vector<8x512xf32>
    %cst_360 = arith.constant 0.000000e+00 : f32
    %629 = vector.broadcast %cst_360 : f32 to vector<8x512xf32>
    %630 = arith.cmpf oge, %628, %629 : vector<8x512xf32>
    %631 = vector.broadcast %606 : f32 to vector<8x512xf32>
    %632 = arith.mulf %631, %628 : vector<8x512xf32>
    %633 = arith.select %630, %628, %632 : vector<8x512xi1>, vector<8x512xf32>
    %c17_i32_361 = arith.constant 17 : i32
    %634 = tpu.dynamic_rotate %569 by %c17_i32_361 dim 1 : vector<8x512xf32>, i32 -> vector<8x512xf32>
    %c0_362 = arith.constant 0 : index
    %c0_363 = arith.constant 0 : index
    %635 = vector.load %arg5[%c0_362, %c0_363] : memref<9x512xf32, #tpu.memory_space<vmem>>, vector<1x512xf32>
    %636 = vector.broadcast %635 : vector<1x512xf32> to vector<8x512xf32>
    %637 = arith.mulf %634, %636 : vector<8x512xf32>
    %c16_i32_364 = arith.constant 16 : i32
    %638 = tpu.dynamic_rotate %569 by %c16_i32_364 dim 1 : vector<8x512xf32>, i32 -> vector<8x512xf32>
    %c1_365 = arith.constant 1 : index
    %c0_366 = arith.constant 0 : index
    %639 = vector.load %arg5[%c1_365, %c0_366] : memref<9x512xf32, #tpu.memory_space<vmem>>, vector<1x512xf32>
    %640 = vector.broadcast %639 : vector<1x512xf32> to vector<8x512xf32>
    %641 = arith.mulf %638, %640 : vector<8x512xf32>
    %642 = tpu.concatenate %637, %641 in 0 : vector<8x512xf32>, vector<8x512xf32> -> vector<16x512xf32>
    %643 = arith.truncf %642 : vector<16x512xf32> to vector<16x512xbf16>
    %c0_367 = arith.constant 0 : index
    %c0_368 = arith.constant 0 : index
    %644 = vector.load %arg19[%c0_367, %c0_368] : memref<216x512xbf16, #tpu.memory_space<vmem>>, vector<16x512xbf16>
    tpu.vector_store %arg19[%c0_367, %c0_368], %643 {strides = array<i32>} : memref<216x512xbf16, #tpu.memory_space<vmem>>, vector<16x512xbf16>,
    %c15_i32_369 = arith.constant 15 : i32
    %645 = tpu.dynamic_rotate %569 by %c15_i32_369 dim 1 : vector<8x512xf32>, i32 -> vector<8x512xf32>
    %c2_370 = arith.constant 2 : index
    %c0_371 = arith.constant 0 : index
    %646 = vector.load %arg5[%c2_370, %c0_371] : memref<9x512xf32, #tpu.memory_space<vmem>>, vector<1x512xf32>
    %647 = vector.broadcast %646 : vector<1x512xf32> to vector<8x512xf32>
    %648 = arith.mulf %645, %647 : vector<8x512xf32>
    %c1_i32_372 = arith.constant 1 : i32
    %649 = tpu.dynamic_rotate %569 by %c1_i32_372 dim 1 : vector<8x512xf32>, i32 -> vector<8x512xf32>
    %c3_373 = arith.constant 3 : index
    %c0_374 = arith.constant 0 : index
    %650 = vector.load %arg5[%c3_373, %c0_374] : memref<9x512xf32, #tpu.memory_space<vmem>>, vector<1x512xf32>
    %651 = vector.broadcast %650 : vector<1x512xf32> to vector<8x512xf32>
    %652 = arith.mulf %649, %651 : vector<8x512xf32>
    %653 = tpu.concatenate %648, %652 in 0 : vector<8x512xf32>, vector<8x512xf32> -> vector<16x512xf32>
    %654 = arith.truncf %653 : vector<16x512xf32> to vector<16x512xbf16>
    %c16_375 = arith.constant 16 : index
    %c0_376 = arith.constant 0 : index
    %655 = vector.load %arg19[%c16_375, %c0_376] : memref<216x512xbf16, #tpu.memory_space<vmem>>, vector<16x512xbf16>
    tpu.vector_store %arg19[%c16_375, %c0_376], %654 {strides = array<i32>} : memref<216x512xbf16, #tpu.memory_space<vmem>>, vector<16x512xbf16>,
    %c511_i32_377 = arith.constant 511 : i32
    %656 = tpu.dynamic_rotate %569 by %c511_i32_377 dim 1 : vector<8x512xf32>, i32 -> vector<8x512xf32>
    %c5_378 = arith.constant 5 : index
    %c0_379 = arith.constant 0 : index
    %657 = vector.load %arg5[%c5_378, %c0_379] : memref<9x512xf32, #tpu.memory_space<vmem>>, vector<1x512xf32>
    %658 = vector.broadcast %657 : vector<1x512xf32> to vector<8x512xf32>
    %659 = arith.mulf %656, %658 : vector<8x512xf32>
    %660 = tpu.concatenate %569, %659 in 0 : vector<8x512xf32>, vector<8x512xf32> -> vector<16x512xf32>
    %661 = arith.truncf %660 : vector<16x512xf32> to vector<16x512xbf16>
    %c32_380 = arith.constant 32 : index
    %c0_381 = arith.constant 0 : index
    %662 = vector.load %arg19[%c32_380, %c0_381] : memref<216x512xbf16, #tpu.memory_space<vmem>>, vector<16x512xbf16>
    tpu.vector_store %arg19[%c32_380, %c0_381], %661 {strides = array<i32>} : memref<216x512xbf16, #tpu.memory_space<vmem>>, vector<16x512xbf16>,
    %c497_i32_382 = arith.constant 497 : i32
    %663 = tpu.dynamic_rotate %569 by %c497_i32_382 dim 1 : vector<8x512xf32>, i32 -> vector<8x512xf32>
    %c6_383 = arith.constant 6 : index
    %c0_384 = arith.constant 0 : index
    %664 = vector.load %arg5[%c6_383, %c0_384] : memref<9x512xf32, #tpu.memory_space<vmem>>, vector<1x512xf32>
    %665 = vector.broadcast %664 : vector<1x512xf32> to vector<8x512xf32>
    %666 = arith.mulf %663, %665 : vector<8x512xf32>
    %c496_i32_385 = arith.constant 496 : i32
    %667 = tpu.dynamic_rotate %569 by %c496_i32_385 dim 1 : vector<8x512xf32>, i32 -> vector<8x512xf32>
    %c7_386 = arith.constant 7 : index
    %c0_387 = arith.constant 0 : index
    %668 = vector.load %arg5[%c7_386, %c0_387] : memref<9x512xf32, #tpu.memory_space<vmem>>, vector<1x512xf32>
    %669 = vector.broadcast %668 : vector<1x512xf32> to vector<8x512xf32>
    %670 = arith.mulf %667, %669 : vector<8x512xf32>
    %671 = tpu.concatenate %666, %670 in 0 : vector<8x512xf32>, vector<8x512xf32> -> vector<16x512xf32>
    %672 = arith.truncf %671 : vector<16x512xf32> to vector<16x512xbf16>
    %c48_388 = arith.constant 48 : index
    %c0_389 = arith.constant 0 : index
    %673 = vector.load %arg19[%c48_388, %c0_389] : memref<216x512xbf16, #tpu.memory_space<vmem>>, vector<16x512xbf16>
    tpu.vector_store %arg19[%c48_388, %c0_389], %672 {strides = array<i32>} : memref<216x512xbf16, #tpu.memory_space<vmem>>, vector<16x512xbf16>,
    %c495_i32_390 = arith.constant 495 : i32
    %674 = tpu.dynamic_rotate %569 by %c495_i32_390 dim 1 : vector<8x512xf32>, i32 -> vector<8x512xf32>
    %c8_391 = arith.constant 8 : index
    %c0_392 = arith.constant 0 : index
    %675 = vector.load %arg5[%c8_391, %c0_392] : memref<9x512xf32, #tpu.memory_space<vmem>>, vector<1x512xf32>
    %676 = vector.broadcast %675 : vector<1x512xf32> to vector<8x512xf32>
    %677 = arith.mulf %674, %676 : vector<8x512xf32>
    %c17_i32_393 = arith.constant 17 : i32
    %678 = tpu.dynamic_rotate %601 by %c17_i32_393 dim 1 : vector<8x512xf32>, i32 -> vector<8x512xf32>
    %c0_394 = arith.constant 0 : index
    %c0_395 = arith.constant 0 : index
    %679 = vector.load %arg5[%c0_394, %c0_395] : memref<9x512xf32, #tpu.memory_space<vmem>>, vector<1x512xf32>
    %680 = vector.broadcast %679 : vector<1x512xf32> to vector<8x512xf32>
    %681 = arith.mulf %678, %680 : vector<8x512xf32>
    %682 = tpu.concatenate %677, %681 in 0 : vector<8x512xf32>, vector<8x512xf32> -> vector<16x512xf32>
    %683 = arith.truncf %682 : vector<16x512xf32> to vector<16x512xbf16>
    %c64_396 = arith.constant 64 : index
    %c0_397 = arith.constant 0 : index
    %684 = vector.load %arg19[%c64_396, %c0_397] : memref<216x512xbf16, #tpu.memory_space<vmem>>, vector<16x512xbf16>
    tpu.vector_store %arg19[%c64_396, %c0_397], %683 {strides = array<i32>} : memref<216x512xbf16, #tpu.memory_space<vmem>>, vector<16x512xbf16>,
    %c16_i32_398 = arith.constant 16 : i32
    %685 = tpu.dynamic_rotate %601 by %c16_i32_398 dim 1 : vector<8x512xf32>, i32 -> vector<8x512xf32>
    %c1_399 = arith.constant 1 : index
    %c0_400 = arith.constant 0 : index
    %686 = vector.load %arg5[%c1_399, %c0_400] : memref<9x512xf32, #tpu.memory_space<vmem>>, vector<1x512xf32>
    %687 = vector.broadcast %686 : vector<1x512xf32> to vector<8x512xf32>
    %688 = arith.mulf %685, %687 : vector<8x512xf32>
    %c15_i32_401 = arith.constant 15 : i32
    %689 = tpu.dynamic_rotate %601 by %c15_i32_401 dim 1 : vector<8x512xf32>, i32 -> vector<8x512xf32>
    %c2_402 = arith.constant 2 : index
    %c0_403 = arith.constant 0 : index
    %690 = vector.load %arg5[%c2_402, %c0_403] : memref<9x512xf32, #tpu.memory_space<vmem>>, vector<1x512xf32>
    %691 = vector.broadcast %690 : vector<1x512xf32> to vector<8x512xf32>
    %692 = arith.mulf %689, %691 : vector<8x512xf32>
    %693 = tpu.concatenate %688, %692 in 0 : vector<8x512xf32>, vector<8x512xf32> -> vector<16x512xf32>
    %694 = arith.truncf %693 : vector<16x512xf32> to vector<16x512xbf16>
    %c80_404 = arith.constant 80 : index
    %c0_405 = arith.constant 0 : index
    %695 = vector.load %arg19[%c80_404, %c0_405] : memref<216x512xbf16, #tpu.memory_space<vmem>>, vector<16x512xbf16>
    tpu.vector_store %arg19[%c80_404, %c0_405], %694 {strides = array<i32>} : memref<216x512xbf16, #tpu.memory_space<vmem>>, vector<16x512xbf16>,
    %c1_i32_406 = arith.constant 1 : i32
    %696 = tpu.dynamic_rotate %601 by %c1_i32_406 dim 1 : vector<8x512xf32>, i32 -> vector<8x512xf32>
    %c3_407 = arith.constant 3 : index
    %c0_408 = arith.constant 0 : index
    %697 = vector.load %arg5[%c3_407, %c0_408] : memref<9x512xf32, #tpu.memory_space<vmem>>, vector<1x512xf32>
    %698 = vector.broadcast %697 : vector<1x512xf32> to vector<8x512xf32>
    %699 = arith.mulf %696, %698 : vector<8x512xf32>
    %700 = tpu.concatenate %699, %601 in 0 : vector<8x512xf32>, vector<8x512xf32> -> vector<16x512xf32>
    %701 = arith.truncf %700 : vector<16x512xf32> to vector<16x512xbf16>
    %c96_409 = arith.constant 96 : index
    %c0_410 = arith.constant 0 : index
    %702 = vector.load %arg19[%c96_409, %c0_410] : memref<216x512xbf16, #tpu.memory_space<vmem>>, vector<16x512xbf16>
    tpu.vector_store %arg19[%c96_409, %c0_410], %701 {strides = array<i32>} : memref<216x512xbf16, #tpu.memory_space<vmem>>, vector<16x512xbf16>,
    %c511_i32_411 = arith.constant 511 : i32
    %703 = tpu.dynamic_rotate %601 by %c511_i32_411 dim 1 : vector<8x512xf32>, i32 -> vector<8x512xf32>
    %c5_412 = arith.constant 5 : index
    %c0_413 = arith.constant 0 : index
    %704 = vector.load %arg5[%c5_412, %c0_413] : memref<9x512xf32, #tpu.memory_space<vmem>>, vector<1x512xf32>
    %705 = vector.broadcast %704 : vector<1x512xf32> to vector<8x512xf32>
    %706 = arith.mulf %703, %705 : vector<8x512xf32>
    %c497_i32_414 = arith.constant 497 : i32
    %707 = tpu.dynamic_rotate %601 by %c497_i32_414 dim 1 : vector<8x512xf32>, i32 -> vector<8x512xf32>
    %c6_415 = arith.constant 6 : index
    %c0_416 = arith.constant 0 : index
    %708 = vector.load %arg5[%c6_415, %c0_416] : memref<9x512xf32, #tpu.memory_space<vmem>>, vector<1x512xf32>
    %709 = vector.broadcast %708 : vector<1x512xf32> to vector<8x512xf32>
    %710 = arith.mulf %707, %709 : vector<8x512xf32>
    %711 = tpu.concatenate %706, %710 in 0 : vector<8x512xf32>, vector<8x512xf32> -> vector<16x512xf32>
    %712 = arith.truncf %711 : vector<16x512xf32> to vector<16x512xbf16>
    %c112_417 = arith.constant 112 : index
    %c0_418 = arith.constant 0 : index
    %713 = vector.load %arg19[%c112_417, %c0_418] : memref<216x512xbf16, #tpu.memory_space<vmem>>, vector<16x512xbf16>
    tpu.vector_store %arg19[%c112_417, %c0_418], %712 {strides = array<i32>} : memref<216x512xbf16, #tpu.memory_space<vmem>>, vector<16x512xbf16>,
    %c496_i32_419 = arith.constant 496 : i32
    %714 = tpu.dynamic_rotate %601 by %c496_i32_419 dim 1 : vector<8x512xf32>, i32 -> vector<8x512xf32>
    %c7_420 = arith.constant 7 : index
    %c0_421 = arith.constant 0 : index
    %715 = vector.load %arg5[%c7_420, %c0_421] : memref<9x512xf32, #tpu.memory_space<vmem>>, vector<1x512xf32>
    %716 = vector.broadcast %715 : vector<1x512xf32> to vector<8x512xf32>
    %717 = arith.mulf %714, %716 : vector<8x512xf32>
    %c495_i32_422 = arith.constant 495 : i32
    %718 = tpu.dynamic_rotate %601 by %c495_i32_422 dim 1 : vector<8x512xf32>, i32 -> vector<8x512xf32>
    %c8_423 = arith.constant 8 : index
    %c0_424 = arith.constant 0 : index
    %719 = vector.load %arg5[%c8_423, %c0_424] : memref<9x512xf32, #tpu.memory_space<vmem>>, vector<1x512xf32>
    %720 = vector.broadcast %719 : vector<1x512xf32> to vector<8x512xf32>
    %721 = arith.mulf %718, %720 : vector<8x512xf32>
    %722 = tpu.concatenate %717, %721 in 0 : vector<8x512xf32>, vector<8x512xf32> -> vector<16x512xf32>
    %723 = arith.truncf %722 : vector<16x512xf32> to vector<16x512xbf16>
    %c128_425 = arith.constant 128 : index
    %c0_426 = arith.constant 0 : index
    %724 = vector.load %arg19[%c128_425, %c0_426] : memref<216x512xbf16, #tpu.memory_space<vmem>>, vector<16x512xbf16>
    tpu.vector_store %arg19[%c128_425, %c0_426], %723 {strides = array<i32>} : memref<216x512xbf16, #tpu.memory_space<vmem>>, vector<16x512xbf16>,
    %c17_i32_427 = arith.constant 17 : i32
    %725 = tpu.dynamic_rotate %633 by %c17_i32_427 dim 1 : vector<8x512xf32>, i32 -> vector<8x512xf32>
    %c0_428 = arith.constant 0 : index
    %c0_429 = arith.constant 0 : index
    %726 = vector.load %arg5[%c0_428, %c0_429] : memref<9x512xf32, #tpu.memory_space<vmem>>, vector<1x512xf32>
    %727 = vector.broadcast %726 : vector<1x512xf32> to vector<8x512xf32>
    %728 = arith.mulf %725, %727 : vector<8x512xf32>
    %c16_i32_430 = arith.constant 16 : i32
    %729 = tpu.dynamic_rotate %633 by %c16_i32_430 dim 1 : vector<8x512xf32>, i32 -> vector<8x512xf32>
    %c1_431 = arith.constant 1 : index
    %c0_432 = arith.constant 0 : index
    %730 = vector.load %arg5[%c1_431, %c0_432] : memref<9x512xf32, #tpu.memory_space<vmem>>, vector<1x512xf32>
    %731 = vector.broadcast %730 : vector<1x512xf32> to vector<8x512xf32>
    %732 = arith.mulf %729, %731 : vector<8x512xf32>
    %733 = tpu.concatenate %728, %732 in 0 : vector<8x512xf32>, vector<8x512xf32> -> vector<16x512xf32>
    %734 = arith.truncf %733 : vector<16x512xf32> to vector<16x512xbf16>
    %c144 = arith.constant 144 : index
    %c0_433 = arith.constant 0 : index
    %735 = vector.load %arg19[%c144, %c0_433] : memref<216x512xbf16, #tpu.memory_space<vmem>>, vector<16x512xbf16>
    tpu.vector_store %arg19[%c144, %c0_433], %734 {strides = array<i32>} : memref<216x512xbf16, #tpu.memory_space<vmem>>, vector<16x512xbf16>,
    %c15_i32_434 = arith.constant 15 : i32
    %736 = tpu.dynamic_rotate %633 by %c15_i32_434 dim 1 : vector<8x512xf32>, i32 -> vector<8x512xf32>
    %c2_435 = arith.constant 2 : index
    %c0_436 = arith.constant 0 : index
    %737 = vector.load %arg5[%c2_435, %c0_436] : memref<9x512xf32, #tpu.memory_space<vmem>>, vector<1x512xf32>
    %738 = vector.broadcast %737 : vector<1x512xf32> to vector<8x512xf32>
    %739 = arith.mulf %736, %738 : vector<8x512xf32>
    %c1_i32_437 = arith.constant 1 : i32
    %740 = tpu.dynamic_rotate %633 by %c1_i32_437 dim 1 : vector<8x512xf32>, i32 -> vector<8x512xf32>
    %c3_438 = arith.constant 3 : index
    %c0_439 = arith.constant 0 : index
    %741 = vector.load %arg5[%c3_438, %c0_439] : memref<9x512xf32, #tpu.memory_space<vmem>>, vector<1x512xf32>
    %742 = vector.broadcast %741 : vector<1x512xf32> to vector<8x512xf32>
    %743 = arith.mulf %740, %742 : vector<8x512xf32>
    %744 = tpu.concatenate %739, %743 in 0 : vector<8x512xf32>, vector<8x512xf32> -> vector<16x512xf32>
    %745 = arith.truncf %744 : vector<16x512xf32> to vector<16x512xbf16>
    %c160 = arith.constant 160 : index
    %c0_440 = arith.constant 0 : index
    %746 = vector.load %arg19[%c160, %c0_440] : memref<216x512xbf16, #tpu.memory_space<vmem>>, vector<16x512xbf16>
    tpu.vector_store %arg19[%c160, %c0_440], %745 {strides = array<i32>} : memref<216x512xbf16, #tpu.memory_space<vmem>>, vector<16x512xbf16>,
    %c511_i32_441 = arith.constant 511 : i32
    %747 = tpu.dynamic_rotate %633 by %c511_i32_441 dim 1 : vector<8x512xf32>, i32 -> vector<8x512xf32>
    %c5_442 = arith.constant 5 : index
    %c0_443 = arith.constant 0 : index
    %748 = vector.load %arg5[%c5_442, %c0_443] : memref<9x512xf32, #tpu.memory_space<vmem>>, vector<1x512xf32>
    %749 = vector.broadcast %748 : vector<1x512xf32> to vector<8x512xf32>
    %750 = arith.mulf %747, %749 : vector<8x512xf32>
    %751 = tpu.concatenate %633, %750 in 0 : vector<8x512xf32>, vector<8x512xf32> -> vector<16x512xf32>
    %752 = arith.truncf %751 : vector<16x512xf32> to vector<16x512xbf16>
    %c176 = arith.constant 176 : index
    %c0_444 = arith.constant 0 : index
    %753 = vector.load %arg19[%c176, %c0_444] : memref<216x512xbf16, #tpu.memory_space<vmem>>, vector<16x512xbf16>
    tpu.vector_store %arg19[%c176, %c0_444], %752 {strides = array<i32>} : memref<216x512xbf16, #tpu.memory_space<vmem>>, vector<16x512xbf16>,
    %c497_i32_445 = arith.constant 497 : i32
    %754 = tpu.dynamic_rotate %633 by %c497_i32_445 dim 1 : vector<8x512xf32>, i32 -> vector<8x512xf32>
    %c6_446 = arith.constant 6 : index
    %c0_447 = arith.constant 0 : index
    %755 = vector.load %arg5[%c6_446, %c0_447] : memref<9x512xf32, #tpu.memory_space<vmem>>, vector<1x512xf32>
    %756 = vector.broadcast %755 : vector<1x512xf32> to vector<8x512xf32>
    %757 = arith.mulf %754, %756 : vector<8x512xf32>
    %c496_i32_448 = arith.constant 496 : i32
    %758 = tpu.dynamic_rotate %633 by %c496_i32_448 dim 1 : vector<8x512xf32>, i32 -> vector<8x512xf32>
    %c7_449 = arith.constant 7 : index
    %c0_450 = arith.constant 0 : index
    %759 = vector.load %arg5[%c7_449, %c0_450] : memref<9x512xf32, #tpu.memory_space<vmem>>, vector<1x512xf32>
    %760 = vector.broadcast %759 : vector<1x512xf32> to vector<8x512xf32>
    %761 = arith.mulf %758, %760 : vector<8x512xf32>
    %762 = tpu.concatenate %757, %761 in 0 : vector<8x512xf32>, vector<8x512xf32> -> vector<16x512xf32>
    %763 = arith.truncf %762 : vector<16x512xf32> to vector<16x512xbf16>
    %c192 = arith.constant 192 : index
    %c0_451 = arith.constant 0 : index
    %764 = vector.load %arg19[%c192, %c0_451] : memref<216x512xbf16, #tpu.memory_space<vmem>>, vector<16x512xbf16>
    tpu.vector_store %arg19[%c192, %c0_451], %763 {strides = array<i32>} : memref<216x512xbf16, #tpu.memory_space<vmem>>, vector<16x512xbf16>,
    %c495_i32_452 = arith.constant 495 : i32
    %765 = tpu.dynamic_rotate %633 by %c495_i32_452 dim 1 : vector<8x512xf32>, i32 -> vector<8x512xf32>
    %c8_453 = arith.constant 8 : index
    %c0_454 = arith.constant 0 : index
    %766 = vector.load %arg5[%c8_453, %c0_454] : memref<9x512xf32, #tpu.memory_space<vmem>>, vector<1x512xf32>
    %767 = vector.broadcast %766 : vector<1x512xf32> to vector<8x512xf32>
    %768 = arith.mulf %765, %767 : vector<8x512xf32>
    %769 = arith.truncf %768 : vector<8x512xf32> to vector<8x512xbf16>
    %c208 = arith.constant 208 : index
    %c0_455 = arith.constant 0 : index
    %770 = vector.load %arg19[%c208, %c0_455] : memref<216x512xbf16, #tpu.memory_space<vmem>>, vector<8x512xbf16>
    tpu.vector_store %arg19[%c208, %c0_455], %769 {strides = array<i32>} : memref<216x512xbf16, #tpu.memory_space<vmem>>, vector<8x512xbf16>,
    %c0_456 = arith.constant 0 : index
    %c0_457 = arith.constant 0 : index
    %771 = vector.load %arg11[%c0_456, %c0_457] : memref<8x216xbf16, #tpu.memory_space<vmem>>, vector<8x216xbf16>
    %c0_458 = arith.constant 0 : index
    %c0_459 = arith.constant 0 : index
    %772 = vector.load %arg19[%c0_458, %c0_459] : memref<216x512xbf16, #tpu.memory_space<vmem>>, vector<216x512xbf16>
    %cst_460 = arith.constant dense<0.000000e+00> : vector<8x512xf32>
    %773 = tpu.matmul %771, %772, %cst_460 {dimension_numbers = #tpu.dot_dimension_numbers<[1], [0], [0], [1], [0, 0, 1, 1], [], []>} : vector<8x216xbf16>, vector<216x512xbf16>, vector<8x512xf32> -> vector<8x512xf32>
    %c0_461 = arith.constant 0 : index
    %c5_462 = arith.constant 5 : index
    %774 = vector.load %arg4[%c0_461, %c5_462] : memref<8x9xf32, #tpu.memory_space<vmem>>, vector<8x1xf32>
    %775 = vector.broadcast %774 : vector<8x1xf32> to vector<8x512xf32>
    %776 = arith.addf %773, %775 : vector<8x512xf32>
    %c5_463 = arith.constant 5 : index
    %c0_464 = arith.constant 0 : index
    %c0_465 = arith.constant 0 : index
    %777 = vector.load %arg18[%c5_463, %c0_464, %c0_465] : memref<7x8x512xf32, #tpu.memory_space<vmem>>, vector<1x8x512xf32>
    %778 = vector.shape_cast %777 : vector<1x8x512xf32> to vector<8x512xf32>
    %779 = vector.shape_cast %776 : vector<8x512xf32> to vector<1x8x512xf32>
    tpu.vector_store %arg18[%c5_463, %c0_464, %c0_465], %779 {strides = array<i32>} : memref<7x8x512xf32, #tpu.memory_space<vmem>>, vector<1x8x512xf32>,
    %c5_466 = arith.constant 5 : index
    %c0_467 = arith.constant 0 : index
    %c0_468 = arith.constant 0 : index
    %780 = vector.load %arg18[%c5_466, %c0_467, %c0_468] : memref<7x8x512xf32, #tpu.memory_space<vmem>>, vector<1x8x512xf32>
    %781 = vector.shape_cast %780 : vector<1x8x512xf32> to vector<8x512xf32>
    %c0_469 = arith.constant 0 : index
    %c6_470 = arith.constant 6 : index
    %782 = vector.load %arg1[%c0_469, %c6_470] : memref<24x8xf32, #tpu.memory_space<vmem>>, vector<8x1xf32>
    %c0_471 = arith.constant 0 : index
    %c6_472 = arith.constant 6 : index
    %783 = vector.load %arg2[%c0_471, %c6_472] : memref<24x8xf32, #tpu.memory_space<vmem>>, vector<8x1xf32>
    %c6_473 = arith.constant 6 : index
    %784 = memref.load %arg3[%c6_473] : memref<8xf32, #tpu.memory_space<smem>>
    %cst_474 = arith.constant dense<0.000000e+00> : vector<8xf32>
    %785 = vector.multi_reduction <add>, %781, %cst_474 [1] : vector<8x512xf32> to vector<8xf32>
    %786 = vector.shape_cast %785 : vector<8xf32> to vector<8x1xf32>
    %cst_475 = arith.constant 5.120000e+02 : f32
    %787 = vector.broadcast %cst_475 : f32 to vector<8x1xf32>
    %788 = arith.divf %786, %787 : vector<8x1xf32>
    %789 = vector.broadcast %788 : vector<8x1xf32> to vector<8x512xf32>
    %790 = arith.subf %781, %789 : vector<8x512xf32>
    %791 = arith.mulf %790, %790 : vector<8x512xf32>
    %cst_476 = arith.constant dense<0.000000e+00> : vector<8xf32>
    %792 = vector.multi_reduction <add>, %791, %cst_476 [1] : vector<8x512xf32> to vector<8xf32>
    %793 = vector.shape_cast %792 : vector<8xf32> to vector<8x1xf32>
    %cst_477 = arith.constant 5.120000e+02 : f32
    %794 = vector.broadcast %cst_477 : f32 to vector<8x1xf32>
    %795 = arith.divf %793, %794 : vector<8x1xf32>
    %796 = vector.broadcast %788 : vector<8x1xf32> to vector<8x512xf32>
    %797 = arith.subf %781, %796 : vector<8x512xf32>
    %cst_478 = arith.constant 9.99999974E-6 : f32
    %798 = vector.broadcast %cst_478 : f32 to vector<8x1xf32>
    %799 = arith.addf %795, %798 : vector<8x1xf32>
    %800 = math.rsqrt %799 : vector<8x1xf32>
    %801 = vector.broadcast %800 : vector<8x1xf32> to vector<8x512xf32>
    %802 = arith.mulf %797, %801 : vector<8x512xf32>
    %803 = vector.broadcast %782 : vector<8x1xf32> to vector<8x512xf32>
    %804 = arith.mulf %802, %803 : vector<8x512xf32>
    %805 = vector.broadcast %783 : vector<8x1xf32> to vector<8x512xf32>
    %806 = arith.addf %804, %805 : vector<8x512xf32>
    %cst_479 = arith.constant 0.000000e+00 : f32
    %807 = vector.broadcast %cst_479 : f32 to vector<8x512xf32>
    %808 = arith.cmpf oge, %806, %807 : vector<8x512xf32>
    %809 = vector.broadcast %784 : f32 to vector<8x512xf32>
    %810 = arith.mulf %809, %806 : vector<8x512xf32>
    %811 = arith.select %808, %806, %810 : vector<8x512xi1>, vector<8x512xf32>
    %c4_480 = arith.constant 4 : index
    %c0_481 = arith.constant 0 : index
    %c0_482 = arith.constant 0 : index
    %812 = vector.load %arg18[%c4_480, %c0_481, %c0_482] : memref<7x8x512xf32, #tpu.memory_space<vmem>>, vector<1x8x512xf32>
    %813 = vector.shape_cast %812 : vector<1x8x512xf32> to vector<8x512xf32>
    %c8_483 = arith.constant 8 : index
    %c6_484 = arith.constant 6 : index
    %814 = vector.load %arg1[%c8_483, %c6_484] : memref<24x8xf32, #tpu.memory_space<vmem>>, vector<8x1xf32>
    %c8_485 = arith.constant 8 : index
    %c6_486 = arith.constant 6 : index
    %815 = vector.load %arg2[%c8_485, %c6_486] : memref<24x8xf32, #tpu.memory_space<vmem>>, vector<8x1xf32>
    %c6_487 = arith.constant 6 : index
    %816 = memref.load %arg3[%c6_487] : memref<8xf32, #tpu.memory_space<smem>>
    %cst_488 = arith.constant dense<0.000000e+00> : vector<8xf32>
    %817 = vector.multi_reduction <add>, %813, %cst_488 [1] : vector<8x512xf32> to vector<8xf32>
    %818 = vector.shape_cast %817 : vector<8xf32> to vector<8x1xf32>
    %cst_489 = arith.constant 5.120000e+02 : f32
    %819 = vector.broadcast %cst_489 : f32 to vector<8x1xf32>
    %820 = arith.divf %818, %819 : vector<8x1xf32>
    %821 = vector.broadcast %820 : vector<8x1xf32> to vector<8x512xf32>
    %822 = arith.subf %813, %821 : vector<8x512xf32>
    %823 = arith.mulf %822, %822 : vector<8x512xf32>
    %cst_490 = arith.constant dense<0.000000e+00> : vector<8xf32>
    %824 = vector.multi_reduction <add>, %823, %cst_490 [1] : vector<8x512xf32> to vector<8xf32>
    %825 = vector.shape_cast %824 : vector<8xf32> to vector<8x1xf32>
    %cst_491 = arith.constant 5.120000e+02 : f32
    %826 = vector.broadcast %cst_491 : f32 to vector<8x1xf32>
    %827 = arith.divf %825, %826 : vector<8x1xf32>
    %828 = vector.broadcast %820 : vector<8x1xf32> to vector<8x512xf32>
    %829 = arith.subf %813, %828 : vector<8x512xf32>
    %cst_492 = arith.constant 9.99999974E-6 : f32
    %830 = vector.broadcast %cst_492 : f32 to vector<8x1xf32>
    %831 = arith.addf %827, %830 : vector<8x1xf32>
    %832 = math.rsqrt %831 : vector<8x1xf32>
    %833 = vector.broadcast %832 : vector<8x1xf32> to vector<8x512xf32>
    %834 = arith.mulf %829, %833 : vector<8x512xf32>
    %835 = vector.broadcast %814 : vector<8x1xf32> to vector<8x512xf32>
    %836 = arith.mulf %834, %835 : vector<8x512xf32>
    %837 = vector.broadcast %815 : vector<8x1xf32> to vector<8x512xf32>
    %838 = arith.addf %836, %837 : vector<8x512xf32>
    %cst_493 = arith.constant 0.000000e+00 : f32
    %839 = vector.broadcast %cst_493 : f32 to vector<8x512xf32>
    %840 = arith.cmpf oge, %838, %839 : vector<8x512xf32>
    %841 = vector.broadcast %816 : f32 to vector<8x512xf32>
    %842 = arith.mulf %841, %838 : vector<8x512xf32>
    %843 = arith.select %840, %838, %842 : vector<8x512xi1>, vector<8x512xf32>
    %c2_494 = arith.constant 2 : index
    %c0_495 = arith.constant 0 : index
    %c0_496 = arith.constant 0 : index
    %844 = vector.load %arg18[%c2_494, %c0_495, %c0_496] : memref<7x8x512xf32, #tpu.memory_space<vmem>>, vector<1x8x512xf32>
    %845 = vector.shape_cast %844 : vector<1x8x512xf32> to vector<8x512xf32>
    %c16_497 = arith.constant 16 : index
    %c6_498 = arith.constant 6 : index
    %846 = vector.load %arg1[%c16_497, %c6_498] : memref<24x8xf32, #tpu.memory_space<vmem>>, vector<8x1xf32>
    %c16_499 = arith.constant 16 : index
    %c6_500 = arith.constant 6 : index
    %847 = vector.load %arg2[%c16_499, %c6_500] : memref<24x8xf32, #tpu.memory_space<vmem>>, vector<8x1xf32>
    %c6_501 = arith.constant 6 : index
    %848 = memref.load %arg3[%c6_501] : memref<8xf32, #tpu.memory_space<smem>>
    %cst_502 = arith.constant dense<0.000000e+00> : vector<8xf32>
    %849 = vector.multi_reduction <add>, %845, %cst_502 [1] : vector<8x512xf32> to vector<8xf32>
    %850 = vector.shape_cast %849 : vector<8xf32> to vector<8x1xf32>
    %cst_503 = arith.constant 5.120000e+02 : f32
    %851 = vector.broadcast %cst_503 : f32 to vector<8x1xf32>
    %852 = arith.divf %850, %851 : vector<8x1xf32>
    %853 = vector.broadcast %852 : vector<8x1xf32> to vector<8x512xf32>
    %854 = arith.subf %845, %853 : vector<8x512xf32>
    %855 = arith.mulf %854, %854 : vector<8x512xf32>
    %cst_504 = arith.constant dense<0.000000e+00> : vector<8xf32>
    %856 = vector.multi_reduction <add>, %855, %cst_504 [1] : vector<8x512xf32> to vector<8xf32>
    %857 = vector.shape_cast %856 : vector<8xf32> to vector<8x1xf32>
    %cst_505 = arith.constant 5.120000e+02 : f32
    %858 = vector.broadcast %cst_505 : f32 to vector<8x1xf32>
    %859 = arith.divf %857, %858 : vector<8x1xf32>
    %860 = vector.broadcast %852 : vector<8x1xf32> to vector<8x512xf32>
    %861 = arith.subf %845, %860 : vector<8x512xf32>
    %cst_506 = arith.constant 9.99999974E-6 : f32
    %862 = vector.broadcast %cst_506 : f32 to vector<8x1xf32>
    %863 = arith.addf %859, %862 : vector<8x1xf32>
    %864 = math.rsqrt %863 : vector<8x1xf32>
    %865 = vector.broadcast %864 : vector<8x1xf32> to vector<8x512xf32>
    %866 = arith.mulf %861, %865 : vector<8x512xf32>
    %867 = vector.broadcast %846 : vector<8x1xf32> to vector<8x512xf32>
    %868 = arith.mulf %866, %867 : vector<8x512xf32>
    %869 = vector.broadcast %847 : vector<8x1xf32> to vector<8x512xf32>
    %870 = arith.addf %868, %869 : vector<8x512xf32>
    %cst_507 = arith.constant 0.000000e+00 : f32
    %871 = vector.broadcast %cst_507 : f32 to vector<8x512xf32>
    %872 = arith.cmpf oge, %870, %871 : vector<8x512xf32>
    %873 = vector.broadcast %848 : f32 to vector<8x512xf32>
    %874 = arith.mulf %873, %870 : vector<8x512xf32>
    %875 = arith.select %872, %870, %874 : vector<8x512xi1>, vector<8x512xf32>
    %876 = tpu.concatenate %811, %843 in 0 : vector<8x512xf32>, vector<8x512xf32> -> vector<16x512xf32>
    %877 = arith.truncf %876 : vector<16x512xf32> to vector<16x512xbf16>
    %c0_508 = arith.constant 0 : index
    %c0_509 = arith.constant 0 : index
    %878 = vector.load %arg19[%c0_508, %c0_509] : memref<216x512xbf16, #tpu.memory_space<vmem>>, vector<16x512xbf16>
    tpu.vector_store %arg19[%c0_508, %c0_509], %877 {strides = array<i32>} : memref<216x512xbf16, #tpu.memory_space<vmem>>, vector<16x512xbf16>,
    %879 = arith.truncf %875 : vector<8x512xf32> to vector<8x512xbf16>
    %c16_510 = arith.constant 16 : index
    %c0_511 = arith.constant 0 : index
    %880 = vector.load %arg19[%c16_510, %c0_511] : memref<216x512xbf16, #tpu.memory_space<vmem>>, vector<8x512xbf16>
    tpu.vector_store %arg19[%c16_510, %c0_511], %879 {strides = array<i32>} : memref<216x512xbf16, #tpu.memory_space<vmem>>, vector<8x512xbf16>,
    %c0_512 = arith.constant 0 : index
    %c0_513 = arith.constant 0 : index
    %881 = vector.load %arg12[%c0_512, %c0_513] : memref<8x24xbf16, #tpu.memory_space<vmem>>, vector<8x24xbf16>
    %c0_514 = arith.constant 0 : index
    %c0_515 = arith.constant 0 : index
    %882 = vector.load %arg19[%c0_514, %c0_515] : memref<216x512xbf16, #tpu.memory_space<vmem>>, vector<24x512xbf16>
    %cst_516 = arith.constant dense<0.000000e+00> : vector<8x512xf32>
    %883 = tpu.matmul %881, %882, %cst_516 {dimension_numbers = #tpu.dot_dimension_numbers<[1], [0], [0], [1], [0, 0, 1, 1], [], []>} : vector<8x24xbf16>, vector<24x512xbf16>, vector<8x512xf32> -> vector<8x512xf32>
    %c0_517 = arith.constant 0 : index
    %c6_518 = arith.constant 6 : index
    %884 = vector.load %arg4[%c0_517, %c6_518] : memref<8x9xf32, #tpu.memory_space<vmem>>, vector<8x1xf32>
    %885 = vector.broadcast %884 : vector<8x1xf32> to vector<8x512xf32>
    %886 = arith.addf %883, %885 : vector<8x512xf32>
    %c6_519 = arith.constant 6 : index
    %c0_520 = arith.constant 0 : index
    %c0_521 = arith.constant 0 : index
    %887 = vector.load %arg18[%c6_519, %c0_520, %c0_521] : memref<7x8x512xf32, #tpu.memory_space<vmem>>, vector<1x8x512xf32>
    %888 = vector.shape_cast %887 : vector<1x8x512xf32> to vector<8x512xf32>
    %889 = vector.shape_cast %886 : vector<8x512xf32> to vector<1x8x512xf32>
    tpu.vector_store %arg18[%c6_519, %c0_520, %c0_521], %889 {strides = array<i32>} : memref<7x8x512xf32, #tpu.memory_space<vmem>>, vector<1x8x512xf32>,
    %c6_522 = arith.constant 6 : index
    %c0_523 = arith.constant 0 : index
    %c0_524 = arith.constant 0 : index
    %890 = vector.load %arg18[%c6_522, %c0_523, %c0_524] : memref<7x8x512xf32, #tpu.memory_space<vmem>>, vector<1x8x512xf32>
    %891 = vector.shape_cast %890 : vector<1x8x512xf32> to vector<8x512xf32>
    %c0_525 = arith.constant 0 : index
    %c7_526 = arith.constant 7 : index
    %892 = vector.load %arg1[%c0_525, %c7_526] : memref<24x8xf32, #tpu.memory_space<vmem>>, vector<8x1xf32>
    %c0_527 = arith.constant 0 : index
    %c7_528 = arith.constant 7 : index
    %893 = vector.load %arg2[%c0_527, %c7_528] : memref<24x8xf32, #tpu.memory_space<vmem>>, vector<8x1xf32>
    %c7_529 = arith.constant 7 : index
    %894 = memref.load %arg3[%c7_529] : memref<8xf32, #tpu.memory_space<smem>>
    %cst_530 = arith.constant dense<0.000000e+00> : vector<8xf32>
    %895 = vector.multi_reduction <add>, %891, %cst_530 [1] : vector<8x512xf32> to vector<8xf32>
    %896 = vector.shape_cast %895 : vector<8xf32> to vector<8x1xf32>
    %cst_531 = arith.constant 5.120000e+02 : f32
    %897 = vector.broadcast %cst_531 : f32 to vector<8x1xf32>
    %898 = arith.divf %896, %897 : vector<8x1xf32>
    %899 = vector.broadcast %898 : vector<8x1xf32> to vector<8x512xf32>
    %900 = arith.subf %891, %899 : vector<8x512xf32>
    %901 = arith.mulf %900, %900 : vector<8x512xf32>
    %cst_532 = arith.constant dense<0.000000e+00> : vector<8xf32>
    %902 = vector.multi_reduction <add>, %901, %cst_532 [1] : vector<8x512xf32> to vector<8xf32>
    %903 = vector.shape_cast %902 : vector<8xf32> to vector<8x1xf32>
    %cst_533 = arith.constant 5.120000e+02 : f32
    %904 = vector.broadcast %cst_533 : f32 to vector<8x1xf32>
    %905 = arith.divf %903, %904 : vector<8x1xf32>
    %906 = vector.broadcast %898 : vector<8x1xf32> to vector<8x512xf32>
    %907 = arith.subf %891, %906 : vector<8x512xf32>
    %cst_534 = arith.constant 9.99999974E-6 : f32
    %908 = vector.broadcast %cst_534 : f32 to vector<8x1xf32>
    %909 = arith.addf %905, %908 : vector<8x1xf32>
    %910 = math.rsqrt %909 : vector<8x1xf32>
    %911 = vector.broadcast %910 : vector<8x1xf32> to vector<8x512xf32>
    %912 = arith.mulf %907, %911 : vector<8x512xf32>
    %913 = vector.broadcast %892 : vector<8x1xf32> to vector<8x512xf32>
    %914 = arith.mulf %912, %913 : vector<8x512xf32>
    %915 = vector.broadcast %893 : vector<8x1xf32> to vector<8x512xf32>
    %916 = arith.addf %914, %915 : vector<8x512xf32>
    %cst_535 = arith.constant 0.000000e+00 : f32
    %917 = vector.broadcast %cst_535 : f32 to vector<8x512xf32>
    %918 = arith.cmpf oge, %916, %917 : vector<8x512xf32>
    %919 = vector.broadcast %894 : f32 to vector<8x512xf32>
    %920 = arith.mulf %919, %916 : vector<8x512xf32>
    %921 = arith.select %918, %916, %920 : vector<8x512xi1>, vector<8x512xf32>
    %c511_i32_536 = arith.constant 511 : i32
    %922 = tpu.dynamic_rotate %921 by %c511_i32_536 dim 1 : vector<8x512xf32>, i32 -> vector<8x512xf32>
    %c5_537 = arith.constant 5 : index
    %c0_538 = arith.constant 0 : index
    %923 = vector.load %arg5[%c5_537, %c0_538] : memref<9x512xf32, #tpu.memory_space<vmem>>, vector<1x512xf32>
    %924 = vector.broadcast %923 : vector<1x512xf32> to vector<8x512xf32>
    %925 = arith.mulf %922, %924 : vector<8x512xf32>
    %926 = tpu.concatenate %921, %925 in 0 : vector<8x512xf32>, vector<8x512xf32> -> vector<16x512xf32>
    %927 = arith.truncf %926 : vector<16x512xf32> to vector<16x512xbf16>
    %c0_539 = arith.constant 0 : index
    %c0_540 = arith.constant 0 : index
    %928 = vector.load %arg19[%c0_539, %c0_540] : memref<216x512xbf16, #tpu.memory_space<vmem>>, vector<16x512xbf16>
    tpu.vector_store %arg19[%c0_539, %c0_540], %927 {strides = array<i32>} : memref<216x512xbf16, #tpu.memory_space<vmem>>, vector<16x512xbf16>,
    %c496_i32_541 = arith.constant 496 : i32
    %929 = tpu.dynamic_rotate %921 by %c496_i32_541 dim 1 : vector<8x512xf32>, i32 -> vector<8x512xf32>
    %c7_542 = arith.constant 7 : index
    %c0_543 = arith.constant 0 : index
    %930 = vector.load %arg5[%c7_542, %c0_543] : memref<9x512xf32, #tpu.memory_space<vmem>>, vector<1x512xf32>
    %931 = vector.broadcast %930 : vector<1x512xf32> to vector<8x512xf32>
    %932 = arith.mulf %929, %931 : vector<8x512xf32>
    %c495_i32_544 = arith.constant 495 : i32
    %933 = tpu.dynamic_rotate %921 by %c495_i32_544 dim 1 : vector<8x512xf32>, i32 -> vector<8x512xf32>
    %c8_545 = arith.constant 8 : index
    %c0_546 = arith.constant 0 : index
    %934 = vector.load %arg5[%c8_545, %c0_546] : memref<9x512xf32, #tpu.memory_space<vmem>>, vector<1x512xf32>
    %935 = vector.broadcast %934 : vector<1x512xf32> to vector<8x512xf32>
    %936 = arith.mulf %933, %935 : vector<8x512xf32>
    %937 = tpu.concatenate %932, %936 in 0 : vector<8x512xf32>, vector<8x512xf32> -> vector<16x512xf32>
    %938 = arith.truncf %937 : vector<16x512xf32> to vector<16x512xbf16>
    %c16_547 = arith.constant 16 : index
    %c0_548 = arith.constant 0 : index
    %939 = vector.load %arg19[%c16_547, %c0_548] : memref<216x512xbf16, #tpu.memory_space<vmem>>, vector<16x512xbf16>
    tpu.vector_store %arg19[%c16_547, %c0_548], %938 {strides = array<i32>} : memref<216x512xbf16, #tpu.memory_space<vmem>>, vector<16x512xbf16>,
    %c0_549 = arith.constant 0 : index
    %c0_550 = arith.constant 0 : index
    %940 = vector.load %arg13[%c0_549, %c0_550] : memref<8x32xbf16, #tpu.memory_space<vmem>>, vector<8x32xbf16>
    %c0_551 = arith.constant 0 : index
    %c0_552 = arith.constant 0 : index
    %941 = vector.load %arg19[%c0_551, %c0_552] : memref<216x512xbf16, #tpu.memory_space<vmem>>, vector<32x512xbf16>
    %cst_553 = arith.constant dense<0.000000e+00> : vector<8x512xf32>
    %942 = tpu.matmul %940, %941, %cst_553 {dimension_numbers = #tpu.dot_dimension_numbers<[1], [0], [0], [1], [0, 0, 1, 1], [], []>} : vector<8x32xbf16>, vector<32x512xbf16>, vector<8x512xf32> -> vector<8x512xf32>
    %c0_554 = arith.constant 0 : index
    %c7_555 = arith.constant 7 : index
    %943 = vector.load %arg4[%c0_554, %c7_555] : memref<8x9xf32, #tpu.memory_space<vmem>>, vector<8x1xf32>
    %944 = vector.broadcast %943 : vector<8x1xf32> to vector<8x512xf32>
    %945 = arith.addf %942, %944 : vector<8x512xf32>
    %c0_556 = arith.constant 0 : index
    %c0_557 = arith.constant 0 : index
    %946 = vector.load %arg16[%c0_556, %c0_557] : memref<8x512xf32, #tpu.memory_space<vmem>>, vector<8x512xf32>
    tpu.vector_store %arg16[%c0_556, %c0_557], %945 {strides = array<i32>} : memref<8x512xf32, #tpu.memory_space<vmem>>, vector<8x512xf32>,
    %c511_i32_558 = arith.constant 511 : i32
    %947 = tpu.dynamic_rotate %945 by %c511_i32_558 dim 1 : vector<8x512xf32>, i32 -> vector<8x512xf32>
    %948 = tpu.concatenate %945, %947 in 0 : vector<8x512xf32>, vector<8x512xf32> -> vector<16x512xf32>
    %949 = arith.truncf %948 : vector<16x512xf32> to vector<16x512xbf16>
    %c0_559 = arith.constant 0 : index
    %c0_560 = arith.constant 0 : index
    %950 = vector.load %arg19[%c0_559, %c0_560] : memref<216x512xbf16, #tpu.memory_space<vmem>>, vector<16x512xbf16>
    tpu.vector_store %arg19[%c0_559, %c0_560], %949 {strides = array<i32>} : memref<216x512xbf16, #tpu.memory_space<vmem>>, vector<16x512xbf16>,
    %c496_i32_561 = arith.constant 496 : i32
    %951 = tpu.dynamic_rotate %945 by %c496_i32_561 dim 1 : vector<8x512xf32>, i32 -> vector<8x512xf32>
    %c495_i32_562 = arith.constant 495 : i32
    %952 = tpu.dynamic_rotate %945 by %c495_i32_562 dim 1 : vector<8x512xf32>, i32 -> vector<8x512xf32>
    %953 = tpu.concatenate %951, %952 in 0 : vector<8x512xf32>, vector<8x512xf32> -> vector<16x512xf32>
    %954 = arith.truncf %953 : vector<16x512xf32> to vector<16x512xbf16>
    %c16_563 = arith.constant 16 : index
    %c0_564 = arith.constant 0 : index
    %955 = vector.load %arg19[%c16_563, %c0_564] : memref<216x512xbf16, #tpu.memory_space<vmem>>, vector<16x512xbf16>
    tpu.vector_store %arg19[%c16_563, %c0_564], %954 {strides = array<i32>} : memref<216x512xbf16, #tpu.memory_space<vmem>>, vector<16x512xbf16>,
    %c0_565 = arith.constant 0 : index
    %c0_566 = arith.constant 0 : index
    %956 = vector.load %arg14[%c0_565, %c0_566] : memref<8x32xbf16, #tpu.memory_space<vmem>>, vector<8x32xbf16>
    %c0_567 = arith.constant 0 : index
    %c0_568 = arith.constant 0 : index
    %957 = vector.load %arg19[%c0_567, %c0_568] : memref<216x512xbf16, #tpu.memory_space<vmem>>, vector<32x512xbf16>
    %cst_569 = arith.constant dense<0.000000e+00> : vector<8x512xf32>
    %958 = tpu.matmul %956, %957, %cst_569 {dimension_numbers = #tpu.dot_dimension_numbers<[1], [0], [0], [1], [0, 0, 1, 1], [], []>} : vector<8x32xbf16>, vector<32x512xbf16>, vector<8x512xf32> -> vector<8x512xf32>
    %c0_570 = arith.constant 0 : index
    %c8_571 = arith.constant 8 : index
    %959 = vector.load %arg4[%c0_570, %c8_571] : memref<8x9xf32, #tpu.memory_space<vmem>>, vector<8x1xf32>
    %960 = vector.broadcast %959 : vector<8x1xf32> to vector<8x512xf32>
    %961 = arith.addf %958, %960 : vector<8x512xf32>
    %c0_572 = arith.constant 0 : index
    %c0_573 = arith.constant 0 : index
    %962 = vector.load %arg15[%c0_572, %c0_573] : memref<512x128xf32, #tpu.memory_space<vmem>>, vector<512x128xf32>
    %cst_574 = arith.constant dense<0.000000e+00> : vector<8x128xf32>
    %963 = tpu.matmul %961, %962, %cst_574 {dimension_numbers = #tpu.dot_dimension_numbers<[1], [0], [0], [1], [0, 0, 1, 1], [], []>} : vector<8x512xf32>, vector<512x128xf32>, vector<8x128xf32> -> vector<8x128xf32>
    %c0_575 = arith.constant 0 : index
    %c0_576 = arith.constant 0 : index
    %964 = vector.load %arg17[%c0_575, %c0_576] : memref<8x128xf32, #tpu.memory_space<vmem>>, vector<8x128xf32>
    tpu.vector_store %arg17[%c0_575, %c0_576], %963 {strides = array<i32>} : memref<8x128xf32, #tpu.memory_space<vmem>>, vector<8x128xf32>,
    return
  }
}

</mosaic_0001>

<llo_original>
// kernel: _lambda_.1
$region0: #{_lambda_.1}
  #allocation0 [shape = 'u32[]', space=smem, size = 0x4, offset = 0x4, fixed_abs, tag = 'smem constant byte address 0x4 - core index']
  #allocation1 [shape = 'u32[144,128]{1,0:T(1,128)}', space=vmem, size = 0x12000, scoped, tag = 'internal scratch']
  #allocation2 [shape = 'f32[7,8,512]{2,1,0:T(8,128)}', space=vmem, size = 0x1c000, scoped, tag = 'scratch operand']
  #allocation3 [shape = 'bf16[216,512]{1,0:T(8,128)(2,1)}', space=vmem, size = 0x36000, scoped, tag = 'scratch operand']
  %s0 = inlined_call_operand.vmem [shape: f32[4,512], index: 0, kind: input, shape index: {}]
  %s1 = inlined_call_operand.vmem [shape: f32[24,8], index: 1, kind: input, shape index: {}]
  %s2 = inlined_call_operand.vmem [shape: f32[24,8], index: 2, kind: input, shape index: {}]
  %s3 = inlined_call_operand.vmem [shape: f32[8], index: 3, kind: input, shape index: {}]
  %s4 = inlined_call_operand.vmem [shape: f32[8,9], index: 4, kind: input, shape index: {}]
  %s5 = inlined_call_operand.vmem [shape: f32[9,512], index: 5, kind: input, shape index: {}]
  %s6 = inlined_call_operand.vmem [shape: bf16[8,36], index: 6, kind: input, shape index: {}]
  %s7 = inlined_call_operand.vmem [shape: bf16[8,8], index: 7, kind: input, shape index: {}]
  %s8 = inlined_call_operand.vmem [shape: bf16[8,72], index: 8, kind: input, shape index: {}]
  %s9 = inlined_call_operand.vmem [shape: bf16[8,144], index: 9, kind: input, shape index: {}]
  %s10 = inlined_call_operand.vmem [shape: bf16[8,144], index: 10, kind: input, shape index: {}]
  %s11 = inlined_call_operand.vmem [shape: bf16[8,216], index: 11, kind: input, shape index: {}]
  %s12 = inlined_call_operand.vmem [shape: bf16[8,24], index: 12, kind: input, shape index: {}]
  %s13 = inlined_call_operand.vmem [shape: bf16[8,32], index: 13, kind: input, shape index: {}]
  %s14 = inlined_call_operand.vmem [shape: bf16[8,32], index: 14, kind: input, shape index: {}]
  %s15 = inlined_call_operand.hbm [shape: f32[512,128], index: 15, kind: input, shape index: {}]
  %s16 = inlined_call_operand.vmem [shape: f32[8,512], index: 16, kind: output, shape index: {0}]
  %s17 = inlined_call_operand.vmem [shape: f32[8,128], index: 17, kind: output, shape index: {1}]
  %18 = xla_tuple %s16, %s17
  %s19 = sld [smem:[#allocation0]]
  $region90: #{_lambda_.1} parent=0
    _
  %s21 = ssub.s32 1, %s19
  %s22 = scalar_select 0, %s21, %s19
  $region1: #{_lambda_.1} parent=0
    #allocation4 [shape = 'u8[512]{0}', space=smem, size = 0x200, scoped, tag = 'input window, operand 3, single buffered']
    #allocation5 [shape = 's32[1]{0}', space=sflag, size = 0x4, scoped, tag = 'scoped memory for _lambda_.1']
    #allocation6 [shape = 's32[1]{0}', space=sflag, size = 0x4, scoped, tag = 'scoped memory for _lambda_.1']
    #allocation7 [shape = 'u8[262144]{0}', space=vmem, size = 0x40000, scoped, tag = 'input window, operand 15, single buffered']
    %23 = vsyncpa [#allocation6], 0
    %24 = vsyncpa [#allocation5], 0
    // Predicated region
    $region2: #{_lambda_.1} parent=1 // pred_check
      _
    $region3: #{_lambda_.1} parent=1 // pred_check_branch
      %26 = sbr.rel (0) target = $region5
    $region4: #{_lambda_.1} parent=1 // pred_region
      _
    $region5: #{_lambda_.1} parent=1 // pred_fallthru
      _
    // Predicated region
    $region6: #{_lambda_.1} parent=1 // pred_check
      _
    $region7: #{_lambda_.1} parent=1 // pred_check_branch
      %28 = sbr.rel (0) target = $region9
    $region8: #{_lambda_.1} parent=1 // pred_region
      _
    $region9: #{_lambda_.1} parent=1 // pred_fallthru
      _
    // Predicated region
    $region10: #{_lambda_.1} parent=1 // pred_check
      _
    $region11: #{_lambda_.1} parent=1 // pred_check_branch
      %30 = sbr.rel (0) target = $region13
    $region12: #{_lambda_.1} parent=1 // pred_region
      _
    $region13: #{_lambda_.1} parent=1 // pred_fallthru
      _
    // Predicated region
    $region14: #{_lambda_.1} parent=1 // pred_check
      _
    $region15: #{_lambda_.1} parent=1 // pred_check_branch
      %32 = sbr.rel (0) target = $region17
    $region16: #{_lambda_.1} parent=1 // pred_region
      %s34 = ssub.s32 16, 16
      %35 = vsyncadd [#allocation6], %s34
      %s37 = sshll.u32 %s3, 4
      %s38 = int_to_ptr.vmem [resolvable:$true] %s37
      %40 = dma.vmem_to_smem %s38, 16, [#allocation4], [#allocation6]
    $region17: #{_lambda_.1} parent=1 // pred_fallthru
      _
    // Predicated region
    $region18: #{_lambda_.1} parent=1 // pred_check
      _
    $region19: #{_lambda_.1} parent=1 // pred_check_branch
      %42 = sbr.rel (0) target = $region21
    $region20: #{_lambda_.1} parent=1 // pred_region
      _
    $region21: #{_lambda_.1} parent=1 // pred_fallthru
      _
    // Predicated region
    $region22: #{_lambda_.1} parent=1 // pred_check
      _
    $region23: #{_lambda_.1} parent=1 // pred_check_branch
      %44 = sbr.rel (0) target = $region25
    $region24: #{_lambda_.1} parent=1 // pred_region
      _
    $region25: #{_lambda_.1} parent=1 // pred_fallthru
      _
    // Predicated region
    $region26: #{_lambda_.1} parent=1 // pred_check
      _
    $region27: #{_lambda_.1} parent=1 // pred_check_branch
      %46 = sbr.rel (0) target = $region29
    $region28: #{_lambda_.1} parent=1 // pred_region
      _
    $region29: #{_lambda_.1} parent=1 // pred_fallthru
      _
    // Predicated region
    $region30: #{_lambda_.1} parent=1 // pred_check
      _
    $region31: #{_lambda_.1} parent=1 // pred_check_branch
      %48 = sbr.rel (0) target = $region33
    $region32: #{_lambda_.1} parent=1 // pred_region
      _
    $region33: #{_lambda_.1} parent=1 // pred_fallthru
      _
    // Predicated region
    $region34: #{_lambda_.1} parent=1 // pred_check
      _
    $region35: #{_lambda_.1} parent=1 // pred_check_branch
      %50 = sbr.rel (0) target = $region37
    $region36: #{_lambda_.1} parent=1 // pred_region
      _
    $region37: #{_lambda_.1} parent=1 // pred_fallthru
      _
    // Predicated region
    $region38: #{_lambda_.1} parent=1 // pred_check
      _
    $region39: #{_lambda_.1} parent=1 // pred_check_branch
      %52 = sbr.rel (0) target = $region41
    $region40: #{_lambda_.1} parent=1 // pred_region
      _
    $region41: #{_lambda_.1} parent=1 // pred_fallthru
      _
    // Predicated region
    $region42: #{_lambda_.1} parent=1 // pred_check
      _
    $region43: #{_lambda_.1} parent=1 // pred_check_branch
      %54 = sbr.rel (0) target = $region45
    $region44: #{_lambda_.1} parent=1 // pred_region
      _
    $region45: #{_lambda_.1} parent=1 // pred_fallthru
      _
    // Predicated region
    $region46: #{_lambda_.1} parent=1 // pred_check
      _
    $region47: #{_lambda_.1} parent=1 // pred_check_branch
      %56 = sbr.rel (0) target = $region49
    $region48: #{_lambda_.1} parent=1 // pred_region
      _
    $region49: #{_lambda_.1} parent=1 // pred_fallthru
      _
    // Predicated region
    $region50: #{_lambda_.1} parent=1 // pred_check
      _
    $region51: #{_lambda_.1} parent=1 // pred_check_branch
      %58 = sbr.rel (0) target = $region53
    $region52: #{_lambda_.1} parent=1 // pred_region
      _
    $region53: #{_lambda_.1} parent=1 // pred_fallthru
      _
    // Predicated region
    $region54: #{_lambda_.1} parent=1 // pred_check
      _
    $region55: #{_lambda_.1} parent=1 // pred_check_branch
      %60 = sbr.rel (0) target = $region57
    $region56: #{_lambda_.1} parent=1 // pred_region
      _
    $region57: #{_lambda_.1} parent=1 // pred_fallthru
      _
    // Predicated region
    $region58: #{_lambda_.1} parent=1 // pred_check
      _
    $region59: #{_lambda_.1} parent=1 // pred_check_branch
      %62 = sbr.rel (0) target = $region61
    $region60: #{_lambda_.1} parent=1 // pred_region
      _
    $region61: #{_lambda_.1} parent=1 // pred_fallthru
      _
    // Predicated region
    $region62: #{_lambda_.1} parent=1 // pred_check
      _
    $region63: #{_lambda_.1} parent=1 // pred_check_branch
      %64 = sbr.rel (0) target = $region65
    $region64: #{_lambda_.1} parent=1 // pred_region
      %s66 = ssub.s32 8192, 8192
      %67 = vsyncadd [#allocation5], %s66
      %s68 = sshll.u32 [#allocation7], 4
      %s69 = int_to_ptr.vmem [resolvable:$true] %s68
      %74 = dma.hbm_to_vmem [thread:$0]  %s15, 8192, %s69, [#allocation5], 128, 128, 8
    $region65: #{_lambda_.1} parent=1 // pred_fallthru
      _
    // Predicated region
    $region66: #{_lambda_.1} parent=1 // pred_check
      _
    $region67: #{_lambda_.1} parent=1 // pred_check_branch
      %76 = sbr.rel (0) target = $region69
    $region68: #{_lambda_.1} parent=1 // pred_region
      %77 = dma.done [#allocation6], 16
    $region69: #{_lambda_.1} parent=1 // pred_fallthru
      _
    // Predicated region
    $region70: #{_lambda_.1} parent=1 // pred_check
      _
    $region71: #{_lambda_.1} parent=1 // pred_check_branch
      %79 = sbr.rel (0) target = $region73
    $region72: #{_lambda_.1} parent=1 // pred_region
      %80 = dma.done [#allocation5], 8192
    $region73: #{_lambda_.1} parent=1 // pred_fallthru
      _
    %81 = sfence
    %v83 = vld [vmem:[%s0] sm:$0xff]
    %v84 = vld [vmem:[%s0 + $0x8] sm:$0xff]
    %v85 = vld [vmem:[%s1] sm:$0xf]
    %v86 = vld [vmem:[%s2] sm:$0xf]
    %s87 = sld [smem:[#allocation4]]
    %v90 = vcombine.high %v83, %v83
    %v91 = vcombine.high %v84, %v84
    %vm94 = vcmask 1043456
    %v95 = vsel %vm94, %v83, 0.0
    %v96 = vsel %vm94, %v90, 0.0
    %v97 = vadd.f32 %v95, %v96
    %v98 = vsel %vm94, %v84, 0.0
    %v99 = vadd.f32 %v97, %v98
    %v100 = vsel %vm94, %v91, 0.0
    %v101 = vadd.f32 %v99, %v100
    %102 = vadd.xlane.f32.xlu0 %v101
    %v103 = vpop.xlane.xlu0 %102
    %v104 = vrcp.pop 512.0
    %v105 = vmul.f32 %v103, %v104
    %v108 = vunpack.c.l.s4 839922192
    %v109 = vunpack.c.0.s8 %v108
    %v110 = vlaneseq
    %v111 = vshrl.u32 %v110, 7
    %v112 = vsub.s32 %v109, %v111
    %v113 = vrot.slane %v105, %v112
    %v115 = vsub.f32 %v83, %v113
    %v116 = vsub.f32 %v84, %v113
    %v117 = vmul.f32 %v115, %v115
    %v118 = vmul.f32 %v116, %v116
    %v121 = vcombine.high %v117, %v117
    %v122 = vcombine.high %v118, %v118
    %v125 = vsel %vm94, %v117, 0.0
    %v126 = vsel %vm94, %v121, 0.0
    %v127 = vadd.f32 %v125, %v126
    %v128 = vsel %vm94, %v118, 0.0
    %v129 = vadd.f32 %v127, %v128
    %v130 = vsel %vm94, %v122, 0.0
    %v131 = vadd.f32 %v129, %v130
    %132 = vadd.xlane.f32.xlu0 %v131
    %v133 = vpop.xlane.xlu0 %132
    %v134 = vmul.f32 %v133, %v104
    %v135 = vadd.f32 %v134, 1e-05
    %v136 = vrsqrt.pop %v135
    %v139 = vunpack.c.l.s4 839922192
    %v140 = vunpack.c.0.s8 %v139
    %v141 = vlaneseq
    %v142 = vshrl.u32 %v141, 7
    %v143 = vsub.s32 %v140, %v142
    %v144 = vrot.slane %v136, %v143
    %v146 = vmul.f32 %v115, %v144
    %v147 = vmul.f32 %v116, %v144
    %149 = vset.pattern.permute.xlu0 0
    %150 = vperm.xlu0 %149, %v85
    %v151 = vpop.permute.xlu0 %150
    %v153 = vunpack.c.l.s4 839922192
    %v154 = vunpack.c.0.s8 %v153
    %v155 = vlaneseq
    %v156 = vshrl.u32 %v155, 7
    %v157 = vsub.s32 %v154, %v156
    %v158 = vrot.slane %v151, %v157
    %v160 = vmul.f32 %v146, %v158
    %v161 = vmul.f32 %v147, %v158
    %163 = vset.pattern.permute.xlu0 0
    %164 = vperm.xlu0 %163, %v86
    %v165 = vpop.permute.xlu0 %164
    %v167 = vunpack.c.l.s4 839922192
    %v168 = vunpack.c.0.s8 %v167
    %v169 = vlaneseq
    %v170 = vshrl.u32 %v169, 7
    %v171 = vsub.s32 %v168, %v170
    %v172 = vrot.slane %v165, %v171
    %v174 = vadd.f32 %v160, %v172
    %v175 = vadd.f32 %v161, %v172
    %vm176 = vcmp.ge.f32.partialorder %v174, 0.0
    %vm177 = vcmp.ge.f32.partialorder %v175, 0.0
    %v178 = vstv %s87
    %v179 = vmul.f32 %v178, %v174
    %v180 = vmul.f32 %v178, %v175
    %v181 = vsel %vm176, %v174, %v179
    %v182 = vsel %vm177, %v175, %v180
    %v185 = vcombine.high %v181, %v181
    %v186 = vcombine.high %v182, %v182
    %189 = vrot.lane.b32.xlu0 %v181, 17
    %v190 = vpop.permute.xlu0 %189
    %191 = vrot.lane.b32.xlu0 %v185, 17
    %v192 = vpop.permute.xlu0 %191
    %193 = vrot.lane.b32.xlu0 %v182, 17
    %v194 = vpop.permute.xlu0 %193
    %195 = vrot.lane.b32.xlu0 %v186, 17
    %v196 = vpop.permute.xlu0 %195
    %v197 = vlaneseq
    %v198 = vand.u32 %v197, 127
    %vm199 = vcmp.lt.s32.totalorder %v198, 17
    %v200 = vsel %vm199, %v194, %v196
    %v201 = vsel %vm199, %v192, %v194
    %v202 = vsel %vm199, %v190, %v192
    %v203 = vsel %vm199, %v196, %v190
    %v204 = vld [vmem:[%s5] ss:$8 sm:$0xf]
    %v206 = vlaneseq
    %v207 = vshrl.u32 %v206, 7
    %v208 = vsub.s32 0, %v207
    %v209 = vrot.slane %v204, %v208
    %v210 = vlaneseq
    %v211 = vshrl.u32 %v210, 7
    %v212 = vsub.s32 1, %v211
    %v213 = vrot.slane %v204, %v212
    %v214 = vlaneseq
    %v215 = vshrl.u32 %v214, 7
    %v216 = vsub.s32 2, %v215
    %v217 = vrot.slane %v204, %v216
    %v218 = vlaneseq
    %v219 = vshrl.u32 %v218, 7
    %v220 = vsub.s32 3, %v219
    %v221 = vrot.slane %v204, %v220
    %v226 = vmul.f32 %v203, %v209
    %v227 = vmul.f32 %v202, %v213
    %v228 = vmul.f32 %v201, %v217
    %v229 = vmul.f32 %v200, %v221
    %230 = vrot.lane.b32.xlu0 %v181, 16
    %v231 = vpop.permute.xlu0 %230
    %232 = vrot.lane.b32.xlu0 %v185, 16
    %v233 = vpop.permute.xlu0 %232
    %234 = vrot.lane.b32.xlu0 %v182, 16
    %v235 = vpop.permute.xlu0 %234
    %236 = vrot.lane.b32.xlu0 %v186, 16
    %v237 = vpop.permute.xlu0 %236
    %vm238 = vcmp.lt.s32.totalorder %v198, 16
    %v239 = vsel %vm238, %v235, %v237
    %v240 = vsel %vm238, %v233, %v235
    %v241 = vsel %vm238, %v231, %v233
    %v242 = vsel %vm238, %v237, %v231
    %s243 = scalar_lea.vmem %s5, 1
    %v244 = vld [vmem:[%s243] ss:$8 sm:$0xf]
    %v246 = vlaneseq
    %v247 = vshrl.u32 %v246, 7
    %v248 = vsub.s32 0, %v247
    %v249 = vrot.slane %v244, %v248
    %v250 = vlaneseq
    %v251 = vshrl.u32 %v250, 7
    %v252 = vsub.s32 1, %v251
    %v253 = vrot.slane %v244, %v252
    %v254 = vlaneseq
    %v255 = vshrl.u32 %v254, 7
    %v256 = vsub.s32 2, %v255
    %v257 = vrot.slane %v244, %v256
    %v258 = vlaneseq
    %v259 = vshrl.u32 %v258, 7
    %v260 = vsub.s32 3, %v259
    %v261 = vrot.slane %v244, %v260
    %v266 = vmul.f32 %v242, %v249
    %v267 = vmul.f32 %v241, %v253
    %v268 = vmul.f32 %v240, %v257
    %v269 = vmul.f32 %v239, %v261
    %270 = vrot.lane.b32.xlu0 %v181, 15
    %v271 = vpop.permute.xlu0 %270
    %272 = vrot.lane.b32.xlu0 %v185, 15
    %v273 = vpop.permute.xlu0 %272
    %274 = vrot.lane.b32.xlu0 %v182, 15
    %v275 = vpop.permute.xlu0 %274
    %276 = vrot.lane.b32.xlu0 %v186, 15
    %v277 = vpop.permute.xlu0 %276
    %vm278 = vcmp.lt.s32.totalorder %v198, 15
    %v279 = vsel %vm278, %v275, %v277
    %v280 = vsel %vm278, %v273, %v275
    %v281 = vsel %vm278, %v271, %v273
    %v282 = vsel %vm278, %v277, %v271
    %s283 = scalar_lea.vmem %s5, 2
    %v284 = vld [vmem:[%s283] ss:$8 sm:$0xf]
    %v286 = vlaneseq
    %v287 = vshrl.u32 %v286, 7
    %v288 = vsub.s32 0, %v287
    %v289 = vrot.slane %v284, %v288
    %v290 = vlaneseq
    %v291 = vshrl.u32 %v290, 7
    %v292 = vsub.s32 1, %v291
    %v293 = vrot.slane %v284, %v292
    %v294 = vlaneseq
    %v295 = vshrl.u32 %v294, 7
    %v296 = vsub.s32 2, %v295
    %v297 = vrot.slane %v284, %v296
    %v298 = vlaneseq
    %v299 = vshrl.u32 %v298, 7
    %v300 = vsub.s32 3, %v299
    %v301 = vrot.slane %v284, %v300
    %v306 = vmul.f32 %v282, %v289
    %v307 = vmul.f32 %v281, %v293
    %v308 = vmul.f32 %v280, %v297
    %v309 = vmul.f32 %v279, %v301
    %310 = vrot.lane.b32.xlu0 %v181, 1
    %v311 = vpop.permute.xlu0 %310
    %312 = vrot.lane.b32.xlu0 %v185, 1
    %v313 = vpop.permute.xlu0 %312
    %314 = vrot.lane.b32.xlu0 %v182, 1
    %v315 = vpop.permute.xlu0 %314
    %316 = vrot.lane.b32.xlu0 %v186, 1
    %v317 = vpop.permute.xlu0 %316
    %vm318 = vcmp.lt.s32.totalorder %v198, 1
    %v319 = vsel %vm318, %v315, %v317
    %v320 = vsel %vm318, %v313, %v315
    %v321 = vsel %vm318, %v311, %v313
    %v322 = vsel %vm318, %v317, %v311
    %s323 = scalar_lea.vmem %s5, 3
    %v324 = vld [vmem:[%s323] ss:$8 sm:$0xf]
    %v326 = vlaneseq
    %v327 = vshrl.u32 %v326, 7
    %v328 = vsub.s32 0, %v327
    %v329 = vrot.slane %v324, %v328
    %v330 = vlaneseq
    %v331 = vshrl.u32 %v330, 7
    %v332 = vsub.s32 1, %v331
    %v333 = vrot.slane %v324, %v332
    %v334 = vlaneseq
    %v335 = vshrl.u32 %v334, 7
    %v336 = vsub.s32 2, %v335
    %v337 = vrot.slane %v324, %v336
    %v338 = vlaneseq
    %v339 = vshrl.u32 %v338, 7
    %v340 = vsub.s32 3, %v339
    %v341 = vrot.slane %v324, %v340
    %v346 = vmul.f32 %v322, %v329
    %v347 = vmul.f32 %v321, %v333
    %v348 = vmul.f32 %v320, %v337
    %v349 = vmul.f32 %v319, %v341
    %v354 = vrot.slane %v266, 4
    %v355 = vrot.slane %v267, 4
    %v356 = vrot.slane %v268, 4
    %v357 = vrot.slane %v269, 4
    %v366 = vrot.slane %v346, 4
    %v367 = vrot.slane %v347, 4
    %v368 = vrot.slane %v348, 4
    %v369 = vrot.slane %v349, 4
    %v374 = vsel %vm94, %v226, %v354
    %v375 = vsel %vm94, %v227, %v355
    %v376 = vsel %vm94, %v228, %v356
    %v377 = vsel %vm94, %v229, %v357
    %v378 = vsel %vm94, %v306, %v366
    %v379 = vsel %vm94, %v307, %v367
    %v380 = vsel %vm94, %v308, %v368
    %v381 = vsel %vm94, %v309, %v369
    %v382 = vpack.c.bf16 %v378, %v374
    %v383 = vpack.c.bf16 %v379, %v375
    %v384 = vpack.c.bf16 %v380, %v376
    %v385 = vpack.c.bf16 %v381, %v377
    %v390 = vunpack.c.l.b16 %v382
    %v391 = vunpack.c.l.b16 %v383
    %v392 = vunpack.c.l.b16 %v384
    %v393 = vunpack.c.l.b16 %v385
    %v394 = vunpack.c.h.b16 %v382
    %v395 = vunpack.c.h.b16 %v383
    %v396 = vunpack.c.h.b16 %v384
    %v397 = vunpack.c.h.b16 %v385
    %v398 = vpack.c.b16 %v391, %v390
    %v399 = vpack.c.b16 %v393, %v392
    %v400 = vpack.c.b16 %v395, %v394
    %v401 = vpack.c.b16 %v397, %v396
    %406 = vst [vmem:[#allocation3] sm:$0xff] %v398
    %407 = vst [vmem:[#allocation3 + $0x8] sm:$0xff] %v399
    %408 = vst [vmem:[#allocation3 + $0x10] sm:$0xff] %v400
    %409 = vst [vmem:[#allocation3 + $0x18] sm:$0xff] %v401
    %410 = vrot.lane.b32.xlu0 %v181, 127
    %v411 = vpop.permute.xlu0 %410
    %412 = vrot.lane.b32.xlu0 %v185, 127
    %v413 = vpop.permute.xlu0 %412
    %414 = vrot.lane.b32.xlu0 %v182, 127
    %v415 = vpop.permute.xlu0 %414
    %416 = vrot.lane.b32.xlu0 %v186, 127
    %v417 = vpop.permute.xlu0 %416
    %vm418 = vcmp.lt.s32.totalorder %v198, 127
    %v419 = vsel %vm418, %v415, %v417
    %v420 = vsel %vm418, %v413, %v415
    %v421 = vsel %vm418, %v411, %v413
    %v422 = vsel %vm418, %v417, %v411
    %s423 = scalar_lea.vmem %s5, 5
    %v424 = vld [vmem:[%s423] ss:$8 sm:$0xf]
    %v426 = vlaneseq
    %v427 = vshrl.u32 %v426, 7
    %v428 = vsub.s32 0, %v427
    %v429 = vrot.slane %v424, %v428
    %v430 = vlaneseq
    %v431 = vshrl.u32 %v430, 7
    %v432 = vsub.s32 1, %v431
    %v433 = vrot.slane %v424, %v432
    %v434 = vlaneseq
    %v435 = vshrl.u32 %v434, 7
    %v436 = vsub.s32 2, %v435
    %v437 = vrot.slane %v424, %v436
    %v438 = vlaneseq
    %v439 = vshrl.u32 %v438, 7
    %v440 = vsub.s32 3, %v439
    %v441 = vrot.slane %v424, %v440
    %v446 = vmul.f32 %v421, %v429
    %v447 = vmul.f32 %v420, %v433
    %v448 = vmul.f32 %v419, %v437
    %v449 = vmul.f32 %v422, %v441
    %450 = vrot.lane.b32.xlu0 %v181, 113
    %v451 = vpop.permute.xlu0 %450
    %452 = vrot.lane.b32.xlu0 %v185, 113
    %v453 = vpop.permute.xlu0 %452
    %454 = vrot.lane.b32.xlu0 %v182, 113
    %v455 = vpop.permute.xlu0 %454
    %456 = vrot.lane.b32.xlu0 %v186, 113
    %v457 = vpop.permute.xlu0 %456
    %vm458 = vcmp.lt.s32.totalorder %v198, 113
    %v459 = vsel %vm458, %v455, %v457
    %v460 = vsel %vm458, %v453, %v455
    %v461 = vsel %vm458, %v451, %v453
    %v462 = vsel %vm458, %v457, %v451
    %s463 = scalar_lea.vmem %s5, 6
    %v464 = vld [vmem:[%s463] ss:$8 sm:$0xf]
    %v466 = vlaneseq
    %v467 = vshrl.u32 %v466, 7
    %v468 = vsub.s32 0, %v467
    %v469 = vrot.slane %v464, %v468
    %v470 = vlaneseq
    %v471 = vshrl.u32 %v470, 7
    %v472 = vsub.s32 1, %v471
    %v473 = vrot.slane %v464, %v472
    %v474 = vlaneseq
    %v475 = vshrl.u32 %v474, 7
    %v476 = vsub.s32 2, %v475
    %v477 = vrot.slane %v464, %v476
    %v478 = vlaneseq
    %v479 = vshrl.u32 %v478, 7
    %v480 = vsub.s32 3, %v479
    %v481 = vrot.slane %v464, %v480
    %v486 = vmul.f32 %v461, %v469
    %v487 = vmul.f32 %v460, %v473
    %v488 = vmul.f32 %v459, %v477
    %v489 = vmul.f32 %v462, %v481
    %490 = vrot.lane.b32.xlu0 %v181, 112
    %v491 = vpop.permute.xlu0 %490
    %492 = vrot.lane.b32.xlu0 %v185, 112
    %v493 = vpop.permute.xlu0 %492
    %494 = vrot.lane.b32.xlu0 %v182, 112
    %v495 = vpop.permute.xlu0 %494
    %496 = vrot.lane.b32.xlu0 %v186, 112
    %v497 = vpop.permute.xlu0 %496
    %vm498 = vcmp.lt.s32.totalorder %v198, 112
    %v499 = vsel %vm498, %v495, %v497
    %v500 = vsel %vm498, %v493, %v495
    %v501 = vsel %vm498, %v491, %v493
    %v502 = vsel %vm498, %v497, %v491
    %s503 = scalar_lea.vmem %s5, 7
    %v504 = vld [vmem:[%s503] ss:$8 sm:$0xf]
    %v506 = vlaneseq
    %v507 = vshrl.u32 %v506, 7
    %v508 = vsub.s32 0, %v507
    %v509 = vrot.slane %v504, %v508
    %v510 = vlaneseq
    %v511 = vshrl.u32 %v510, 7
    %v512 = vsub.s32 1, %v511
    %v513 = vrot.slane %v504, %v512
    %v514 = vlaneseq
    %v515 = vshrl.u32 %v514, 7
    %v516 = vsub.s32 2, %v515
    %v517 = vrot.slane %v504, %v516
    %v518 = vlaneseq
    %v519 = vshrl.u32 %v518, 7
    %v520 = vsub.s32 3, %v519
    %v521 = vrot.slane %v504, %v520
    %v526 = vmul.f32 %v501, %v509
    %v527 = vmul.f32 %v500, %v513
    %v528 = vmul.f32 %v499, %v517
    %v529 = vmul.f32 %v502, %v521
    %v534 = vrot.slane %v446, 4
    %v535 = vrot.slane %v447, 4
    %v536 = vrot.slane %v448, 4
    %v537 = vrot.slane %v449, 4
    %v546 = vrot.slane %v526, 4
    %v547 = vrot.slane %v527, 4
    %v548 = vrot.slane %v528, 4
    %v549 = vrot.slane %v529, 4
    %v554 = vsel %vm94, %v181, %v534
    %v555 = vsel %vm94, %v185, %v535
    %v556 = vsel %vm94, %v182, %v536
    %v557 = vsel %vm94, %v186, %v537
    %v558 = vsel %vm94, %v486, %v546
    %v559 = vsel %vm94, %v487, %v547
    %v560 = vsel %vm94, %v488, %v548
    %v561 = vsel %vm94, %v489, %v549
    %v562 = vpack.c.bf16 %v558, %v554
    %v563 = vpack.c.bf16 %v559, %v555
    %v564 = vpack.c.bf16 %v560, %v556
    %v565 = vpack.c.bf16 %v561, %v557
    %v570 = vunpack.c.l.b16 %v562
    %v571 = vunpack.c.l.b16 %v563
    %v572 = vunpack.c.l.b16 %v564
    %v573 = vunpack.c.l.b16 %v565
    %v574 = vunpack.c.h.b16 %v562
    %v575 = vunpack.c.h.b16 %v563
    %v576 = vunpack.c.h.b16 %v564
    %v577 = vunpack.c.h.b16 %v565
    %v578 = vpack.c.b16 %v571, %v570
    %v579 = vpack.c.b16 %v573, %v572
    %v580 = vpack.c.b16 %v575, %v574
    %v581 = vpack.c.b16 %v577, %v576
    %586 = vst [vmem:[#allocation3 + $0x20] sm:$0xff] %v578
    %587 = vst [vmem:[#allocation3 + $0x28] sm:$0xff] %v579
    %588 = vst [vmem:[#allocation3 + $0x30] sm:$0xff] %v580
    %589 = vst [vmem:[#allocation3 + $0x38] sm:$0xff] %v581
    %590 = vrot.lane.b32.xlu0 %v181, 111
    %v591 = vpop.permute.xlu0 %590
    %592 = vrot.lane.b32.xlu0 %v185, 111
    %v593 = vpop.permute.xlu0 %592
    %594 = vrot.lane.b32.xlu0 %v182, 111
    %v595 = vpop.permute.xlu0 %594
    %596 = vrot.lane.b32.xlu0 %v186, 111
    %v597 = vpop.permute.xlu0 %596
    %vm598 = vcmp.lt.s32.totalorder %v198, 111
    %v599 = vsel %vm598, %v595, %v597
    %v600 = vsel %vm598, %v593, %v595
    %v601 = vsel %vm598, %v591, %v593
    %v602 = vsel %vm598, %v597, %v591
    %s603 = scalar_lea.vmem %s5, 32
    %v604 = vld [vmem:[%s603] ss:$8 sm:$0xf]
    %v606 = vlaneseq
    %v607 = vshrl.u32 %v606, 7
    %v608 = vsub.s32 0, %v607
    %v609 = vrot.slane %v604, %v608
    %v610 = vlaneseq
    %v611 = vshrl.u32 %v610, 7
    %v612 = vsub.s32 1, %v611
    %v613 = vrot.slane %v604, %v612
    %v614 = vlaneseq
    %v615 = vshrl.u32 %v614, 7
    %v616 = vsub.s32 2, %v615
    %v617 = vrot.slane %v604, %v616
    %v618 = vlaneseq
    %v619 = vshrl.u32 %v618, 7
    %v620 = vsub.s32 3, %v619
    %v621 = vrot.slane %v604, %v620
    %v626 = vmul.f32 %v601, %v609
    %v627 = vmul.f32 %v600, %v613
    %v628 = vmul.f32 %v599, %v617
    %v629 = vmul.f32 %v602, %v621
    %v630 = vpack.c.bf16 %v626, %v626
    %v631 = vpack.c.bf16 %v627, %v627
    %v632 = vpack.c.bf16 %v628, %v628
    %v633 = vpack.c.bf16 %v629, %v629
    %v638 = vunpack.c.l.b16 %v630
    %v639 = vunpack.c.l.b16 %v631
    %v640 = vunpack.c.l.b16 %v632
    %v641 = vunpack.c.l.b16 %v633
    %v642 = vpack.c.b16 %v639, %v638
    %v643 = vpack.c.b16 %v641, %v640
    %646 = vst [vmem:[#allocation3 + $0x40] sm:$0x33] %v642
    %647 = vst [vmem:[#allocation3 + $0x48] sm:$0x33] %v643
    %v648 = vld [vmem:[%s6] sm:$0xf]
    %v649 = vld [vmem:[#allocation3] sm:$0xff]
    %v650 = vld [vmem:[#allocation3 + $0x8] sm:$0xff]
    %v651 = vld [vmem:[#allocation3 + $0x10] sm:$0xff]
    %v652 = vld [vmem:[#allocation3 + $0x18] sm:$0xff]
    %v653 = vld [vmem:[#allocation3 + $0x20] sm:$0xff]
    %v654 = vld [vmem:[#allocation3 + $0x28] sm:$0xff]
    %v655 = vld [vmem:[#allocation3 + $0x30] sm:$0xff]
    %v656 = vld [vmem:[#allocation3 + $0x38] sm:$0xff]
    %v657 = vld [vmem:[#allocation3 + $0x40] sm:$0x33]
    %v658 = vld [vmem:[#allocation3 + $0x48] sm:$0x33]
    %v659 = vld [vmem:[%s4] sm:$0xff]
    %661 = vset.pattern.permute.xlu0 0
    %662 = vperm.xlu0 %661, %v659
    %v663 = vpop.permute.xlu0 %662
    %v675 = vunpack.c.l.b16 %v649
    %v676 = vunpack.c.h.b16 %v649
    %v677 = vunpack.c.l.b16 %v650
    %v678 = vunpack.c.h.b16 %v650
    %v679 = vunpack.c.l.b16 %v651
    %v680 = vunpack.c.h.b16 %v651
    %v681 = vunpack.c.l.b16 %v652
    %v682 = vunpack.c.h.b16 %v652
    %v683 = vunpack.c.l.b16 %v653
    %v684 = vunpack.c.h.b16 %v653
    %v685 = vunpack.c.l.b16 %v654
    %v686 = vunpack.c.h.b16 %v654
    %v687 = vunpack.c.l.b16 %v655
    %v688 = vunpack.c.h.b16 %v655
    %v689 = vunpack.c.l.b16 %v656
    %v690 = vunpack.c.h.b16 %v656
    %v691 = vunpack.c.l.b16 %v657
    %v692 = vunpack.c.h.b16 %v657
    %v693 = vunpack.c.l.b16 %v658
    %v694 = vunpack.c.h.b16 %v658
    %v695 = vpack.c.b16 %v679, %v675
    %v696 = vpack.c.b16 %v680, %v676
    %v697 = vpack.c.b16 %v681, %v677
    %v698 = vpack.c.b16 %v682, %v678
    %v699 = vpack.c.b16 %v687, %v683
    %v700 = vpack.c.b16 %v688, %v684
    %v701 = vpack.c.b16 %v689, %v685
    %v702 = vpack.c.b16 %v690, %v686
    %v703 = vpack.c.b16 %v691, %v691
    %v704 = vpack.c.b16 %v692, %v692
    %v705 = vpack.c.b16 %v693, %v693
    %v706 = vpack.c.b16 %v694, %v694
    %vm715 = vcmask 293888
    %v717 = vsel %vm715, %v648, 0
    %vm719 = vcmask 1041408
    %v721 = vsel %vm719, %v703, 0
    %v724 = vsel %vm719, %v704, 0
    %v727 = vsel %vm719, %v705, 0
    %v730 = vsel %vm719, %v706, 0
    %732 = vmatprep.subr.bf16.mxu0 %v696
    %733 = vmatpush1.bf16.msra.mxu0 %v695
    %734 = vmatprep.subr.bf16.mxu0 %v700
    %735 = vmatpush1.bf16.msra.mxu0 %v699
    %736 = vmatprep.subr.bf16.mxu0 %v724
    %737 = vmatpush1.bf16.msra.mxu0 %v721
    %738 = vmatprep.subr.bf16.mxu0 0
    %739 = vmatpush1.bf16.msra.mxu0 0
    %740 = vmatprep.subr.bf16.mxu0 0
    %741 = vmatpush1.bf16.msra.mxu0 0
    %742 = vmatprep.subr.bf16.mxu0 0
    %743 = vmatpush1.bf16.msra.mxu0 0
    %744 = vmatprep.subr.bf16.mxu0 0
    %745 = vmatpush1.bf16.msra.mxu0 0
    %746 = vmatprep.subr.bf16.mxu0 0
    %747 = vmatpush1.bf16.msra.mxu0 0
    %748 = vmatprep.subr.bf16.mxu0 0
    %749 = vmatpush1.bf16.msra.mxu0 0
    %750 = vmatprep.subr.bf16.mxu0 0
    %751 = vmatpush1.bf16.msra.mxu0 0
    %752 = vmatprep.subr.bf16.mxu0 0
    %753 = vmatpush1.bf16.msra.mxu0 0
    %754 = vmatprep.subr.bf16.mxu0 0
    %755 = vmatpush1.bf16.msra.mxu0 0
    %756 = vmatprep.subr.bf16.mxu0 0
    %757 = vmatpush1.bf16.msra.mxu0 0
    %758 = vmatprep.subr.bf16.mxu0 0
    %759 = vmatpush1.bf16.msra.mxu0 0
    %760 = vmatprep.subr.bf16.mxu0 0
    %761 = vmatpush1.bf16.msra.mxu0 0
    %762 = vmatprep.subr.bf16.mxu0 0
    %763 = vmatpush1.bf16.msra.mxu0 0
    %764 = vmatprep.mubr.bf16.mxu0 0
    %765 = vmatmul.mubr.bf16.gmra.mrb[0].mxu0 %v717
    %v766 = vpop.f32.mrb[0].mxu0
    %v767 = vadd.f32 %v663, %v766
    %v768 = vpop.f32.mrb[0].mxu0
    %v769 = vadd.f32 %v663, %v768
    %v770 = vpop.f32.mrb[0].mxu0
    %v771 = vpop.f32.mrb[0].mxu0
    %772 = vdwg.mxu0
    %773 = vmatprep.subr.bf16.mxu0 %v698
    %774 = vmatpush1.bf16.msra.mxu0 %v697
    %775 = vmatprep.subr.bf16.mxu0 %v702
    %776 = vmatpush1.bf16.msra.mxu0 %v701
    %777 = vmatprep.subr.bf16.mxu0 %v730
    %778 = vmatpush1.bf16.msra.mxu0 %v727
    %779 = vmatprep.subr.bf16.mxu0 0
    %780 = vmatpush1.bf16.msra.mxu0 0
    %781 = vmatprep.subr.bf16.mxu0 0
    %782 = vmatpush1.bf16.msra.mxu0 0
    %783 = vmatprep.subr.bf16.mxu0 0
    %784 = vmatpush1.bf16.msra.mxu0 0
    %785 = vmatprep.subr.bf16.mxu0 0
    %786 = vmatpush1.bf16.msra.mxu0 0
    %787 = vmatprep.subr.bf16.mxu0 0
    %788 = vmatpush1.bf16.msra.mxu0 0
    %789 = vmatprep.subr.bf16.mxu0 0
    %790 = vmatpush1.bf16.msra.mxu0 0
    %791 = vmatprep.subr.bf16.mxu0 0
    %792 = vmatpush1.bf16.msra.mxu0 0
    %793 = vmatprep.subr.bf16.mxu0 0
    %794 = vmatpush1.bf16.msra.mxu0 0
    %795 = vmatprep.subr.bf16.mxu0 0
    %796 = vmatpush1.bf16.msra.mxu0 0
    %797 = vmatprep.subr.bf16.mxu0 0
    %798 = vmatpush1.bf16.msra.mxu0 0
    %799 = vmatprep.subr.bf16.mxu0 0
    %800 = vmatpush1.bf16.msra.mxu0 0
    %801 = vmatprep.subr.bf16.mxu0 0
    %802 = vmatpush1.bf16.msra.mxu0 0
    %803 = vmatprep.subr.bf16.mxu0 0
    %804 = vmatpush1.bf16.msra.mxu0 0
    %805 = vmatprep.mubr.bf16.mxu0 0
    %806 = vmatmul.mubr.bf16.gmra.mrb[0].mxu0 %v717
    %v807 = vpop.f32.mrb[0].mxu0
    %v808 = vadd.f32 %v663, %v807
    %v809 = vpop.f32.mrb[0].mxu0
    %v810 = vadd.f32 %v663, %v809
    %v811 = vpop.f32.mrb[0].mxu0
    %v812 = vpop.f32.mrb[0].mxu0
    %813 = vdwg.mxu0
    %814 = vst [vmem:[#allocation2] sm:$0xff] %v767
    %815 = vst [vmem:[#allocation2 + $0x8] sm:$0xff] %v769
    %816 = vst [vmem:[#allocation2 + $0x10] sm:$0xff] %v808
    %817 = vst [vmem:[#allocation2 + $0x18] sm:$0xff] %v810
    %v818 = vld [vmem:[#allocation2] sm:$0xff]
    %v819 = vld [vmem:[#allocation2 + $0x8] sm:$0xff]
    %v820 = vld [vmem:[#allocation2 + $0x10] sm:$0xff]
    %v821 = vld [vmem:[#allocation2 + $0x18] sm:$0xff]
    %v822 = vld [vmem:[%s1] sm:$0xff]
    %v823 = vld [vmem:[%s2] sm:$0xff]
    %s824 = sld [smem:[#allocation4 + $0x1]]
    %v825 = vadd.f32 %v818, %v819
    %v826 = vadd.f32 %v825, %v820
    %v827 = vadd.f32 %v826, %v821
    %828 = vadd.xlane.f32.xlu0 %v827
    %v829 = vpop.xlane.xlu0 %828
    %v830 = vmul.f32 %v829, %v104
    %v831 = vsub.f32 %v818, %v830
    %v832 = vsub.f32 %v819, %v830
    %v833 = vsub.f32 %v820, %v830
    %v834 = vsub.f32 %v821, %v830
    %v835 = vmul.f32 %v831, %v831
    %v836 = vmul.f32 %v832, %v832
    %v837 = vmul.f32 %v833, %v833
    %v838 = vmul.f32 %v834, %v834
    %v839 = vadd.f32 %v835, %v836
    %v840 = vadd.f32 %v839, %v837
    %v841 = vadd.f32 %v840, %v838
    %842 = vadd.xlane.f32.xlu0 %v841
    %v843 = vpop.xlane.xlu0 %842
    %v844 = vmul.f32 %v843, %v104
    %v845 = vadd.f32 %v844, 1e-05
    %v846 = vrsqrt.pop %v845
    %v847 = vmul.f32 %v831, %v846
    %v848 = vmul.f32 %v832, %v846
    %v849 = vmul.f32 %v833, %v846
    %v850 = vmul.f32 %v834, %v846
    %852 = vset.pattern.permute.xlu0 1
    %853 = vperm.xlu0 %852, %v822
    %v854 = vpop.permute.xlu0 %853
    %v856 = vmul.f32 %v847, %v854
    %v857 = vmul.f32 %v848, %v854
    %v858 = vmul.f32 %v849, %v854
    %v859 = vmul.f32 %v850, %v854
    %861 = vset.pattern.permute.xlu0 1
    %862 = vperm.xlu0 %861, %v823
    %v863 = vpop.permute.xlu0 %862
    %v865 = vadd.f32 %v856, %v863
    %v866 = vadd.f32 %v857, %v863
    %v867 = vadd.f32 %v858, %v863
    %v868 = vadd.f32 %v859, %v863
    %vm869 = vcmp.ge.f32.partialorder %v865, 0.0
    %vm870 = vcmp.ge.f32.partialorder %v866, 0.0
    %vm871 = vcmp.ge.f32.partialorder %v867, 0.0
    %vm872 = vcmp.ge.f32.partialorder %v868, 0.0
    %v873 = vstv %s824
    %v874 = vmul.f32 %v873, %v865
    %v875 = vmul.f32 %v873, %v866
    %v876 = vmul.f32 %v873, %v867
    %v877 = vmul.f32 %v873, %v868
    %v878 = vsel %vm869, %v865, %v874
    %v879 = vsel %vm870, %v866, %v875
    %v880 = vsel %vm871, %v867, %v876
    %v881 = vsel %vm872, %v868, %v877
    %v882 = vpack.c.bf16 %v878, %v878
    %v883 = vpack.c.bf16 %v879, %v879
    %v884 = vpack.c.bf16 %v880, %v880
    %v885 = vpack.c.bf16 %v881, %v881
    %v890 = vunpack.c.l.b16 %v882
    %v891 = vunpack.c.l.b16 %v883
    %v892 = vunpack.c.l.b16 %v884
    %v893 = vunpack.c.l.b16 %v885
    %v894 = vpack.c.b16 %v891, %v890
    %v895 = vpack.c.b16 %v893, %v892
    %898 = vst [vmem:[#allocation3] sm:$0xff] %v894
    %899 = vst [vmem:[#allocation3 + $0x8] sm:$0xff] %v895
    %v900 = vld [vmem:[%s7] sm:$0xf]
    %v901 = vld [vmem:[#allocation3] sm:$0xff]
    %v902 = vld [vmem:[#allocation3 + $0x8] sm:$0xff]
    %v903 = vld [vmem:[%s4] sm:$0xff]
    %905 = vset.pattern.permute.xlu0 1
    %906 = vperm.xlu0 %905, %v903
    %v907 = vpop.permute.xlu0 %906
    %v911 = vunpack.c.l.b16 %v901
    %v912 = vunpack.c.h.b16 %v901
    %v913 = vunpack.c.l.b16 %v902
    %v914 = vunpack.c.h.b16 %v902
    %v915 = vpack.c.b16 %v911, %v911
    %v916 = vpack.c.b16 %v912, %v912
    %v917 = vpack.c.b16 %v913, %v913
    %v918 = vpack.c.b16 %v914, %v914
    %vm919 = vcmask 64512
    %v921 = vsel %vm919, %v900, 0
    %v924 = vsel %vm94, %v915, 0
    %v927 = vsel %vm94, %v916, 0
    %v930 = vsel %vm94, %v917, 0
    %v933 = vsel %vm94, %v918, 0
    %935 = vmatprep.subr.bf16.mxu0 %v927
    %936 = vmatpush1.bf16.msra.mxu0 %v924
    %937 = vmatprep.subr.bf16.mxu0 0
    %938 = vmatpush1.bf16.msra.mxu0 0
    %939 = vmatprep.subr.bf16.mxu0 0
    %940 = vmatpush1.bf16.msra.mxu0 0
    %941 = vmatprep.subr.bf16.mxu0 0
    %942 = vmatpush1.bf16.msra.mxu0 0
    %943 = vmatprep.subr.bf16.mxu0 0
    %944 = vmatpush1.bf16.msra.mxu0 0
    %945 = vmatprep.subr.bf16.mxu0 0
    %946 = vmatpush1.bf16.msra.mxu0 0
    %947 = vmatprep.subr.bf16.mxu0 0
    %948 = vmatpush1.bf16.msra.mxu0 0
    %949 = vmatprep.subr.bf16.mxu0 0
    %950 = vmatpush1.bf16.msra.mxu0 0
    %951 = vmatprep.subr.bf16.mxu0 0
    %952 = vmatpush1.bf16.msra.mxu0 0
    %953 = vmatprep.subr.bf16.mxu0 0
    %954 = vmatpush1.bf16.msra.mxu0 0
    %955 = vmatprep.subr.bf16.mxu0 0
    %956 = vmatpush1.bf16.msra.mxu0 0
    %957 = vmatprep.subr.bf16.mxu0 0
    %958 = vmatpush1.bf16.msra.mxu0 0
    %959 = vmatprep.subr.bf16.mxu0 0
    %960 = vmatpush1.bf16.msra.mxu0 0
    %961 = vmatprep.subr.bf16.mxu0 0
    %962 = vmatpush1.bf16.msra.mxu0 0
    %963 = vmatprep.subr.bf16.mxu0 0
    %964 = vmatpush1.bf16.msra.mxu0 0
    %965 = vmatprep.subr.bf16.mxu0 0
    %966 = vmatpush1.bf16.msra.mxu0 0
    %967 = vmatprep.mubr.bf16.mxu0 0
    %968 = vmatmul.mubr.bf16.gmra.mrb[0].mxu0 %v921
    %v969 = vpop.f32.mrb[0].mxu0
    %v970 = vadd.f32 %v907, %v969
    %v971 = vpop.f32.mrb[0].mxu0
    %v972 = vadd.f32 %v907, %v971
    %v973 = vpop.f32.mrb[0].mxu0
    %v974 = vpop.f32.mrb[0].mxu0
    %975 = vdwg.mxu0
    %976 = vmatprep.subr.bf16.mxu0 %v933
    %977 = vmatpush1.bf16.msra.mxu0 %v930
    %978 = vmatprep.subr.bf16.mxu0 0
    %979 = vmatpush1.bf16.msra.mxu0 0
    %980 = vmatprep.subr.bf16.mxu0 0
    %981 = vmatpush1.bf16.msra.mxu0 0
    %982 = vmatprep.subr.bf16.mxu0 0
    %983 = vmatpush1.bf16.msra.mxu0 0
    %984 = vmatprep.subr.bf16.mxu0 0
    %985 = vmatpush1.bf16.msra.mxu0 0
    %986 = vmatprep.subr.bf16.mxu0 0
    %987 = vmatpush1.bf16.msra.mxu0 0
    %988 = vmatprep.subr.bf16.mxu0 0
    %989 = vmatpush1.bf16.msra.mxu0 0
    %990 = vmatprep.subr.bf16.mxu0 0
    %991 = vmatpush1.bf16.msra.mxu0 0
    %992 = vmatprep.subr.bf16.mxu0 0
    %993 = vmatpush1.bf16.msra.mxu0 0
    %994 = vmatprep.subr.bf16.mxu0 0
    %995 = vmatpush1.bf16.msra.mxu0 0
    %996 = vmatprep.subr.bf16.mxu0 0
    %997 = vmatpush1.bf16.msra.mxu0 0
    %998 = vmatprep.subr.bf16.mxu0 0
    %999 = vmatpush1.bf16.msra.mxu0 0
    %1000 = vmatprep.subr.bf16.mxu0 0
    %1001 = vmatpush1.bf16.msra.mxu0 0
    %1002 = vmatprep.subr.bf16.mxu0 0
    %1003 = vmatpush1.bf16.msra.mxu0 0
    %1004 = vmatprep.subr.bf16.mxu0 0
    %1005 = vmatpush1.bf16.msra.mxu0 0
    %1006 = vmatprep.subr.bf16.mxu0 0
    %1007 = vmatpush1.bf16.msra.mxu0 0
    %1008 = vmatprep.mubr.bf16.mxu0 0
    %1009 = vmatmul.mubr.bf16.gmra.mrb[0].mxu0 %v921
    %v1010 = vpop.f32.mrb[0].mxu0
    %v1011 = vadd.f32 %v907, %v1010
    %v1012 = vpop.f32.mrb[0].mxu0
    %v1013 = vadd.f32 %v907, %v1012
    %v1014 = vpop.f32.mrb[0].mxu0
    %v1015 = vpop.f32.mrb[0].mxu0
    %1016 = vdwg.mxu0
    %s1017 = scalar_lea.vmem [#allocation2], 32
    %1018 = vst [vmem:[%s1017] sm:$0xff] %v970
    %1019 = vst [vmem:[%s1017 + $0x8] sm:$0xff] %v972
    %1020 = vst [vmem:[%s1017 + $0x10] sm:$0xff] %v1011
    %1021 = vst [vmem:[%s1017 + $0x18] sm:$0xff] %v1013
    %v1022 = vld [vmem:[%s1017] sm:$0xff]
    %v1023 = vld [vmem:[%s1017 + $0x8] sm:$0xff]
    %v1024 = vld [vmem:[%s1017 + $0x10] sm:$0xff]
    %v1025 = vld [vmem:[%s1017 + $0x18] sm:$0xff]
    %v1026 = vld [vmem:[%s1] sm:$0xff]
    %v1027 = vld [vmem:[%s2] sm:$0xff]
    %s1028 = sld [smem:[#allocation4 + $0x2]]
    %v1029 = vadd.f32 %v1022, %v1023
    %v1030 = vadd.f32 %v1029, %v1024
    %v1031 = vadd.f32 %v1030, %v1025
    %1032 = vadd.xlane.f32.xlu0 %v1031
    %v1033 = vpop.xlane.xlu0 %1032
    %v1034 = vmul.f32 %v1033, %v104
    %v1035 = vsub.f32 %v1022, %v1034
    %v1036 = vsub.f32 %v1023, %v1034
    %v1037 = vsub.f32 %v1024, %v1034
    %v1038 = vsub.f32 %v1025, %v1034
    %v1039 = vmul.f32 %v1035, %v1035
    %v1040 = vmul.f32 %v1036, %v1036
    %v1041 = vmul.f32 %v1037, %v1037
    %v1042 = vmul.f32 %v1038, %v1038
    %v1043 = vadd.f32 %v1039, %v1040
    %v1044 = vadd.f32 %v1043, %v1041
    %v1045 = vadd.f32 %v1044, %v1042
    %1046 = vadd.xlane.f32.xlu0 %v1045
    %v1047 = vpop.xlane.xlu0 %1046
    %v1048 = vmul.f32 %v1047, %v104
    %v1049 = vadd.f32 %v1048, 1e-05
    %v1050 = vrsqrt.pop %v1049
    %v1051 = vmul.f32 %v1035, %v1050
    %v1052 = vmul.f32 %v1036, %v1050
    %v1053 = vmul.f32 %v1037, %v1050
    %v1054 = vmul.f32 %v1038, %v1050
    %1056 = vset.pattern.permute.xlu0 2
    %1057 = vperm.xlu0 %1056, %v1026
    %v1058 = vpop.permute.xlu0 %1057
    %v1060 = vmul.f32 %v1051, %v1058
    %v1061 = vmul.f32 %v1052, %v1058
    %v1062 = vmul.f32 %v1053, %v1058
    %v1063 = vmul.f32 %v1054, %v1058
    %1065 = vset.pattern.permute.xlu0 2
    %1066 = vperm.xlu0 %1065, %v1027
    %v1067 = vpop.permute.xlu0 %1066
    %v1069 = vadd.f32 %v1060, %v1067
    %v1070 = vadd.f32 %v1061, %v1067
    %v1071 = vadd.f32 %v1062, %v1067
    %v1072 = vadd.f32 %v1063, %v1067
    %vm1073 = vcmp.ge.f32.partialorder %v1069, 0.0
    %vm1074 = vcmp.ge.f32.partialorder %v1070, 0.0
    %vm1075 = vcmp.ge.f32.partialorder %v1071, 0.0
    %vm1076 = vcmp.ge.f32.partialorder %v1072, 0.0
    %v1077 = vstv %s1028
    %v1078 = vmul.f32 %v1077, %v1069
    %v1079 = vmul.f32 %v1077, %v1070
    %v1080 = vmul.f32 %v1077, %v1071
    %v1081 = vmul.f32 %v1077, %v1072
    %v1082 = vsel %vm1073, %v1069, %v1078
    %v1083 = vsel %vm1074, %v1070, %v1079
    %v1084 = vsel %vm1075, %v1071, %v1080
    %v1085 = vsel %vm1076, %v1072, %v1081
    %1086 = vrot.lane.b32.xlu0 %v1082, 17
    %v1087 = vpop.permute.xlu0 %1086
    %1088 = vrot.lane.b32.xlu0 %v1083, 17
    %v1089 = vpop.permute.xlu0 %1088
    %1090 = vrot.lane.b32.xlu0 %v1084, 17
    %v1091 = vpop.permute.xlu0 %1090
    %1092 = vrot.lane.b32.xlu0 %v1085, 17
    %v1093 = vpop.permute.xlu0 %1092
    %v1094 = vsel %vm199, %v1091, %v1093
    %v1095 = vsel %vm199, %v1089, %v1091
    %v1096 = vsel %vm199, %v1087, %v1089
    %v1097 = vsel %vm199, %v1093, %v1087
    %v1098 = vld [vmem:[%s5] ss:$8 sm:$0xf]
    %v1100 = vlaneseq
    %v1101 = vshrl.u32 %v1100, 7
    %v1102 = vsub.s32 0, %v1101
    %v1103 = vrot.slane %v1098, %v1102
    %v1104 = vlaneseq
    %v1105 = vshrl.u32 %v1104, 7
    %v1106 = vsub.s32 1, %v1105
    %v1107 = vrot.slane %v1098, %v1106
    %v1108 = vlaneseq
    %v1109 = vshrl.u32 %v1108, 7
    %v1110 = vsub.s32 2, %v1109
    %v1111 = vrot.slane %v1098, %v1110
    %v1112 = vlaneseq
    %v1113 = vshrl.u32 %v1112, 7
    %v1114 = vsub.s32 3, %v1113
    %v1115 = vrot.slane %v1098, %v1114
    %v1120 = vmul.f32 %v1097, %v1103
    %v1121 = vmul.f32 %v1096, %v1107
    %v1122 = vmul.f32 %v1095, %v1111
    %v1123 = vmul.f32 %v1094, %v1115
    %1124 = vrot.lane.b32.xlu0 %v1082, 16
    %v1125 = vpop.permute.xlu0 %1124
    %1126 = vrot.lane.b32.xlu0 %v1083, 16
    %v1127 = vpop.permute.xlu0 %1126
    %1128 = vrot.lane.b32.xlu0 %v1084, 16
    %v1129 = vpop.permute.xlu0 %1128
    %1130 = vrot.lane.b32.xlu0 %v1085, 16
    %v1131 = vpop.permute.xlu0 %1130
    %v1132 = vsel %vm238, %v1129, %v1131
    %v1133 = vsel %vm238, %v1127, %v1129
    %v1134 = vsel %vm238, %v1125, %v1127
    %v1135 = vsel %vm238, %v1131, %v1125
    %v1136 = vld [vmem:[%s243] ss:$8 sm:$0xf]
    %v1138 = vlaneseq
    %v1139 = vshrl.u32 %v1138, 7
    %v1140 = vsub.s32 0, %v1139
    %v1141 = vrot.slane %v1136, %v1140
    %v1142 = vlaneseq
    %v1143 = vshrl.u32 %v1142, 7
    %v1144 = vsub.s32 1, %v1143
    %v1145 = vrot.slane %v1136, %v1144
    %v1146 = vlaneseq
    %v1147 = vshrl.u32 %v1146, 7
    %v1148 = vsub.s32 2, %v1147
    %v1149 = vrot.slane %v1136, %v1148
    %v1150 = vlaneseq
    %v1151 = vshrl.u32 %v1150, 7
    %v1152 = vsub.s32 3, %v1151
    %v1153 = vrot.slane %v1136, %v1152
    %v1158 = vmul.f32 %v1135, %v1141
    %v1159 = vmul.f32 %v1134, %v1145
    %v1160 = vmul.f32 %v1133, %v1149
    %v1161 = vmul.f32 %v1132, %v1153
    %v1162 = vpack.c.bf16 %v1158, %v1120
    %v1163 = vpack.c.bf16 %v1159, %v1121
    %v1164 = vpack.c.bf16 %v1160, %v1122
    %v1165 = vpack.c.bf16 %v1161, %v1123
    %v1170 = vunpack.c.l.b16 %v1162
    %v1171 = vunpack.c.l.b16 %v1163
    %v1172 = vunpack.c.l.b16 %v1164
    %v1173 = vunpack.c.l.b16 %v1165
    %v1174 = vunpack.c.h.b16 %v1162
    %v1175 = vunpack.c.h.b16 %v1163
    %v1176 = vunpack.c.h.b16 %v1164
    %v1177 = vunpack.c.h.b16 %v1165
    %v1178 = vpack.c.b16 %v1171, %v1170
    %v1179 = vpack.c.b16 %v1173, %v1172
    %v1180 = vpack.c.b16 %v1175, %v1174
    %v1181 = vpack.c.b16 %v1177, %v1176
    %1186 = vst [vmem:[#allocation3] sm:$0xff] %v1178
    %1187 = vst [vmem:[#allocation3 + $0x8] sm:$0xff] %v1179
    %1188 = vst [vmem:[#allocation3 + $0x10] sm:$0xff] %v1180
    %1189 = vst [vmem:[#allocation3 + $0x18] sm:$0xff] %v1181
    %1190 = vrot.lane.b32.xlu0 %v1082, 15
    %v1191 = vpop.permute.xlu0 %1190
    %1192 = vrot.lane.b32.xlu0 %v1083, 15
    %v1193 = vpop.permute.xlu0 %1192
    %1194 = vrot.lane.b32.xlu0 %v1084, 15
    %v1195 = vpop.permute.xlu0 %1194
    %1196 = vrot.lane.b32.xlu0 %v1085, 15
    %v1197 = vpop.permute.xlu0 %1196
    %v1198 = vsel %vm278, %v1195, %v1197
    %v1199 = vsel %vm278, %v1193, %v1195
    %v1200 = vsel %vm278, %v1191, %v1193
    %v1201 = vsel %vm278, %v1197, %v1191
    %v1202 = vld [vmem:[%s283] ss:$8 sm:$0xf]
    %v1204 = vlaneseq
    %v1205 = vshrl.u32 %v1204, 7
    %v1206 = vsub.s32 0, %v1205
    %v1207 = vrot.slane %v1202, %v1206
    %v1208 = vlaneseq
    %v1209 = vshrl.u32 %v1208, 7
    %v1210 = vsub.s32 1, %v1209
    %v1211 = vrot.slane %v1202, %v1210
    %v1212 = vlaneseq
    %v1213 = vshrl.u32 %v1212, 7
    %v1214 = vsub.s32 2, %v1213
    %v1215 = vrot.slane %v1202, %v1214
    %v1216 = vlaneseq
    %v1217 = vshrl.u32 %v1216, 7
    %v1218 = vsub.s32 3, %v1217
    %v1219 = vrot.slane %v1202, %v1218
    %v1224 = vmul.f32 %v1201, %v1207
    %v1225 = vmul.f32 %v1200, %v1211
    %v1226 = vmul.f32 %v1199, %v1215
    %v1227 = vmul.f32 %v1198, %v1219
    %1228 = vrot.lane.b32.xlu0 %v1082, 1
    %v1229 = vpop.permute.xlu0 %1228
    %1230 = vrot.lane.b32.xlu0 %v1083, 1
    %v1231 = vpop.permute.xlu0 %1230
    %1232 = vrot.lane.b32.xlu0 %v1084, 1
    %v1233 = vpop.permute.xlu0 %1232
    %1234 = vrot.lane.b32.xlu0 %v1085, 1
    %v1235 = vpop.permute.xlu0 %1234
    %v1236 = vsel %vm318, %v1233, %v1235
    %v1237 = vsel %vm318, %v1231, %v1233
    %v1238 = vsel %vm318, %v1229, %v1231
    %v1239 = vsel %vm318, %v1235, %v1229
    %v1240 = vld [vmem:[%s323] ss:$8 sm:$0xf]
    %v1242 = vlaneseq
    %v1243 = vshrl.u32 %v1242, 7
    %v1244 = vsub.s32 0, %v1243
    %v1245 = vrot.slane %v1240, %v1244
    %v1246 = vlaneseq
    %v1247 = vshrl.u32 %v1246, 7
    %v1248 = vsub.s32 1, %v1247
    %v1249 = vrot.slane %v1240, %v1248
    %v1250 = vlaneseq
    %v1251 = vshrl.u32 %v1250, 7
    %v1252 = vsub.s32 2, %v1251
    %v1253 = vrot.slane %v1240, %v1252
    %v1254 = vlaneseq
    %v1255 = vshrl.u32 %v1254, 7
    %v1256 = vsub.s32 3, %v1255
    %v1257 = vrot.slane %v1240, %v1256
    %v1262 = vmul.f32 %v1239, %v1245
    %v1263 = vmul.f32 %v1238, %v1249
    %v1264 = vmul.f32 %v1237, %v1253
    %v1265 = vmul.f32 %v1236, %v1257
    %v1266 = vpack.c.bf16 %v1262, %v1224
    %v1267 = vpack.c.bf16 %v1263, %v1225
    %v1268 = vpack.c.bf16 %v1264, %v1226
    %v1269 = vpack.c.bf16 %v1265, %v1227
    %v1274 = vunpack.c.l.b16 %v1266
    %v1275 = vunpack.c.l.b16 %v1267
    %v1276 = vunpack.c.l.b16 %v1268
    %v1277 = vunpack.c.l.b16 %v1269
    %v1278 = vunpack.c.h.b16 %v1266
    %v1279 = vunpack.c.h.b16 %v1267
    %v1280 = vunpack.c.h.b16 %v1268
    %v1281 = vunpack.c.h.b16 %v1269
    %v1282 = vpack.c.b16 %v1275, %v1274
    %v1283 = vpack.c.b16 %v1277, %v1276
    %v1284 = vpack.c.b16 %v1279, %v1278
    %v1285 = vpack.c.b16 %v1281, %v1280
    %1290 = vst [vmem:[#allocation3 + $0x20] sm:$0xff] %v1282
    %1291 = vst [vmem:[#allocation3 + $0x28] sm:$0xff] %v1283
    %1292 = vst [vmem:[#allocation3 + $0x30] sm:$0xff] %v1284
    %1293 = vst [vmem:[#allocation3 + $0x38] sm:$0xff] %v1285
    %1294 = vrot.lane.b32.xlu0 %v1082, 127
    %v1295 = vpop.permute.xlu0 %1294
    %1296 = vrot.lane.b32.xlu0 %v1083, 127
    %v1297 = vpop.permute.xlu0 %1296
    %1298 = vrot.lane.b32.xlu0 %v1084, 127
    %v1299 = vpop.permute.xlu0 %1298
    %1300 = vrot.lane.b32.xlu0 %v1085, 127
    %v1301 = vpop.permute.xlu0 %1300
    %v1302 = vsel %vm418, %v1299, %v1301
    %v1303 = vsel %vm418, %v1297, %v1299
    %v1304 = vsel %vm418, %v1295, %v1297
    %v1305 = vsel %vm418, %v1301, %v1295
    %v1306 = vld [vmem:[%s423] ss:$8 sm:$0xf]
    %v1308 = vlaneseq
    %v1309 = vshrl.u32 %v1308, 7
    %v1310 = vsub.s32 0, %v1309
    %v1311 = vrot.slane %v1306, %v1310
    %v1312 = vlaneseq
    %v1313 = vshrl.u32 %v1312, 7
    %v1314 = vsub.s32 1, %v1313
    %v1315 = vrot.slane %v1306, %v1314
    %v1316 = vlaneseq
    %v1317 = vshrl.u32 %v1316, 7
    %v1318 = vsub.s32 2, %v1317
    %v1319 = vrot.slane %v1306, %v1318
    %v1320 = vlaneseq
    %v1321 = vshrl.u32 %v1320, 7
    %v1322 = vsub.s32 3, %v1321
    %v1323 = vrot.slane %v1306, %v1322
    %v1328 = vmul.f32 %v1304, %v1311
    %v1329 = vmul.f32 %v1303, %v1315
    %v1330 = vmul.f32 %v1302, %v1319
    %v1331 = vmul.f32 %v1305, %v1323
    %v1332 = vpack.c.bf16 %v1328, %v1082
    %v1333 = vpack.c.bf16 %v1329, %v1083
    %v1334 = vpack.c.bf16 %v1330, %v1084
    %v1335 = vpack.c.bf16 %v1331, %v1085
    %v1340 = vunpack.c.l.b16 %v1332
    %v1341 = vunpack.c.l.b16 %v1333
    %v1342 = vunpack.c.l.b16 %v1334
    %v1343 = vunpack.c.l.b16 %v1335
    %v1344 = vunpack.c.h.b16 %v1332
    %v1345 = vunpack.c.h.b16 %v1333
    %v1346 = vunpack.c.h.b16 %v1334
    %v1347 = vunpack.c.h.b16 %v1335
    %v1348 = vpack.c.b16 %v1341, %v1340
    %v1349 = vpack.c.b16 %v1343, %v1342
    %v1350 = vpack.c.b16 %v1345, %v1344
    %v1351 = vpack.c.b16 %v1347, %v1346
    %1356 = vst [vmem:[#allocation3 + $0x40] sm:$0xff] %v1348
    %1357 = vst [vmem:[#allocation3 + $0x48] sm:$0xff] %v1349
    %1358 = vst [vmem:[#allocation3 + $0x50] sm:$0xff] %v1350
    %1359 = vst [vmem:[#allocation3 + $0x58] sm:$0xff] %v1351
    %1360 = vrot.lane.b32.xlu0 %v1082, 113
    %v1361 = vpop.permute.xlu0 %1360
    %1362 = vrot.lane.b32.xlu0 %v1083, 113
    %v1363 = vpop.permute.xlu0 %1362
    %1364 = vrot.lane.b32.xlu0 %v1084, 113
    %v1365 = vpop.permute.xlu0 %1364
    %1366 = vrot.lane.b32.xlu0 %v1085, 113
    %v1367 = vpop.permute.xlu0 %1366
    %v1368 = vsel %vm458, %v1365, %v1367
    %v1369 = vsel %vm458, %v1363, %v1365
    %v1370 = vsel %vm458, %v1361, %v1363
    %v1371 = vsel %vm458, %v1367, %v1361
    %v1372 = vld [vmem:[%s463] ss:$8 sm:$0xf]
    %v1374 = vlaneseq
    %v1375 = vshrl.u32 %v1374, 7
    %v1376 = vsub.s32 0, %v1375
    %v1377 = vrot.slane %v1372, %v1376
    %v1378 = vlaneseq
    %v1379 = vshrl.u32 %v1378, 7
    %v1380 = vsub.s32 1, %v1379
    %v1381 = vrot.slane %v1372, %v1380
    %v1382 = vlaneseq
    %v1383 = vshrl.u32 %v1382, 7
    %v1384 = vsub.s32 2, %v1383
    %v1385 = vrot.slane %v1372, %v1384
    %v1386 = vlaneseq
    %v1387 = vshrl.u32 %v1386, 7
    %v1388 = vsub.s32 3, %v1387
    %v1389 = vrot.slane %v1372, %v1388
    %v1394 = vmul.f32 %v1370, %v1377
    %v1395 = vmul.f32 %v1369, %v1381
    %v1396 = vmul.f32 %v1368, %v1385
    %v1397 = vmul.f32 %v1371, %v1389
    %1398 = vrot.lane.b32.xlu0 %v1082, 112
    %v1399 = vpop.permute.xlu0 %1398
    %1400 = vrot.lane.b32.xlu0 %v1083, 112
    %v1401 = vpop.permute.xlu0 %1400
    %1402 = vrot.lane.b32.xlu0 %v1084, 112
    %v1403 = vpop.permute.xlu0 %1402
    %1404 = vrot.lane.b32.xlu0 %v1085, 112
    %v1405 = vpop.permute.xlu0 %1404
    %v1406 = vsel %vm498, %v1403, %v1405
    %v1407 = vsel %vm498, %v1401, %v1403
    %v1408 = vsel %vm498, %v1399, %v1401
    %v1409 = vsel %vm498, %v1405, %v1399
    %v1410 = vld [vmem:[%s503] ss:$8 sm:$0xf]
    %v1412 = vlaneseq
    %v1413 = vshrl.u32 %v1412, 7
    %v1414 = vsub.s32 0, %v1413
    %v1415 = vrot.slane %v1410, %v1414
    %v1416 = vlaneseq
    %v1417 = vshrl.u32 %v1416, 7
    %v1418 = vsub.s32 1, %v1417
    %v1419 = vrot.slane %v1410, %v1418
    %v1420 = vlaneseq
    %v1421 = vshrl.u32 %v1420, 7
    %v1422 = vsub.s32 2, %v1421
    %v1423 = vrot.slane %v1410, %v1422
    %v1424 = vlaneseq
    %v1425 = vshrl.u32 %v1424, 7
    %v1426 = vsub.s32 3, %v1425
    %v1427 = vrot.slane %v1410, %v1426
    %v1432 = vmul.f32 %v1408, %v1415
    %v1433 = vmul.f32 %v1407, %v1419
    %v1434 = vmul.f32 %v1406, %v1423
    %v1435 = vmul.f32 %v1409, %v1427
    %v1436 = vpack.c.bf16 %v1432, %v1394
    %v1437 = vpack.c.bf16 %v1433, %v1395
    %v1438 = vpack.c.bf16 %v1434, %v1396
    %v1439 = vpack.c.bf16 %v1435, %v1397
    %v1444 = vunpack.c.l.b16 %v1436
    %v1445 = vunpack.c.l.b16 %v1437
    %v1446 = vunpack.c.l.b16 %v1438
    %v1447 = vunpack.c.l.b16 %v1439
    %v1448 = vunpack.c.h.b16 %v1436
    %v1449 = vunpack.c.h.b16 %v1437
    %v1450 = vunpack.c.h.b16 %v1438
    %v1451 = vunpack.c.h.b16 %v1439
    %v1452 = vpack.c.b16 %v1445, %v1444
    %v1453 = vpack.c.b16 %v1447, %v1446
    %v1454 = vpack.c.b16 %v1449, %v1448
    %v1455 = vpack.c.b16 %v1451, %v1450
    %1460 = vst [vmem:[#allocation3 + $0x60] sm:$0xff] %v1452
    %1461 = vst [vmem:[#allocation3 + $0x68] sm:$0xff] %v1453
    %1462 = vst [vmem:[#allocation3 + $0x70] sm:$0xff] %v1454
    %1463 = vst [vmem:[#allocation3 + $0x78] sm:$0xff] %v1455
    %1464 = vrot.lane.b32.xlu0 %v1082, 111
    %v1465 = vpop.permute.xlu0 %1464
    %1466 = vrot.lane.b32.xlu0 %v1083, 111
    %v1467 = vpop.permute.xlu0 %1466
    %1468 = vrot.lane.b32.xlu0 %v1084, 111
    %v1469 = vpop.permute.xlu0 %1468
    %1470 = vrot.lane.b32.xlu0 %v1085, 111
    %v1471 = vpop.permute.xlu0 %1470
    %v1472 = vsel %vm598, %v1469, %v1471
    %v1473 = vsel %vm598, %v1467, %v1469
    %v1474 = vsel %vm598, %v1465, %v1467
    %v1475 = vsel %vm598, %v1471, %v1465
    %v1476 = vld [vmem:[%s603] ss:$8 sm:$0xf]
    %v1478 = vlaneseq
    %v1479 = vshrl.u32 %v1478, 7
    %v1480 = vsub.s32 0, %v1479
    %v1481 = vrot.slane %v1476, %v1480
    %v1482 = vlaneseq
    %v1483 = vshrl.u32 %v1482, 7
    %v1484 = vsub.s32 1, %v1483
    %v1485 = vrot.slane %v1476, %v1484
    %v1486 = vlaneseq
    %v1487 = vshrl.u32 %v1486, 7
    %v1488 = vsub.s32 2, %v1487
    %v1489 = vrot.slane %v1476, %v1488
    %v1490 = vlaneseq
    %v1491 = vshrl.u32 %v1490, 7
    %v1492 = vsub.s32 3, %v1491
    %v1493 = vrot.slane %v1476, %v1492
    %v1498 = vmul.f32 %v1474, %v1481
    %v1499 = vmul.f32 %v1473, %v1485
    %v1500 = vmul.f32 %v1472, %v1489
    %v1501 = vmul.f32 %v1475, %v1493
    %v1502 = vpack.c.bf16 %v1498, %v1498
    %v1503 = vpack.c.bf16 %v1499, %v1499
    %v1504 = vpack.c.bf16 %v1500, %v1500
    %v1505 = vpack.c.bf16 %v1501, %v1501
    %v1510 = vunpack.c.l.b16 %v1502
    %v1511 = vunpack.c.l.b16 %v1503
    %v1512 = vunpack.c.l.b16 %v1504
    %v1513 = vunpack.c.l.b16 %v1505
    %v1514 = vpack.c.b16 %v1511, %v1510
    %v1515 = vpack.c.b16 %v1513, %v1512
    %1518 = vst [vmem:[#allocation3 + $0x80] sm:$0xff] %v1514
    %1519 = vst [vmem:[#allocation3 + $0x88] sm:$0xff] %v1515
    %v1520 = vld [vmem:[%s8] sm:$0xf]
    %v1521 = vld [vmem:[#allocation3] sm:$0xff]
    %v1522 = vld [vmem:[#allocation3 + $0x8] sm:$0xff]
    %v1523 = vld [vmem:[#allocation3 + $0x10] sm:$0xff]
    %v1524 = vld [vmem:[#allocation3 + $0x18] sm:$0xff]
    %v1525 = vld [vmem:[#allocation3 + $0x20] sm:$0xff]
    %v1526 = vld [vmem:[#allocation3 + $0x28] sm:$0xff]
    %v1527 = vld [vmem:[#allocation3 + $0x30] sm:$0xff]
    %v1528 = vld [vmem:[#allocation3 + $0x38] sm:$0xff]
    %v1529 = vld [vmem:[#allocation3 + $0x40] sm:$0xff]
    %v1530 = vld [vmem:[#allocation3 + $0x48] sm:$0xff]
    %v1531 = vld [vmem:[#allocation3 + $0x50] sm:$0xff]
    %v1532 = vld [vmem:[#allocation3 + $0x58] sm:$0xff]
    %v1533 = vld [vmem:[#allocation3 + $0x60] sm:$0xff]
    %v1534 = vld [vmem:[#allocation3 + $0x68] sm:$0xff]
    %v1535 = vld [vmem:[#allocation3 + $0x70] sm:$0xff]
    %v1536 = vld [vmem:[#allocation3 + $0x78] sm:$0xff]
    %v1537 = vld [vmem:[#allocation3 + $0x80] sm:$0xff]
    %v1538 = vld [vmem:[#allocation3 + $0x88] sm:$0xff]
    %v1539 = vld [vmem:[%s4] sm:$0xff]
    %1541 = vset.pattern.permute.xlu0 2
    %1542 = vperm.xlu0 %1541, %v1539
    %v1543 = vpop.permute.xlu0 %1542
    %v1563 = vunpack.c.l.b16 %v1521
    %v1564 = vunpack.c.h.b16 %v1521
    %v1565 = vunpack.c.l.b16 %v1522
    %v1566 = vunpack.c.h.b16 %v1522
    %v1567 = vunpack.c.l.b16 %v1523
    %v1568 = vunpack.c.h.b16 %v1523
    %v1569 = vunpack.c.l.b16 %v1524
    %v1570 = vunpack.c.h.b16 %v1524
    %v1571 = vunpack.c.l.b16 %v1525
    %v1572 = vunpack.c.h.b16 %v1525
    %v1573 = vunpack.c.l.b16 %v1526
    %v1574 = vunpack.c.h.b16 %v1526
    %v1575 = vunpack.c.l.b16 %v1527
    %v1576 = vunpack.c.h.b16 %v1527
    %v1577 = vunpack.c.l.b16 %v1528
    %v1578 = vunpack.c.h.b16 %v1528
    %v1579 = vunpack.c.l.b16 %v1529
    %v1580 = vunpack.c.h.b16 %v1529
    %v1581 = vunpack.c.l.b16 %v1530
    %v1582 = vunpack.c.h.b16 %v1530
    %v1583 = vunpack.c.l.b16 %v1531
    %v1584 = vunpack.c.h.b16 %v1531
    %v1585 = vunpack.c.l.b16 %v1532
    %v1586 = vunpack.c.h.b16 %v1532
    %v1587 = vunpack.c.l.b16 %v1533
    %v1588 = vunpack.c.h.b16 %v1533
    %v1589 = vunpack.c.l.b16 %v1534
    %v1590 = vunpack.c.h.b16 %v1534
    %v1591 = vunpack.c.l.b16 %v1535
    %v1592 = vunpack.c.h.b16 %v1535
    %v1593 = vunpack.c.l.b16 %v1536
    %v1594 = vunpack.c.h.b16 %v1536
    %v1595 = vunpack.c.l.b16 %v1537
    %v1596 = vunpack.c.h.b16 %v1537
    %v1597 = vunpack.c.l.b16 %v1538
    %v1598 = vunpack.c.h.b16 %v1538
    %v1599 = vpack.c.b16 %v1567, %v1563
    %v1600 = vpack.c.b16 %v1568, %v1564
    %v1601 = vpack.c.b16 %v1569, %v1565
    %v1602 = vpack.c.b16 %v1570, %v1566
    %v1603 = vpack.c.b16 %v1575, %v1571
    %v1604 = vpack.c.b16 %v1576, %v1572
    %v1605 = vpack.c.b16 %v1577, %v1573
    %v1606 = vpack.c.b16 %v1578, %v1574
    %v1607 = vpack.c.b16 %v1583, %v1579
    %v1608 = vpack.c.b16 %v1584, %v1580
    %v1609 = vpack.c.b16 %v1585, %v1581
    %v1610 = vpack.c.b16 %v1586, %v1582
    %v1611 = vpack.c.b16 %v1591, %v1587
    %v1612 = vpack.c.b16 %v1592, %v1588
    %v1613 = vpack.c.b16 %v1593, %v1589
    %v1614 = vpack.c.b16 %v1594, %v1590
    %v1615 = vpack.c.b16 %v1595, %v1595
    %v1616 = vpack.c.b16 %v1596, %v1596
    %v1617 = vpack.c.b16 %v1597, %v1597
    %v1618 = vpack.c.b16 %v1598, %v1598
    %vm1635 = vcmask 588800
    %v1637 = vsel %vm1635, %v1520, 0
    %v1640 = vsel %vm94, %v1615, 0
    %v1643 = vsel %vm94, %v1616, 0
    %v1646 = vsel %vm94, %v1617, 0
    %v1649 = vsel %vm94, %v1618, 0
    %1651 = vmatprep.subr.bf16.mxu0 %v1600
    %1652 = vmatpush1.bf16.msra.mxu0 %v1599
    %1653 = vmatprep.subr.bf16.mxu0 %v1604
    %1654 = vmatpush1.bf16.msra.mxu0 %v1603
    %1655 = vmatprep.subr.bf16.mxu0 %v1608
    %1656 = vmatpush1.bf16.msra.mxu0 %v1607
    %1657 = vmatprep.subr.bf16.mxu0 %v1612
    %1658 = vmatpush1.bf16.msra.mxu0 %v1611
    %1659 = vmatprep.subr.bf16.mxu0 %v1643
    %1660 = vmatpush1.bf16.msra.mxu0 %v1640
    %1661 = vmatprep.subr.bf16.mxu0 0
    %1662 = vmatpush1.bf16.msra.mxu0 0
    %1663 = vmatprep.subr.bf16.mxu0 0
    %1664 = vmatpush1.bf16.msra.mxu0 0
    %1665 = vmatprep.subr.bf16.mxu0 0
    %1666 = vmatpush1.bf16.msra.mxu0 0
    %1667 = vmatprep.subr.bf16.mxu0 0
    %1668 = vmatpush1.bf16.msra.mxu0 0
    %1669 = vmatprep.subr.bf16.mxu0 0
    %1670 = vmatpush1.bf16.msra.mxu0 0
    %1671 = vmatprep.subr.bf16.mxu0 0
    %1672 = vmatpush1.bf16.msra.mxu0 0
    %1673 = vmatprep.subr.bf16.mxu0 0
    %1674 = vmatpush1.bf16.msra.mxu0 0
    %1675 = vmatprep.subr.bf16.mxu0 0
    %1676 = vmatpush1.bf16.msra.mxu0 0
    %1677 = vmatprep.subr.bf16.mxu0 0
    %1678 = vmatpush1.bf16.msra.mxu0 0
    %1679 = vmatprep.subr.bf16.mxu0 0
    %1680 = vmatpush1.bf16.msra.mxu0 0
    %1681 = vmatprep.subr.bf16.mxu0 0
    %1682 = vmatpush1.bf16.msra.mxu0 0
    %1683 = vmatprep.mubr.bf16.mxu0 0
    %1684 = vmatmul.mubr.bf16.gmra.mrb[0].mxu0 %v1637
    %v1685 = vpop.f32.mrb[0].mxu0
    %v1686 = vadd.f32 %v1543, %v1685
    %v1687 = vpop.f32.mrb[0].mxu0
    %v1688 = vadd.f32 %v1543, %v1687
    %v1689 = vpop.f32.mrb[0].mxu0
    %v1690 = vpop.f32.mrb[0].mxu0
    %1691 = vdwg.mxu0
    %1692 = vmatprep.subr.bf16.mxu0 %v1602
    %1693 = vmatpush1.bf16.msra.mxu0 %v1601
    %1694 = vmatprep.subr.bf16.mxu0 %v1606
    %1695 = vmatpush1.bf16.msra.mxu0 %v1605
    %1696 = vmatprep.subr.bf16.mxu0 %v1610
    %1697 = vmatpush1.bf16.msra.mxu0 %v1609
    %1698 = vmatprep.subr.bf16.mxu0 %v1614
    %1699 = vmatpush1.bf16.msra.mxu0 %v1613
    %1700 = vmatprep.subr.bf16.mxu0 %v1649
    %1701 = vmatpush1.bf16.msra.mxu0 %v1646
    %1702 = vmatprep.subr.bf16.mxu0 0
    %1703 = vmatpush1.bf16.msra.mxu0 0
    %1704 = vmatprep.subr.bf16.mxu0 0
    %1705 = vmatpush1.bf16.msra.mxu0 0
    %1706 = vmatprep.subr.bf16.mxu0 0
    %1707 = vmatpush1.bf16.msra.mxu0 0
    %1708 = vmatprep.subr.bf16.mxu0 0
    %1709 = vmatpush1.bf16.msra.mxu0 0
    %1710 = vmatprep.subr.bf16.mxu0 0
    %1711 = vmatpush1.bf16.msra.mxu0 0
    %1712 = vmatprep.subr.bf16.mxu0 0
    %1713 = vmatpush1.bf16.msra.mxu0 0
    %1714 = vmatprep.subr.bf16.mxu0 0
    %1715 = vmatpush1.bf16.msra.mxu0 0
    %1716 = vmatprep.subr.bf16.mxu0 0
    %1717 = vmatpush1.bf16.msra.mxu0 0
    %1718 = vmatprep.subr.bf16.mxu0 0
    %1719 = vmatpush1.bf16.msra.mxu0 0
    %1720 = vmatprep.subr.bf16.mxu0 0
    %1721 = vmatpush1.bf16.msra.mxu0 0
    %1722 = vmatprep.subr.bf16.mxu0 0
    %1723 = vmatpush1.bf16.msra.mxu0 0
    %1724 = vmatprep.mubr.bf16.mxu0 0
    %1725 = vmatmul.mubr.bf16.gmra.mrb[0].mxu0 %v1637
    %v1726 = vpop.f32.mrb[0].mxu0
    %v1727 = vadd.f32 %v1543, %v1726
    %v1728 = vpop.f32.mrb[0].mxu0
    %v1729 = vadd.f32 %v1543, %v1728
    %v1730 = vpop.f32.mrb[0].mxu0
    %v1731 = vpop.f32.mrb[0].mxu0
    %1732 = vdwg.mxu0
    %s1733 = scalar_lea.vmem [#allocation2], 64
    %1734 = vst [vmem:[%s1733] sm:$0xff] %v1686
    %1735 = vst [vmem:[%s1733 + $0x8] sm:$0xff] %v1688
    %1736 = vst [vmem:[%s1733 + $0x10] sm:$0xff] %v1727
    %1737 = vst [vmem:[%s1733 + $0x18] sm:$0xff] %v1729
    %v1738 = vld [vmem:[%s1733] sm:$0xff]
    %v1739 = vld [vmem:[%s1733 + $0x8] sm:$0xff]
    %v1740 = vld [vmem:[%s1733 + $0x10] sm:$0xff]
    %v1741 = vld [vmem:[%s1733 + $0x18] sm:$0xff]
    %v1742 = vld [vmem:[%s1] sm:$0xff]
    %v1743 = vld [vmem:[%s2] sm:$0xff]
    %s1744 = sld [smem:[#allocation4 + $0x3]]
    %v1745 = vadd.f32 %v1738, %v1739
    %v1746 = vadd.f32 %v1745, %v1740
    %v1747 = vadd.f32 %v1746, %v1741
    %1748 = vadd.xlane.f32.xlu0 %v1747
    %v1749 = vpop.xlane.xlu0 %1748
    %v1750 = vmul.f32 %v1749, %v104
    %v1751 = vsub.f32 %v1738, %v1750
    %v1752 = vsub.f32 %v1739, %v1750
    %v1753 = vsub.f32 %v1740, %v1750
    %v1754 = vsub.f32 %v1741, %v1750
    %v1755 = vmul.f32 %v1751, %v1751
    %v1756 = vmul.f32 %v1752, %v1752
    %v1757 = vmul.f32 %v1753, %v1753
    %v1758 = vmul.f32 %v1754, %v1754
    %v1759 = vadd.f32 %v1755, %v1756
    %v1760 = vadd.f32 %v1759, %v1757
    %v1761 = vadd.f32 %v1760, %v1758
    %1762 = vadd.xlane.f32.xlu0 %v1761
    %v1763 = vpop.xlane.xlu0 %1762
    %v1764 = vmul.f32 %v1763, %v104
    %v1765 = vadd.f32 %v1764, 1e-05
    %v1766 = vrsqrt.pop %v1765
    %v1767 = vmul.f32 %v1751, %v1766
    %v1768 = vmul.f32 %v1752, %v1766
    %v1769 = vmul.f32 %v1753, %v1766
    %v1770 = vmul.f32 %v1754, %v1766
    %1772 = vset.pattern.permute.xlu0 3
    %1773 = vperm.xlu0 %1772, %v1742
    %v1774 = vpop.permute.xlu0 %1773
    %v1776 = vmul.f32 %v1767, %v1774
    %v1777 = vmul.f32 %v1768, %v1774
    %v1778 = vmul.f32 %v1769, %v1774
    %v1779 = vmul.f32 %v1770, %v1774
    %1781 = vset.pattern.permute.xlu0 3
    %1782 = vperm.xlu0 %1781, %v1743
    %v1783 = vpop.permute.xlu0 %1782
    %v1785 = vadd.f32 %v1776, %v1783
    %v1786 = vadd.f32 %v1777, %v1783
    %v1787 = vadd.f32 %v1778, %v1783
    %v1788 = vadd.f32 %v1779, %v1783
    %vm1789 = vcmp.ge.f32.partialorder %v1785, 0.0
    %vm1790 = vcmp.ge.f32.partialorder %v1786, 0.0
    %vm1791 = vcmp.ge.f32.partialorder %v1787, 0.0
    %vm1792 = vcmp.ge.f32.partialorder %v1788, 0.0
    %v1793 = vstv %s1744
    %v1794 = vmul.f32 %v1793, %v1785
    %v1795 = vmul.f32 %v1793, %v1786
    %v1796 = vmul.f32 %v1793, %v1787
    %v1797 = vmul.f32 %v1793, %v1788
    %v1798 = vsel %vm1789, %v1785, %v1794
    %v1799 = vsel %vm1790, %v1786, %v1795
    %v1800 = vsel %vm1791, %v1787, %v1796
    %v1801 = vsel %vm1792, %v1788, %v1797
    %v1802 = vld [vmem:[%s1017] sm:$0xff]
    %v1803 = vld [vmem:[%s1017 + $0x8] sm:$0xff]
    %v1804 = vld [vmem:[%s1017 + $0x10] sm:$0xff]
    %v1805 = vld [vmem:[%s1017 + $0x18] sm:$0xff]
    %v1806 = vld [vmem:[%s1 + $0x8] sm:$0xff]
    %v1807 = vld [vmem:[%s2 + $0x8] sm:$0xff]
    %v1808 = vadd.f32 %v1802, %v1803
    %v1809 = vadd.f32 %v1808, %v1804
    %v1810 = vadd.f32 %v1809, %v1805
    %1811 = vadd.xlane.f32.xlu0 %v1810
    %v1812 = vpop.xlane.xlu0 %1811
    %v1813 = vmul.f32 %v1812, %v104
    %v1814 = vsub.f32 %v1802, %v1813
    %v1815 = vsub.f32 %v1803, %v1813
    %v1816 = vsub.f32 %v1804, %v1813
    %v1817 = vsub.f32 %v1805, %v1813
    %v1818 = vmul.f32 %v1814, %v1814
    %v1819 = vmul.f32 %v1815, %v1815
    %v1820 = vmul.f32 %v1816, %v1816
    %v1821 = vmul.f32 %v1817, %v1817
    %v1822 = vadd.f32 %v1818, %v1819
    %v1823 = vadd.f32 %v1822, %v1820
    %v1824 = vadd.f32 %v1823, %v1821
    %1825 = vadd.xlane.f32.xlu0 %v1824
    %v1826 = vpop.xlane.xlu0 %1825
    %v1827 = vmul.f32 %v1826, %v104
    %v1828 = vadd.f32 %v1827, 1e-05
    %v1829 = vrsqrt.pop %v1828
    %v1830 = vmul.f32 %v1814, %v1829
    %v1831 = vmul.f32 %v1815, %v1829
    %v1832 = vmul.f32 %v1816, %v1829
    %v1833 = vmul.f32 %v1817, %v1829
    %1835 = vset.pattern.permute.xlu0 3
    %1836 = vperm.xlu0 %1835, %v1806
    %v1837 = vpop.permute.xlu0 %1836
    %v1839 = vmul.f32 %v1830, %v1837
    %v1840 = vmul.f32 %v1831, %v1837
    %v1841 = vmul.f32 %v1832, %v1837
    %v1842 = vmul.f32 %v1833, %v1837
    %1844 = vset.pattern.permute.xlu0 3
    %1845 = vperm.xlu0 %1844, %v1807
    %v1846 = vpop.permute.xlu0 %1845
    %v1848 = vadd.f32 %v1839, %v1846
    %v1849 = vadd.f32 %v1840, %v1846
    %v1850 = vadd.f32 %v1841, %v1846
    %v1851 = vadd.f32 %v1842, %v1846
    %vm1852 = vcmp.ge.f32.partialorder %v1848, 0.0
    %vm1853 = vcmp.ge.f32.partialorder %v1849, 0.0
    %vm1854 = vcmp.ge.f32.partialorder %v1850, 0.0
    %vm1855 = vcmp.ge.f32.partialorder %v1851, 0.0
    %v1856 = vmul.f32 %v1793, %v1848
    %v1857 = vmul.f32 %v1793, %v1849
    %v1858 = vmul.f32 %v1793, %v1850
    %v1859 = vmul.f32 %v1793, %v1851
    %v1860 = vsel %vm1852, %v1848, %v1856
    %v1861 = vsel %vm1853, %v1849, %v1857
    %v1862 = vsel %vm1854, %v1850, %v1858
    %v1863 = vsel %vm1855, %v1851, %v1859
    %1864 = vrot.lane.b32.xlu0 %v1798, 17
    %v1865 = vpop.permute.xlu0 %1864
    %1866 = vrot.lane.b32.xlu0 %v1799, 17
    %v1867 = vpop.permute.xlu0 %1866
    %1868 = vrot.lane.b32.xlu0 %v1800, 17
    %v1869 = vpop.permute.xlu0 %1868
    %1870 = vrot.lane.b32.xlu0 %v1801, 17
    %v1871 = vpop.permute.xlu0 %1870
    %v1872 = vsel %vm199, %v1869, %v1871
    %v1873 = vsel %vm199, %v1867, %v1869
    %v1874 = vsel %vm199, %v1865, %v1867
    %v1875 = vsel %vm199, %v1871, %v1865
    %v1876 = vld [vmem:[%s5] ss:$8 sm:$0xf]
    %v1878 = vlaneseq
    %v1879 = vshrl.u32 %v1878, 7
    %v1880 = vsub.s32 0, %v1879
    %v1881 = vrot.slane %v1876, %v1880
    %v1882 = vlaneseq
    %v1883 = vshrl.u32 %v1882, 7
    %v1884 = vsub.s32 1, %v1883
    %v1885 = vrot.slane %v1876, %v1884
    %v1886 = vlaneseq
    %v1887 = vshrl.u32 %v1886, 7
    %v1888 = vsub.s32 2, %v1887
    %v1889 = vrot.slane %v1876, %v1888
    %v1890 = vlaneseq
    %v1891 = vshrl.u32 %v1890, 7
    %v1892 = vsub.s32 3, %v1891
    %v1893 = vrot.slane %v1876, %v1892
    %v1898 = vmul.f32 %v1875, %v1881
    %v1899 = vmul.f32 %v1874, %v1885
    %v1900 = vmul.f32 %v1873, %v1889
    %v1901 = vmul.f32 %v1872, %v1893
    %1902 = vrot.lane.b32.xlu0 %v1798, 16
    %v1903 = vpop.permute.xlu0 %1902
    %1904 = vrot.lane.b32.xlu0 %v1799, 16
    %v1905 = vpop.permute.xlu0 %1904
    %1906 = vrot.lane.b32.xlu0 %v1800, 16
    %v1907 = vpop.permute.xlu0 %1906
    %1908 = vrot.lane.b32.xlu0 %v1801, 16
    %v1909 = vpop.permute.xlu0 %1908
    %v1910 = vsel %vm238, %v1907, %v1909
    %v1911 = vsel %vm238, %v1905, %v1907
    %v1912 = vsel %vm238, %v1903, %v1905
    %v1913 = vsel %vm238, %v1909, %v1903
    %v1914 = vld [vmem:[%s243] ss:$8 sm:$0xf]
    %v1916 = vlaneseq
    %v1917 = vshrl.u32 %v1916, 7
    %v1918 = vsub.s32 0, %v1917
    %v1919 = vrot.slane %v1914, %v1918
    %v1920 = vlaneseq
    %v1921 = vshrl.u32 %v1920, 7
    %v1922 = vsub.s32 1, %v1921
    %v1923 = vrot.slane %v1914, %v1922
    %v1924 = vlaneseq
    %v1925 = vshrl.u32 %v1924, 7
    %v1926 = vsub.s32 2, %v1925
    %v1927 = vrot.slane %v1914, %v1926
    %v1928 = vlaneseq
    %v1929 = vshrl.u32 %v1928, 7
    %v1930 = vsub.s32 3, %v1929
    %v1931 = vrot.slane %v1914, %v1930
    %v1936 = vmul.f32 %v1913, %v1919
    %v1937 = vmul.f32 %v1912, %v1923
    %v1938 = vmul.f32 %v1911, %v1927
    %v1939 = vmul.f32 %v1910, %v1931
    %v1940 = vpack.c.bf16 %v1936, %v1898
    %v1941 = vpack.c.bf16 %v1937, %v1899
    %v1942 = vpack.c.bf16 %v1938, %v1900
    %v1943 = vpack.c.bf16 %v1939, %v1901
    %v1948 = vunpack.c.l.b16 %v1940
    %v1949 = vunpack.c.l.b16 %v1941
    %v1950 = vunpack.c.l.b16 %v1942
    %v1951 = vunpack.c.l.b16 %v1943
    %v1952 = vunpack.c.h.b16 %v1940
    %v1953 = vunpack.c.h.b16 %v1941
    %v1954 = vunpack.c.h.b16 %v1942
    %v1955 = vunpack.c.h.b16 %v1943
    %v1956 = vpack.c.b16 %v1949, %v1948
    %v1957 = vpack.c.b16 %v1951, %v1950
    %v1958 = vpack.c.b16 %v1953, %v1952
    %v1959 = vpack.c.b16 %v1955, %v1954
    %1964 = vst [vmem:[#allocation3] sm:$0xff] %v1956
    %1965 = vst [vmem:[#allocation3 + $0x8] sm:$0xff] %v1957
    %1966 = vst [vmem:[#allocation3 + $0x10] sm:$0xff] %v1958
    %1967 = vst [vmem:[#allocation3 + $0x18] sm:$0xff] %v1959
    %1968 = vrot.lane.b32.xlu0 %v1798, 15
    %v1969 = vpop.permute.xlu0 %1968
    %1970 = vrot.lane.b32.xlu0 %v1799, 15
    %v1971 = vpop.permute.xlu0 %1970
    %1972 = vrot.lane.b32.xlu0 %v1800, 15
    %v1973 = vpop.permute.xlu0 %1972
    %1974 = vrot.lane.b32.xlu0 %v1801, 15
    %v1975 = vpop.permute.xlu0 %1974
    %v1976 = vsel %vm278, %v1973, %v1975
    %v1977 = vsel %vm278, %v1971, %v1973
    %v1978 = vsel %vm278, %v1969, %v1971
    %v1979 = vsel %vm278, %v1975, %v1969
    %v1980 = vld [vmem:[%s283] ss:$8 sm:$0xf]
    %v1982 = vlaneseq
    %v1983 = vshrl.u32 %v1982, 7
    %v1984 = vsub.s32 0, %v1983
    %v1985 = vrot.slane %v1980, %v1984
    %v1986 = vlaneseq
    %v1987 = vshrl.u32 %v1986, 7
    %v1988 = vsub.s32 1, %v1987
    %v1989 = vrot.slane %v1980, %v1988
    %v1990 = vlaneseq
    %v1991 = vshrl.u32 %v1990, 7
    %v1992 = vsub.s32 2, %v1991
    %v1993 = vrot.slane %v1980, %v1992
    %v1994 = vlaneseq
    %v1995 = vshrl.u32 %v1994, 7
    %v1996 = vsub.s32 3, %v1995
    %v1997 = vrot.slane %v1980, %v1996
    %v2002 = vmul.f32 %v1979, %v1985
    %v2003 = vmul.f32 %v1978, %v1989
    %v2004 = vmul.f32 %v1977, %v1993
    %v2005 = vmul.f32 %v1976, %v1997
    %2006 = vrot.lane.b32.xlu0 %v1798, 1
    %v2007 = vpop.permute.xlu0 %2006
    %2008 = vrot.lane.b32.xlu0 %v1799, 1
    %v2009 = vpop.permute.xlu0 %2008
    %2010 = vrot.lane.b32.xlu0 %v1800, 1
    %v2011 = vpop.permute.xlu0 %2010
    %2012 = vrot.lane.b32.xlu0 %v1801, 1
    %v2013 = vpop.permute.xlu0 %2012
    %v2014 = vsel %vm318, %v2011, %v2013
    %v2015 = vsel %vm318, %v2009, %v2011
    %v2016 = vsel %vm318, %v2007, %v2009
    %v2017 = vsel %vm318, %v2013, %v2007
    %v2018 = vld [vmem:[%s323] ss:$8 sm:$0xf]
    %v2020 = vlaneseq
    %v2021 = vshrl.u32 %v2020, 7
    %v2022 = vsub.s32 0, %v2021
    %v2023 = vrot.slane %v2018, %v2022
    %v2024 = vlaneseq
    %v2025 = vshrl.u32 %v2024, 7
    %v2026 = vsub.s32 1, %v2025
    %v2027 = vrot.slane %v2018, %v2026
    %v2028 = vlaneseq
    %v2029 = vshrl.u32 %v2028, 7
    %v2030 = vsub.s32 2, %v2029
    %v2031 = vrot.slane %v2018, %v2030
    %v2032 = vlaneseq
    %v2033 = vshrl.u32 %v2032, 7
    %v2034 = vsub.s32 3, %v2033
    %v2035 = vrot.slane %v2018, %v2034
    %v2040 = vmul.f32 %v2017, %v2023
    %v2041 = vmul.f32 %v2016, %v2027
    %v2042 = vmul.f32 %v2015, %v2031
    %v2043 = vmul.f32 %v2014, %v2035
    %v2044 = vpack.c.bf16 %v2040, %v2002
    %v2045 = vpack.c.bf16 %v2041, %v2003
    %v2046 = vpack.c.bf16 %v2042, %v2004
    %v2047 = vpack.c.bf16 %v2043, %v2005
    %v2052 = vunpack.c.l.b16 %v2044
    %v2053 = vunpack.c.l.b16 %v2045
    %v2054 = vunpack.c.l.b16 %v2046
    %v2055 = vunpack.c.l.b16 %v2047
    %v2056 = vunpack.c.h.b16 %v2044
    %v2057 = vunpack.c.h.b16 %v2045
    %v2058 = vunpack.c.h.b16 %v2046
    %v2059 = vunpack.c.h.b16 %v2047
    %v2060 = vpack.c.b16 %v2053, %v2052
    %v2061 = vpack.c.b16 %v2055, %v2054
    %v2062 = vpack.c.b16 %v2057, %v2056
    %v2063 = vpack.c.b16 %v2059, %v2058
    %2068 = vst [vmem:[#allocation3 + $0x20] sm:$0xff] %v2060
    %2069 = vst [vmem:[#allocation3 + $0x28] sm:$0xff] %v2061
    %2070 = vst [vmem:[#allocation3 + $0x30] sm:$0xff] %v2062
    %2071 = vst [vmem:[#allocation3 + $0x38] sm:$0xff] %v2063
    %2072 = vrot.lane.b32.xlu0 %v1798, 127
    %v2073 = vpop.permute.xlu0 %2072
    %2074 = vrot.lane.b32.xlu0 %v1799, 127
    %v2075 = vpop.permute.xlu0 %2074
    %2076 = vrot.lane.b32.xlu0 %v1800, 127
    %v2077 = vpop.permute.xlu0 %2076
    %2078 = vrot.lane.b32.xlu0 %v1801, 127
    %v2079 = vpop.permute.xlu0 %2078
    %v2080 = vsel %vm418, %v2077, %v2079
    %v2081 = vsel %vm418, %v2075, %v2077
    %v2082 = vsel %vm418, %v2073, %v2075
    %v2083 = vsel %vm418, %v2079, %v2073
    %v2084 = vld [vmem:[%s423] ss:$8 sm:$0xf]
    %v2086 = vlaneseq
    %v2087 = vshrl.u32 %v2086, 7
    %v2088 = vsub.s32 0, %v2087
    %v2089 = vrot.slane %v2084, %v2088
    %v2090 = vlaneseq
    %v2091 = vshrl.u32 %v2090, 7
    %v2092 = vsub.s32 1, %v2091
    %v2093 = vrot.slane %v2084, %v2092
    %v2094 = vlaneseq
    %v2095 = vshrl.u32 %v2094, 7
    %v2096 = vsub.s32 2, %v2095
    %v2097 = vrot.slane %v2084, %v2096
    %v2098 = vlaneseq
    %v2099 = vshrl.u32 %v2098, 7
    %v2100 = vsub.s32 3, %v2099
    %v2101 = vrot.slane %v2084, %v2100
    %v2106 = vmul.f32 %v2082, %v2089
    %v2107 = vmul.f32 %v2081, %v2093
    %v2108 = vmul.f32 %v2080, %v2097
    %v2109 = vmul.f32 %v2083, %v2101
    %v2110 = vpack.c.bf16 %v2106, %v1798
    %v2111 = vpack.c.bf16 %v2107, %v1799
    %v2112 = vpack.c.bf16 %v2108, %v1800
    %v2113 = vpack.c.bf16 %v2109, %v1801
    %v2118 = vunpack.c.l.b16 %v2110
    %v2119 = vunpack.c.l.b16 %v2111
    %v2120 = vunpack.c.l.b16 %v2112
    %v2121 = vunpack.c.l.b16 %v2113
    %v2122 = vunpack.c.h.b16 %v2110
    %v2123 = vunpack.c.h.b16 %v2111
    %v2124 = vunpack.c.h.b16 %v2112
    %v2125 = vunpack.c.h.b16 %v2113
    %v2126 = vpack.c.b16 %v2119, %v2118
    %v2127 = vpack.c.b16 %v2121, %v2120
    %v2128 = vpack.c.b16 %v2123, %v2122
    %v2129 = vpack.c.b16 %v2125, %v2124
    %2134 = vst [vmem:[#allocation3 + $0x40] sm:$0xff] %v2126
    %2135 = vst [vmem:[#allocation3 + $0x48] sm:$0xff] %v2127
    %2136 = vst [vmem:[#allocation3 + $0x50] sm:$0xff] %v2128
    %2137 = vst [vmem:[#allocation3 + $0x58] sm:$0xff] %v2129
    %2138 = vrot.lane.b32.xlu0 %v1798, 113
    %v2139 = vpop.permute.xlu0 %2138
    %2140 = vrot.lane.b32.xlu0 %v1799, 113
    %v2141 = vpop.permute.xlu0 %2140
    %2142 = vrot.lane.b32.xlu0 %v1800, 113
    %v2143 = vpop.permute.xlu0 %2142
    %2144 = vrot.lane.b32.xlu0 %v1801, 113
    %v2145 = vpop.permute.xlu0 %2144
    %v2146 = vsel %vm458, %v2143, %v2145
    %v2147 = vsel %vm458, %v2141, %v2143
    %v2148 = vsel %vm458, %v2139, %v2141
    %v2149 = vsel %vm458, %v2145, %v2139
    %v2150 = vld [vmem:[%s463] ss:$8 sm:$0xf]
    %v2152 = vlaneseq
    %v2153 = vshrl.u32 %v2152, 7
    %v2154 = vsub.s32 0, %v2153
    %v2155 = vrot.slane %v2150, %v2154
    %v2156 = vlaneseq
    %v2157 = vshrl.u32 %v2156, 7
    %v2158 = vsub.s32 1, %v2157
    %v2159 = vrot.slane %v2150, %v2158
    %v2160 = vlaneseq
    %v2161 = vshrl.u32 %v2160, 7
    %v2162 = vsub.s32 2, %v2161
    %v2163 = vrot.slane %v2150, %v2162
    %v2164 = vlaneseq
    %v2165 = vshrl.u32 %v2164, 7
    %v2166 = vsub.s32 3, %v2165
    %v2167 = vrot.slane %v2150, %v2166
    %v2172 = vmul.f32 %v2148, %v2155
    %v2173 = vmul.f32 %v2147, %v2159
    %v2174 = vmul.f32 %v2146, %v2163
    %v2175 = vmul.f32 %v2149, %v2167
    %2176 = vrot.lane.b32.xlu0 %v1798, 112
    %v2177 = vpop.permute.xlu0 %2176
    %2178 = vrot.lane.b32.xlu0 %v1799, 112
    %v2179 = vpop.permute.xlu0 %2178
    %2180 = vrot.lane.b32.xlu0 %v1800, 112
    %v2181 = vpop.permute.xlu0 %2180
    %2182 = vrot.lane.b32.xlu0 %v1801, 112
    %v2183 = vpop.permute.xlu0 %2182
    %v2184 = vsel %vm498, %v2181, %v2183
    %v2185 = vsel %vm498, %v2179, %v2181
    %v2186 = vsel %vm498, %v2177, %v2179
    %v2187 = vsel %vm498, %v2183, %v2177
    %v2188 = vld [vmem:[%s503] ss:$8 sm:$0xf]
    %v2190 = vlaneseq
    %v2191 = vshrl.u32 %v2190, 7
    %v2192 = vsub.s32 0, %v2191
    %v2193 = vrot.slane %v2188, %v2192
    %v2194 = vlaneseq
    %v2195 = vshrl.u32 %v2194, 7
    %v2196 = vsub.s32 1, %v2195
    %v2197 = vrot.slane %v2188, %v2196
    %v2198 = vlaneseq
    %v2199 = vshrl.u32 %v2198, 7
    %v2200 = vsub.s32 2, %v2199
    %v2201 = vrot.slane %v2188, %v2200
    %v2202 = vlaneseq
    %v2203 = vshrl.u32 %v2202, 7
    %v2204 = vsub.s32 3, %v2203
    %v2205 = vrot.slane %v2188, %v2204
    %v2210 = vmul.f32 %v2186, %v2193
    %v2211 = vmul.f32 %v2185, %v2197
    %v2212 = vmul.f32 %v2184, %v2201
    %v2213 = vmul.f32 %v2187, %v2205
    %v2214 = vpack.c.bf16 %v2210, %v2172
    %v2215 = vpack.c.bf16 %v2211, %v2173
    %v2216 = vpack.c.bf16 %v2212, %v2174
    %v2217 = vpack.c.bf16 %v2213, %v2175
    %v2222 = vunpack.c.l.b16 %v2214
    %v2223 = vunpack.c.l.b16 %v2215
    %v2224 = vunpack.c.l.b16 %v2216
    %v2225 = vunpack.c.l.b16 %v2217
    %v2226 = vunpack.c.h.b16 %v2214
    %v2227 = vunpack.c.h.b16 %v2215
    %v2228 = vunpack.c.h.b16 %v2216
    %v2229 = vunpack.c.h.b16 %v2217
    %v2230 = vpack.c.b16 %v2223, %v2222
    %v2231 = vpack.c.b16 %v2225, %v2224
    %v2232 = vpack.c.b16 %v2227, %v2226
    %v2233 = vpack.c.b16 %v2229, %v2228
    %2238 = vst [vmem:[#allocation3 + $0x60] sm:$0xff] %v2230
    %2239 = vst [vmem:[#allocation3 + $0x68] sm:$0xff] %v2231
    %2240 = vst [vmem:[#allocation3 + $0x70] sm:$0xff] %v2232
    %2241 = vst [vmem:[#allocation3 + $0x78] sm:$0xff] %v2233
    %2242 = vrot.lane.b32.xlu0 %v1798, 111
    %v2243 = vpop.permute.xlu0 %2242
    %2244 = vrot.lane.b32.xlu0 %v1799, 111
    %v2245 = vpop.permute.xlu0 %2244
    %2246 = vrot.lane.b32.xlu0 %v1800, 111
    %v2247 = vpop.permute.xlu0 %2246
    %2248 = vrot.lane.b32.xlu0 %v1801, 111
    %v2249 = vpop.permute.xlu0 %2248
    %v2250 = vsel %vm598, %v2247, %v2249
    %v2251 = vsel %vm598, %v2245, %v2247
    %v2252 = vsel %vm598, %v2243, %v2245
    %v2253 = vsel %vm598, %v2249, %v2243
    %v2254 = vld [vmem:[%s603] ss:$8 sm:$0xf]
    %v2256 = vlaneseq
    %v2257 = vshrl.u32 %v2256, 7
    %v2258 = vsub.s32 0, %v2257
    %v2259 = vrot.slane %v2254, %v2258
    %v2260 = vlaneseq
    %v2261 = vshrl.u32 %v2260, 7
    %v2262 = vsub.s32 1, %v2261
    %v2263 = vrot.slane %v2254, %v2262
    %v2264 = vlaneseq
    %v2265 = vshrl.u32 %v2264, 7
    %v2266 = vsub.s32 2, %v2265
    %v2267 = vrot.slane %v2254, %v2266
    %v2268 = vlaneseq
    %v2269 = vshrl.u32 %v2268, 7
    %v2270 = vsub.s32 3, %v2269
    %v2271 = vrot.slane %v2254, %v2270
    %v2276 = vmul.f32 %v2252, %v2259
    %v2277 = vmul.f32 %v2251, %v2263
    %v2278 = vmul.f32 %v2250, %v2267
    %v2279 = vmul.f32 %v2253, %v2271
    %2280 = vrot.lane.b32.xlu0 %v1860, 17
    %v2281 = vpop.permute.xlu0 %2280
    %2282 = vrot.lane.b32.xlu0 %v1861, 17
    %v2283 = vpop.permute.xlu0 %2282
    %2284 = vrot.lane.b32.xlu0 %v1862, 17
    %v2285 = vpop.permute.xlu0 %2284
    %2286 = vrot.lane.b32.xlu0 %v1863, 17
    %v2287 = vpop.permute.xlu0 %2286
    %v2288 = vsel %vm199, %v2285, %v2287
    %v2289 = vsel %vm199, %v2283, %v2285
    %v2290 = vsel %vm199, %v2281, %v2283
    %v2291 = vsel %vm199, %v2287, %v2281
    %v2292 = vld [vmem:[%s5] ss:$8 sm:$0xf]
    %v2294 = vlaneseq
    %v2295 = vshrl.u32 %v2294, 7
    %v2296 = vsub.s32 0, %v2295
    %v2297 = vrot.slane %v2292, %v2296
    %v2298 = vlaneseq
    %v2299 = vshrl.u32 %v2298, 7
    %v2300 = vsub.s32 1, %v2299
    %v2301 = vrot.slane %v2292, %v2300
    %v2302 = vlaneseq
    %v2303 = vshrl.u32 %v2302, 7
    %v2304 = vsub.s32 2, %v2303
    %v2305 = vrot.slane %v2292, %v2304
    %v2306 = vlaneseq
    %v2307 = vshrl.u32 %v2306, 7
    %v2308 = vsub.s32 3, %v2307
    %v2309 = vrot.slane %v2292, %v2308
    %v2314 = vmul.f32 %v2291, %v2297
    %v2315 = vmul.f32 %v2290, %v2301
    %v2316 = vmul.f32 %v2289, %v2305
    %v2317 = vmul.f32 %v2288, %v2309
    %v2318 = vpack.c.bf16 %v2314, %v2276
    %v2319 = vpack.c.bf16 %v2315, %v2277
    %v2320 = vpack.c.bf16 %v2316, %v2278
    %v2321 = vpack.c.bf16 %v2317, %v2279
    %v2326 = vunpack.c.l.b16 %v2318
    %v2327 = vunpack.c.l.b16 %v2319
    %v2328 = vunpack.c.l.b16 %v2320
    %v2329 = vunpack.c.l.b16 %v2321
    %v2330 = vunpack.c.h.b16 %v2318
    %v2331 = vunpack.c.h.b16 %v2319
    %v2332 = vunpack.c.h.b16 %v2320
    %v2333 = vunpack.c.h.b16 %v2321
    %v2334 = vpack.c.b16 %v2327, %v2326
    %v2335 = vpack.c.b16 %v2329, %v2328
    %v2336 = vpack.c.b16 %v2331, %v2330
    %v2337 = vpack.c.b16 %v2333, %v2332
    %2342 = vst [vmem:[#allocation3 + $0x80] sm:$0xff] %v2334
    %2343 = vst [vmem:[#allocation3 + $0x88] sm:$0xff] %v2335
    %2344 = vst [vmem:[#allocation3 + $0x90] sm:$0xff] %v2336
    %2345 = vst [vmem:[#allocation3 + $0x98] sm:$0xff] %v2337
    %2346 = vrot.lane.b32.xlu0 %v1860, 16
    %v2347 = vpop.permute.xlu0 %2346
    %2348 = vrot.lane.b32.xlu0 %v1861, 16
    %v2349 = vpop.permute.xlu0 %2348
    %2350 = vrot.lane.b32.xlu0 %v1862, 16
    %v2351 = vpop.permute.xlu0 %2350
    %2352 = vrot.lane.b32.xlu0 %v1863, 16
    %v2353 = vpop.permute.xlu0 %2352
    %v2354 = vsel %vm238, %v2351, %v2353
    %v2355 = vsel %vm238, %v2349, %v2351
    %v2356 = vsel %vm238, %v2347, %v2349
    %v2357 = vsel %vm238, %v2353, %v2347
    %v2358 = vld [vmem:[%s243] ss:$8 sm:$0xf]
    %v2360 = vlaneseq
    %v2361 = vshrl.u32 %v2360, 7
    %v2362 = vsub.s32 0, %v2361
    %v2363 = vrot.slane %v2358, %v2362
    %v2364 = vlaneseq
    %v2365 = vshrl.u32 %v2364, 7
    %v2366 = vsub.s32 1, %v2365
    %v2367 = vrot.slane %v2358, %v2366
    %v2368 = vlaneseq
    %v2369 = vshrl.u32 %v2368, 7
    %v2370 = vsub.s32 2, %v2369
    %v2371 = vrot.slane %v2358, %v2370
    %v2372 = vlaneseq
    %v2373 = vshrl.u32 %v2372, 7
    %v2374 = vsub.s32 3, %v2373
    %v2375 = vrot.slane %v2358, %v2374
    %v2380 = vmul.f32 %v2357, %v2363
    %v2381 = vmul.f32 %v2356, %v2367
    %v2382 = vmul.f32 %v2355, %v2371
    %v2383 = vmul.f32 %v2354, %v2375
    %2384 = vrot.lane.b32.xlu0 %v1860, 15
    %v2385 = vpop.permute.xlu0 %2384
    %2386 = vrot.lane.b32.xlu0 %v1861, 15
    %v2387 = vpop.permute.xlu0 %2386
    %2388 = vrot.lane.b32.xlu0 %v1862, 15
    %v2389 = vpop.permute.xlu0 %2388
    %2390 = vrot.lane.b32.xlu0 %v1863, 15
    %v2391 = vpop.permute.xlu0 %2390
    %v2392 = vsel %vm278, %v2389, %v2391
    %v2393 = vsel %vm278, %v2387, %v2389
    %v2394 = vsel %vm278, %v2385, %v2387
    %v2395 = vsel %vm278, %v2391, %v2385
    %v2396 = vld [vmem:[%s283] ss:$8 sm:$0xf]
    %v2398 = vlaneseq
    %v2399 = vshrl.u32 %v2398, 7
    %v2400 = vsub.s32 0, %v2399
    %v2401 = vrot.slane %v2396, %v2400
    %v2402 = vlaneseq
    %v2403 = vshrl.u32 %v2402, 7
    %v2404 = vsub.s32 1, %v2403
    %v2405 = vrot.slane %v2396, %v2404
    %v2406 = vlaneseq
    %v2407 = vshrl.u32 %v2406, 7
    %v2408 = vsub.s32 2, %v2407
    %v2409 = vrot.slane %v2396, %v2408
    %v2410 = vlaneseq
    %v2411 = vshrl.u32 %v2410, 7
    %v2412 = vsub.s32 3, %v2411
    %v2413 = vrot.slane %v2396, %v2412
    %v2418 = vmul.f32 %v2395, %v2401
    %v2419 = vmul.f32 %v2394, %v2405
    %v2420 = vmul.f32 %v2393, %v2409
    %v2421 = vmul.f32 %v2392, %v2413
    %v2422 = vpack.c.bf16 %v2418, %v2380
    %v2423 = vpack.c.bf16 %v2419, %v2381
    %v2424 = vpack.c.bf16 %v2420, %v2382
    %v2425 = vpack.c.bf16 %v2421, %v2383
    %v2430 = vunpack.c.l.b16 %v2422
    %v2431 = vunpack.c.l.b16 %v2423
    %v2432 = vunpack.c.l.b16 %v2424
    %v2433 = vunpack.c.l.b16 %v2425
    %v2434 = vunpack.c.h.b16 %v2422
    %v2435 = vunpack.c.h.b16 %v2423
    %v2436 = vunpack.c.h.b16 %v2424
    %v2437 = vunpack.c.h.b16 %v2425
    %v2438 = vpack.c.b16 %v2431, %v2430
    %v2439 = vpack.c.b16 %v2433, %v2432
    %v2440 = vpack.c.b16 %v2435, %v2434
    %v2441 = vpack.c.b16 %v2437, %v2436
    %2446 = vst [vmem:[#allocation3 + $0xa0] sm:$0xff] %v2438
    %2447 = vst [vmem:[#allocation3 + $0xa8] sm:$0xff] %v2439
    %2448 = vst [vmem:[#allocation3 + $0xb0] sm:$0xff] %v2440
    %2449 = vst [vmem:[#allocation3 + $0xb8] sm:$0xff] %v2441
    %2450 = vrot.lane.b32.xlu0 %v1860, 1
    %v2451 = vpop.permute.xlu0 %2450
    %2452 = vrot.lane.b32.xlu0 %v1861, 1
    %v2453 = vpop.permute.xlu0 %2452
    %2454 = vrot.lane.b32.xlu0 %v1862, 1
    %v2455 = vpop.permute.xlu0 %2454
    %2456 = vrot.lane.b32.xlu0 %v1863, 1
    %v2457 = vpop.permute.xlu0 %2456
    %v2458 = vsel %vm318, %v2455, %v2457
    %v2459 = vsel %vm318, %v2453, %v2455
    %v2460 = vsel %vm318, %v2451, %v2453
    %v2461 = vsel %vm318, %v2457, %v2451
    %v2462 = vld [vmem:[%s323] ss:$8 sm:$0xf]
    %v2464 = vlaneseq
    %v2465 = vshrl.u32 %v2464, 7
    %v2466 = vsub.s32 0, %v2465
    %v2467 = vrot.slane %v2462, %v2466
    %v2468 = vlaneseq
    %v2469 = vshrl.u32 %v2468, 7
    %v2470 = vsub.s32 1, %v2469
    %v2471 = vrot.slane %v2462, %v2470
    %v2472 = vlaneseq
    %v2473 = vshrl.u32 %v2472, 7
    %v2474 = vsub.s32 2, %v2473
    %v2475 = vrot.slane %v2462, %v2474
    %v2476 = vlaneseq
    %v2477 = vshrl.u32 %v2476, 7
    %v2478 = vsub.s32 3, %v2477
    %v2479 = vrot.slane %v2462, %v2478
    %v2484 = vmul.f32 %v2461, %v2467
    %v2485 = vmul.f32 %v2460, %v2471
    %v2486 = vmul.f32 %v2459, %v2475
    %v2487 = vmul.f32 %v2458, %v2479
    %v2488 = vpack.c.bf16 %v1860, %v2484
    %v2489 = vpack.c.bf16 %v1861, %v2485
    %v2490 = vpack.c.bf16 %v1862, %v2486
    %v2491 = vpack.c.bf16 %v1863, %v2487
    %v2496 = vunpack.c.l.b16 %v2488
    %v2497 = vunpack.c.l.b16 %v2489
    %v2498 = vunpack.c.l.b16 %v2490
    %v2499 = vunpack.c.l.b16 %v2491
    %v2500 = vunpack.c.h.b16 %v2488
    %v2501 = vunpack.c.h.b16 %v2489
    %v2502 = vunpack.c.h.b16 %v2490
    %v2503 = vunpack.c.h.b16 %v2491
    %v2504 = vpack.c.b16 %v2497, %v2496
    %v2505 = vpack.c.b16 %v2499, %v2498
    %v2506 = vpack.c.b16 %v2501, %v2500
    %v2507 = vpack.c.b16 %v2503, %v2502
    %2512 = vst [vmem:[#allocation3 + $0xc0] sm:$0xff] %v2504
    %2513 = vst [vmem:[#allocation3 + $0xc8] sm:$0xff] %v2505
    %2514 = vst [vmem:[#allocation3 + $0xd0] sm:$0xff] %v2506
    %2515 = vst [vmem:[#allocation3 + $0xd8] sm:$0xff] %v2507
    %2516 = vrot.lane.b32.xlu0 %v1860, 127
    %v2517 = vpop.permute.xlu0 %2516
    %2518 = vrot.lane.b32.xlu0 %v1861, 127
    %v2519 = vpop.permute.xlu0 %2518
    %2520 = vrot.lane.b32.xlu0 %v1862, 127
    %v2521 = vpop.permute.xlu0 %2520
    %2522 = vrot.lane.b32.xlu0 %v1863, 127
    %v2523 = vpop.permute.xlu0 %2522
    %v2524 = vsel %vm418, %v2521, %v2523
    %v2525 = vsel %vm418, %v2519, %v2521
    %v2526 = vsel %vm418, %v2517, %v2519
    %v2527 = vsel %vm418, %v2523, %v2517
    %v2528 = vld [vmem:[%s423] ss:$8 sm:$0xf]
    %v2530 = vlaneseq
    %v2531 = vshrl.u32 %v2530, 7
    %v2532 = vsub.s32 0, %v2531
    %v2533 = vrot.slane %v2528, %v2532
    %v2534 = vlaneseq
    %v2535 = vshrl.u32 %v2534, 7
    %v2536 = vsub.s32 1, %v2535
    %v2537 = vrot.slane %v2528, %v2536
    %v2538 = vlaneseq
    %v2539 = vshrl.u32 %v2538, 7
    %v2540 = vsub.s32 2, %v2539
    %v2541 = vrot.slane %v2528, %v2540
    %v2542 = vlaneseq
    %v2543 = vshrl.u32 %v2542, 7
    %v2544 = vsub.s32 3, %v2543
    %v2545 = vrot.slane %v2528, %v2544
    %v2550 = vmul.f32 %v2526, %v2533
    %v2551 = vmul.f32 %v2525, %v2537
    %v2552 = vmul.f32 %v2524, %v2541
    %v2553 = vmul.f32 %v2527, %v2545
    %2554 = vrot.lane.b32.xlu0 %v1860, 113
    %v2555 = vpop.permute.xlu0 %2554
    %2556 = vrot.lane.b32.xlu0 %v1861, 113
    %v2557 = vpop.permute.xlu0 %2556
    %2558 = vrot.lane.b32.xlu0 %v1862, 113
    %v2559 = vpop.permute.xlu0 %2558
    %2560 = vrot.lane.b32.xlu0 %v1863, 113
    %v2561 = vpop.permute.xlu0 %2560
    %v2562 = vsel %vm458, %v2559, %v2561
    %v2563 = vsel %vm458, %v2557, %v2559
    %v2564 = vsel %vm458, %v2555, %v2557
    %v2565 = vsel %vm458, %v2561, %v2555
    %v2566 = vld [vmem:[%s463] ss:$8 sm:$0xf]
    %v2568 = vlaneseq
    %v2569 = vshrl.u32 %v2568, 7
    %v2570 = vsub.s32 0, %v2569
    %v2571 = vrot.slane %v2566, %v2570
    %v2572 = vlaneseq
    %v2573 = vshrl.u32 %v2572, 7
    %v2574 = vsub.s32 1, %v2573
    %v2575 = vrot.slane %v2566, %v2574
    %v2576 = vlaneseq
    %v2577 = vshrl.u32 %v2576, 7
    %v2578 = vsub.s32 2, %v2577
    %v2579 = vrot.slane %v2566, %v2578
    %v2580 = vlaneseq
    %v2581 = vshrl.u32 %v2580, 7
    %v2582 = vsub.s32 3, %v2581
    %v2583 = vrot.slane %v2566, %v2582
    %v2588 = vmul.f32 %v2564, %v2571
    %v2589 = vmul.f32 %v2563, %v2575
    %v2590 = vmul.f32 %v2562, %v2579
    %v2591 = vmul.f32 %v2565, %v2583
    %v2592 = vpack.c.bf16 %v2588, %v2550
    %v2593 = vpack.c.bf16 %v2589, %v2551
    %v2594 = vpack.c.bf16 %v2590, %v2552
    %v2595 = vpack.c.bf16 %v2591, %v2553
    %v2600 = vunpack.c.l.b16 %v2592
    %v2601 = vunpack.c.l.b16 %v2593
    %v2602 = vunpack.c.l.b16 %v2594
    %v2603 = vunpack.c.l.b16 %v2595
    %v2604 = vunpack.c.h.b16 %v2592
    %v2605 = vunpack.c.h.b16 %v2593
    %v2606 = vunpack.c.h.b16 %v2594
    %v2607 = vunpack.c.h.b16 %v2595
    %v2608 = vpack.c.b16 %v2601, %v2600
    %v2609 = vpack.c.b16 %v2603, %v2602
    %v2610 = vpack.c.b16 %v2605, %v2604
    %v2611 = vpack.c.b16 %v2607, %v2606
    %2616 = vst [vmem:[#allocation3 + $0xe0] sm:$0xff] %v2608
    %2617 = vst [vmem:[#allocation3 + $0xe8] sm:$0xff] %v2609
    %2618 = vst [vmem:[#allocation3 + $0xf0] sm:$0xff] %v2610
    %2619 = vst [vmem:[#allocation3 + $0xf8] sm:$0xff] %v2611
    %2620 = vrot.lane.b32.xlu0 %v1860, 112
    %v2621 = vpop.permute.xlu0 %2620
    %2622 = vrot.lane.b32.xlu0 %v1861, 112
    %v2623 = vpop.permute.xlu0 %2622
    %2624 = vrot.lane.b32.xlu0 %v1862, 112
    %v2625 = vpop.permute.xlu0 %2624
    %2626 = vrot.lane.b32.xlu0 %v1863, 112
    %v2627 = vpop.permute.xlu0 %2626
    %v2628 = vsel %vm498, %v2625, %v2627
    %v2629 = vsel %vm498, %v2623, %v2625
    %v2630 = vsel %vm498, %v2621, %v2623
    %v2631 = vsel %vm498, %v2627, %v2621
    %v2632 = vld [vmem:[%s503] ss:$8 sm:$0xf]
    %v2634 = vlaneseq
    %v2635 = vshrl.u32 %v2634, 7
    %v2636 = vsub.s32 0, %v2635
    %v2637 = vrot.slane %v2632, %v2636
    %v2638 = vlaneseq
    %v2639 = vshrl.u32 %v2638, 7
    %v2640 = vsub.s32 1, %v2639
    %v2641 = vrot.slane %v2632, %v2640
    %v2642 = vlaneseq
    %v2643 = vshrl.u32 %v2642, 7
    %v2644 = vsub.s32 2, %v2643
    %v2645 = vrot.slane %v2632, %v2644
    %v2646 = vlaneseq
    %v2647 = vshrl.u32 %v2646, 7
    %v2648 = vsub.s32 3, %v2647
    %v2649 = vrot.slane %v2632, %v2648
    %v2654 = vmul.f32 %v2630, %v2637
    %v2655 = vmul.f32 %v2629, %v2641
    %v2656 = vmul.f32 %v2628, %v2645
    %v2657 = vmul.f32 %v2631, %v2649
    %2658 = vrot.lane.b32.xlu0 %v1860, 111
    %v2659 = vpop.permute.xlu0 %2658
    %2660 = vrot.lane.b32.xlu0 %v1861, 111
    %v2661 = vpop.permute.xlu0 %2660
    %2662 = vrot.lane.b32.xlu0 %v1862, 111
    %v2663 = vpop.permute.xlu0 %2662
    %2664 = vrot.lane.b32.xlu0 %v1863, 111
    %v2665 = vpop.permute.xlu0 %2664
    %v2666 = vsel %vm598, %v2663, %v2665
    %v2667 = vsel %vm598, %v2661, %v2663
    %v2668 = vsel %vm598, %v2659, %v2661
    %v2669 = vsel %vm598, %v2665, %v2659
    %v2670 = vld [vmem:[%s603] ss:$8 sm:$0xf]
    %v2672 = vlaneseq
    %v2673 = vshrl.u32 %v2672, 7
    %v2674 = vsub.s32 0, %v2673
    %v2675 = vrot.slane %v2670, %v2674
    %v2676 = vlaneseq
    %v2677 = vshrl.u32 %v2676, 7
    %v2678 = vsub.s32 1, %v2677
    %v2679 = vrot.slane %v2670, %v2678
    %v2680 = vlaneseq
    %v2681 = vshrl.u32 %v2680, 7
    %v2682 = vsub.s32 2, %v2681
    %v2683 = vrot.slane %v2670, %v2682
    %v2684 = vlaneseq
    %v2685 = vshrl.u32 %v2684, 7
    %v2686 = vsub.s32 3, %v2685
    %v2687 = vrot.slane %v2670, %v2686
    %v2692 = vmul.f32 %v2668, %v2675
    %v2693 = vmul.f32 %v2667, %v2679
    %v2694 = vmul.f32 %v2666, %v2683
    %v2695 = vmul.f32 %v2669, %v2687
    %v2696 = vpack.c.bf16 %v2692, %v2654
    %v2697 = vpack.c.bf16 %v2693, %v2655
    %v2698 = vpack.c.bf16 %v2694, %v2656
    %v2699 = vpack.c.bf16 %v2695, %v2657
    %v2704 = vunpack.c.l.b16 %v2696
    %v2705 = vunpack.c.l.b16 %v2697
    %v2706 = vunpack.c.l.b16 %v2698
    %v2707 = vunpack.c.l.b16 %v2699
    %v2708 = vunpack.c.h.b16 %v2696
    %v2709 = vunpack.c.h.b16 %v2697
    %v2710 = vunpack.c.h.b16 %v2698
    %v2711 = vunpack.c.h.b16 %v2699
    %v2712 = vpack.c.b16 %v2705, %v2704
    %v2713 = vpack.c.b16 %v2707, %v2706
    %v2714 = vpack.c.b16 %v2709, %v2708
    %v2715 = vpack.c.b16 %v2711, %v2710
    %2720 = vst [vmem:[#allocation3 + $0x100] sm:$0xff] %v2712
    %2721 = vst [vmem:[#allocation3 + $0x108] sm:$0xff] %v2713
    %2722 = vst [vmem:[#allocation3 + $0x110] sm:$0xff] %v2714
    %2723 = vst [vmem:[#allocation3 + $0x118] sm:$0xff] %v2715
    %v2724 = vld [vmem:[%s9] sm:$0xff]
    %v2725 = vld [vmem:[#allocation3] sm:$0xff]
    %v2726 = vld [vmem:[#allocation3 + $0x8] sm:$0xff]
    %v2727 = vld [vmem:[#allocation3 + $0x10] sm:$0xff]
    %v2728 = vld [vmem:[#allocation3 + $0x18] sm:$0xff]
    %v2729 = vld [vmem:[#allocation3 + $0x20] sm:$0xff]
    %v2730 = vld [vmem:[#allocation3 + $0x28] sm:$0xff]
    %v2731 = vld [vmem:[#allocation3 + $0x30] sm:$0xff]
    %v2732 = vld [vmem:[#allocation3 + $0x38] sm:$0xff]
    %v2733 = vld [vmem:[#allocation3 + $0x40] sm:$0xff]
    %v2734 = vld [vmem:[#allocation3 + $0x48] sm:$0xff]
    %v2735 = vld [vmem:[#allocation3 + $0x50] sm:$0xff]
    %v2736 = vld [vmem:[#allocation3 + $0x58] sm:$0xff]
    %v2737 = vld [vmem:[#allocation3 + $0x60] sm:$0xff]
    %v2738 = vld [vmem:[#allocation3 + $0x68] sm:$0xff]
    %v2739 = vld [vmem:[#allocation3 + $0x70] sm:$0xff]
    %v2740 = vld [vmem:[#allocation3 + $0x78] sm:$0xff]
    %v2741 = vld [vmem:[#allocation3 + $0x80] sm:$0xff]
    %v2742 = vld [vmem:[#allocation3 + $0x88] sm:$0xff]
    %v2743 = vld [vmem:[#allocation3 + $0x90] sm:$0xff]
    %v2744 = vld [vmem:[#allocation3 + $0x98] sm:$0xff]
    %v2745 = vld [vmem:[#allocation3 + $0xa0] sm:$0xff]
    %v2746 = vld [vmem:[#allocation3 + $0xa8] sm:$0xff]
    %v2747 = vld [vmem:[#allocation3 + $0xb0] sm:$0xff]
    %v2748 = vld [vmem:[#allocation3 + $0xb8] sm:$0xff]
    %v2749 = vld [vmem:[#allocation3 + $0xc0] sm:$0xff]
    %v2750 = vld [vmem:[#allocation3 + $0xc8] sm:$0xff]
    %v2751 = vld [vmem:[#allocation3 + $0xd0] sm:$0xff]
    %v2752 = vld [vmem:[#allocation3 + $0xd8] sm:$0xff]
    %v2753 = vld [vmem:[#allocation3 + $0xe0] sm:$0xff]
    %v2754 = vld [vmem:[#allocation3 + $0xe8] sm:$0xff]
    %v2755 = vld [vmem:[#allocation3 + $0xf0] sm:$0xff]
    %v2756 = vld [vmem:[#allocation3 + $0xf8] sm:$0xff]
    %v2757 = vld [vmem:[#allocation3 + $0x100] sm:$0xff]
    %v2758 = vld [vmem:[#allocation3 + $0x108] sm:$0xff]
    %v2759 = vld [vmem:[#allocation3 + $0x110] sm:$0xff]
    %v2760 = vld [vmem:[#allocation3 + $0x118] sm:$0xff]
    %v2761 = vld [vmem:[%s4] sm:$0xff]
    %2763 = vset.pattern.permute.xlu0 3
    %2764 = vperm.xlu0 %2763, %v2761
    %v2765 = vpop.permute.xlu0 %2764
    %v2768 = vunpack.c.l.b16 %v2724
    %v2769 = vunpack.c.h.b16 %v2724
    %v2770 = vpack.c.b16 %v2768, %v2768
    %v2771 = vpack.c.b16 %v2769, %v2769
    %v2809 = vunpack.c.l.b16 %v2725
    %v2810 = vunpack.c.h.b16 %v2725
    %v2811 = vunpack.c.l.b16 %v2726
    %v2812 = vunpack.c.h.b16 %v2726
    %v2813 = vunpack.c.l.b16 %v2727
    %v2814 = vunpack.c.h.b16 %v2727
    %v2815 = vunpack.c.l.b16 %v2728
    %v2816 = vunpack.c.h.b16 %v2728
    %v2817 = vunpack.c.l.b16 %v2729
    %v2818 = vunpack.c.h.b16 %v2729
    %v2819 = vunpack.c.l.b16 %v2730
    %v2820 = vunpack.c.h.b16 %v2730
    %v2821 = vunpack.c.l.b16 %v2731
    %v2822 = vunpack.c.h.b16 %v2731
    %v2823 = vunpack.c.l.b16 %v2732
    %v2824 = vunpack.c.h.b16 %v2732
    %v2825 = vunpack.c.l.b16 %v2733
    %v2826 = vunpack.c.h.b16 %v2733
    %v2827 = vunpack.c.l.b16 %v2734
    %v2828 = vunpack.c.h.b16 %v2734
    %v2829 = vunpack.c.l.b16 %v2735
    %v2830 = vunpack.c.h.b16 %v2735
    %v2831 = vunpack.c.l.b16 %v2736
    %v2832 = vunpack.c.h.b16 %v2736
    %v2833 = vunpack.c.l.b16 %v2737
    %v2834 = vunpack.c.h.b16 %v2737
    %v2835 = vunpack.c.l.b16 %v2738
    %v2836 = vunpack.c.h.b16 %v2738
    %v2837 = vunpack.c.l.b16 %v2739
    %v2838 = vunpack.c.h.b16 %v2739
    %v2839 = vunpack.c.l.b16 %v2740
    %v2840 = vunpack.c.h.b16 %v2740
    %v2841 = vunpack.c.l.b16 %v2741
    %v2842 = vunpack.c.h.b16 %v2741
    %v2843 = vunpack.c.l.b16 %v2742
    %v2844 = vunpack.c.h.b16 %v2742
    %v2845 = vunpack.c.l.b16 %v2743
    %v2846 = vunpack.c.h.b16 %v2743
    %v2847 = vunpack.c.l.b16 %v2744
    %v2848 = vunpack.c.h.b16 %v2744
    %v2849 = vunpack.c.l.b16 %v2745
    %v2850 = vunpack.c.h.b16 %v2745
    %v2851 = vunpack.c.l.b16 %v2746
    %v2852 = vunpack.c.h.b16 %v2746
    %v2853 = vunpack.c.l.b16 %v2747
    %v2854 = vunpack.c.h.b16 %v2747
    %v2855 = vunpack.c.l.b16 %v2748
    %v2856 = vunpack.c.h.b16 %v2748
    %v2857 = vunpack.c.l.b16 %v2749
    %v2858 = vunpack.c.h.b16 %v2749
    %v2859 = vunpack.c.l.b16 %v2750
    %v2860 = vunpack.c.h.b16 %v2750
    %v2861 = vunpack.c.l.b16 %v2751
    %v2862 = vunpack.c.h.b16 %v2751
    %v2863 = vunpack.c.l.b16 %v2752
    %v2864 = vunpack.c.h.b16 %v2752
    %v2865 = vunpack.c.l.b16 %v2753
    %v2866 = vunpack.c.h.b16 %v2753
    %v2867 = vunpack.c.l.b16 %v2754
    %v2868 = vunpack.c.h.b16 %v2754
    %v2869 = vunpack.c.l.b16 %v2755
    %v2870 = vunpack.c.h.b16 %v2755
    %v2871 = vunpack.c.l.b16 %v2756
    %v2872 = vunpack.c.h.b16 %v2756
    %v2873 = vunpack.c.l.b16 %v2757
    %v2874 = vunpack.c.h.b16 %v2757
    %v2875 = vunpack.c.l.b16 %v2758
    %v2876 = vunpack.c.h.b16 %v2758
    %v2877 = vunpack.c.l.b16 %v2759
    %v2878 = vunpack.c.h.b16 %v2759
    %v2879 = vunpack.c.l.b16 %v2760
    %v2880 = vunpack.c.h.b16 %v2760
    %v2881 = vpack.c.b16 %v2813, %v2809
    %v2882 = vpack.c.b16 %v2814, %v2810
    %v2883 = vpack.c.b16 %v2815, %v2811
    %v2884 = vpack.c.b16 %v2816, %v2812
    %v2885 = vpack.c.b16 %v2821, %v2817
    %v2886 = vpack.c.b16 %v2822, %v2818
    %v2887 = vpack.c.b16 %v2823, %v2819
    %v2888 = vpack.c.b16 %v2824, %v2820
    %v2889 = vpack.c.b16 %v2829, %v2825
    %v2890 = vpack.c.b16 %v2830, %v2826
    %v2891 = vpack.c.b16 %v2831, %v2827
    %v2892 = vpack.c.b16 %v2832, %v2828
    %v2893 = vpack.c.b16 %v2837, %v2833
    %v2894 = vpack.c.b16 %v2838, %v2834
    %v2895 = vpack.c.b16 %v2839, %v2835
    %v2896 = vpack.c.b16 %v2840, %v2836
    %v2897 = vpack.c.b16 %v2845, %v2841
    %v2898 = vpack.c.b16 %v2846, %v2842
    %v2899 = vpack.c.b16 %v2847, %v2843
    %v2900 = vpack.c.b16 %v2848, %v2844
    %v2901 = vpack.c.b16 %v2853, %v2849
    %v2902 = vpack.c.b16 %v2854, %v2850
    %v2903 = vpack.c.b16 %v2855, %v2851
    %v2904 = vpack.c.b16 %v2856, %v2852
    %v2905 = vpack.c.b16 %v2861, %v2857
    %v2906 = vpack.c.b16 %v2862, %v2858
    %v2907 = vpack.c.b16 %v2863, %v2859
    %v2908 = vpack.c.b16 %v2864, %v2860
    %v2909 = vpack.c.b16 %v2869, %v2865
    %v2910 = vpack.c.b16 %v2870, %v2866
    %v2911 = vpack.c.b16 %v2871, %v2867
    %v2912 = vpack.c.b16 %v2872, %v2868
    %v2913 = vpack.c.b16 %v2877, %v2873
    %v2914 = vpack.c.b16 %v2878, %v2874
    %v2915 = vpack.c.b16 %v2879, %v2875
    %v2916 = vpack.c.b16 %v2880, %v2876
    %vm2953 = vcmask 130048
    %v2955 = vsel %vm2953, %v2771, 0
    %2957 = vmatprep.subr.bf16.mxu0 %v2882
    %2958 = vmatpush1.bf16.msra.mxu0 %v2881
    %2959 = vmatprep.subr.bf16.mxu0 %v2886
    %2960 = vmatpush1.bf16.msra.mxu0 %v2885
    %2961 = vmatprep.subr.bf16.mxu0 %v2890
    %2962 = vmatpush1.bf16.msra.mxu0 %v2889
    %2963 = vmatprep.subr.bf16.mxu0 %v2894
    %2964 = vmatpush1.bf16.msra.mxu0 %v2893
    %2965 = vmatprep.subr.bf16.mxu0 %v2898
    %2966 = vmatpush1.bf16.msra.mxu0 %v2897
    %2967 = vmatprep.subr.bf16.mxu0 %v2902
    %2968 = vmatpush1.bf16.msra.mxu0 %v2901
    %2969 = vmatprep.subr.bf16.mxu0 %v2906
    %2970 = vmatpush1.bf16.msra.mxu0 %v2905
    %2971 = vmatprep.subr.bf16.mxu0 %v2910
    %2972 = vmatpush1.bf16.msra.mxu0 %v2909
    %2973 = vmatprep.subr.bf16.mxu0 %v2914
    %2974 = vmatpush1.bf16.msra.mxu0 %v2913
    %2975 = vmatprep.subr.bf16.mxu0 0
    %2976 = vmatpush1.bf16.msra.mxu0 0
    %2977 = vmatprep.subr.bf16.mxu0 0
    %2978 = vmatpush1.bf16.msra.mxu0 0
    %2979 = vmatprep.subr.bf16.mxu0 0
    %2980 = vmatpush1.bf16.msra.mxu0 0
    %2981 = vmatprep.subr.bf16.mxu0 0
    %2982 = vmatpush1.bf16.msra.mxu0 0
    %2983 = vmatprep.subr.bf16.mxu0 0
    %2984 = vmatpush1.bf16.msra.mxu0 0
    %2985 = vmatprep.subr.bf16.mxu0 0
    %2986 = vmatpush1.bf16.msra.mxu0 0
    %2987 = vmatprep.subr.bf16.mxu0 0
    %2988 = vmatpush1.bf16.msra.mxu0 0
    %2989 = vmatprep.mubr.bf16.mxu0 %v2955
    %2990 = vmatmul.mubr.bf16.gmra.mrb[0].mxu0 %v2770
    %v2991 = vpop.f32.mrb[0].mxu0
    %v2992 = vadd.f32 %v2765, %v2991
    %v2993 = vpop.f32.mrb[0].mxu0
    %v2994 = vadd.f32 %v2765, %v2993
    %v2995 = vpop.f32.mrb[0].mxu0
    %v2996 = vpop.f32.mrb[0].mxu0
    %2997 = vdwg.mxu0
    %2998 = vmatprep.subr.bf16.mxu0 %v2884
    %2999 = vmatpush1.bf16.msra.mxu0 %v2883
    %3000 = vmatprep.subr.bf16.mxu0 %v2888
    %3001 = vmatpush1.bf16.msra.mxu0 %v2887
    %3002 = vmatprep.subr.bf16.mxu0 %v2892
    %3003 = vmatpush1.bf16.msra.mxu0 %v2891
    %3004 = vmatprep.subr.bf16.mxu0 %v2896
    %3005 = vmatpush1.bf16.msra.mxu0 %v2895
    %3006 = vmatprep.subr.bf16.mxu0 %v2900
    %3007 = vmatpush1.bf16.msra.mxu0 %v2899
    %3008 = vmatprep.subr.bf16.mxu0 %v2904
    %3009 = vmatpush1.bf16.msra.mxu0 %v2903
    %3010 = vmatprep.subr.bf16.mxu0 %v2908
    %3011 = vmatpush1.bf16.msra.mxu0 %v2907
    %3012 = vmatprep.subr.bf16.mxu0 %v2912
    %3013 = vmatpush1.bf16.msra.mxu0 %v2911
    %3014 = vmatprep.subr.bf16.mxu0 %v2916
    %3015 = vmatpush1.bf16.msra.mxu0 %v2915
    %3016 = vmatprep.subr.bf16.mxu0 0
    %3017 = vmatpush1.bf16.msra.mxu0 0
    %3018 = vmatprep.subr.bf16.mxu0 0
    %3019 = vmatpush1.bf16.msra.mxu0 0
    %3020 = vmatprep.subr.bf16.mxu0 0
    %3021 = vmatpush1.bf16.msra.mxu0 0
    %3022 = vmatprep.subr.bf16.mxu0 0
    %3023 = vmatpush1.bf16.msra.mxu0 0
    %3024 = vmatprep.subr.bf16.mxu0 0
    %3025 = vmatpush1.bf16.msra.mxu0 0
    %3026 = vmatprep.subr.bf16.mxu0 0
    %3027 = vmatpush1.bf16.msra.mxu0 0
    %3028 = vmatprep.subr.bf16.mxu0 0
    %3029 = vmatpush1.bf16.msra.mxu0 0
    %3030 = vmatprep.mubr.bf16.mxu0 %v2955
    %3031 = vmatmul.mubr.bf16.gmra.mrb[0].mxu0 %v2770
    %v3032 = vpop.f32.mrb[0].mxu0
    %v3033 = vadd.f32 %v2765, %v3032
    %v3034 = vpop.f32.mrb[0].mxu0
    %v3035 = vadd.f32 %v2765, %v3034
    %v3036 = vpop.f32.mrb[0].mxu0
    %v3037 = vpop.f32.mrb[0].mxu0
    %3038 = vdwg.mxu0
    %s3039 = scalar_lea.vmem [#allocation2], 96
    %3040 = vst [vmem:[%s3039] sm:$0xff] %v2992
    %3041 = vst [vmem:[%s3039 + $0x8] sm:$0xff] %v2994
    %3042 = vst [vmem:[%s3039 + $0x10] sm:$0xff] %v3033
    %3043 = vst [vmem:[%s3039 + $0x18] sm:$0xff] %v3035
    %v3044 = vld [vmem:[%s3039] sm:$0xff]
    %v3045 = vld [vmem:[%s3039 + $0x8] sm:$0xff]
    %v3046 = vld [vmem:[%s3039 + $0x10] sm:$0xff]
    %v3047 = vld [vmem:[%s3039 + $0x18] sm:$0xff]
    %v3048 = vld [vmem:[%s1] sm:$0xff]
    %v3049 = vld [vmem:[%s2] sm:$0xff]
    %s3050 = sld [smem:[#allocation4 + $0x4]]
    %v3051 = vadd.f32 %v3044, %v3045
    %v3052 = vadd.f32 %v3051, %v3046
    %v3053 = vadd.f32 %v3052, %v3047
    %3054 = vadd.xlane.f32.xlu0 %v3053
    %v3055 = vpop.xlane.xlu0 %3054
    %v3056 = vmul.f32 %v3055, %v104
    %v3057 = vsub.f32 %v3044, %v3056
    %v3058 = vsub.f32 %v3045, %v3056
    %v3059 = vsub.f32 %v3046, %v3056
    %v3060 = vsub.f32 %v3047, %v3056
    %v3061 = vmul.f32 %v3057, %v3057
    %v3062 = vmul.f32 %v3058, %v3058
    %v3063 = vmul.f32 %v3059, %v3059
    %v3064 = vmul.f32 %v3060, %v3060
    %v3065 = vadd.f32 %v3061, %v3062
    %v3066 = vadd.f32 %v3065, %v3063
    %v3067 = vadd.f32 %v3066, %v3064
    %3068 = vadd.xlane.f32.xlu0 %v3067
    %v3069 = vpop.xlane.xlu0 %3068
    %v3070 = vmul.f32 %v3069, %v104
    %v3071 = vadd.f32 %v3070, 1e-05
    %v3072 = vrsqrt.pop %v3071
    %v3073 = vmul.f32 %v3057, %v3072
    %v3074 = vmul.f32 %v3058, %v3072
    %v3075 = vmul.f32 %v3059, %v3072
    %v3076 = vmul.f32 %v3060, %v3072
    %3078 = vset.pattern.permute.xlu0 4
    %3079 = vperm.xlu0 %3078, %v3048
    %v3080 = vpop.permute.xlu0 %3079
    %v3082 = vmul.f32 %v3073, %v3080
    %v3083 = vmul.f32 %v3074, %v3080
    %v3084 = vmul.f32 %v3075, %v3080
    %v3085 = vmul.f32 %v3076, %v3080
    %3087 = vset.pattern.permute.xlu0 4
    %3088 = vperm.xlu0 %3087, %v3049
    %v3089 = vpop.permute.xlu0 %3088
    %v3091 = vadd.f32 %v3082, %v3089
    %v3092 = vadd.f32 %v3083, %v3089
    %v3093 = vadd.f32 %v3084, %v3089
    %v3094 = vadd.f32 %v3085, %v3089
    %vm3095 = vcmp.ge.f32.partialorder %v3091, 0.0
    %vm3096 = vcmp.ge.f32.partialorder %v3092, 0.0
    %vm3097 = vcmp.ge.f32.partialorder %v3093, 0.0
    %vm3098 = vcmp.ge.f32.partialorder %v3094, 0.0
    %v3099 = vstv %s3050
    %v3100 = vmul.f32 %v3099, %v3091
    %v3101 = vmul.f32 %v3099, %v3092
    %v3102 = vmul.f32 %v3099, %v3093
    %v3103 = vmul.f32 %v3099, %v3094
    %v3104 = vsel %vm3095, %v3091, %v3100
    %v3105 = vsel %vm3096, %v3092, %v3101
    %v3106 = vsel %vm3097, %v3093, %v3102
    %v3107 = vsel %vm3098, %v3094, %v3103
    %v3108 = vld [vmem:[%s1733] sm:$0xff]
    %v3109 = vld [vmem:[%s1733 + $0x8] sm:$0xff]
    %v3110 = vld [vmem:[%s1733 + $0x10] sm:$0xff]
    %v3111 = vld [vmem:[%s1733 + $0x18] sm:$0xff]
    %v3112 = vld [vmem:[%s1 + $0x8] sm:$0xff]
    %v3113 = vld [vmem:[%s2 + $0x8] sm:$0xff]
    %v3114 = vadd.f32 %v3108, %v3109
    %v3115 = vadd.f32 %v3114, %v3110
    %v3116 = vadd.f32 %v3115, %v3111
    %3117 = vadd.xlane.f32.xlu0 %v3116
    %v3118 = vpop.xlane.xlu0 %3117
    %v3119 = vmul.f32 %v3118, %v104
    %v3120 = vsub.f32 %v3108, %v3119
    %v3121 = vsub.f32 %v3109, %v3119
    %v3122 = vsub.f32 %v3110, %v3119
    %v3123 = vsub.f32 %v3111, %v3119
    %v3124 = vmul.f32 %v3120, %v3120
    %v3125 = vmul.f32 %v3121, %v3121
    %v3126 = vmul.f32 %v3122, %v3122
    %v3127 = vmul.f32 %v3123, %v3123
    %v3128 = vadd.f32 %v3124, %v3125
    %v3129 = vadd.f32 %v3128, %v3126
    %v3130 = vadd.f32 %v3129, %v3127
    %3131 = vadd.xlane.f32.xlu0 %v3130
    %v3132 = vpop.xlane.xlu0 %3131
    %v3133 = vmul.f32 %v3132, %v104
    %v3134 = vadd.f32 %v3133, 1e-05
    %v3135 = vrsqrt.pop %v3134
    %v3136 = vmul.f32 %v3120, %v3135
    %v3137 = vmul.f32 %v3121, %v3135
    %v3138 = vmul.f32 %v3122, %v3135
    %v3139 = vmul.f32 %v3123, %v3135
    %3141 = vset.pattern.permute.xlu0 4
    %3142 = vperm.xlu0 %3141, %v3112
    %v3143 = vpop.permute.xlu0 %3142
    %v3145 = vmul.f32 %v3136, %v3143
    %v3146 = vmul.f32 %v3137, %v3143
    %v3147 = vmul.f32 %v3138, %v3143
    %v3148 = vmul.f32 %v3139, %v3143
    %3150 = vset.pattern.permute.xlu0 4
    %3151 = vperm.xlu0 %3150, %v3113
    %v3152 = vpop.permute.xlu0 %3151
    %v3154 = vadd.f32 %v3145, %v3152
    %v3155 = vadd.f32 %v3146, %v3152
    %v3156 = vadd.f32 %v3147, %v3152
    %v3157 = vadd.f32 %v3148, %v3152
    %vm3158 = vcmp.ge.f32.partialorder %v3154, 0.0
    %vm3159 = vcmp.ge.f32.partialorder %v3155, 0.0
    %vm3160 = vcmp.ge.f32.partialorder %v3156, 0.0
    %vm3161 = vcmp.ge.f32.partialorder %v3157, 0.0
    %v3162 = vmul.f32 %v3099, %v3154
    %v3163 = vmul.f32 %v3099, %v3155
    %v3164 = vmul.f32 %v3099, %v3156
    %v3165 = vmul.f32 %v3099, %v3157
    %v3166 = vsel %vm3158, %v3154, %v3162
    %v3167 = vsel %vm3159, %v3155, %v3163
    %v3168 = vsel %vm3160, %v3156, %v3164
    %v3169 = vsel %vm3161, %v3157, %v3165
    %3170 = vrot.lane.b32.xlu0 %v3104, 17
    %v3171 = vpop.permute.xlu0 %3170
    %3172 = vrot.lane.b32.xlu0 %v3105, 17
    %v3173 = vpop.permute.xlu0 %3172
    %3174 = vrot.lane.b32.xlu0 %v3106, 17
    %v3175 = vpop.permute.xlu0 %3174
    %3176 = vrot.lane.b32.xlu0 %v3107, 17
    %v3177 = vpop.permute.xlu0 %3176
    %v3178 = vsel %vm199, %v3175, %v3177
    %v3179 = vsel %vm199, %v3173, %v3175
    %v3180 = vsel %vm199, %v3171, %v3173
    %v3181 = vsel %vm199, %v3177, %v3171
    %v3182 = vld [vmem:[%s5] ss:$8 sm:$0xf]
    %v3184 = vlaneseq
    %v3185 = vshrl.u32 %v3184, 7
    %v3186 = vsub.s32 0, %v3185
    %v3187 = vrot.slane %v3182, %v3186
    %v3188 = vlaneseq
    %v3189 = vshrl.u32 %v3188, 7
    %v3190 = vsub.s32 1, %v3189
    %v3191 = vrot.slane %v3182, %v3190
    %v3192 = vlaneseq
    %v3193 = vshrl.u32 %v3192, 7
    %v3194 = vsub.s32 2, %v3193
    %v3195 = vrot.slane %v3182, %v3194
    %v3196 = vlaneseq
    %v3197 = vshrl.u32 %v3196, 7
    %v3198 = vsub.s32 3, %v3197
    %v3199 = vrot.slane %v3182, %v3198
    %v3204 = vmul.f32 %v3181, %v3187
    %v3205 = vmul.f32 %v3180, %v3191
    %v3206 = vmul.f32 %v3179, %v3195
    %v3207 = vmul.f32 %v3178, %v3199
    %3208 = vrot.lane.b32.xlu0 %v3104, 16
    %v3209 = vpop.permute.xlu0 %3208
    %3210 = vrot.lane.b32.xlu0 %v3105, 16
    %v3211 = vpop.permute.xlu0 %3210
    %3212 = vrot.lane.b32.xlu0 %v3106, 16
    %v3213 = vpop.permute.xlu0 %3212
    %3214 = vrot.lane.b32.xlu0 %v3107, 16
    %v3215 = vpop.permute.xlu0 %3214
    %v3216 = vsel %vm238, %v3213, %v3215
    %v3217 = vsel %vm238, %v3211, %v3213
    %v3218 = vsel %vm238, %v3209, %v3211
    %v3219 = vsel %vm238, %v3215, %v3209
    %v3220 = vld [vmem:[%s243] ss:$8 sm:$0xf]
    %v3222 = vlaneseq
    %v3223 = vshrl.u32 %v3222, 7
    %v3224 = vsub.s32 0, %v3223
    %v3225 = vrot.slane %v3220, %v3224
    %v3226 = vlaneseq
    %v3227 = vshrl.u32 %v3226, 7
    %v3228 = vsub.s32 1, %v3227
    %v3229 = vrot.slane %v3220, %v3228
    %v3230 = vlaneseq
    %v3231 = vshrl.u32 %v3230, 7
    %v3232 = vsub.s32 2, %v3231
    %v3233 = vrot.slane %v3220, %v3232
    %v3234 = vlaneseq
    %v3235 = vshrl.u32 %v3234, 7
    %v3236 = vsub.s32 3, %v3235
    %v3237 = vrot.slane %v3220, %v3236
    %v3242 = vmul.f32 %v3219, %v3225
    %v3243 = vmul.f32 %v3218, %v3229
    %v3244 = vmul.f32 %v3217, %v3233
    %v3245 = vmul.f32 %v3216, %v3237
    %v3246 = vpack.c.bf16 %v3242, %v3204
    %v3247 = vpack.c.bf16 %v3243, %v3205
    %v3248 = vpack.c.bf16 %v3244, %v3206
    %v3249 = vpack.c.bf16 %v3245, %v3207
    %v3254 = vunpack.c.l.b16 %v3246
    %v3255 = vunpack.c.l.b16 %v3247
    %v3256 = vunpack.c.l.b16 %v3248
    %v3257 = vunpack.c.l.b16 %v3249
    %v3258 = vunpack.c.h.b16 %v3246
    %v3259 = vunpack.c.h.b16 %v3247
    %v3260 = vunpack.c.h.b16 %v3248
    %v3261 = vunpack.c.h.b16 %v3249
    %v3262 = vpack.c.b16 %v3255, %v3254
    %v3263 = vpack.c.b16 %v3257, %v3256
    %v3264 = vpack.c.b16 %v3259, %v3258
    %v3265 = vpack.c.b16 %v3261, %v3260
    %3270 = vst [vmem:[#allocation3] sm:$0xff] %v3262
    %3271 = vst [vmem:[#allocation3 + $0x8] sm:$0xff] %v3263
    %3272 = vst [vmem:[#allocation3 + $0x10] sm:$0xff] %v3264
    %3273 = vst [vmem:[#allocation3 + $0x18] sm:$0xff] %v3265
    %3274 = vrot.lane.b32.xlu0 %v3104, 15
    %v3275 = vpop.permute.xlu0 %3274
    %3276 = vrot.lane.b32.xlu0 %v3105, 15
    %v3277 = vpop.permute.xlu0 %3276
    %3278 = vrot.lane.b32.xlu0 %v3106, 15
    %v3279 = vpop.permute.xlu0 %3278
    %3280 = vrot.lane.b32.xlu0 %v3107, 15
    %v3281 = vpop.permute.xlu0 %3280
    %v3282 = vsel %vm278, %v3279, %v3281
    %v3283 = vsel %vm278, %v3277, %v3279
    %v3284 = vsel %vm278, %v3275, %v3277
    %v3285 = vsel %vm278, %v3281, %v3275
    %v3286 = vld [vmem:[%s283] ss:$8 sm:$0xf]
    %v3288 = vlaneseq
    %v3289 = vshrl.u32 %v3288, 7
    %v3290 = vsub.s32 0, %v3289
    %v3291 = vrot.slane %v3286, %v3290
    %v3292 = vlaneseq
    %v3293 = vshrl.u32 %v3292, 7
    %v3294 = vsub.s32 1, %v3293
    %v3295 = vrot.slane %v3286, %v3294
    %v3296 = vlaneseq
    %v3297 = vshrl.u32 %v3296, 7
    %v3298 = vsub.s32 2, %v3297
    %v3299 = vrot.slane %v3286, %v3298
    %v3300 = vlaneseq
    %v3301 = vshrl.u32 %v3300, 7
    %v3302 = vsub.s32 3, %v3301
    %v3303 = vrot.slane %v3286, %v3302
    %v3308 = vmul.f32 %v3285, %v3291
    %v3309 = vmul.f32 %v3284, %v3295
    %v3310 = vmul.f32 %v3283, %v3299
    %v3311 = vmul.f32 %v3282, %v3303
    %3312 = vrot.lane.b32.xlu0 %v3104, 1
    %v3313 = vpop.permute.xlu0 %3312
    %3314 = vrot.lane.b32.xlu0 %v3105, 1
    %v3315 = vpop.permute.xlu0 %3314
    %3316 = vrot.lane.b32.xlu0 %v3106, 1
    %v3317 = vpop.permute.xlu0 %3316
    %3318 = vrot.lane.b32.xlu0 %v3107, 1
    %v3319 = vpop.permute.xlu0 %3318
    %v3320 = vsel %vm318, %v3317, %v3319
    %v3321 = vsel %vm318, %v3315, %v3317
    %v3322 = vsel %vm318, %v3313, %v3315
    %v3323 = vsel %vm318, %v3319, %v3313
    %v3324 = vld [vmem:[%s323] ss:$8 sm:$0xf]
    %v3326 = vlaneseq
    %v3327 = vshrl.u32 %v3326, 7
    %v3328 = vsub.s32 0, %v3327
    %v3329 = vrot.slane %v3324, %v3328
    %v3330 = vlaneseq
    %v3331 = vshrl.u32 %v3330, 7
    %v3332 = vsub.s32 1, %v3331
    %v3333 = vrot.slane %v3324, %v3332
    %v3334 = vlaneseq
    %v3335 = vshrl.u32 %v3334, 7
    %v3336 = vsub.s32 2, %v3335
    %v3337 = vrot.slane %v3324, %v3336
    %v3338 = vlaneseq
    %v3339 = vshrl.u32 %v3338, 7
    %v3340 = vsub.s32 3, %v3339
    %v3341 = vrot.slane %v3324, %v3340
    %v3346 = vmul.f32 %v3323, %v3329
    %v3347 = vmul.f32 %v3322, %v3333
    %v3348 = vmul.f32 %v3321, %v3337
    %v3349 = vmul.f32 %v3320, %v3341
    %v3350 = vpack.c.bf16 %v3346, %v3308
    %v3351 = vpack.c.bf16 %v3347, %v3309
    %v3352 = vpack.c.bf16 %v3348, %v3310
    %v3353 = vpack.c.bf16 %v3349, %v3311
    %v3358 = vunpack.c.l.b16 %v3350
    %v3359 = vunpack.c.l.b16 %v3351
    %v3360 = vunpack.c.l.b16 %v3352
    %v3361 = vunpack.c.l.b16 %v3353
    %v3362 = vunpack.c.h.b16 %v3350
    %v3363 = vunpack.c.h.b16 %v3351
    %v3364 = vunpack.c.h.b16 %v3352
    %v3365 = vunpack.c.h.b16 %v3353
    %v3366 = vpack.c.b16 %v3359, %v3358
    %v3367 = vpack.c.b16 %v3361, %v3360
    %v3368 = vpack.c.b16 %v3363, %v3362
    %v3369 = vpack.c.b16 %v3365, %v3364
    %3374 = vst [vmem:[#allocation3 + $0x20] sm:$0xff] %v3366
    %3375 = vst [vmem:[#allocation3 + $0x28] sm:$0xff] %v3367
    %3376 = vst [vmem:[#allocation3 + $0x30] sm:$0xff] %v3368
    %3377 = vst [vmem:[#allocation3 + $0x38] sm:$0xff] %v3369
    %3378 = vrot.lane.b32.xlu0 %v3104, 127
    %v3379 = vpop.permute.xlu0 %3378
    %3380 = vrot.lane.b32.xlu0 %v3105, 127
    %v3381 = vpop.permute.xlu0 %3380
    %3382 = vrot.lane.b32.xlu0 %v3106, 127
    %v3383 = vpop.permute.xlu0 %3382
    %3384 = vrot.lane.b32.xlu0 %v3107, 127
    %v3385 = vpop.permute.xlu0 %3384
    %v3386 = vsel %vm418, %v3383, %v3385
    %v3387 = vsel %vm418, %v3381, %v3383
    %v3388 = vsel %vm418, %v3379, %v3381
    %v3389 = vsel %vm418, %v3385, %v3379
    %v3390 = vld [vmem:[%s423] ss:$8 sm:$0xf]
    %v3392 = vlaneseq
    %v3393 = vshrl.u32 %v3392, 7
    %v3394 = vsub.s32 0, %v3393
    %v3395 = vrot.slane %v3390, %v3394
    %v3396 = vlaneseq
    %v3397 = vshrl.u32 %v3396, 7
    %v3398 = vsub.s32 1, %v3397
    %v3399 = vrot.slane %v3390, %v3398
    %v3400 = vlaneseq
    %v3401 = vshrl.u32 %v3400, 7
    %v3402 = vsub.s32 2, %v3401
    %v3403 = vrot.slane %v3390, %v3402
    %v3404 = vlaneseq
    %v3405 = vshrl.u32 %v3404, 7
    %v3406 = vsub.s32 3, %v3405
    %v3407 = vrot.slane %v3390, %v3406
    %v3412 = vmul.f32 %v3388, %v3395
    %v3413 = vmul.f32 %v3387, %v3399
    %v3414 = vmul.f32 %v3386, %v3403
    %v3415 = vmul.f32 %v3389, %v3407
    %v3416 = vpack.c.bf16 %v3412, %v3104
    %v3417 = vpack.c.bf16 %v3413, %v3105
    %v3418 = vpack.c.bf16 %v3414, %v3106
    %v3419 = vpack.c.bf16 %v3415, %v3107
    %v3424 = vunpack.c.l.b16 %v3416
    %v3425 = vunpack.c.l.b16 %v3417
    %v3426 = vunpack.c.l.b16 %v3418
    %v3427 = vunpack.c.l.b16 %v3419
    %v3428 = vunpack.c.h.b16 %v3416
    %v3429 = vunpack.c.h.b16 %v3417
    %v3430 = vunpack.c.h.b16 %v3418
    %v3431 = vunpack.c.h.b16 %v3419
    %v3432 = vpack.c.b16 %v3425, %v3424
    %v3433 = vpack.c.b16 %v3427, %v3426
    %v3434 = vpack.c.b16 %v3429, %v3428
    %v3435 = vpack.c.b16 %v3431, %v3430
    %3440 = vst [vmem:[#allocation3 + $0x40] sm:$0xff] %v3432
    %3441 = vst [vmem:[#allocation3 + $0x48] sm:$0xff] %v3433
    %3442 = vst [vmem:[#allocation3 + $0x50] sm:$0xff] %v3434
    %3443 = vst [vmem:[#allocation3 + $0x58] sm:$0xff] %v3435
    %3444 = vrot.lane.b32.xlu0 %v3104, 113
    %v3445 = vpop.permute.xlu0 %3444
    %3446 = vrot.lane.b32.xlu0 %v3105, 113
    %v3447 = vpop.permute.xlu0 %3446
    %3448 = vrot.lane.b32.xlu0 %v3106, 113
    %v3449 = vpop.permute.xlu0 %3448
    %3450 = vrot.lane.b32.xlu0 %v3107, 113
    %v3451 = vpop.permute.xlu0 %3450
    %v3452 = vsel %vm458, %v3449, %v3451
    %v3453 = vsel %vm458, %v3447, %v3449
    %v3454 = vsel %vm458, %v3445, %v3447
    %v3455 = vsel %vm458, %v3451, %v3445
    %v3456 = vld [vmem:[%s463] ss:$8 sm:$0xf]
    %v3458 = vlaneseq
    %v3459 = vshrl.u32 %v3458, 7
    %v3460 = vsub.s32 0, %v3459
    %v3461 = vrot.slane %v3456, %v3460
    %v3462 = vlaneseq
    %v3463 = vshrl.u32 %v3462, 7
    %v3464 = vsub.s32 1, %v3463
    %v3465 = vrot.slane %v3456, %v3464
    %v3466 = vlaneseq
    %v3467 = vshrl.u32 %v3466, 7
    %v3468 = vsub.s32 2, %v3467
    %v3469 = vrot.slane %v3456, %v3468
    %v3470 = vlaneseq
    %v3471 = vshrl.u32 %v3470, 7
    %v3472 = vsub.s32 3, %v3471
    %v3473 = vrot.slane %v3456, %v3472
    %v3478 = vmul.f32 %v3454, %v3461
    %v3479 = vmul.f32 %v3453, %v3465
    %v3480 = vmul.f32 %v3452, %v3469
    %v3481 = vmul.f32 %v3455, %v3473
    %3482 = vrot.lane.b32.xlu0 %v3104, 112
    %v3483 = vpop.permute.xlu0 %3482
    %3484 = vrot.lane.b32.xlu0 %v3105, 112
    %v3485 = vpop.permute.xlu0 %3484
    %3486 = vrot.lane.b32.xlu0 %v3106, 112
    %v3487 = vpop.permute.xlu0 %3486
    %3488 = vrot.lane.b32.xlu0 %v3107, 112
    %v3489 = vpop.permute.xlu0 %3488
    %v3490 = vsel %vm498, %v3487, %v3489
    %v3491 = vsel %vm498, %v3485, %v3487
    %v3492 = vsel %vm498, %v3483, %v3485
    %v3493 = vsel %vm498, %v3489, %v3483
    %v3494 = vld [vmem:[%s503] ss:$8 sm:$0xf]
    %v3496 = vlaneseq
    %v3497 = vshrl.u32 %v3496, 7
    %v3498 = vsub.s32 0, %v3497
    %v3499 = vrot.slane %v3494, %v3498
    %v3500 = vlaneseq
    %v3501 = vshrl.u32 %v3500, 7
    %v3502 = vsub.s32 1, %v3501
    %v3503 = vrot.slane %v3494, %v3502
    %v3504 = vlaneseq
    %v3505 = vshrl.u32 %v3504, 7
    %v3506 = vsub.s32 2, %v3505
    %v3507 = vrot.slane %v3494, %v3506
    %v3508 = vlaneseq
    %v3509 = vshrl.u32 %v3508, 7
    %v3510 = vsub.s32 3, %v3509
    %v3511 = vrot.slane %v3494, %v3510
    %v3516 = vmul.f32 %v3492, %v3499
    %v3517 = vmul.f32 %v3491, %v3503
    %v3518 = vmul.f32 %v3490, %v3507
    %v3519 = vmul.f32 %v3493, %v3511
    %v3520 = vpack.c.bf16 %v3516, %v3478
    %v3521 = vpack.c.bf16 %v3517, %v3479
    %v3522 = vpack.c.bf16 %v3518, %v3480
    %v3523 = vpack.c.bf16 %v3519, %v3481
    %v3528 = vunpack.c.l.b16 %v3520
    %v3529 = vunpack.c.l.b16 %v3521
    %v3530 = vunpack.c.l.b16 %v3522
    %v3531 = vunpack.c.l.b16 %v3523
    %v3532 = vunpack.c.h.b16 %v3520
    %v3533 = vunpack.c.h.b16 %v3521
    %v3534 = vunpack.c.h.b16 %v3522
    %v3535 = vunpack.c.h.b16 %v3523
    %v3536 = vpack.c.b16 %v3529, %v3528
    %v3537 = vpack.c.b16 %v3531, %v3530
    %v3538 = vpack.c.b16 %v3533, %v3532
    %v3539 = vpack.c.b16 %v3535, %v3534
    %3544 = vst [vmem:[#allocation3 + $0x60] sm:$0xff] %v3536
    %3545 = vst [vmem:[#allocation3 + $0x68] sm:$0xff] %v3537
    %3546 = vst [vmem:[#allocation3 + $0x70] sm:$0xff] %v3538
    %3547 = vst [vmem:[#allocation3 + $0x78] sm:$0xff] %v3539
    %3548 = vrot.lane.b32.xlu0 %v3104, 111
    %v3549 = vpop.permute.xlu0 %3548
    %3550 = vrot.lane.b32.xlu0 %v3105, 111
    %v3551 = vpop.permute.xlu0 %3550
    %3552 = vrot.lane.b32.xlu0 %v3106, 111
    %v3553 = vpop.permute.xlu0 %3552
    %3554 = vrot.lane.b32.xlu0 %v3107, 111
    %v3555 = vpop.permute.xlu0 %3554
    %v3556 = vsel %vm598, %v3553, %v3555
    %v3557 = vsel %vm598, %v3551, %v3553
    %v3558 = vsel %vm598, %v3549, %v3551
    %v3559 = vsel %vm598, %v3555, %v3549
    %v3560 = vld [vmem:[%s603] ss:$8 sm:$0xf]
    %v3562 = vlaneseq
    %v3563 = vshrl.u32 %v3562, 7
    %v3564 = vsub.s32 0, %v3563
    %v3565 = vrot.slane %v3560, %v3564
    %v3566 = vlaneseq
    %v3567 = vshrl.u32 %v3566, 7
    %v3568 = vsub.s32 1, %v3567
    %v3569 = vrot.slane %v3560, %v3568
    %v3570 = vlaneseq
    %v3571 = vshrl.u32 %v3570, 7
    %v3572 = vsub.s32 2, %v3571
    %v3573 = vrot.slane %v3560, %v3572
    %v3574 = vlaneseq
    %v3575 = vshrl.u32 %v3574, 7
    %v3576 = vsub.s32 3, %v3575
    %v3577 = vrot.slane %v3560, %v3576
    %v3582 = vmul.f32 %v3558, %v3565
    %v3583 = vmul.f32 %v3557, %v3569
    %v3584 = vmul.f32 %v3556, %v3573
    %v3585 = vmul.f32 %v3559, %v3577
    %3586 = vrot.lane.b32.xlu0 %v3166, 17
    %v3587 = vpop.permute.xlu0 %3586
    %3588 = vrot.lane.b32.xlu0 %v3167, 17
    %v3589 = vpop.permute.xlu0 %3588
    %3590 = vrot.lane.b32.xlu0 %v3168, 17
    %v3591 = vpop.permute.xlu0 %3590
    %3592 = vrot.lane.b32.xlu0 %v3169, 17
    %v3593 = vpop.permute.xlu0 %3592
    %v3594 = vsel %vm199, %v3591, %v3593
    %v3595 = vsel %vm199, %v3589, %v3591
    %v3596 = vsel %vm199, %v3587, %v3589
    %v3597 = vsel %vm199, %v3593, %v3587
    %v3598 = vld [vmem:[%s5] ss:$8 sm:$0xf]
    %v3600 = vlaneseq
    %v3601 = vshrl.u32 %v3600, 7
    %v3602 = vsub.s32 0, %v3601
    %v3603 = vrot.slane %v3598, %v3602
    %v3604 = vlaneseq
    %v3605 = vshrl.u32 %v3604, 7
    %v3606 = vsub.s32 1, %v3605
    %v3607 = vrot.slane %v3598, %v3606
    %v3608 = vlaneseq
    %v3609 = vshrl.u32 %v3608, 7
    %v3610 = vsub.s32 2, %v3609
    %v3611 = vrot.slane %v3598, %v3610
    %v3612 = vlaneseq
    %v3613 = vshrl.u32 %v3612, 7
    %v3614 = vsub.s32 3, %v3613
    %v3615 = vrot.slane %v3598, %v3614
    %v3620 = vmul.f32 %v3597, %v3603
    %v3621 = vmul.f32 %v3596, %v3607
    %v3622 = vmul.f32 %v3595, %v3611
    %v3623 = vmul.f32 %v3594, %v3615
    %v3624 = vpack.c.bf16 %v3620, %v3582
    %v3625 = vpack.c.bf16 %v3621, %v3583
    %v3626 = vpack.c.bf16 %v3622, %v3584
    %v3627 = vpack.c.bf16 %v3623, %v3585
    %v3632 = vunpack.c.l.b16 %v3624
    %v3633 = vunpack.c.l.b16 %v3625
    %v3634 = vunpack.c.l.b16 %v3626
    %v3635 = vunpack.c.l.b16 %v3627
    %v3636 = vunpack.c.h.b16 %v3624
    %v3637 = vunpack.c.h.b16 %v3625
    %v3638 = vunpack.c.h.b16 %v3626
    %v3639 = vunpack.c.h.b16 %v3627
    %v3640 = vpack.c.b16 %v3633, %v3632
    %v3641 = vpack.c.b16 %v3635, %v3634
    %v3642 = vpack.c.b16 %v3637, %v3636
    %v3643 = vpack.c.b16 %v3639, %v3638
    %3648 = vst [vmem:[#allocation3 + $0x80] sm:$0xff] %v3640
    %3649 = vst [vmem:[#allocation3 + $0x88] sm:$0xff] %v3641
    %3650 = vst [vmem:[#allocation3 + $0x90] sm:$0xff] %v3642
    %3651 = vst [vmem:[#allocation3 + $0x98] sm:$0xff] %v3643
    %3652 = vrot.lane.b32.xlu0 %v3166, 16
    %v3653 = vpop.permute.xlu0 %3652
    %3654 = vrot.lane.b32.xlu0 %v3167, 16
    %v3655 = vpop.permute.xlu0 %3654
    %3656 = vrot.lane.b32.xlu0 %v3168, 16
    %v3657 = vpop.permute.xlu0 %3656
    %3658 = vrot.lane.b32.xlu0 %v3169, 16
    %v3659 = vpop.permute.xlu0 %3658
    %v3660 = vsel %vm238, %v3657, %v3659
    %v3661 = vsel %vm238, %v3655, %v3657
    %v3662 = vsel %vm238, %v3653, %v3655
    %v3663 = vsel %vm238, %v3659, %v3653
    %v3664 = vld [vmem:[%s243] ss:$8 sm:$0xf]
    %v3666 = vlaneseq
    %v3667 = vshrl.u32 %v3666, 7
    %v3668 = vsub.s32 0, %v3667
    %v3669 = vrot.slane %v3664, %v3668
    %v3670 = vlaneseq
    %v3671 = vshrl.u32 %v3670, 7
    %v3672 = vsub.s32 1, %v3671
    %v3673 = vrot.slane %v3664, %v3672
    %v3674 = vlaneseq
    %v3675 = vshrl.u32 %v3674, 7
    %v3676 = vsub.s32 2, %v3675
    %v3677 = vrot.slane %v3664, %v3676
    %v3678 = vlaneseq
    %v3679 = vshrl.u32 %v3678, 7
    %v3680 = vsub.s32 3, %v3679
    %v3681 = vrot.slane %v3664, %v3680
    %v3686 = vmul.f32 %v3663, %v3669
    %v3687 = vmul.f32 %v3662, %v3673
    %v3688 = vmul.f32 %v3661, %v3677
    %v3689 = vmul.f32 %v3660, %v3681
    %3690 = vrot.lane.b32.xlu0 %v3166, 15
    %v3691 = vpop.permute.xlu0 %3690
    %3692 = vrot.lane.b32.xlu0 %v3167, 15
    %v3693 = vpop.permute.xlu0 %3692
    %3694 = vrot.lane.b32.xlu0 %v3168, 15
    %v3695 = vpop.permute.xlu0 %3694
    %3696 = vrot.lane.b32.xlu0 %v3169, 15
    %v3697 = vpop.permute.xlu0 %3696
    %v3698 = vsel %vm278, %v3695, %v3697
    %v3699 = vsel %vm278, %v3693, %v3695
    %v3700 = vsel %vm278, %v3691, %v3693
    %v3701 = vsel %vm278, %v3697, %v3691
    %v3702 = vld [vmem:[%s283] ss:$8 sm:$0xf]
    %v3704 = vlaneseq
    %v3705 = vshrl.u32 %v3704, 7
    %v3706 = vsub.s32 0, %v3705
    %v3707 = vrot.slane %v3702, %v3706
    %v3708 = vlaneseq
    %v3709 = vshrl.u32 %v3708, 7
    %v3710 = vsub.s32 1, %v3709
    %v3711 = vrot.slane %v3702, %v3710
    %v3712 = vlaneseq
    %v3713 = vshrl.u32 %v3712, 7
    %v3714 = vsub.s32 2, %v3713
    %v3715 = vrot.slane %v3702, %v3714
    %v3716 = vlaneseq
    %v3717 = vshrl.u32 %v3716, 7
    %v3718 = vsub.s32 3, %v3717
    %v3719 = vrot.slane %v3702, %v3718
    %v3724 = vmul.f32 %v3701, %v3707
    %v3725 = vmul.f32 %v3700, %v3711
    %v3726 = vmul.f32 %v3699, %v3715
    %v3727 = vmul.f32 %v3698, %v3719
    %v3728 = vpack.c.bf16 %v3724, %v3686
    %v3729 = vpack.c.bf16 %v3725, %v3687
    %v3730 = vpack.c.bf16 %v3726, %v3688
    %v3731 = vpack.c.bf16 %v3727, %v3689
    %v3736 = vunpack.c.l.b16 %v3728
    %v3737 = vunpack.c.l.b16 %v3729
    %v3738 = vunpack.c.l.b16 %v3730
    %v3739 = vunpack.c.l.b16 %v3731
    %v3740 = vunpack.c.h.b16 %v3728
    %v3741 = vunpack.c.h.b16 %v3729
    %v3742 = vunpack.c.h.b16 %v3730
    %v3743 = vunpack.c.h.b16 %v3731
    %v3744 = vpack.c.b16 %v3737, %v3736
    %v3745 = vpack.c.b16 %v3739, %v3738
    %v3746 = vpack.c.b16 %v3741, %v3740
    %v3747 = vpack.c.b16 %v3743, %v3742
    %3752 = vst [vmem:[#allocation3 + $0xa0] sm:$0xff] %v3744
    %3753 = vst [vmem:[#allocation3 + $0xa8] sm:$0xff] %v3745
    %3754 = vst [vmem:[#allocation3 + $0xb0] sm:$0xff] %v3746
    %3755 = vst [vmem:[#allocation3 + $0xb8] sm:$0xff] %v3747
    %3756 = vrot.lane.b32.xlu0 %v3166, 1
    %v3757 = vpop.permute.xlu0 %3756
    %3758 = vrot.lane.b32.xlu0 %v3167, 1
    %v3759 = vpop.permute.xlu0 %3758
    %3760 = vrot.lane.b32.xlu0 %v3168, 1
    %v3761 = vpop.permute.xlu0 %3760
    %3762 = vrot.lane.b32.xlu0 %v3169, 1
    %v3763 = vpop.permute.xlu0 %3762
    %v3764 = vsel %vm318, %v3761, %v3763
    %v3765 = vsel %vm318, %v3759, %v3761
    %v3766 = vsel %vm318, %v3757, %v3759
    %v3767 = vsel %vm318, %v3763, %v3757
    %v3768 = vld [vmem:[%s323] ss:$8 sm:$0xf]
    %v3770 = vlaneseq
    %v3771 = vshrl.u32 %v3770, 7
    %v3772 = vsub.s32 0, %v3771
    %v3773 = vrot.slane %v3768, %v3772
    %v3774 = vlaneseq
    %v3775 = vshrl.u32 %v3774, 7
    %v3776 = vsub.s32 1, %v3775
    %v3777 = vrot.slane %v3768, %v3776
    %v3778 = vlaneseq
    %v3779 = vshrl.u32 %v3778, 7
    %v3780 = vsub.s32 2, %v3779
    %v3781 = vrot.slane %v3768, %v3780
    %v3782 = vlaneseq
    %v3783 = vshrl.u32 %v3782, 7
    %v3784 = vsub.s32 3, %v3783
    %v3785 = vrot.slane %v3768, %v3784
    %v3790 = vmul.f32 %v3767, %v3773
    %v3791 = vmul.f32 %v3766, %v3777
    %v3792 = vmul.f32 %v3765, %v3781
    %v3793 = vmul.f32 %v3764, %v3785
    %v3794 = vpack.c.bf16 %v3166, %v3790
    %v3795 = vpack.c.bf16 %v3167, %v3791
    %v3796 = vpack.c.bf16 %v3168, %v3792
    %v3797 = vpack.c.bf16 %v3169, %v3793
    %v3802 = vunpack.c.l.b16 %v3794
    %v3803 = vunpack.c.l.b16 %v3795
    %v3804 = vunpack.c.l.b16 %v3796
    %v3805 = vunpack.c.l.b16 %v3797
    %v3806 = vunpack.c.h.b16 %v3794
    %v3807 = vunpack.c.h.b16 %v3795
    %v3808 = vunpack.c.h.b16 %v3796
    %v3809 = vunpack.c.h.b16 %v3797
    %v3810 = vpack.c.b16 %v3803, %v3802
    %v3811 = vpack.c.b16 %v3805, %v3804
    %v3812 = vpack.c.b16 %v3807, %v3806
    %v3813 = vpack.c.b16 %v3809, %v3808
    %3818 = vst [vmem:[#allocation3 + $0xc0] sm:$0xff] %v3810
    %3819 = vst [vmem:[#allocation3 + $0xc8] sm:$0xff] %v3811
    %3820 = vst [vmem:[#allocation3 + $0xd0] sm:$0xff] %v3812
    %3821 = vst [vmem:[#allocation3 + $0xd8] sm:$0xff] %v3813
    %3822 = vrot.lane.b32.xlu0 %v3166, 127
    %v3823 = vpop.permute.xlu0 %3822
    %3824 = vrot.lane.b32.xlu0 %v3167, 127
    %v3825 = vpop.permute.xlu0 %3824
    %3826 = vrot.lane.b32.xlu0 %v3168, 127
    %v3827 = vpop.permute.xlu0 %3826
    %3828 = vrot.lane.b32.xlu0 %v3169, 127
    %v3829 = vpop.permute.xlu0 %3828
    %v3830 = vsel %vm418, %v3827, %v3829
    %v3831 = vsel %vm418, %v3825, %v3827
    %v3832 = vsel %vm418, %v3823, %v3825
    %v3833 = vsel %vm418, %v3829, %v3823
    %v3834 = vld [vmem:[%s423] ss:$8 sm:$0xf]
    %v3836 = vlaneseq
    %v3837 = vshrl.u32 %v3836, 7
    %v3838 = vsub.s32 0, %v3837
    %v3839 = vrot.slane %v3834, %v3838
    %v3840 = vlaneseq
    %v3841 = vshrl.u32 %v3840, 7
    %v3842 = vsub.s32 1, %v3841
    %v3843 = vrot.slane %v3834, %v3842
    %v3844 = vlaneseq
    %v3845 = vshrl.u32 %v3844, 7
    %v3846 = vsub.s32 2, %v3845
    %v3847 = vrot.slane %v3834, %v3846
    %v3848 = vlaneseq
    %v3849 = vshrl.u32 %v3848, 7
    %v3850 = vsub.s32 3, %v3849
    %v3851 = vrot.slane %v3834, %v3850
    %v3856 = vmul.f32 %v3832, %v3839
    %v3857 = vmul.f32 %v3831, %v3843
    %v3858 = vmul.f32 %v3830, %v3847
    %v3859 = vmul.f32 %v3833, %v3851
    %3860 = vrot.lane.b32.xlu0 %v3166, 113
    %v3861 = vpop.permute.xlu0 %3860
    %3862 = vrot.lane.b32.xlu0 %v3167, 113
    %v3863 = vpop.permute.xlu0 %3862
    %3864 = vrot.lane.b32.xlu0 %v3168, 113
    %v3865 = vpop.permute.xlu0 %3864
    %3866 = vrot.lane.b32.xlu0 %v3169, 113
    %v3867 = vpop.permute.xlu0 %3866
    %v3868 = vsel %vm458, %v3865, %v3867
    %v3869 = vsel %vm458, %v3863, %v3865
    %v3870 = vsel %vm458, %v3861, %v3863
    %v3871 = vsel %vm458, %v3867, %v3861
    %v3872 = vld [vmem:[%s463] ss:$8 sm:$0xf]
    %v3874 = vlaneseq
    %v3875 = vshrl.u32 %v3874, 7
    %v3876 = vsub.s32 0, %v3875
    %v3877 = vrot.slane %v3872, %v3876
    %v3878 = vlaneseq
    %v3879 = vshrl.u32 %v3878, 7
    %v3880 = vsub.s32 1, %v3879
    %v3881 = vrot.slane %v3872, %v3880
    %v3882 = vlaneseq
    %v3883 = vshrl.u32 %v3882, 7
    %v3884 = vsub.s32 2, %v3883
    %v3885 = vrot.slane %v3872, %v3884
    %v3886 = vlaneseq
    %v3887 = vshrl.u32 %v3886, 7
    %v3888 = vsub.s32 3, %v3887
    %v3889 = vrot.slane %v3872, %v3888
    %v3894 = vmul.f32 %v3870, %v3877
    %v3895 = vmul.f32 %v3869, %v3881
    %v3896 = vmul.f32 %v3868, %v3885
    %v3897 = vmul.f32 %v3871, %v3889
    %v3898 = vpack.c.bf16 %v3894, %v3856
    %v3899 = vpack.c.bf16 %v3895, %v3857
    %v3900 = vpack.c.bf16 %v3896, %v3858
    %v3901 = vpack.c.bf16 %v3897, %v3859
    %v3906 = vunpack.c.l.b16 %v3898
    %v3907 = vunpack.c.l.b16 %v3899
    %v3908 = vunpack.c.l.b16 %v3900
    %v3909 = vunpack.c.l.b16 %v3901
    %v3910 = vunpack.c.h.b16 %v3898
    %v3911 = vunpack.c.h.b16 %v3899
    %v3912 = vunpack.c.h.b16 %v3900
    %v3913 = vunpack.c.h.b16 %v3901
    %v3914 = vpack.c.b16 %v3907, %v3906
    %v3915 = vpack.c.b16 %v3909, %v3908
    %v3916 = vpack.c.b16 %v3911, %v3910
    %v3917 = vpack.c.b16 %v3913, %v3912
    %3922 = vst [vmem:[#allocation3 + $0xe0] sm:$0xff] %v3914
    %3923 = vst [vmem:[#allocation3 + $0xe8] sm:$0xff] %v3915
    %3924 = vst [vmem:[#allocation3 + $0xf0] sm:$0xff] %v3916
    %3925 = vst [vmem:[#allocation3 + $0xf8] sm:$0xff] %v3917
    %3926 = vrot.lane.b32.xlu0 %v3166, 112
    %v3927 = vpop.permute.xlu0 %3926
    %3928 = vrot.lane.b32.xlu0 %v3167, 112
    %v3929 = vpop.permute.xlu0 %3928
    %3930 = vrot.lane.b32.xlu0 %v3168, 112
    %v3931 = vpop.permute.xlu0 %3930
    %3932 = vrot.lane.b32.xlu0 %v3169, 112
    %v3933 = vpop.permute.xlu0 %3932
    %v3934 = vsel %vm498, %v3931, %v3933
    %v3935 = vsel %vm498, %v3929, %v3931
    %v3936 = vsel %vm498, %v3927, %v3929
    %v3937 = vsel %vm498, %v3933, %v3927
    %v3938 = vld [vmem:[%s503] ss:$8 sm:$0xf]
    %v3940 = vlaneseq
    %v3941 = vshrl.u32 %v3940, 7
    %v3942 = vsub.s32 0, %v3941
    %v3943 = vrot.slane %v3938, %v3942
    %v3944 = vlaneseq
    %v3945 = vshrl.u32 %v3944, 7
    %v3946 = vsub.s32 1, %v3945
    %v3947 = vrot.slane %v3938, %v3946
    %v3948 = vlaneseq
    %v3949 = vshrl.u32 %v3948, 7
    %v3950 = vsub.s32 2, %v3949
    %v3951 = vrot.slane %v3938, %v3950
    %v3952 = vlaneseq
    %v3953 = vshrl.u32 %v3952, 7
    %v3954 = vsub.s32 3, %v3953
    %v3955 = vrot.slane %v3938, %v3954
    %v3960 = vmul.f32 %v3936, %v3943
    %v3961 = vmul.f32 %v3935, %v3947
    %v3962 = vmul.f32 %v3934, %v3951
    %v3963 = vmul.f32 %v3937, %v3955
    %3964 = vrot.lane.b32.xlu0 %v3166, 111
    %v3965 = vpop.permute.xlu0 %3964
    %3966 = vrot.lane.b32.xlu0 %v3167, 111
    %v3967 = vpop.permute.xlu0 %3966
    %3968 = vrot.lane.b32.xlu0 %v3168, 111
    %v3969 = vpop.permute.xlu0 %3968
    %3970 = vrot.lane.b32.xlu0 %v3169, 111
    %v3971 = vpop.permute.xlu0 %3970
    %v3972 = vsel %vm598, %v3969, %v3971
    %v3973 = vsel %vm598, %v3967, %v3969
    %v3974 = vsel %vm598, %v3965, %v3967
    %v3975 = vsel %vm598, %v3971, %v3965
    %v3976 = vld [vmem:[%s603] ss:$8 sm:$0xf]
    %v3978 = vlaneseq
    %v3979 = vshrl.u32 %v3978, 7
    %v3980 = vsub.s32 0, %v3979
    %v3981 = vrot.slane %v3976, %v3980
    %v3982 = vlaneseq
    %v3983 = vshrl.u32 %v3982, 7
    %v3984 = vsub.s32 1, %v3983
    %v3985 = vrot.slane %v3976, %v3984
    %v3986 = vlaneseq
    %v3987 = vshrl.u32 %v3986, 7
    %v3988 = vsub.s32 2, %v3987
    %v3989 = vrot.slane %v3976, %v3988
    %v3990 = vlaneseq
    %v3991 = vshrl.u32 %v3990, 7
    %v3992 = vsub.s32 3, %v3991
    %v3993 = vrot.slane %v3976, %v3992
    %v3998 = vmul.f32 %v3974, %v3981
    %v3999 = vmul.f32 %v3973, %v3985
    %v4000 = vmul.f32 %v3972, %v3989
    %v4001 = vmul.f32 %v3975, %v3993
    %v4002 = vpack.c.bf16 %v3998, %v3960
    %v4003 = vpack.c.bf16 %v3999, %v3961
    %v4004 = vpack.c.bf16 %v4000, %v3962
    %v4005 = vpack.c.bf16 %v4001, %v3963
    %v4010 = vunpack.c.l.b16 %v4002
    %v4011 = vunpack.c.l.b16 %v4003
    %v4012 = vunpack.c.l.b16 %v4004
    %v4013 = vunpack.c.l.b16 %v4005
    %v4014 = vunpack.c.h.b16 %v4002
    %v4015 = vunpack.c.h.b16 %v4003
    %v4016 = vunpack.c.h.b16 %v4004
    %v4017 = vunpack.c.h.b16 %v4005
    %v4018 = vpack.c.b16 %v4011, %v4010
    %v4019 = vpack.c.b16 %v4013, %v4012
    %v4020 = vpack.c.b16 %v4015, %v4014
    %v4021 = vpack.c.b16 %v4017, %v4016
    %4026 = vst [vmem:[#allocation3 + $0x100] sm:$0xff] %v4018
    %4027 = vst [vmem:[#allocation3 + $0x108] sm:$0xff] %v4019
    %4028 = vst [vmem:[#allocation3 + $0x110] sm:$0xff] %v4020
    %4029 = vst [vmem:[#allocation3 + $0x118] sm:$0xff] %v4021
    %v4030 = vld [vmem:[%s10] sm:$0xff]
    %v4031 = vld [vmem:[#allocation3] sm:$0xff]
    %v4032 = vld [vmem:[#allocation3 + $0x8] sm:$0xff]
    %v4033 = vld [vmem:[#allocation3 + $0x10] sm:$0xff]
    %v4034 = vld [vmem:[#allocation3 + $0x18] sm:$0xff]
    %v4035 = vld [vmem:[#allocation3 + $0x20] sm:$0xff]
    %v4036 = vld [vmem:[#allocation3 + $0x28] sm:$0xff]
    %v4037 = vld [vmem:[#allocation3 + $0x30] sm:$0xff]
    %v4038 = vld [vmem:[#allocation3 + $0x38] sm:$0xff]
    %v4039 = vld [vmem:[#allocation3 + $0x40] sm:$0xff]
    %v4040 = vld [vmem:[#allocation3 + $0x48] sm:$0xff]
    %v4041 = vld [vmem:[#allocation3 + $0x50] sm:$0xff]
    %v4042 = vld [vmem:[#allocation3 + $0x58] sm:$0xff]
    %v4043 = vld [vmem:[#allocation3 + $0x60] sm:$0xff]
    %v4044 = vld [vmem:[#allocation3 + $0x68] sm:$0xff]
    %v4045 = vld [vmem:[#allocation3 + $0x70] sm:$0xff]
    %v4046 = vld [vmem:[#allocation3 + $0x78] sm:$0xff]
    %v4047 = vld [vmem:[#allocation3 + $0x80] sm:$0xff]
    %v4048 = vld [vmem:[#allocation3 + $0x88] sm:$0xff]
    %v4049 = vld [vmem:[#allocation3 + $0x90] sm:$0xff]
    %v4050 = vld [vmem:[#allocation3 + $0x98] sm:$0xff]
    %v4051 = vld [vmem:[#allocation3 + $0xa0] sm:$0xff]
    %v4052 = vld [vmem:[#allocation3 + $0xa8] sm:$0xff]
    %v4053 = vld [vmem:[#allocation3 + $0xb0] sm:$0xff]
    %v4054 = vld [vmem:[#allocation3 + $0xb8] sm:$0xff]
    %v4055 = vld [vmem:[#allocation3 + $0xc0] sm:$0xff]
    %v4056 = vld [vmem:[#allocation3 + $0xc8] sm:$0xff]
    %v4057 = vld [vmem:[#allocation3 + $0xd0] sm:$0xff]
    %v4058 = vld [vmem:[#allocation3 + $0xd8] sm:$0xff]
    %v4059 = vld [vmem:[#allocation3 + $0xe0] sm:$0xff]
    %v4060 = vld [vmem:[#allocation3 + $0xe8] sm:$0xff]
    %v4061 = vld [vmem:[#allocation3 + $0xf0] sm:$0xff]
    %v4062 = vld [vmem:[#allocation3 + $0xf8] sm:$0xff]
    %v4063 = vld [vmem:[#allocation3 + $0x100] sm:$0xff]
    %v4064 = vld [vmem:[#allocation3 + $0x108] sm:$0xff]
    %v4065 = vld [vmem:[#allocation3 + $0x110] sm:$0xff]
    %v4066 = vld [vmem:[#allocation3 + $0x118] sm:$0xff]
    %v4067 = vld [vmem:[%s4] sm:$0xff]
    %4069 = vset.pattern.permute.xlu0 4
    %4070 = vperm.xlu0 %4069, %v4067
    %v4071 = vpop.permute.xlu0 %4070
    %v4074 = vunpack.c.l.b16 %v4030
    %v4075 = vunpack.c.h.b16 %v4030
    %v4076 = vpack.c.b16 %v4074, %v4074
    %v4077 = vpack.c.b16 %v4075, %v4075
    %v4115 = vunpack.c.l.b16 %v4031
    %v4116 = vunpack.c.h.b16 %v4031
    %v4117 = vunpack.c.l.b16 %v4032
    %v4118 = vunpack.c.h.b16 %v4032
    %v4119 = vunpack.c.l.b16 %v4033
    %v4120 = vunpack.c.h.b16 %v4033
    %v4121 = vunpack.c.l.b16 %v4034
    %v4122 = vunpack.c.h.b16 %v4034
    %v4123 = vunpack.c.l.b16 %v4035
    %v4124 = vunpack.c.h.b16 %v4035
    %v4125 = vunpack.c.l.b16 %v4036
    %v4126 = vunpack.c.h.b16 %v4036
    %v4127 = vunpack.c.l.b16 %v4037
    %v4128 = vunpack.c.h.b16 %v4037
    %v4129 = vunpack.c.l.b16 %v4038
    %v4130 = vunpack.c.h.b16 %v4038
    %v4131 = vunpack.c.l.b16 %v4039
    %v4132 = vunpack.c.h.b16 %v4039
    %v4133 = vunpack.c.l.b16 %v4040
    %v4134 = vunpack.c.h.b16 %v4040
    %v4135 = vunpack.c.l.b16 %v4041
    %v4136 = vunpack.c.h.b16 %v4041
    %v4137 = vunpack.c.l.b16 %v4042
    %v4138 = vunpack.c.h.b16 %v4042
    %v4139 = vunpack.c.l.b16 %v4043
    %v4140 = vunpack.c.h.b16 %v4043
    %v4141 = vunpack.c.l.b16 %v4044
    %v4142 = vunpack.c.h.b16 %v4044
    %v4143 = vunpack.c.l.b16 %v4045
    %v4144 = vunpack.c.h.b16 %v4045
    %v4145 = vunpack.c.l.b16 %v4046
    %v4146 = vunpack.c.h.b16 %v4046
    %v4147 = vunpack.c.l.b16 %v4047
    %v4148 = vunpack.c.h.b16 %v4047
    %v4149 = vunpack.c.l.b16 %v4048
    %v4150 = vunpack.c.h.b16 %v4048
    %v4151 = vunpack.c.l.b16 %v4049
    %v4152 = vunpack.c.h.b16 %v4049
    %v4153 = vunpack.c.l.b16 %v4050
    %v4154 = vunpack.c.h.b16 %v4050
    %v4155 = vunpack.c.l.b16 %v4051
    %v4156 = vunpack.c.h.b16 %v4051
    %v4157 = vunpack.c.l.b16 %v4052
    %v4158 = vunpack.c.h.b16 %v4052
    %v4159 = vunpack.c.l.b16 %v4053
    %v4160 = vunpack.c.h.b16 %v4053
    %v4161 = vunpack.c.l.b16 %v4054
    %v4162 = vunpack.c.h.b16 %v4054
    %v4163 = vunpack.c.l.b16 %v4055
    %v4164 = vunpack.c.h.b16 %v4055
    %v4165 = vunpack.c.l.b16 %v4056
    %v4166 = vunpack.c.h.b16 %v4056
    %v4167 = vunpack.c.l.b16 %v4057
    %v4168 = vunpack.c.h.b16 %v4057
    %v4169 = vunpack.c.l.b16 %v4058
    %v4170 = vunpack.c.h.b16 %v4058
    %v4171 = vunpack.c.l.b16 %v4059
    %v4172 = vunpack.c.h.b16 %v4059
    %v4173 = vunpack.c.l.b16 %v4060
    %v4174 = vunpack.c.h.b16 %v4060
    %v4175 = vunpack.c.l.b16 %v4061
    %v4176 = vunpack.c.h.b16 %v4061
    %v4177 = vunpack.c.l.b16 %v4062
    %v4178 = vunpack.c.h.b16 %v4062
    %v4179 = vunpack.c.l.b16 %v4063
    %v4180 = vunpack.c.h.b16 %v4063
    %v4181 = vunpack.c.l.b16 %v4064
    %v4182 = vunpack.c.h.b16 %v4064
    %v4183 = vunpack.c.l.b16 %v4065
    %v4184 = vunpack.c.h.b16 %v4065
    %v4185 = vunpack.c.l.b16 %v4066
    %v4186 = vunpack.c.h.b16 %v4066
    %v4187 = vpack.c.b16 %v4119, %v4115
    %v4188 = vpack.c.b16 %v4120, %v4116
    %v4189 = vpack.c.b16 %v4121, %v4117
    %v4190 = vpack.c.b16 %v4122, %v4118
    %v4191 = vpack.c.b16 %v4127, %v4123
    %v4192 = vpack.c.b16 %v4128, %v4124
    %v4193 = vpack.c.b16 %v4129, %v4125
    %v4194 = vpack.c.b16 %v4130, %v4126
    %v4195 = vpack.c.b16 %v4135, %v4131
    %v4196 = vpack.c.b16 %v4136, %v4132
    %v4197 = vpack.c.b16 %v4137, %v4133
    %v4198 = vpack.c.b16 %v4138, %v4134
    %v4199 = vpack.c.b16 %v4143, %v4139
    %v4200 = vpack.c.b16 %v4144, %v4140
    %v4201 = vpack.c.b16 %v4145, %v4141
    %v4202 = vpack.c.b16 %v4146, %v4142
    %v4203 = vpack.c.b16 %v4151, %v4147
    %v4204 = vpack.c.b16 %v4152, %v4148
    %v4205 = vpack.c.b16 %v4153, %v4149
    %v4206 = vpack.c.b16 %v4154, %v4150
    %v4207 = vpack.c.b16 %v4159, %v4155
    %v4208 = vpack.c.b16 %v4160, %v4156
    %v4209 = vpack.c.b16 %v4161, %v4157
    %v4210 = vpack.c.b16 %v4162, %v4158
    %v4211 = vpack.c.b16 %v4167, %v4163
    %v4212 = vpack.c.b16 %v4168, %v4164
    %v4213 = vpack.c.b16 %v4169, %v4165
    %v4214 = vpack.c.b16 %v4170, %v4166
    %v4215 = vpack.c.b16 %v4175, %v4171
    %v4216 = vpack.c.b16 %v4176, %v4172
    %v4217 = vpack.c.b16 %v4177, %v4173
    %v4218 = vpack.c.b16 %v4178, %v4174
    %v4219 = vpack.c.b16 %v4183, %v4179
    %v4220 = vpack.c.b16 %v4184, %v4180
    %v4221 = vpack.c.b16 %v4185, %v4181
    %v4222 = vpack.c.b16 %v4186, %v4182
    %v4260 = vsel %vm2953, %v4077, 0
    %4262 = vmatprep.subr.bf16.mxu0 %v4188
    %4263 = vmatpush1.bf16.msra.mxu0 %v4187
    %4264 = vmatprep.subr.bf16.mxu0 %v4192
    %4265 = vmatpush1.bf16.msra.mxu0 %v4191
    %4266 = vmatprep.subr.bf16.mxu0 %v4196
    %4267 = vmatpush1.bf16.msra.mxu0 %v4195
    %4268 = vmatprep.subr.bf16.mxu0 %v4200
    %4269 = vmatpush1.bf16.msra.mxu0 %v4199
    %4270 = vmatprep.subr.bf16.mxu0 %v4204
    %4271 = vmatpush1.bf16.msra.mxu0 %v4203
    %4272 = vmatprep.subr.bf16.mxu0 %v4208
    %4273 = vmatpush1.bf16.msra.mxu0 %v4207
    %4274 = vmatprep.subr.bf16.mxu0 %v4212
    %4275 = vmatpush1.bf16.msra.mxu0 %v4211
    %4276 = vmatprep.subr.bf16.mxu0 %v4216
    %4277 = vmatpush1.bf16.msra.mxu0 %v4215
    %4278 = vmatprep.subr.bf16.mxu0 %v4220
    %4279 = vmatpush1.bf16.msra.mxu0 %v4219
    %4280 = vmatprep.subr.bf16.mxu0 0
    %4281 = vmatpush1.bf16.msra.mxu0 0
    %4282 = vmatprep.subr.bf16.mxu0 0
    %4283 = vmatpush1.bf16.msra.mxu0 0
    %4284 = vmatprep.subr.bf16.mxu0 0
    %4285 = vmatpush1.bf16.msra.mxu0 0
    %4286 = vmatprep.subr.bf16.mxu0 0
    %4287 = vmatpush1.bf16.msra.mxu0 0
    %4288 = vmatprep.subr.bf16.mxu0 0
    %4289 = vmatpush1.bf16.msra.mxu0 0
    %4290 = vmatprep.subr.bf16.mxu0 0
    %4291 = vmatpush1.bf16.msra.mxu0 0
    %4292 = vmatprep.subr.bf16.mxu0 0
    %4293 = vmatpush1.bf16.msra.mxu0 0
    %4294 = vmatprep.mubr.bf16.mxu0 %v4260
    %4295 = vmatmul.mubr.bf16.gmra.mrb[0].mxu0 %v4076
    %v4296 = vpop.f32.mrb[0].mxu0
    %v4297 = vadd.f32 %v4071, %v4296
    %v4298 = vpop.f32.mrb[0].mxu0
    %v4299 = vadd.f32 %v4071, %v4298
    %v4300 = vpop.f32.mrb[0].mxu0
    %v4301 = vpop.f32.mrb[0].mxu0
    %4302 = vdwg.mxu0
    %4303 = vmatprep.subr.bf16.mxu0 %v4190
    %4304 = vmatpush1.bf16.msra.mxu0 %v4189
    %4305 = vmatprep.subr.bf16.mxu0 %v4194
    %4306 = vmatpush1.bf16.msra.mxu0 %v4193
    %4307 = vmatprep.subr.bf16.mxu0 %v4198
    %4308 = vmatpush1.bf16.msra.mxu0 %v4197
    %4309 = vmatprep.subr.bf16.mxu0 %v4202
    %4310 = vmatpush1.bf16.msra.mxu0 %v4201
    %4311 = vmatprep.subr.bf16.mxu0 %v4206
    %4312 = vmatpush1.bf16.msra.mxu0 %v4205
    %4313 = vmatprep.subr.bf16.mxu0 %v4210
    %4314 = vmatpush1.bf16.msra.mxu0 %v4209
    %4315 = vmatprep.subr.bf16.mxu0 %v4214
    %4316 = vmatpush1.bf16.msra.mxu0 %v4213
    %4317 = vmatprep.subr.bf16.mxu0 %v4218
    %4318 = vmatpush1.bf16.msra.mxu0 %v4217
    %4319 = vmatprep.subr.bf16.mxu0 %v4222
    %4320 = vmatpush1.bf16.msra.mxu0 %v4221
    %4321 = vmatprep.subr.bf16.mxu0 0
    %4322 = vmatpush1.bf16.msra.mxu0 0
    %4323 = vmatprep.subr.bf16.mxu0 0
    %4324 = vmatpush1.bf16.msra.mxu0 0
    %4325 = vmatprep.subr.bf16.mxu0 0
    %4326 = vmatpush1.bf16.msra.mxu0 0
    %4327 = vmatprep.subr.bf16.mxu0 0
    %4328 = vmatpush1.bf16.msra.mxu0 0
    %4329 = vmatprep.subr.bf16.mxu0 0
    %4330 = vmatpush1.bf16.msra.mxu0 0
    %4331 = vmatprep.subr.bf16.mxu0 0
    %4332 = vmatpush1.bf16.msra.mxu0 0
    %4333 = vmatprep.subr.bf16.mxu0 0
    %4334 = vmatpush1.bf16.msra.mxu0 0
    %4335 = vmatprep.mubr.bf16.mxu0 %v4260
    %4336 = vmatmul.mubr.bf16.gmra.mrb[0].mxu0 %v4076
    %v4337 = vpop.f32.mrb[0].mxu0
    %v4338 = vadd.f32 %v4071, %v4337
    %v4339 = vpop.f32.mrb[0].mxu0
    %v4340 = vadd.f32 %v4071, %v4339
    %v4341 = vpop.f32.mrb[0].mxu0
    %v4342 = vpop.f32.mrb[0].mxu0
    %4343 = vdwg.mxu0
    %s4344 = scalar_lea.vmem [#allocation2], 128
    %4345 = vst [vmem:[%s4344] sm:$0xff] %v4297
    %4346 = vst [vmem:[%s4344 + $0x8] sm:$0xff] %v4299
    %4347 = vst [vmem:[%s4344 + $0x10] sm:$0xff] %v4338
    %4348 = vst [vmem:[%s4344 + $0x18] sm:$0xff] %v4340
    %v4349 = vld [vmem:[%s4344] sm:$0xff]
    %v4350 = vld [vmem:[%s4344 + $0x8] sm:$0xff]
    %v4351 = vld [vmem:[%s4344 + $0x10] sm:$0xff]
    %v4352 = vld [vmem:[%s4344 + $0x18] sm:$0xff]
    %v4353 = vld [vmem:[%s1] sm:$0xff]
    %v4354 = vld [vmem:[%s2] sm:$0xff]
    %s4355 = sld [smem:[#allocation4 + $0x5]]
    %v4356 = vadd.f32 %v4349, %v4350
    %v4357 = vadd.f32 %v4356, %v4351
    %v4358 = vadd.f32 %v4357, %v4352
    %4359 = vadd.xlane.f32.xlu0 %v4358
    %v4360 = vpop.xlane.xlu0 %4359
    %v4361 = vmul.f32 %v4360, %v104
    %v4362 = vsub.f32 %v4349, %v4361
    %v4363 = vsub.f32 %v4350, %v4361
    %v4364 = vsub.f32 %v4351, %v4361
    %v4365 = vsub.f32 %v4352, %v4361
    %v4366 = vmul.f32 %v4362, %v4362
    %v4367 = vmul.f32 %v4363, %v4363
    %v4368 = vmul.f32 %v4364, %v4364
    %v4369 = vmul.f32 %v4365, %v4365
    %v4370 = vadd.f32 %v4366, %v4367
    %v4371 = vadd.f32 %v4370, %v4368
    %v4372 = vadd.f32 %v4371, %v4369
    %4373 = vadd.xlane.f32.xlu0 %v4372
    %v4374 = vpop.xlane.xlu0 %4373
    %v4375 = vmul.f32 %v4374, %v104
    %v4376 = vadd.f32 %v4375, 1e-05
    %v4377 = vrsqrt.pop %v4376
    %v4378 = vmul.f32 %v4362, %v4377
    %v4379 = vmul.f32 %v4363, %v4377
    %v4380 = vmul.f32 %v4364, %v4377
    %v4381 = vmul.f32 %v4365, %v4377
    %4383 = vset.pattern.permute.xlu0 5
    %4384 = vperm.xlu0 %4383, %v4353
    %v4385 = vpop.permute.xlu0 %4384
    %v4387 = vmul.f32 %v4378, %v4385
    %v4388 = vmul.f32 %v4379, %v4385
    %v4389 = vmul.f32 %v4380, %v4385
    %v4390 = vmul.f32 %v4381, %v4385
    %4392 = vset.pattern.permute.xlu0 5
    %4393 = vperm.xlu0 %4392, %v4354
    %v4394 = vpop.permute.xlu0 %4393
    %v4396 = vadd.f32 %v4387, %v4394
    %v4397 = vadd.f32 %v4388, %v4394
    %v4398 = vadd.f32 %v4389, %v4394
    %v4399 = vadd.f32 %v4390, %v4394
    %vm4400 = vcmp.ge.f32.partialorder %v4396, 0.0
    %vm4401 = vcmp.ge.f32.partialorder %v4397, 0.0
    %vm4402 = vcmp.ge.f32.partialorder %v4398, 0.0
    %vm4403 = vcmp.ge.f32.partialorder %v4399, 0.0
    %v4404 = vstv %s4355
    %v4405 = vmul.f32 %v4404, %v4396
    %v4406 = vmul.f32 %v4404, %v4397
    %v4407 = vmul.f32 %v4404, %v4398
    %v4408 = vmul.f32 %v4404, %v4399
    %v4409 = vsel %vm4400, %v4396, %v4405
    %v4410 = vsel %vm4401, %v4397, %v4406
    %v4411 = vsel %vm4402, %v4398, %v4407
    %v4412 = vsel %vm4403, %v4399, %v4408
    %v4413 = vld [vmem:[%s3039] sm:$0xff]
    %v4414 = vld [vmem:[%s3039 + $0x8] sm:$0xff]
    %v4415 = vld [vmem:[%s3039 + $0x10] sm:$0xff]
    %v4416 = vld [vmem:[%s3039 + $0x18] sm:$0xff]
    %v4417 = vld [vmem:[%s1 + $0x8] sm:$0xff]
    %v4418 = vld [vmem:[%s2 + $0x8] sm:$0xff]
    %v4419 = vadd.f32 %v4413, %v4414
    %v4420 = vadd.f32 %v4419, %v4415
    %v4421 = vadd.f32 %v4420, %v4416
    %4422 = vadd.xlane.f32.xlu0 %v4421
    %v4423 = vpop.xlane.xlu0 %4422
    %v4424 = vmul.f32 %v4423, %v104
    %v4425 = vsub.f32 %v4413, %v4424
    %v4426 = vsub.f32 %v4414, %v4424
    %v4427 = vsub.f32 %v4415, %v4424
    %v4428 = vsub.f32 %v4416, %v4424
    %v4429 = vmul.f32 %v4425, %v4425
    %v4430 = vmul.f32 %v4426, %v4426
    %v4431 = vmul.f32 %v4427, %v4427
    %v4432 = vmul.f32 %v4428, %v4428
    %v4433 = vadd.f32 %v4429, %v4430
    %v4434 = vadd.f32 %v4433, %v4431
    %v4435 = vadd.f32 %v4434, %v4432
    %4436 = vadd.xlane.f32.xlu0 %v4435
    %v4437 = vpop.xlane.xlu0 %4436
    %v4438 = vmul.f32 %v4437, %v104
    %v4439 = vadd.f32 %v4438, 1e-05
    %v4440 = vrsqrt.pop %v4439
    %v4441 = vmul.f32 %v4425, %v4440
    %v4442 = vmul.f32 %v4426, %v4440
    %v4443 = vmul.f32 %v4427, %v4440
    %v4444 = vmul.f32 %v4428, %v4440
    %4446 = vset.pattern.permute.xlu0 5
    %4447 = vperm.xlu0 %4446, %v4417
    %v4448 = vpop.permute.xlu0 %4447
    %v4450 = vmul.f32 %v4441, %v4448
    %v4451 = vmul.f32 %v4442, %v4448
    %v4452 = vmul.f32 %v4443, %v4448
    %v4453 = vmul.f32 %v4444, %v4448
    %4455 = vset.pattern.permute.xlu0 5
    %4456 = vperm.xlu0 %4455, %v4418
    %v4457 = vpop.permute.xlu0 %4456
    %v4459 = vadd.f32 %v4450, %v4457
    %v4460 = vadd.f32 %v4451, %v4457
    %v4461 = vadd.f32 %v4452, %v4457
    %v4462 = vadd.f32 %v4453, %v4457
    %vm4463 = vcmp.ge.f32.partialorder %v4459, 0.0
    %vm4464 = vcmp.ge.f32.partialorder %v4460, 0.0
    %vm4465 = vcmp.ge.f32.partialorder %v4461, 0.0
    %vm4466 = vcmp.ge.f32.partialorder %v4462, 0.0
    %v4467 = vmul.f32 %v4404, %v4459
    %v4468 = vmul.f32 %v4404, %v4460
    %v4469 = vmul.f32 %v4404, %v4461
    %v4470 = vmul.f32 %v4404, %v4462
    %v4471 = vsel %vm4463, %v4459, %v4467
    %v4472 = vsel %vm4464, %v4460, %v4468
    %v4473 = vsel %vm4465, %v4461, %v4469
    %v4474 = vsel %vm4466, %v4462, %v4470
    %v4475 = vld [vmem:[%s1017] sm:$0xff]
    %v4476 = vld [vmem:[%s1017 + $0x8] sm:$0xff]
    %v4477 = vld [vmem:[%s1017 + $0x10] sm:$0xff]
    %v4478 = vld [vmem:[%s1017 + $0x18] sm:$0xff]
    %v4479 = vld [vmem:[%s1 + $0x10] sm:$0xff]
    %v4480 = vld [vmem:[%s2 + $0x10] sm:$0xff]
    %v4481 = vadd.f32 %v4475, %v4476
    %v4482 = vadd.f32 %v4481, %v4477
    %v4483 = vadd.f32 %v4482, %v4478
    %4484 = vadd.xlane.f32.xlu0 %v4483
    %v4485 = vpop.xlane.xlu0 %4484
    %v4486 = vmul.f32 %v4485, %v104
    %v4487 = vsub.f32 %v4475, %v4486
    %v4488 = vsub.f32 %v4476, %v4486
    %v4489 = vsub.f32 %v4477, %v4486
    %v4490 = vsub.f32 %v4478, %v4486
    %v4491 = vmul.f32 %v4487, %v4487
    %v4492 = vmul.f32 %v4488, %v4488
    %v4493 = vmul.f32 %v4489, %v4489
    %v4494 = vmul.f32 %v4490, %v4490
    %v4495 = vadd.f32 %v4491, %v4492
    %v4496 = vadd.f32 %v4495, %v4493
    %v4497 = vadd.f32 %v4496, %v4494
    %4498 = vadd.xlane.f32.xlu0 %v4497
    %v4499 = vpop.xlane.xlu0 %4498
    %v4500 = vmul.f32 %v4499, %v104
    %v4501 = vadd.f32 %v4500, 1e-05
    %v4502 = vrsqrt.pop %v4501
    %v4503 = vmul.f32 %v4487, %v4502
    %v4504 = vmul.f32 %v4488, %v4502
    %v4505 = vmul.f32 %v4489, %v4502
    %v4506 = vmul.f32 %v4490, %v4502
    %4508 = vset.pattern.permute.xlu0 5
    %4509 = vperm.xlu0 %4508, %v4479
    %v4510 = vpop.permute.xlu0 %4509
    %v4512 = vmul.f32 %v4503, %v4510
    %v4513 = vmul.f32 %v4504, %v4510
    %v4514 = vmul.f32 %v4505, %v4510
    %v4515 = vmul.f32 %v4506, %v4510
    %4517 = vset.pattern.permute.xlu0 5
    %4518 = vperm.xlu0 %4517, %v4480
    %v4519 = vpop.permute.xlu0 %4518
    %v4521 = vadd.f32 %v4512, %v4519
    %v4522 = vadd.f32 %v4513, %v4519
    %v4523 = vadd.f32 %v4514, %v4519
    %v4524 = vadd.f32 %v4515, %v4519
    %vm4525 = vcmp.ge.f32.partialorder %v4521, 0.0
    %vm4526 = vcmp.ge.f32.partialorder %v4522, 0.0
    %vm4527 = vcmp.ge.f32.partialorder %v4523, 0.0
    %vm4528 = vcmp.ge.f32.partialorder %v4524, 0.0
    %v4529 = vmul.f32 %v4404, %v4521
    %v4530 = vmul.f32 %v4404, %v4522
    %v4531 = vmul.f32 %v4404, %v4523
    %v4532 = vmul.f32 %v4404, %v4524
    %v4533 = vsel %vm4525, %v4521, %v4529
    %v4534 = vsel %vm4526, %v4522, %v4530
    %v4535 = vsel %vm4527, %v4523, %v4531
    %v4536 = vsel %vm4528, %v4524, %v4532
    %4537 = vrot.lane.b32.xlu0 %v4409, 17
    %v4538 = vpop.permute.xlu0 %4537
    %4539 = vrot.lane.b32.xlu0 %v4410, 17
    %v4540 = vpop.permute.xlu0 %4539
    %4541 = vrot.lane.b32.xlu0 %v4411, 17
    %v4542 = vpop.permute.xlu0 %4541
    %4543 = vrot.lane.b32.xlu0 %v4412, 17
    %v4544 = vpop.permute.xlu0 %4543
    %v4545 = vsel %vm199, %v4542, %v4544
    %v4546 = vsel %vm199, %v4540, %v4542
    %v4547 = vsel %vm199, %v4538, %v4540
    %v4548 = vsel %vm199, %v4544, %v4538
    %v4549 = vld [vmem:[%s5] ss:$8 sm:$0xf]
    %v4551 = vlaneseq
    %v4552 = vshrl.u32 %v4551, 7
    %v4553 = vsub.s32 0, %v4552
    %v4554 = vrot.slane %v4549, %v4553
    %v4555 = vlaneseq
    %v4556 = vshrl.u32 %v4555, 7
    %v4557 = vsub.s32 1, %v4556
    %v4558 = vrot.slane %v4549, %v4557
    %v4559 = vlaneseq
    %v4560 = vshrl.u32 %v4559, 7
    %v4561 = vsub.s32 2, %v4560
    %v4562 = vrot.slane %v4549, %v4561
    %v4563 = vlaneseq
    %v4564 = vshrl.u32 %v4563, 7
    %v4565 = vsub.s32 3, %v4564
    %v4566 = vrot.slane %v4549, %v4565
    %v4571 = vmul.f32 %v4548, %v4554
    %v4572 = vmul.f32 %v4547, %v4558
    %v4573 = vmul.f32 %v4546, %v4562
    %v4574 = vmul.f32 %v4545, %v4566
    %4575 = vrot.lane.b32.xlu0 %v4409, 16
    %v4576 = vpop.permute.xlu0 %4575
    %4577 = vrot.lane.b32.xlu0 %v4410, 16
    %v4578 = vpop.permute.xlu0 %4577
    %4579 = vrot.lane.b32.xlu0 %v4411, 16
    %v4580 = vpop.permute.xlu0 %4579
    %4581 = vrot.lane.b32.xlu0 %v4412, 16
    %v4582 = vpop.permute.xlu0 %4581
    %v4583 = vsel %vm238, %v4580, %v4582
    %v4584 = vsel %vm238, %v4578, %v4580
    %v4585 = vsel %vm238, %v4576, %v4578
    %v4586 = vsel %vm238, %v4582, %v4576
    %v4587 = vld [vmem:[%s243] ss:$8 sm:$0xf]
    %v4589 = vlaneseq
    %v4590 = vshrl.u32 %v4589, 7
    %v4591 = vsub.s32 0, %v4590
    %v4592 = vrot.slane %v4587, %v4591
    %v4593 = vlaneseq
    %v4594 = vshrl.u32 %v4593, 7
    %v4595 = vsub.s32 1, %v4594
    %v4596 = vrot.slane %v4587, %v4595
    %v4597 = vlaneseq
    %v4598 = vshrl.u32 %v4597, 7
    %v4599 = vsub.s32 2, %v4598
    %v4600 = vrot.slane %v4587, %v4599
    %v4601 = vlaneseq
    %v4602 = vshrl.u32 %v4601, 7
    %v4603 = vsub.s32 3, %v4602
    %v4604 = vrot.slane %v4587, %v4603
    %v4609 = vmul.f32 %v4586, %v4592
    %v4610 = vmul.f32 %v4585, %v4596
    %v4611 = vmul.f32 %v4584, %v4600
    %v4612 = vmul.f32 %v4583, %v4604
    %v4613 = vpack.c.bf16 %v4609, %v4571
    %v4614 = vpack.c.bf16 %v4610, %v4572
    %v4615 = vpack.c.bf16 %v4611, %v4573
    %v4616 = vpack.c.bf16 %v4612, %v4574
    %v4621 = vunpack.c.l.b16 %v4613
    %v4622 = vunpack.c.l.b16 %v4614
    %v4623 = vunpack.c.l.b16 %v4615
    %v4624 = vunpack.c.l.b16 %v4616
    %v4625 = vunpack.c.h.b16 %v4613
    %v4626 = vunpack.c.h.b16 %v4614
    %v4627 = vunpack.c.h.b16 %v4615
    %v4628 = vunpack.c.h.b16 %v4616
    %v4629 = vpack.c.b16 %v4622, %v4621
    %v4630 = vpack.c.b16 %v4624, %v4623
    %v4631 = vpack.c.b16 %v4626, %v4625
    %v4632 = vpack.c.b16 %v4628, %v4627
    %4637 = vst [vmem:[#allocation3] sm:$0xff] %v4629
    %4638 = vst [vmem:[#allocation3 + $0x8] sm:$0xff] %v4630
    %4639 = vst [vmem:[#allocation3 + $0x10] sm:$0xff] %v4631
    %4640 = vst [vmem:[#allocation3 + $0x18] sm:$0xff] %v4632
    %4641 = vrot.lane.b32.xlu0 %v4409, 15
    %v4642 = vpop.permute.xlu0 %4641
    %4643 = vrot.lane.b32.xlu0 %v4410, 15
    %v4644 = vpop.permute.xlu0 %4643
    %4645 = vrot.lane.b32.xlu0 %v4411, 15
    %v4646 = vpop.permute.xlu0 %4645
    %4647 = vrot.lane.b32.xlu0 %v4412, 15
    %v4648 = vpop.permute.xlu0 %4647
    %v4649 = vsel %vm278, %v4646, %v4648
    %v4650 = vsel %vm278, %v4644, %v4646
    %v4651 = vsel %vm278, %v4642, %v4644
    %v4652 = vsel %vm278, %v4648, %v4642
    %v4653 = vld [vmem:[%s283] ss:$8 sm:$0xf]
    %v4655 = vlaneseq
    %v4656 = vshrl.u32 %v4655, 7
    %v4657 = vsub.s32 0, %v4656
    %v4658 = vrot.slane %v4653, %v4657
    %v4659 = vlaneseq
    %v4660 = vshrl.u32 %v4659, 7
    %v4661 = vsub.s32 1, %v4660
    %v4662 = vrot.slane %v4653, %v4661
    %v4663 = vlaneseq
    %v4664 = vshrl.u32 %v4663, 7
    %v4665 = vsub.s32 2, %v4664
    %v4666 = vrot.slane %v4653, %v4665
    %v4667 = vlaneseq
    %v4668 = vshrl.u32 %v4667, 7
    %v4669 = vsub.s32 3, %v4668
    %v4670 = vrot.slane %v4653, %v4669
    %v4675 = vmul.f32 %v4652, %v4658
    %v4676 = vmul.f32 %v4651, %v4662
    %v4677 = vmul.f32 %v4650, %v4666
    %v4678 = vmul.f32 %v4649, %v4670
    %4679 = vrot.lane.b32.xlu0 %v4409, 1
    %v4680 = vpop.permute.xlu0 %4679
    %4681 = vrot.lane.b32.xlu0 %v4410, 1
    %v4682 = vpop.permute.xlu0 %4681
    %4683 = vrot.lane.b32.xlu0 %v4411, 1
    %v4684 = vpop.permute.xlu0 %4683
    %4685 = vrot.lane.b32.xlu0 %v4412, 1
    %v4686 = vpop.permute.xlu0 %4685
    %v4687 = vsel %vm318, %v4684, %v4686
    %v4688 = vsel %vm318, %v4682, %v4684
    %v4689 = vsel %vm318, %v4680, %v4682
    %v4690 = vsel %vm318, %v4686, %v4680
    %v4691 = vld [vmem:[%s323] ss:$8 sm:$0xf]
    %v4693 = vlaneseq
    %v4694 = vshrl.u32 %v4693, 7
    %v4695 = vsub.s32 0, %v4694
    %v4696 = vrot.slane %v4691, %v4695
    %v4697 = vlaneseq
    %v4698 = vshrl.u32 %v4697, 7
    %v4699 = vsub.s32 1, %v4698
    %v4700 = vrot.slane %v4691, %v4699
    %v4701 = vlaneseq
    %v4702 = vshrl.u32 %v4701, 7
    %v4703 = vsub.s32 2, %v4702
    %v4704 = vrot.slane %v4691, %v4703
    %v4705 = vlaneseq
    %v4706 = vshrl.u32 %v4705, 7
    %v4707 = vsub.s32 3, %v4706
    %v4708 = vrot.slane %v4691, %v4707
    %v4713 = vmul.f32 %v4690, %v4696
    %v4714 = vmul.f32 %v4689, %v4700
    %v4715 = vmul.f32 %v4688, %v4704
    %v4716 = vmul.f32 %v4687, %v4708
    %v4717 = vpack.c.bf16 %v4713, %v4675
    %v4718 = vpack.c.bf16 %v4714, %v4676
    %v4719 = vpack.c.bf16 %v4715, %v4677
    %v4720 = vpack.c.bf16 %v4716, %v4678
    %v4725 = vunpack.c.l.b16 %v4717
    %v4726 = vunpack.c.l.b16 %v4718
    %v4727 = vunpack.c.l.b16 %v4719
    %v4728 = vunpack.c.l.b16 %v4720
    %v4729 = vunpack.c.h.b16 %v4717
    %v4730 = vunpack.c.h.b16 %v4718
    %v4731 = vunpack.c.h.b16 %v4719
    %v4732 = vunpack.c.h.b16 %v4720
    %v4733 = vpack.c.b16 %v4726, %v4725
    %v4734 = vpack.c.b16 %v4728, %v4727
    %v4735 = vpack.c.b16 %v4730, %v4729
    %v4736 = vpack.c.b16 %v4732, %v4731
    %4741 = vst [vmem:[#allocation3 + $0x20] sm:$0xff] %v4733
    %4742 = vst [vmem:[#allocation3 + $0x28] sm:$0xff] %v4734
    %4743 = vst [vmem:[#allocation3 + $0x30] sm:$0xff] %v4735
    %4744 = vst [vmem:[#allocation3 + $0x38] sm:$0xff] %v4736
    %4745 = vrot.lane.b32.xlu0 %v4409, 127
    %v4746 = vpop.permute.xlu0 %4745
    %4747 = vrot.lane.b32.xlu0 %v4410, 127
    %v4748 = vpop.permute.xlu0 %4747
    %4749 = vrot.lane.b32.xlu0 %v4411, 127
    %v4750 = vpop.permute.xlu0 %4749
    %4751 = vrot.lane.b32.xlu0 %v4412, 127
    %v4752 = vpop.permute.xlu0 %4751
    %v4753 = vsel %vm418, %v4750, %v4752
    %v4754 = vsel %vm418, %v4748, %v4750
    %v4755 = vsel %vm418, %v4746, %v4748
    %v4756 = vsel %vm418, %v4752, %v4746
    %v4757 = vld [vmem:[%s423] ss:$8 sm:$0xf]
    %v4759 = vlaneseq
    %v4760 = vshrl.u32 %v4759, 7
    %v4761 = vsub.s32 0, %v4760
    %v4762 = vrot.slane %v4757, %v4761
    %v4763 = vlaneseq
    %v4764 = vshrl.u32 %v4763, 7
    %v4765 = vsub.s32 1, %v4764
    %v4766 = vrot.slane %v4757, %v4765
    %v4767 = vlaneseq
    %v4768 = vshrl.u32 %v4767, 7
    %v4769 = vsub.s32 2, %v4768
    %v4770 = vrot.slane %v4757, %v4769
    %v4771 = vlaneseq
    %v4772 = vshrl.u32 %v4771, 7
    %v4773 = vsub.s32 3, %v4772
    %v4774 = vrot.slane %v4757, %v4773
    %v4779 = vmul.f32 %v4755, %v4762
    %v4780 = vmul.f32 %v4754, %v4766
    %v4781 = vmul.f32 %v4753, %v4770
    %v4782 = vmul.f32 %v4756, %v4774
    %v4783 = vpack.c.bf16 %v4779, %v4409
    %v4784 = vpack.c.bf16 %v4780, %v4410
    %v4785 = vpack.c.bf16 %v4781, %v4411
    %v4786 = vpack.c.bf16 %v4782, %v4412
    %v4791 = vunpack.c.l.b16 %v4783
    %v4792 = vunpack.c.l.b16 %v4784
    %v4793 = vunpack.c.l.b16 %v4785
    %v4794 = vunpack.c.l.b16 %v4786
    %v4795 = vunpack.c.h.b16 %v4783
    %v4796 = vunpack.c.h.b16 %v4784
    %v4797 = vunpack.c.h.b16 %v4785
    %v4798 = vunpack.c.h.b16 %v4786
    %v4799 = vpack.c.b16 %v4792, %v4791
    %v4800 = vpack.c.b16 %v4794, %v4793
    %v4801 = vpack.c.b16 %v4796, %v4795
    %v4802 = vpack.c.b16 %v4798, %v4797
    %4807 = vst [vmem:[#allocation3 + $0x40] sm:$0xff] %v4799
    %4808 = vst [vmem:[#allocation3 + $0x48] sm:$0xff] %v4800
    %4809 = vst [vmem:[#allocation3 + $0x50] sm:$0xff] %v4801
    %4810 = vst [vmem:[#allocation3 + $0x58] sm:$0xff] %v4802
    %4811 = vrot.lane.b32.xlu0 %v4409, 113
    %v4812 = vpop.permute.xlu0 %4811
    %4813 = vrot.lane.b32.xlu0 %v4410, 113
    %v4814 = vpop.permute.xlu0 %4813
    %4815 = vrot.lane.b32.xlu0 %v4411, 113
    %v4816 = vpop.permute.xlu0 %4815
    %4817 = vrot.lane.b32.xlu0 %v4412, 113
    %v4818 = vpop.permute.xlu0 %4817
    %v4819 = vsel %vm458, %v4816, %v4818
    %v4820 = vsel %vm458, %v4814, %v4816
    %v4821 = vsel %vm458, %v4812, %v4814
    %v4822 = vsel %vm458, %v4818, %v4812
    %v4823 = vld [vmem:[%s463] ss:$8 sm:$0xf]
    %v4825 = vlaneseq
    %v4826 = vshrl.u32 %v4825, 7
    %v4827 = vsub.s32 0, %v4826
    %v4828 = vrot.slane %v4823, %v4827
    %v4829 = vlaneseq
    %v4830 = vshrl.u32 %v4829, 7
    %v4831 = vsub.s32 1, %v4830
    %v4832 = vrot.slane %v4823, %v4831
    %v4833 = vlaneseq
    %v4834 = vshrl.u32 %v4833, 7
    %v4835 = vsub.s32 2, %v4834
    %v4836 = vrot.slane %v4823, %v4835
    %v4837 = vlaneseq
    %v4838 = vshrl.u32 %v4837, 7
    %v4839 = vsub.s32 3, %v4838
    %v4840 = vrot.slane %v4823, %v4839
    %v4845 = vmul.f32 %v4821, %v4828
    %v4846 = vmul.f32 %v4820, %v4832
    %v4847 = vmul.f32 %v4819, %v4836
    %v4848 = vmul.f32 %v4822, %v4840
    %4849 = vrot.lane.b32.xlu0 %v4409, 112
    %v4850 = vpop.permute.xlu0 %4849
    %4851 = vrot.lane.b32.xlu0 %v4410, 112
    %v4852 = vpop.permute.xlu0 %4851
    %4853 = vrot.lane.b32.xlu0 %v4411, 112
    %v4854 = vpop.permute.xlu0 %4853
    %4855 = vrot.lane.b32.xlu0 %v4412, 112
    %v4856 = vpop.permute.xlu0 %4855
    %v4857 = vsel %vm498, %v4854, %v4856
    %v4858 = vsel %vm498, %v4852, %v4854
    %v4859 = vsel %vm498, %v4850, %v4852
    %v4860 = vsel %vm498, %v4856, %v4850
    %v4861 = vld [vmem:[%s503] ss:$8 sm:$0xf]
    %v4863 = vlaneseq
    %v4864 = vshrl.u32 %v4863, 7
    %v4865 = vsub.s32 0, %v4864
    %v4866 = vrot.slane %v4861, %v4865
    %v4867 = vlaneseq
    %v4868 = vshrl.u32 %v4867, 7
    %v4869 = vsub.s32 1, %v4868
    %v4870 = vrot.slane %v4861, %v4869
    %v4871 = vlaneseq
    %v4872 = vshrl.u32 %v4871, 7
    %v4873 = vsub.s32 2, %v4872
    %v4874 = vrot.slane %v4861, %v4873
    %v4875 = vlaneseq
    %v4876 = vshrl.u32 %v4875, 7
    %v4877 = vsub.s32 3, %v4876
    %v4878 = vrot.slane %v4861, %v4877
    %v4883 = vmul.f32 %v4859, %v4866
    %v4884 = vmul.f32 %v4858, %v4870
    %v4885 = vmul.f32 %v4857, %v4874
    %v4886 = vmul.f32 %v4860, %v4878
    %v4887 = vpack.c.bf16 %v4883, %v4845
    %v4888 = vpack.c.bf16 %v4884, %v4846
    %v4889 = vpack.c.bf16 %v4885, %v4847
    %v4890 = vpack.c.bf16 %v4886, %v4848
    %v4895 = vunpack.c.l.b16 %v4887
    %v4896 = vunpack.c.l.b16 %v4888
    %v4897 = vunpack.c.l.b16 %v4889
    %v4898 = vunpack.c.l.b16 %v4890
    %v4899 = vunpack.c.h.b16 %v4887
    %v4900 = vunpack.c.h.b16 %v4888
    %v4901 = vunpack.c.h.b16 %v4889
    %v4902 = vunpack.c.h.b16 %v4890
    %v4903 = vpack.c.b16 %v4896, %v4895
    %v4904 = vpack.c.b16 %v4898, %v4897
    %v4905 = vpack.c.b16 %v4900, %v4899
    %v4906 = vpack.c.b16 %v4902, %v4901
    %4911 = vst [vmem:[#allocation3 + $0x60] sm:$0xff] %v4903
    %4912 = vst [vmem:[#allocation3 + $0x68] sm:$0xff] %v4904
    %4913 = vst [vmem:[#allocation3 + $0x70] sm:$0xff] %v4905
    %4914 = vst [vmem:[#allocation3 + $0x78] sm:$0xff] %v4906
    %4915 = vrot.lane.b32.xlu0 %v4409, 111
    %v4916 = vpop.permute.xlu0 %4915
    %4917 = vrot.lane.b32.xlu0 %v4410, 111
    %v4918 = vpop.permute.xlu0 %4917
    %4919 = vrot.lane.b32.xlu0 %v4411, 111
    %v4920 = vpop.permute.xlu0 %4919
    %4921 = vrot.lane.b32.xlu0 %v4412, 111
    %v4922 = vpop.permute.xlu0 %4921
    %v4923 = vsel %vm598, %v4920, %v4922
    %v4924 = vsel %vm598, %v4918, %v4920
    %v4925 = vsel %vm598, %v4916, %v4918
    %v4926 = vsel %vm598, %v4922, %v4916
    %v4927 = vld [vmem:[%s603] ss:$8 sm:$0xf]
    %v4929 = vlaneseq
    %v4930 = vshrl.u32 %v4929, 7
    %v4931 = vsub.s32 0, %v4930
    %v4932 = vrot.slane %v4927, %v4931
    %v4933 = vlaneseq
    %v4934 = vshrl.u32 %v4933, 7
    %v4935 = vsub.s32 1, %v4934
    %v4936 = vrot.slane %v4927, %v4935
    %v4937 = vlaneseq
    %v4938 = vshrl.u32 %v4937, 7
    %v4939 = vsub.s32 2, %v4938
    %v4940 = vrot.slane %v4927, %v4939
    %v4941 = vlaneseq
    %v4942 = vshrl.u32 %v4941, 7
    %v4943 = vsub.s32 3, %v4942
    %v4944 = vrot.slane %v4927, %v4943
    %v4949 = vmul.f32 %v4925, %v4932
    %v4950 = vmul.f32 %v4924, %v4936
    %v4951 = vmul.f32 %v4923, %v4940
    %v4952 = vmul.f32 %v4926, %v4944
    %4953 = vrot.lane.b32.xlu0 %v4471, 17
    %v4954 = vpop.permute.xlu0 %4953
    %4955 = vrot.lane.b32.xlu0 %v4472, 17
    %v4956 = vpop.permute.xlu0 %4955
    %4957 = vrot.lane.b32.xlu0 %v4473, 17
    %v4958 = vpop.permute.xlu0 %4957
    %4959 = vrot.lane.b32.xlu0 %v4474, 17
    %v4960 = vpop.permute.xlu0 %4959
    %v4961 = vsel %vm199, %v4958, %v4960
    %v4962 = vsel %vm199, %v4956, %v4958
    %v4963 = vsel %vm199, %v4954, %v4956
    %v4964 = vsel %vm199, %v4960, %v4954
    %v4965 = vld [vmem:[%s5] ss:$8 sm:$0xf]
    %v4967 = vlaneseq
    %v4968 = vshrl.u32 %v4967, 7
    %v4969 = vsub.s32 0, %v4968
    %v4970 = vrot.slane %v4965, %v4969
    %v4971 = vlaneseq
    %v4972 = vshrl.u32 %v4971, 7
    %v4973 = vsub.s32 1, %v4972
    %v4974 = vrot.slane %v4965, %v4973
    %v4975 = vlaneseq
    %v4976 = vshrl.u32 %v4975, 7
    %v4977 = vsub.s32 2, %v4976
    %v4978 = vrot.slane %v4965, %v4977
    %v4979 = vlaneseq
    %v4980 = vshrl.u32 %v4979, 7
    %v4981 = vsub.s32 3, %v4980
    %v4982 = vrot.slane %v4965, %v4981
    %v4987 = vmul.f32 %v4964, %v4970
    %v4988 = vmul.f32 %v4963, %v4974
    %v4989 = vmul.f32 %v4962, %v4978
    %v4990 = vmul.f32 %v4961, %v4982
    %v4991 = vpack.c.bf16 %v4987, %v4949
    %v4992 = vpack.c.bf16 %v4988, %v4950
    %v4993 = vpack.c.bf16 %v4989, %v4951
    %v4994 = vpack.c.bf16 %v4990, %v4952
    %v4999 = vunpack.c.l.b16 %v4991
    %v5000 = vunpack.c.l.b16 %v4992
    %v5001 = vunpack.c.l.b16 %v4993
    %v5002 = vunpack.c.l.b16 %v4994
    %v5003 = vunpack.c.h.b16 %v4991
    %v5004 = vunpack.c.h.b16 %v4992
    %v5005 = vunpack.c.h.b16 %v4993
    %v5006 = vunpack.c.h.b16 %v4994
    %v5007 = vpack.c.b16 %v5000, %v4999
    %v5008 = vpack.c.b16 %v5002, %v5001
    %v5009 = vpack.c.b16 %v5004, %v5003
    %v5010 = vpack.c.b16 %v5006, %v5005
    %5015 = vst [vmem:[#allocation3 + $0x80] sm:$0xff] %v5007
    %5016 = vst [vmem:[#allocation3 + $0x88] sm:$0xff] %v5008
    %5017 = vst [vmem:[#allocation3 + $0x90] sm:$0xff] %v5009
    %5018 = vst [vmem:[#allocation3 + $0x98] sm:$0xff] %v5010
    %5019 = vrot.lane.b32.xlu0 %v4471, 16
    %v5020 = vpop.permute.xlu0 %5019
    %5021 = vrot.lane.b32.xlu0 %v4472, 16
    %v5022 = vpop.permute.xlu0 %5021
    %5023 = vrot.lane.b32.xlu0 %v4473, 16
    %v5024 = vpop.permute.xlu0 %5023
    %5025 = vrot.lane.b32.xlu0 %v4474, 16
    %v5026 = vpop.permute.xlu0 %5025
    %v5027 = vsel %vm238, %v5024, %v5026
    %v5028 = vsel %vm238, %v5022, %v5024
    %v5029 = vsel %vm238, %v5020, %v5022
    %v5030 = vsel %vm238, %v5026, %v5020
    %v5031 = vld [vmem:[%s243] ss:$8 sm:$0xf]
    %v5033 = vlaneseq
    %v5034 = vshrl.u32 %v5033, 7
    %v5035 = vsub.s32 0, %v5034
    %v5036 = vrot.slane %v5031, %v5035
    %v5037 = vlaneseq
    %v5038 = vshrl.u32 %v5037, 7
    %v5039 = vsub.s32 1, %v5038
    %v5040 = vrot.slane %v5031, %v5039
    %v5041 = vlaneseq
    %v5042 = vshrl.u32 %v5041, 7
    %v5043 = vsub.s32 2, %v5042
    %v5044 = vrot.slane %v5031, %v5043
    %v5045 = vlaneseq
    %v5046 = vshrl.u32 %v5045, 7
    %v5047 = vsub.s32 3, %v5046
    %v5048 = vrot.slane %v5031, %v5047
    %v5053 = vmul.f32 %v5030, %v5036
    %v5054 = vmul.f32 %v5029, %v5040
    %v5055 = vmul.f32 %v5028, %v5044
    %v5056 = vmul.f32 %v5027, %v5048
    %5057 = vrot.lane.b32.xlu0 %v4471, 15
    %v5058 = vpop.permute.xlu0 %5057
    %5059 = vrot.lane.b32.xlu0 %v4472, 15
    %v5060 = vpop.permute.xlu0 %5059
    %5061 = vrot.lane.b32.xlu0 %v4473, 15
    %v5062 = vpop.permute.xlu0 %5061
    %5063 = vrot.lane.b32.xlu0 %v4474, 15
    %v5064 = vpop.permute.xlu0 %5063
    %v5065 = vsel %vm278, %v5062, %v5064
    %v5066 = vsel %vm278, %v5060, %v5062
    %v5067 = vsel %vm278, %v5058, %v5060
    %v5068 = vsel %vm278, %v5064, %v5058
    %v5069 = vld [vmem:[%s283] ss:$8 sm:$0xf]
    %v5071 = vlaneseq
    %v5072 = vshrl.u32 %v5071, 7
    %v5073 = vsub.s32 0, %v5072
    %v5074 = vrot.slane %v5069, %v5073
    %v5075 = vlaneseq
    %v5076 = vshrl.u32 %v5075, 7
    %v5077 = vsub.s32 1, %v5076
    %v5078 = vrot.slane %v5069, %v5077
    %v5079 = vlaneseq
    %v5080 = vshrl.u32 %v5079, 7
    %v5081 = vsub.s32 2, %v5080
    %v5082 = vrot.slane %v5069, %v5081
    %v5083 = vlaneseq
    %v5084 = vshrl.u32 %v5083, 7
    %v5085 = vsub.s32 3, %v5084
    %v5086 = vrot.slane %v5069, %v5085
    %v5091 = vmul.f32 %v5068, %v5074
    %v5092 = vmul.f32 %v5067, %v5078
    %v5093 = vmul.f32 %v5066, %v5082
    %v5094 = vmul.f32 %v5065, %v5086
    %v5095 = vpack.c.bf16 %v5091, %v5053
    %v5096 = vpack.c.bf16 %v5092, %v5054
    %v5097 = vpack.c.bf16 %v5093, %v5055
    %v5098 = vpack.c.bf16 %v5094, %v5056
    %v5103 = vunpack.c.l.b16 %v5095
    %v5104 = vunpack.c.l.b16 %v5096
    %v5105 = vunpack.c.l.b16 %v5097
    %v5106 = vunpack.c.l.b16 %v5098
    %v5107 = vunpack.c.h.b16 %v5095
    %v5108 = vunpack.c.h.b16 %v5096
    %v5109 = vunpack.c.h.b16 %v5097
    %v5110 = vunpack.c.h.b16 %v5098
    %v5111 = vpack.c.b16 %v5104, %v5103
    %v5112 = vpack.c.b16 %v5106, %v5105
    %v5113 = vpack.c.b16 %v5108, %v5107
    %v5114 = vpack.c.b16 %v5110, %v5109
    %5119 = vst [vmem:[#allocation3 + $0xa0] sm:$0xff] %v5111
    %5120 = vst [vmem:[#allocation3 + $0xa8] sm:$0xff] %v5112
    %5121 = vst [vmem:[#allocation3 + $0xb0] sm:$0xff] %v5113
    %5122 = vst [vmem:[#allocation3 + $0xb8] sm:$0xff] %v5114
    %5123 = vrot.lane.b32.xlu0 %v4471, 1
    %v5124 = vpop.permute.xlu0 %5123
    %5125 = vrot.lane.b32.xlu0 %v4472, 1
    %v5126 = vpop.permute.xlu0 %5125
    %5127 = vrot.lane.b32.xlu0 %v4473, 1
    %v5128 = vpop.permute.xlu0 %5127
    %5129 = vrot.lane.b32.xlu0 %v4474, 1
    %v5130 = vpop.permute.xlu0 %5129
    %v5131 = vsel %vm318, %v5128, %v5130
    %v5132 = vsel %vm318, %v5126, %v5128
    %v5133 = vsel %vm318, %v5124, %v5126
    %v5134 = vsel %vm318, %v5130, %v5124
    %v5135 = vld [vmem:[%s323] ss:$8 sm:$0xf]
    %v5137 = vlaneseq
    %v5138 = vshrl.u32 %v5137, 7
    %v5139 = vsub.s32 0, %v5138
    %v5140 = vrot.slane %v5135, %v5139
    %v5141 = vlaneseq
    %v5142 = vshrl.u32 %v5141, 7
    %v5143 = vsub.s32 1, %v5142
    %v5144 = vrot.slane %v5135, %v5143
    %v5145 = vlaneseq
    %v5146 = vshrl.u32 %v5145, 7
    %v5147 = vsub.s32 2, %v5146
    %v5148 = vrot.slane %v5135, %v5147
    %v5149 = vlaneseq
    %v5150 = vshrl.u32 %v5149, 7
    %v5151 = vsub.s32 3, %v5150
    %v5152 = vrot.slane %v5135, %v5151
    %v5157 = vmul.f32 %v5134, %v5140
    %v5158 = vmul.f32 %v5133, %v5144
    %v5159 = vmul.f32 %v5132, %v5148
    %v5160 = vmul.f32 %v5131, %v5152
    %v5161 = vpack.c.bf16 %v4471, %v5157
    %v5162 = vpack.c.bf16 %v4472, %v5158
    %v5163 = vpack.c.bf16 %v4473, %v5159
    %v5164 = vpack.c.bf16 %v4474, %v5160
    %v5169 = vunpack.c.l.b16 %v5161
    %v5170 = vunpack.c.l.b16 %v5162
    %v5171 = vunpack.c.l.b16 %v5163
    %v5172 = vunpack.c.l.b16 %v5164
    %v5173 = vunpack.c.h.b16 %v5161
    %v5174 = vunpack.c.h.b16 %v5162
    %v5175 = vunpack.c.h.b16 %v5163
    %v5176 = vunpack.c.h.b16 %v5164
    %v5177 = vpack.c.b16 %v5170, %v5169
    %v5178 = vpack.c.b16 %v5172, %v5171
    %v5179 = vpack.c.b16 %v5174, %v5173
    %v5180 = vpack.c.b16 %v5176, %v5175
    %5185 = vst [vmem:[#allocation3 + $0xc0] sm:$0xff] %v5177
    %5186 = vst [vmem:[#allocation3 + $0xc8] sm:$0xff] %v5178
    %5187 = vst [vmem:[#allocation3 + $0xd0] sm:$0xff] %v5179
    %5188 = vst [vmem:[#allocation3 + $0xd8] sm:$0xff] %v5180
    %5189 = vrot.lane.b32.xlu0 %v4471, 127
    %v5190 = vpop.permute.xlu0 %5189
    %5191 = vrot.lane.b32.xlu0 %v4472, 127
    %v5192 = vpop.permute.xlu0 %5191
    %5193 = vrot.lane.b32.xlu0 %v4473, 127
    %v5194 = vpop.permute.xlu0 %5193
    %5195 = vrot.lane.b32.xlu0 %v4474, 127
    %v5196 = vpop.permute.xlu0 %5195
    %v5197 = vsel %vm418, %v5194, %v5196
    %v5198 = vsel %vm418, %v5192, %v5194
    %v5199 = vsel %vm418, %v5190, %v5192
    %v5200 = vsel %vm418, %v5196, %v5190
    %v5201 = vld [vmem:[%s423] ss:$8 sm:$0xf]
    %v5203 = vlaneseq
    %v5204 = vshrl.u32 %v5203, 7
    %v5205 = vsub.s32 0, %v5204
    %v5206 = vrot.slane %v5201, %v5205
    %v5207 = vlaneseq
    %v5208 = vshrl.u32 %v5207, 7
    %v5209 = vsub.s32 1, %v5208
    %v5210 = vrot.slane %v5201, %v5209
    %v5211 = vlaneseq
    %v5212 = vshrl.u32 %v5211, 7
    %v5213 = vsub.s32 2, %v5212
    %v5214 = vrot.slane %v5201, %v5213
    %v5215 = vlaneseq
    %v5216 = vshrl.u32 %v5215, 7
    %v5217 = vsub.s32 3, %v5216
    %v5218 = vrot.slane %v5201, %v5217
    %v5223 = vmul.f32 %v5199, %v5206
    %v5224 = vmul.f32 %v5198, %v5210
    %v5225 = vmul.f32 %v5197, %v5214
    %v5226 = vmul.f32 %v5200, %v5218
    %5227 = vrot.lane.b32.xlu0 %v4471, 113
    %v5228 = vpop.permute.xlu0 %5227
    %5229 = vrot.lane.b32.xlu0 %v4472, 113
    %v5230 = vpop.permute.xlu0 %5229
    %5231 = vrot.lane.b32.xlu0 %v4473, 113
    %v5232 = vpop.permute.xlu0 %5231
    %5233 = vrot.lane.b32.xlu0 %v4474, 113
    %v5234 = vpop.permute.xlu0 %5233
    %v5235 = vsel %vm458, %v5232, %v5234
    %v5236 = vsel %vm458, %v5230, %v5232
    %v5237 = vsel %vm458, %v5228, %v5230
    %v5238 = vsel %vm458, %v5234, %v5228
    %v5239 = vld [vmem:[%s463] ss:$8 sm:$0xf]
    %v5241 = vlaneseq
    %v5242 = vshrl.u32 %v5241, 7
    %v5243 = vsub.s32 0, %v5242
    %v5244 = vrot.slane %v5239, %v5243
    %v5245 = vlaneseq
    %v5246 = vshrl.u32 %v5245, 7
    %v5247 = vsub.s32 1, %v5246
    %v5248 = vrot.slane %v5239, %v5247
    %v5249 = vlaneseq
    %v5250 = vshrl.u32 %v5249, 7
    %v5251 = vsub.s32 2, %v5250
    %v5252 = vrot.slane %v5239, %v5251
    %v5253 = vlaneseq
    %v5254 = vshrl.u32 %v5253, 7
    %v5255 = vsub.s32 3, %v5254
    %v5256 = vrot.slane %v5239, %v5255
    %v5261 = vmul.f32 %v5237, %v5244
    %v5262 = vmul.f32 %v5236, %v5248
    %v5263 = vmul.f32 %v5235, %v5252
    %v5264 = vmul.f32 %v5238, %v5256
    %v5265 = vpack.c.bf16 %v5261, %v5223
    %v5266 = vpack.c.bf16 %v5262, %v5224
    %v5267 = vpack.c.bf16 %v5263, %v5225
    %v5268 = vpack.c.bf16 %v5264, %v5226
    %v5273 = vunpack.c.l.b16 %v5265
    %v5274 = vunpack.c.l.b16 %v5266
    %v5275 = vunpack.c.l.b16 %v5267
    %v5276 = vunpack.c.l.b16 %v5268
    %v5277 = vunpack.c.h.b16 %v5265
    %v5278 = vunpack.c.h.b16 %v5266
    %v5279 = vunpack.c.h.b16 %v5267
    %v5280 = vunpack.c.h.b16 %v5268
    %v5281 = vpack.c.b16 %v5274, %v5273
    %v5282 = vpack.c.b16 %v5276, %v5275
    %v5283 = vpack.c.b16 %v5278, %v5277
    %v5284 = vpack.c.b16 %v5280, %v5279
    %5289 = vst [vmem:[#allocation3 + $0xe0] sm:$0xff] %v5281
    %5290 = vst [vmem:[#allocation3 + $0xe8] sm:$0xff] %v5282
    %5291 = vst [vmem:[#allocation3 + $0xf0] sm:$0xff] %v5283
    %5292 = vst [vmem:[#allocation3 + $0xf8] sm:$0xff] %v5284
    %5293 = vrot.lane.b32.xlu0 %v4471, 112
    %v5294 = vpop.permute.xlu0 %5293
    %5295 = vrot.lane.b32.xlu0 %v4472, 112
    %v5296 = vpop.permute.xlu0 %5295
    %5297 = vrot.lane.b32.xlu0 %v4473, 112
    %v5298 = vpop.permute.xlu0 %5297
    %5299 = vrot.lane.b32.xlu0 %v4474, 112
    %v5300 = vpop.permute.xlu0 %5299
    %v5301 = vsel %vm498, %v5298, %v5300
    %v5302 = vsel %vm498, %v5296, %v5298
    %v5303 = vsel %vm498, %v5294, %v5296
    %v5304 = vsel %vm498, %v5300, %v5294
    %v5305 = vld [vmem:[%s503] ss:$8 sm:$0xf]
    %v5307 = vlaneseq
    %v5308 = vshrl.u32 %v5307, 7
    %v5309 = vsub.s32 0, %v5308
    %v5310 = vrot.slane %v5305, %v5309
    %v5311 = vlaneseq
    %v5312 = vshrl.u32 %v5311, 7
    %v5313 = vsub.s32 1, %v5312
    %v5314 = vrot.slane %v5305, %v5313
    %v5315 = vlaneseq
    %v5316 = vshrl.u32 %v5315, 7
    %v5317 = vsub.s32 2, %v5316
    %v5318 = vrot.slane %v5305, %v5317
    %v5319 = vlaneseq
    %v5320 = vshrl.u32 %v5319, 7
    %v5321 = vsub.s32 3, %v5320
    %v5322 = vrot.slane %v5305, %v5321
    %v5327 = vmul.f32 %v5303, %v5310
    %v5328 = vmul.f32 %v5302, %v5314
    %v5329 = vmul.f32 %v5301, %v5318
    %v5330 = vmul.f32 %v5304, %v5322
    %5331 = vrot.lane.b32.xlu0 %v4471, 111
    %v5332 = vpop.permute.xlu0 %5331
    %5333 = vrot.lane.b32.xlu0 %v4472, 111
    %v5334 = vpop.permute.xlu0 %5333
    %5335 = vrot.lane.b32.xlu0 %v4473, 111
    %v5336 = vpop.permute.xlu0 %5335
    %5337 = vrot.lane.b32.xlu0 %v4474, 111
    %v5338 = vpop.permute.xlu0 %5337
    %v5339 = vsel %vm598, %v5336, %v5338
    %v5340 = vsel %vm598, %v5334, %v5336
    %v5341 = vsel %vm598, %v5332, %v5334
    %v5342 = vsel %vm598, %v5338, %v5332
    %v5343 = vld [vmem:[%s603] ss:$8 sm:$0xf]
    %v5345 = vlaneseq
    %v5346 = vshrl.u32 %v5345, 7
    %v5347 = vsub.s32 0, %v5346
    %v5348 = vrot.slane %v5343, %v5347
    %v5349 = vlaneseq
    %v5350 = vshrl.u32 %v5349, 7
    %v5351 = vsub.s32 1, %v5350
    %v5352 = vrot.slane %v5343, %v5351
    %v5353 = vlaneseq
    %v5354 = vshrl.u32 %v5353, 7
    %v5355 = vsub.s32 2, %v5354
    %v5356 = vrot.slane %v5343, %v5355
    %v5357 = vlaneseq
    %v5358 = vshrl.u32 %v5357, 7
    %v5359 = vsub.s32 3, %v5358
    %v5360 = vrot.slane %v5343, %v5359
    %v5365 = vmul.f32 %v5341, %v5348
    %v5366 = vmul.f32 %v5340, %v5352
    %v5367 = vmul.f32 %v5339, %v5356
    %v5368 = vmul.f32 %v5342, %v5360
    %v5369 = vpack.c.bf16 %v5365, %v5327
    %v5370 = vpack.c.bf16 %v5366, %v5328
    %v5371 = vpack.c.bf16 %v5367, %v5329
    %v5372 = vpack.c.bf16 %v5368, %v5330
    %v5377 = vunpack.c.l.b16 %v5369
    %v5378 = vunpack.c.l.b16 %v5370
    %v5379 = vunpack.c.l.b16 %v5371
    %v5380 = vunpack.c.l.b16 %v5372
    %v5381 = vunpack.c.h.b16 %v5369
    %v5382 = vunpack.c.h.b16 %v5370
    %v5383 = vunpack.c.h.b16 %v5371
    %v5384 = vunpack.c.h.b16 %v5372
    %v5385 = vpack.c.b16 %v5378, %v5377
    %v5386 = vpack.c.b16 %v5380, %v5379
    %v5387 = vpack.c.b16 %v5382, %v5381
    %v5388 = vpack.c.b16 %v5384, %v5383
    %5393 = vst [vmem:[#allocation3 + $0x100] sm:$0xff] %v5385
    %5394 = vst [vmem:[#allocation3 + $0x108] sm:$0xff] %v5386
    %5395 = vst [vmem:[#allocation3 + $0x110] sm:$0xff] %v5387
    %5396 = vst [vmem:[#allocation3 + $0x118] sm:$0xff] %v5388
    %5397 = vrot.lane.b32.xlu0 %v4533, 17
    %v5398 = vpop.permute.xlu0 %5397
    %5399 = vrot.lane.b32.xlu0 %v4534, 17
    %v5400 = vpop.permute.xlu0 %5399
    %5401 = vrot.lane.b32.xlu0 %v4535, 17
    %v5402 = vpop.permute.xlu0 %5401
    %5403 = vrot.lane.b32.xlu0 %v4536, 17
    %v5404 = vpop.permute.xlu0 %5403
    %v5405 = vsel %vm199, %v5402, %v5404
    %v5406 = vsel %vm199, %v5400, %v5402
    %v5407 = vsel %vm199, %v5398, %v5400
    %v5408 = vsel %vm199, %v5404, %v5398
    %v5409 = vld [vmem:[%s5] ss:$8 sm:$0xf]
    %v5411 = vlaneseq
    %v5412 = vshrl.u32 %v5411, 7
    %v5413 = vsub.s32 0, %v5412
    %v5414 = vrot.slane %v5409, %v5413
    %v5415 = vlaneseq
    %v5416 = vshrl.u32 %v5415, 7
    %v5417 = vsub.s32 1, %v5416
    %v5418 = vrot.slane %v5409, %v5417
    %v5419 = vlaneseq
    %v5420 = vshrl.u32 %v5419, 7
    %v5421 = vsub.s32 2, %v5420
    %v5422 = vrot.slane %v5409, %v5421
    %v5423 = vlaneseq
    %v5424 = vshrl.u32 %v5423, 7
    %v5425 = vsub.s32 3, %v5424
    %v5426 = vrot.slane %v5409, %v5425
    %v5431 = vmul.f32 %v5408, %v5414
    %v5432 = vmul.f32 %v5407, %v5418
    %v5433 = vmul.f32 %v5406, %v5422
    %v5434 = vmul.f32 %v5405, %v5426
    %5435 = vrot.lane.b32.xlu0 %v4533, 16
    %v5436 = vpop.permute.xlu0 %5435
    %5437 = vrot.lane.b32.xlu0 %v4534, 16
    %v5438 = vpop.permute.xlu0 %5437
    %5439 = vrot.lane.b32.xlu0 %v4535, 16
    %v5440 = vpop.permute.xlu0 %5439
    %5441 = vrot.lane.b32.xlu0 %v4536, 16
    %v5442 = vpop.permute.xlu0 %5441
    %v5443 = vsel %vm238, %v5440, %v5442
    %v5444 = vsel %vm238, %v5438, %v5440
    %v5445 = vsel %vm238, %v5436, %v5438
    %v5446 = vsel %vm238, %v5442, %v5436
    %v5447 = vld [vmem:[%s243] ss:$8 sm:$0xf]
    %v5449 = vlaneseq
    %v5450 = vshrl.u32 %v5449, 7
    %v5451 = vsub.s32 0, %v5450
    %v5452 = vrot.slane %v5447, %v5451
    %v5453 = vlaneseq
    %v5454 = vshrl.u32 %v5453, 7
    %v5455 = vsub.s32 1, %v5454
    %v5456 = vrot.slane %v5447, %v5455
    %v5457 = vlaneseq
    %v5458 = vshrl.u32 %v5457, 7
    %v5459 = vsub.s32 2, %v5458
    %v5460 = vrot.slane %v5447, %v5459
    %v5461 = vlaneseq
    %v5462 = vshrl.u32 %v5461, 7
    %v5463 = vsub.s32 3, %v5462
    %v5464 = vrot.slane %v5447, %v5463
    %v5469 = vmul.f32 %v5446, %v5452
    %v5470 = vmul.f32 %v5445, %v5456
    %v5471 = vmul.f32 %v5444, %v5460
    %v5472 = vmul.f32 %v5443, %v5464
    %v5473 = vpack.c.bf16 %v5469, %v5431
    %v5474 = vpack.c.bf16 %v5470, %v5432
    %v5475 = vpack.c.bf16 %v5471, %v5433
    %v5476 = vpack.c.bf16 %v5472, %v5434
    %v5481 = vunpack.c.l.b16 %v5473
    %v5482 = vunpack.c.l.b16 %v5474
    %v5483 = vunpack.c.l.b16 %v5475
    %v5484 = vunpack.c.l.b16 %v5476
    %v5485 = vunpack.c.h.b16 %v5473
    %v5486 = vunpack.c.h.b16 %v5474
    %v5487 = vunpack.c.h.b16 %v5475
    %v5488 = vunpack.c.h.b16 %v5476
    %v5489 = vpack.c.b16 %v5482, %v5481
    %v5490 = vpack.c.b16 %v5484, %v5483
    %v5491 = vpack.c.b16 %v5486, %v5485
    %v5492 = vpack.c.b16 %v5488, %v5487
    %5497 = vst [vmem:[#allocation3 + $0x120] sm:$0xff] %v5489
    %5498 = vst [vmem:[#allocation3 + $0x128] sm:$0xff] %v5490
    %5499 = vst [vmem:[#allocation3 + $0x130] sm:$0xff] %v5491
    %5500 = vst [vmem:[#allocation3 + $0x138] sm:$0xff] %v5492
    %5501 = vrot.lane.b32.xlu0 %v4533, 15
    %v5502 = vpop.permute.xlu0 %5501
    %5503 = vrot.lane.b32.xlu0 %v4534, 15
    %v5504 = vpop.permute.xlu0 %5503
    %5505 = vrot.lane.b32.xlu0 %v4535, 15
    %v5506 = vpop.permute.xlu0 %5505
    %5507 = vrot.lane.b32.xlu0 %v4536, 15
    %v5508 = vpop.permute.xlu0 %5507
    %v5509 = vsel %vm278, %v5506, %v5508
    %v5510 = vsel %vm278, %v5504, %v5506
    %v5511 = vsel %vm278, %v5502, %v5504
    %v5512 = vsel %vm278, %v5508, %v5502
    %v5513 = vld [vmem:[%s283] ss:$8 sm:$0xf]
    %v5515 = vlaneseq
    %v5516 = vshrl.u32 %v5515, 7
    %v5517 = vsub.s32 0, %v5516
    %v5518 = vrot.slane %v5513, %v5517
    %v5519 = vlaneseq
    %v5520 = vshrl.u32 %v5519, 7
    %v5521 = vsub.s32 1, %v5520
    %v5522 = vrot.slane %v5513, %v5521
    %v5523 = vlaneseq
    %v5524 = vshrl.u32 %v5523, 7
    %v5525 = vsub.s32 2, %v5524
    %v5526 = vrot.slane %v5513, %v5525
    %v5527 = vlaneseq
    %v5528 = vshrl.u32 %v5527, 7
    %v5529 = vsub.s32 3, %v5528
    %v5530 = vrot.slane %v5513, %v5529
    %v5535 = vmul.f32 %v5512, %v5518
    %v5536 = vmul.f32 %v5511, %v5522
    %v5537 = vmul.f32 %v5510, %v5526
    %v5538 = vmul.f32 %v5509, %v5530
    %5539 = vrot.lane.b32.xlu0 %v4533, 1
    %v5540 = vpop.permute.xlu0 %5539
    %5541 = vrot.lane.b32.xlu0 %v4534, 1
    %v5542 = vpop.permute.xlu0 %5541
    %5543 = vrot.lane.b32.xlu0 %v4535, 1
    %v5544 = vpop.permute.xlu0 %5543
    %5545 = vrot.lane.b32.xlu0 %v4536, 1
    %v5546 = vpop.permute.xlu0 %5545
    %v5547 = vsel %vm318, %v5544, %v5546
    %v5548 = vsel %vm318, %v5542, %v5544
    %v5549 = vsel %vm318, %v5540, %v5542
    %v5550 = vsel %vm318, %v5546, %v5540
    %v5551 = vld [vmem:[%s323] ss:$8 sm:$0xf]
    %v5553 = vlaneseq
    %v5554 = vshrl.u32 %v5553, 7
    %v5555 = vsub.s32 0, %v5554
    %v5556 = vrot.slane %v5551, %v5555
    %v5557 = vlaneseq
    %v5558 = vshrl.u32 %v5557, 7
    %v5559 = vsub.s32 1, %v5558
    %v5560 = vrot.slane %v5551, %v5559
    %v5561 = vlaneseq
    %v5562 = vshrl.u32 %v5561, 7
    %v5563 = vsub.s32 2, %v5562
    %v5564 = vrot.slane %v5551, %v5563
    %v5565 = vlaneseq
    %v5566 = vshrl.u32 %v5565, 7
    %v5567 = vsub.s32 3, %v5566
    %v5568 = vrot.slane %v5551, %v5567
    %v5573 = vmul.f32 %v5550, %v5556
    %v5574 = vmul.f32 %v5549, %v5560
    %v5575 = vmul.f32 %v5548, %v5564
    %v5576 = vmul.f32 %v5547, %v5568
    %v5577 = vpack.c.bf16 %v5573, %v5535
    %v5578 = vpack.c.bf16 %v5574, %v5536
    %v5579 = vpack.c.bf16 %v5575, %v5537
    %v5580 = vpack.c.bf16 %v5576, %v5538
    %v5585 = vunpack.c.l.b16 %v5577
    %v5586 = vunpack.c.l.b16 %v5578
    %v5587 = vunpack.c.l.b16 %v5579
    %v5588 = vunpack.c.l.b16 %v5580
    %v5589 = vunpack.c.h.b16 %v5577
    %v5590 = vunpack.c.h.b16 %v5578
    %v5591 = vunpack.c.h.b16 %v5579
    %v5592 = vunpack.c.h.b16 %v5580
    %v5593 = vpack.c.b16 %v5586, %v5585
    %v5594 = vpack.c.b16 %v5588, %v5587
    %v5595 = vpack.c.b16 %v5590, %v5589
    %v5596 = vpack.c.b16 %v5592, %v5591
    %5601 = vst [vmem:[#allocation3 + $0x140] sm:$0xff] %v5593
    %5602 = vst [vmem:[#allocation3 + $0x148] sm:$0xff] %v5594
    %5603 = vst [vmem:[#allocation3 + $0x150] sm:$0xff] %v5595
    %5604 = vst [vmem:[#allocation3 + $0x158] sm:$0xff] %v5596
    %5605 = vrot.lane.b32.xlu0 %v4533, 127
    %v5606 = vpop.permute.xlu0 %5605
    %5607 = vrot.lane.b32.xlu0 %v4534, 127
    %v5608 = vpop.permute.xlu0 %5607
    %5609 = vrot.lane.b32.xlu0 %v4535, 127
    %v5610 = vpop.permute.xlu0 %5609
    %5611 = vrot.lane.b32.xlu0 %v4536, 127
    %v5612 = vpop.permute.xlu0 %5611
    %v5613 = vsel %vm418, %v5610, %v5612
    %v5614 = vsel %vm418, %v5608, %v5610
    %v5615 = vsel %vm418, %v5606, %v5608
    %v5616 = vsel %vm418, %v5612, %v5606
    %v5617 = vld [vmem:[%s423] ss:$8 sm:$0xf]
    %v5619 = vlaneseq
    %v5620 = vshrl.u32 %v5619, 7
    %v5621 = vsub.s32 0, %v5620
    %v5622 = vrot.slane %v5617, %v5621
    %v5623 = vlaneseq
    %v5624 = vshrl.u32 %v5623, 7
    %v5625 = vsub.s32 1, %v5624
    %v5626 = vrot.slane %v5617, %v5625
    %v5627 = vlaneseq
    %v5628 = vshrl.u32 %v5627, 7
    %v5629 = vsub.s32 2, %v5628
    %v5630 = vrot.slane %v5617, %v5629
    %v5631 = vlaneseq
    %v5632 = vshrl.u32 %v5631, 7
    %v5633 = vsub.s32 3, %v5632
    %v5634 = vrot.slane %v5617, %v5633
    %v5639 = vmul.f32 %v5615, %v5622
    %v5640 = vmul.f32 %v5614, %v5626
    %v5641 = vmul.f32 %v5613, %v5630
    %v5642 = vmul.f32 %v5616, %v5634
    %v5643 = vpack.c.bf16 %v5639, %v4533
    %v5644 = vpack.c.bf16 %v5640, %v4534
    %v5645 = vpack.c.bf16 %v5641, %v4535
    %v5646 = vpack.c.bf16 %v5642, %v4536
    %v5651 = vunpack.c.l.b16 %v5643
    %v5652 = vunpack.c.l.b16 %v5644
    %v5653 = vunpack.c.l.b16 %v5645
    %v5654 = vunpack.c.l.b16 %v5646
    %v5655 = vunpack.c.h.b16 %v5643
    %v5656 = vunpack.c.h.b16 %v5644
    %v5657 = vunpack.c.h.b16 %v5645
    %v5658 = vunpack.c.h.b16 %v5646
    %v5659 = vpack.c.b16 %v5652, %v5651
    %v5660 = vpack.c.b16 %v5654, %v5653
    %v5661 = vpack.c.b16 %v5656, %v5655
    %v5662 = vpack.c.b16 %v5658, %v5657
    %5667 = vst [vmem:[#allocation3 + $0x160] sm:$0xff] %v5659
    %5668 = vst [vmem:[#allocation3 + $0x168] sm:$0xff] %v5660
    %5669 = vst [vmem:[#allocation3 + $0x170] sm:$0xff] %v5661
    %5670 = vst [vmem:[#allocation3 + $0x178] sm:$0xff] %v5662
    %5671 = vrot.lane.b32.xlu0 %v4533, 113
    %v5672 = vpop.permute.xlu0 %5671
    %5673 = vrot.lane.b32.xlu0 %v4534, 113
    %v5674 = vpop.permute.xlu0 %5673
    %5675 = vrot.lane.b32.xlu0 %v4535, 113
    %v5676 = vpop.permute.xlu0 %5675
    %5677 = vrot.lane.b32.xlu0 %v4536, 113
    %v5678 = vpop.permute.xlu0 %5677
    %v5679 = vsel %vm458, %v5676, %v5678
    %v5680 = vsel %vm458, %v5674, %v5676
    %v5681 = vsel %vm458, %v5672, %v5674
    %v5682 = vsel %vm458, %v5678, %v5672
    %v5683 = vld [vmem:[%s463] ss:$8 sm:$0xf]
    %v5685 = vlaneseq
    %v5686 = vshrl.u32 %v5685, 7
    %v5687 = vsub.s32 0, %v5686
    %v5688 = vrot.slane %v5683, %v5687
    %v5689 = vlaneseq
    %v5690 = vshrl.u32 %v5689, 7
    %v5691 = vsub.s32 1, %v5690
    %v5692 = vrot.slane %v5683, %v5691
    %v5693 = vlaneseq
    %v5694 = vshrl.u32 %v5693, 7
    %v5695 = vsub.s32 2, %v5694
    %v5696 = vrot.slane %v5683, %v5695
    %v5697 = vlaneseq
    %v5698 = vshrl.u32 %v5697, 7
    %v5699 = vsub.s32 3, %v5698
    %v5700 = vrot.slane %v5683, %v5699
    %v5705 = vmul.f32 %v5681, %v5688
    %v5706 = vmul.f32 %v5680, %v5692
    %v5707 = vmul.f32 %v5679, %v5696
    %v5708 = vmul.f32 %v5682, %v5700
    %5709 = vrot.lane.b32.xlu0 %v4533, 112
    %v5710 = vpop.permute.xlu0 %5709
    %5711 = vrot.lane.b32.xlu0 %v4534, 112
    %v5712 = vpop.permute.xlu0 %5711
    %5713 = vrot.lane.b32.xlu0 %v4535, 112
    %v5714 = vpop.permute.xlu0 %5713
    %5715 = vrot.lane.b32.xlu0 %v4536, 112
    %v5716 = vpop.permute.xlu0 %5715
    %v5717 = vsel %vm498, %v5714, %v5716
    %v5718 = vsel %vm498, %v5712, %v5714
    %v5719 = vsel %vm498, %v5710, %v5712
    %v5720 = vsel %vm498, %v5716, %v5710
    %v5721 = vld [vmem:[%s503] ss:$8 sm:$0xf]
    %v5723 = vlaneseq
    %v5724 = vshrl.u32 %v5723, 7
    %v5725 = vsub.s32 0, %v5724
    %v5726 = vrot.slane %v5721, %v5725
    %v5727 = vlaneseq
    %v5728 = vshrl.u32 %v5727, 7
    %v5729 = vsub.s32 1, %v5728
    %v5730 = vrot.slane %v5721, %v5729
    %v5731 = vlaneseq
    %v5732 = vshrl.u32 %v5731, 7
    %v5733 = vsub.s32 2, %v5732
    %v5734 = vrot.slane %v5721, %v5733
    %v5735 = vlaneseq
    %v5736 = vshrl.u32 %v5735, 7
    %v5737 = vsub.s32 3, %v5736
    %v5738 = vrot.slane %v5721, %v5737
    %v5743 = vmul.f32 %v5719, %v5726
    %v5744 = vmul.f32 %v5718, %v5730
    %v5745 = vmul.f32 %v5717, %v5734
    %v5746 = vmul.f32 %v5720, %v5738
    %v5747 = vpack.c.bf16 %v5743, %v5705
    %v5748 = vpack.c.bf16 %v5744, %v5706
    %v5749 = vpack.c.bf16 %v5745, %v5707
    %v5750 = vpack.c.bf16 %v5746, %v5708
    %v5755 = vunpack.c.l.b16 %v5747
    %v5756 = vunpack.c.l.b16 %v5748
    %v5757 = vunpack.c.l.b16 %v5749
    %v5758 = vunpack.c.l.b16 %v5750
    %v5759 = vunpack.c.h.b16 %v5747
    %v5760 = vunpack.c.h.b16 %v5748
    %v5761 = vunpack.c.h.b16 %v5749
    %v5762 = vunpack.c.h.b16 %v5750
    %v5763 = vpack.c.b16 %v5756, %v5755
    %v5764 = vpack.c.b16 %v5758, %v5757
    %v5765 = vpack.c.b16 %v5760, %v5759
    %v5766 = vpack.c.b16 %v5762, %v5761
    %5771 = vst [vmem:[#allocation3 + $0x180] sm:$0xff] %v5763
    %5772 = vst [vmem:[#allocation3 + $0x188] sm:$0xff] %v5764
    %5773 = vst [vmem:[#allocation3 + $0x190] sm:$0xff] %v5765
    %5774 = vst [vmem:[#allocation3 + $0x198] sm:$0xff] %v5766
    %5775 = vrot.lane.b32.xlu0 %v4533, 111
    %v5776 = vpop.permute.xlu0 %5775
    %5777 = vrot.lane.b32.xlu0 %v4534, 111
    %v5778 = vpop.permute.xlu0 %5777
    %5779 = vrot.lane.b32.xlu0 %v4535, 111
    %v5780 = vpop.permute.xlu0 %5779
    %5781 = vrot.lane.b32.xlu0 %v4536, 111
    %v5782 = vpop.permute.xlu0 %5781
    %v5783 = vsel %vm598, %v5780, %v5782
    %v5784 = vsel %vm598, %v5778, %v5780
    %v5785 = vsel %vm598, %v5776, %v5778
    %v5786 = vsel %vm598, %v5782, %v5776
    %v5787 = vld [vmem:[%s603] ss:$8 sm:$0xf]
    %v5789 = vlaneseq
    %v5790 = vshrl.u32 %v5789, 7
    %v5791 = vsub.s32 0, %v5790
    %v5792 = vrot.slane %v5787, %v5791
    %v5793 = vlaneseq
    %v5794 = vshrl.u32 %v5793, 7
    %v5795 = vsub.s32 1, %v5794
    %v5796 = vrot.slane %v5787, %v5795
    %v5797 = vlaneseq
    %v5798 = vshrl.u32 %v5797, 7
    %v5799 = vsub.s32 2, %v5798
    %v5800 = vrot.slane %v5787, %v5799
    %v5801 = vlaneseq
    %v5802 = vshrl.u32 %v5801, 7
    %v5803 = vsub.s32 3, %v5802
    %v5804 = vrot.slane %v5787, %v5803
    %v5809 = vmul.f32 %v5785, %v5792
    %v5810 = vmul.f32 %v5784, %v5796
    %v5811 = vmul.f32 %v5783, %v5800
    %v5812 = vmul.f32 %v5786, %v5804
    %v5813 = vpack.c.bf16 %v5809, %v5809
    %v5814 = vpack.c.bf16 %v5810, %v5810
    %v5815 = vpack.c.bf16 %v5811, %v5811
    %v5816 = vpack.c.bf16 %v5812, %v5812
    %v5821 = vunpack.c.l.b16 %v5813
    %v5822 = vunpack.c.l.b16 %v5814
    %v5823 = vunpack.c.l.b16 %v5815
    %v5824 = vunpack.c.l.b16 %v5816
    %v5825 = vpack.c.b16 %v5822, %v5821
    %v5826 = vpack.c.b16 %v5824, %v5823
    %5829 = vst [vmem:[#allocation3 + $0x1a0] sm:$0xff] %v5825
    %5830 = vst [vmem:[#allocation3 + $0x1a8] sm:$0xff] %v5826
    %v5831 = vld [vmem:[%s11] sm:$0xff]
    %v5832 = vld [vmem:[#allocation3] sm:$0xff]
    %v5833 = vld [vmem:[#allocation3 + $0x8] sm:$0xff]
    %v5834 = vld [vmem:[#allocation3 + $0x10] sm:$0xff]
    %v5835 = vld [vmem:[#allocation3 + $0x18] sm:$0xff]
    %v5836 = vld [vmem:[#allocation3 + $0x20] sm:$0xff]
    %v5837 = vld [vmem:[#allocation3 + $0x28] sm:$0xff]
    %v5838 = vld [vmem:[#allocation3 + $0x30] sm:$0xff]
    %v5839 = vld [vmem:[#allocation3 + $0x38] sm:$0xff]
    %v5840 = vld [vmem:[#allocation3 + $0x40] sm:$0xff]
    %v5841 = vld [vmem:[#allocation3 + $0x48] sm:$0xff]
    %v5842 = vld [vmem:[#allocation3 + $0x50] sm:$0xff]
    %v5843 = vld [vmem:[#allocation3 + $0x58] sm:$0xff]
    %v5844 = vld [vmem:[#allocation3 + $0x60] sm:$0xff]
    %v5845 = vld [vmem:[#allocation3 + $0x68] sm:$0xff]
    %v5846 = vld [vmem:[#allocation3 + $0x70] sm:$0xff]
    %v5847 = vld [vmem:[#allocation3 + $0x78] sm:$0xff]
    %v5848 = vld [vmem:[#allocation3 + $0x80] sm:$0xff]
    %v5849 = vld [vmem:[#allocation3 + $0x88] sm:$0xff]
    %v5850 = vld [vmem:[#allocation3 + $0x90] sm:$0xff]
    %v5851 = vld [vmem:[#allocation3 + $0x98] sm:$0xff]
    %v5852 = vld [vmem:[#allocation3 + $0xa0] sm:$0xff]
    %v5853 = vld [vmem:[#allocation3 + $0xa8] sm:$0xff]
    %v5854 = vld [vmem:[#allocation3 + $0xb0] sm:$0xff]
    %v5855 = vld [vmem:[#allocation3 + $0xb8] sm:$0xff]
    %v5856 = vld [vmem:[#allocation3 + $0xc0] sm:$0xff]
    %v5857 = vld [vmem:[#allocation3 + $0xc8] sm:$0xff]
    %v5858 = vld [vmem:[#allocation3 + $0xd0] sm:$0xff]
    %v5859 = vld [vmem:[#allocation3 + $0xd8] sm:$0xff]
    %v5860 = vld [vmem:[#allocation3 + $0xe0] sm:$0xff]
    %v5861 = vld [vmem:[#allocation3 + $0xe8] sm:$0xff]
    %v5862 = vld [vmem:[#allocation3 + $0xf0] sm:$0xff]
    %v5863 = vld [vmem:[#allocation3 + $0xf8] sm:$0xff]
    %v5864 = vld [vmem:[#allocation3 + $0x100] sm:$0xff]
    %v5865 = vld [vmem:[#allocation3 + $0x108] sm:$0xff]
    %v5866 = vld [vmem:[#allocation3 + $0x110] sm:$0xff]
    %v5867 = vld [vmem:[#allocation3 + $0x118] sm:$0xff]
    %v5868 = vld [vmem:[#allocation3 + $0x120] sm:$0xff]
    %v5869 = vld [vmem:[#allocation3 + $0x128] sm:$0xff]
    %v5870 = vld [vmem:[#allocation3 + $0x130] sm:$0xff]
    %v5871 = vld [vmem:[#allocation3 + $0x138] sm:$0xff]
    %v5872 = vld [vmem:[#allocation3 + $0x140] sm:$0xff]
    %v5873 = vld [vmem:[#allocation3 + $0x148] sm:$0xff]
    %v5874 = vld [vmem:[#allocation3 + $0x150] sm:$0xff]
    %v5875 = vld [vmem:[#allocation3 + $0x158] sm:$0xff]
    %v5876 = vld [vmem:[#allocation3 + $0x160] sm:$0xff]
    %v5877 = vld [vmem:[#allocation3 + $0x168] sm:$0xff]
    %v5878 = vld [vmem:[#allocation3 + $0x170] sm:$0xff]
    %v5879 = vld [vmem:[#allocation3 + $0x178] sm:$0xff]
    %v5880 = vld [vmem:[#allocation3 + $0x180] sm:$0xff]
    %v5881 = vld [vmem:[#allocation3 + $0x188] sm:$0xff]
    %v5882 = vld [vmem:[#allocation3 + $0x190] sm:$0xff]
    %v5883 = vld [vmem:[#allocation3 + $0x198] sm:$0xff]
    %v5884 = vld [vmem:[#allocation3 + $0x1a0] sm:$0xff]
    %v5885 = vld [vmem:[#allocation3 + $0x1a8] sm:$0xff]
    %v5886 = vld [vmem:[%s4] sm:$0xff]
    %5888 = vset.pattern.permute.xlu0 5
    %5889 = vperm.xlu0 %5888, %v5886
    %v5890 = vpop.permute.xlu0 %5889
    %v5893 = vunpack.c.l.b16 %v5831
    %v5894 = vunpack.c.h.b16 %v5831
    %v5895 = vpack.c.b16 %v5893, %v5893
    %v5896 = vpack.c.b16 %v5894, %v5894
    %v5952 = vunpack.c.l.b16 %v5832
    %v5953 = vunpack.c.h.b16 %v5832
    %v5954 = vunpack.c.l.b16 %v5833
    %v5955 = vunpack.c.h.b16 %v5833
    %v5956 = vunpack.c.l.b16 %v5834
    %v5957 = vunpack.c.h.b16 %v5834
    %v5958 = vunpack.c.l.b16 %v5835
    %v5959 = vunpack.c.h.b16 %v5835
    %v5960 = vunpack.c.l.b16 %v5836
    %v5961 = vunpack.c.h.b16 %v5836
    %v5962 = vunpack.c.l.b16 %v5837
    %v5963 = vunpack.c.h.b16 %v5837
    %v5964 = vunpack.c.l.b16 %v5838
    %v5965 = vunpack.c.h.b16 %v5838
    %v5966 = vunpack.c.l.b16 %v5839
    %v5967 = vunpack.c.h.b16 %v5839
    %v5968 = vunpack.c.l.b16 %v5840
    %v5969 = vunpack.c.h.b16 %v5840
    %v5970 = vunpack.c.l.b16 %v5841
    %v5971 = vunpack.c.h.b16 %v5841
    %v5972 = vunpack.c.l.b16 %v5842
    %v5973 = vunpack.c.h.b16 %v5842
    %v5974 = vunpack.c.l.b16 %v5843
    %v5975 = vunpack.c.h.b16 %v5843
    %v5976 = vunpack.c.l.b16 %v5844
    %v5977 = vunpack.c.h.b16 %v5844
    %v5978 = vunpack.c.l.b16 %v5845
    %v5979 = vunpack.c.h.b16 %v5845
    %v5980 = vunpack.c.l.b16 %v5846
    %v5981 = vunpack.c.h.b16 %v5846
    %v5982 = vunpack.c.l.b16 %v5847
    %v5983 = vunpack.c.h.b16 %v5847
    %v5984 = vunpack.c.l.b16 %v5848
    %v5985 = vunpack.c.h.b16 %v5848
    %v5986 = vunpack.c.l.b16 %v5849
    %v5987 = vunpack.c.h.b16 %v5849
    %v5988 = vunpack.c.l.b16 %v5850
    %v5989 = vunpack.c.h.b16 %v5850
    %v5990 = vunpack.c.l.b16 %v5851
    %v5991 = vunpack.c.h.b16 %v5851
    %v5992 = vunpack.c.l.b16 %v5852
    %v5993 = vunpack.c.h.b16 %v5852
    %v5994 = vunpack.c.l.b16 %v5853
    %v5995 = vunpack.c.h.b16 %v5853
    %v5996 = vunpack.c.l.b16 %v5854
    %v5997 = vunpack.c.h.b16 %v5854
    %v5998 = vunpack.c.l.b16 %v5855
    %v5999 = vunpack.c.h.b16 %v5855
    %v6000 = vunpack.c.l.b16 %v5856
    %v6001 = vunpack.c.h.b16 %v5856
    %v6002 = vunpack.c.l.b16 %v5857
    %v6003 = vunpack.c.h.b16 %v5857
    %v6004 = vunpack.c.l.b16 %v5858
    %v6005 = vunpack.c.h.b16 %v5858
    %v6006 = vunpack.c.l.b16 %v5859
    %v6007 = vunpack.c.h.b16 %v5859
    %v6008 = vunpack.c.l.b16 %v5860
    %v6009 = vunpack.c.h.b16 %v5860
    %v6010 = vunpack.c.l.b16 %v5861
    %v6011 = vunpack.c.h.b16 %v5861
    %v6012 = vunpack.c.l.b16 %v5862
    %v6013 = vunpack.c.h.b16 %v5862
    %v6014 = vunpack.c.l.b16 %v5863
    %v6015 = vunpack.c.h.b16 %v5863
    %v6016 = vunpack.c.l.b16 %v5864
    %v6017 = vunpack.c.h.b16 %v5864
    %v6018 = vunpack.c.l.b16 %v5865
    %v6019 = vunpack.c.h.b16 %v5865
    %v6020 = vunpack.c.l.b16 %v5866
    %v6021 = vunpack.c.h.b16 %v5866
    %v6022 = vunpack.c.l.b16 %v5867
    %v6023 = vunpack.c.h.b16 %v5867
    %v6024 = vunpack.c.l.b16 %v5868
    %v6025 = vunpack.c.h.b16 %v5868
    %v6026 = vunpack.c.l.b16 %v5869
    %v6027 = vunpack.c.h.b16 %v5869
    %v6028 = vunpack.c.l.b16 %v5870
    %v6029 = vunpack.c.h.b16 %v5870
    %v6030 = vunpack.c.l.b16 %v5871
    %v6031 = vunpack.c.h.b16 %v5871
    %v6032 = vunpack.c.l.b16 %v5872
    %v6033 = vunpack.c.h.b16 %v5872
    %v6034 = vunpack.c.l.b16 %v5873
    %v6035 = vunpack.c.h.b16 %v5873
    %v6036 = vunpack.c.l.b16 %v5874
    %v6037 = vunpack.c.h.b16 %v5874
    %v6038 = vunpack.c.l.b16 %v5875
    %v6039 = vunpack.c.h.b16 %v5875
    %v6040 = vunpack.c.l.b16 %v5876
    %v6041 = vunpack.c.h.b16 %v5876
    %v6042 = vunpack.c.l.b16 %v5877
    %v6043 = vunpack.c.h.b16 %v5877
    %v6044 = vunpack.c.l.b16 %v5878
    %v6045 = vunpack.c.h.b16 %v5878
    %v6046 = vunpack.c.l.b16 %v5879
    %v6047 = vunpack.c.h.b16 %v5879
    %v6048 = vunpack.c.l.b16 %v5880
    %v6049 = vunpack.c.h.b16 %v5880
    %v6050 = vunpack.c.l.b16 %v5881
    %v6051 = vunpack.c.h.b16 %v5881
    %v6052 = vunpack.c.l.b16 %v5882
    %v6053 = vunpack.c.h.b16 %v5882
    %v6054 = vunpack.c.l.b16 %v5883
    %v6055 = vunpack.c.h.b16 %v5883
    %v6056 = vunpack.c.l.b16 %v5884
    %v6057 = vunpack.c.h.b16 %v5884
    %v6058 = vunpack.c.l.b16 %v5885
    %v6059 = vunpack.c.h.b16 %v5885
    %v6060 = vpack.c.b16 %v5956, %v5952
    %v6061 = vpack.c.b16 %v5957, %v5953
    %v6062 = vpack.c.b16 %v5958, %v5954
    %v6063 = vpack.c.b16 %v5959, %v5955
    %v6064 = vpack.c.b16 %v5964, %v5960
    %v6065 = vpack.c.b16 %v5965, %v5961
    %v6066 = vpack.c.b16 %v5966, %v5962
    %v6067 = vpack.c.b16 %v5967, %v5963
    %v6068 = vpack.c.b16 %v5972, %v5968
    %v6069 = vpack.c.b16 %v5973, %v5969
    %v6070 = vpack.c.b16 %v5974, %v5970
    %v6071 = vpack.c.b16 %v5975, %v5971
    %v6072 = vpack.c.b16 %v5980, %v5976
    %v6073 = vpack.c.b16 %v5981, %v5977
    %v6074 = vpack.c.b16 %v5982, %v5978
    %v6075 = vpack.c.b16 %v5983, %v5979
    %v6076 = vpack.c.b16 %v5988, %v5984
    %v6077 = vpack.c.b16 %v5989, %v5985
    %v6078 = vpack.c.b16 %v5990, %v5986
    %v6079 = vpack.c.b16 %v5991, %v5987
    %v6080 = vpack.c.b16 %v5996, %v5992
    %v6081 = vpack.c.b16 %v5997, %v5993
    %v6082 = vpack.c.b16 %v5998, %v5994
    %v6083 = vpack.c.b16 %v5999, %v5995
    %v6084 = vpack.c.b16 %v6004, %v6000
    %v6085 = vpack.c.b16 %v6005, %v6001
    %v6086 = vpack.c.b16 %v6006, %v6002
    %v6087 = vpack.c.b16 %v6007, %v6003
    %v6088 = vpack.c.b16 %v6012, %v6008
    %v6089 = vpack.c.b16 %v6013, %v6009
    %v6090 = vpack.c.b16 %v6014, %v6010
    %v6091 = vpack.c.b16 %v6015, %v6011
    %v6092 = vpack.c.b16 %v6020, %v6016
    %v6093 = vpack.c.b16 %v6021, %v6017
    %v6094 = vpack.c.b16 %v6022, %v6018
    %v6095 = vpack.c.b16 %v6023, %v6019
    %v6096 = vpack.c.b16 %v6028, %v6024
    %v6097 = vpack.c.b16 %v6029, %v6025
    %v6098 = vpack.c.b16 %v6030, %v6026
    %v6099 = vpack.c.b16 %v6031, %v6027
    %v6100 = vpack.c.b16 %v6036, %v6032
    %v6101 = vpack.c.b16 %v6037, %v6033
    %v6102 = vpack.c.b16 %v6038, %v6034
    %v6103 = vpack.c.b16 %v6039, %v6035
    %v6104 = vpack.c.b16 %v6044, %v6040
    %v6105 = vpack.c.b16 %v6045, %v6041
    %v6106 = vpack.c.b16 %v6046, %v6042
    %v6107 = vpack.c.b16 %v6047, %v6043
    %v6108 = vpack.c.b16 %v6052, %v6048
    %v6109 = vpack.c.b16 %v6053, %v6049
    %v6110 = vpack.c.b16 %v6054, %v6050
    %v6111 = vpack.c.b16 %v6055, %v6051
    %v6112 = vpack.c.b16 %v6056, %v6056
    %v6113 = vpack.c.b16 %v6057, %v6057
    %v6114 = vpack.c.b16 %v6058, %v6058
    %v6115 = vpack.c.b16 %v6059, %v6059
    %vm6168 = vcmask 719872
    %v6170 = vsel %vm6168, %v5896, 0
    %v6173 = vsel %vm94, %v6112, 0
    %v6176 = vsel %vm94, %v6113, 0
    %v6179 = vsel %vm94, %v6114, 0
    %v6182 = vsel %vm94, %v6115, 0
    %6184 = vmatprep.subr.bf16.mxu0 %v6061
    %6185 = vmatpush1.bf16.msra.mxu0 %v6060
    %6186 = vmatprep.subr.bf16.mxu0 %v6065
    %6187 = vmatpush1.bf16.msra.mxu0 %v6064
    %6188 = vmatprep.subr.bf16.mxu0 %v6069
    %6189 = vmatpush1.bf16.msra.mxu0 %v6068
    %6190 = vmatprep.subr.bf16.mxu0 %v6073
    %6191 = vmatpush1.bf16.msra.mxu0 %v6072
    %6192 = vmatprep.subr.bf16.mxu0 %v6077
    %6193 = vmatpush1.bf16.msra.mxu0 %v6076
    %6194 = vmatprep.subr.bf16.mxu0 %v6081
    %6195 = vmatpush1.bf16.msra.mxu0 %v6080
    %6196 = vmatprep.subr.bf16.mxu0 %v6085
    %6197 = vmatpush1.bf16.msra.mxu0 %v6084
    %6198 = vmatprep.subr.bf16.mxu0 %v6089
    %6199 = vmatpush1.bf16.msra.mxu0 %v6088
    %6200 = vmatprep.subr.bf16.mxu0 %v6093
    %6201 = vmatpush1.bf16.msra.mxu0 %v6092
    %6202 = vmatprep.subr.bf16.mxu0 %v6097
    %6203 = vmatpush1.bf16.msra.mxu0 %v6096
    %6204 = vmatprep.subr.bf16.mxu0 %v6101
    %6205 = vmatpush1.bf16.msra.mxu0 %v6100
    %6206 = vmatprep.subr.bf16.mxu0 %v6105
    %6207 = vmatpush1.bf16.msra.mxu0 %v6104
    %6208 = vmatprep.subr.bf16.mxu0 %v6109
    %6209 = vmatpush1.bf16.msra.mxu0 %v6108
    %6210 = vmatprep.subr.bf16.mxu0 %v6176
    %6211 = vmatpush1.bf16.msra.mxu0 %v6173
    %6212 = vmatprep.subr.bf16.mxu0 0
    %6213 = vmatpush1.bf16.msra.mxu0 0
    %6214 = vmatprep.subr.bf16.mxu0 0
    %6215 = vmatpush1.bf16.msra.mxu0 0
    %6216 = vmatprep.mubr.bf16.mxu0 %v6170
    %6217 = vmatmul.mubr.bf16.gmra.mrb[0].mxu0 %v5895
    %v6218 = vpop.f32.mrb[0].mxu0
    %v6219 = vadd.f32 %v5890, %v6218
    %v6220 = vpop.f32.mrb[0].mxu0
    %v6221 = vadd.f32 %v5890, %v6220
    %v6222 = vpop.f32.mrb[0].mxu0
    %v6223 = vpop.f32.mrb[0].mxu0
    %6224 = vdwg.mxu0
    %6225 = vmatprep.subr.bf16.mxu0 %v6063
    %6226 = vmatpush1.bf16.msra.mxu0 %v6062
    %6227 = vmatprep.subr.bf16.mxu0 %v6067
    %6228 = vmatpush1.bf16.msra.mxu0 %v6066
    %6229 = vmatprep.subr.bf16.mxu0 %v6071
    %6230 = vmatpush1.bf16.msra.mxu0 %v6070
    %6231 = vmatprep.subr.bf16.mxu0 %v6075
    %6232 = vmatpush1.bf16.msra.mxu0 %v6074
    %6233 = vmatprep.subr.bf16.mxu0 %v6079
    %6234 = vmatpush1.bf16.msra.mxu0 %v6078
    %6235 = vmatprep.subr.bf16.mxu0 %v6083
    %6236 = vmatpush1.bf16.msra.mxu0 %v6082
    %6237 = vmatprep.subr.bf16.mxu0 %v6087
    %6238 = vmatpush1.bf16.msra.mxu0 %v6086
    %6239 = vmatprep.subr.bf16.mxu0 %v6091
    %6240 = vmatpush1.bf16.msra.mxu0 %v6090
    %6241 = vmatprep.subr.bf16.mxu0 %v6095
    %6242 = vmatpush1.bf16.msra.mxu0 %v6094
    %6243 = vmatprep.subr.bf16.mxu0 %v6099
    %6244 = vmatpush1.bf16.msra.mxu0 %v6098
    %6245 = vmatprep.subr.bf16.mxu0 %v6103
    %6246 = vmatpush1.bf16.msra.mxu0 %v6102
    %6247 = vmatprep.subr.bf16.mxu0 %v6107
    %6248 = vmatpush1.bf16.msra.mxu0 %v6106
    %6249 = vmatprep.subr.bf16.mxu0 %v6111
    %6250 = vmatpush1.bf16.msra.mxu0 %v6110
    %6251 = vmatprep.subr.bf16.mxu0 %v6182
    %6252 = vmatpush1.bf16.msra.mxu0 %v6179
    %6253 = vmatprep.subr.bf16.mxu0 0
    %6254 = vmatpush1.bf16.msra.mxu0 0
    %6255 = vmatprep.subr.bf16.mxu0 0
    %6256 = vmatpush1.bf16.msra.mxu0 0
    %6257 = vmatprep.mubr.bf16.mxu0 %v6170
    %6258 = vmatmul.mubr.bf16.gmra.mrb[0].mxu0 %v5895
    %v6259 = vpop.f32.mrb[0].mxu0
    %v6260 = vadd.f32 %v5890, %v6259
    %v6261 = vpop.f32.mrb[0].mxu0
    %v6262 = vadd.f32 %v5890, %v6261
    %v6263 = vpop.f32.mrb[0].mxu0
    %v6264 = vpop.f32.mrb[0].mxu0
    %6265 = vdwg.mxu0
    %s6266 = scalar_lea.vmem [#allocation2], 160
    %6267 = vst [vmem:[%s6266] sm:$0xff] %v6219
    %6268 = vst [vmem:[%s6266 + $0x8] sm:$0xff] %v6221
    %6269 = vst [vmem:[%s6266 + $0x10] sm:$0xff] %v6260
    %6270 = vst [vmem:[%s6266 + $0x18] sm:$0xff] %v6262
    %v6271 = vld [vmem:[%s6266] sm:$0xff]
    %v6272 = vld [vmem:[%s6266 + $0x8] sm:$0xff]
    %v6273 = vld [vmem:[%s6266 + $0x10] sm:$0xff]
    %v6274 = vld [vmem:[%s6266 + $0x18] sm:$0xff]
    %v6275 = vld [vmem:[%s1] sm:$0xff]
    %v6276 = vld [vmem:[%s2] sm:$0xff]
    %s6277 = sld [smem:[#allocation4 + $0x6]]
    %v6278 = vadd.f32 %v6271, %v6272
    %v6279 = vadd.f32 %v6278, %v6273
    %v6280 = vadd.f32 %v6279, %v6274
    %6281 = vadd.xlane.f32.xlu0 %v6280
    %v6282 = vpop.xlane.xlu0 %6281
    %v6283 = vmul.f32 %v6282, %v104
    %v6284 = vsub.f32 %v6271, %v6283
    %v6285 = vsub.f32 %v6272, %v6283
    %v6286 = vsub.f32 %v6273, %v6283
    %v6287 = vsub.f32 %v6274, %v6283
    %v6288 = vmul.f32 %v6284, %v6284
    %v6289 = vmul.f32 %v6285, %v6285
    %v6290 = vmul.f32 %v6286, %v6286
    %v6291 = vmul.f32 %v6287, %v6287
    %v6292 = vadd.f32 %v6288, %v6289
    %v6293 = vadd.f32 %v6292, %v6290
    %v6294 = vadd.f32 %v6293, %v6291
    %6295 = vadd.xlane.f32.xlu0 %v6294
    %v6296 = vpop.xlane.xlu0 %6295
    %v6297 = vmul.f32 %v6296, %v104
    %v6298 = vadd.f32 %v6297, 1e-05
    %v6299 = vrsqrt.pop %v6298
    %v6300 = vmul.f32 %v6284, %v6299
    %v6301 = vmul.f32 %v6285, %v6299
    %v6302 = vmul.f32 %v6286, %v6299
    %v6303 = vmul.f32 %v6287, %v6299
    %6305 = vset.pattern.permute.xlu0 6
    %6306 = vperm.xlu0 %6305, %v6275
    %v6307 = vpop.permute.xlu0 %6306
    %v6309 = vmul.f32 %v6300, %v6307
    %v6310 = vmul.f32 %v6301, %v6307
    %v6311 = vmul.f32 %v6302, %v6307
    %v6312 = vmul.f32 %v6303, %v6307
    %6314 = vset.pattern.permute.xlu0 6
    %6315 = vperm.xlu0 %6314, %v6276
    %v6316 = vpop.permute.xlu0 %6315
    %v6318 = vadd.f32 %v6309, %v6316
    %v6319 = vadd.f32 %v6310, %v6316
    %v6320 = vadd.f32 %v6311, %v6316
    %v6321 = vadd.f32 %v6312, %v6316
    %vm6322 = vcmp.ge.f32.partialorder %v6318, 0.0
    %vm6323 = vcmp.ge.f32.partialorder %v6319, 0.0
    %vm6324 = vcmp.ge.f32.partialorder %v6320, 0.0
    %vm6325 = vcmp.ge.f32.partialorder %v6321, 0.0
    %v6326 = vstv %s6277
    %v6327 = vmul.f32 %v6326, %v6318
    %v6328 = vmul.f32 %v6326, %v6319
    %v6329 = vmul.f32 %v6326, %v6320
    %v6330 = vmul.f32 %v6326, %v6321
    %v6331 = vsel %vm6322, %v6318, %v6327
    %v6332 = vsel %vm6323, %v6319, %v6328
    %v6333 = vsel %vm6324, %v6320, %v6329
    %v6334 = vsel %vm6325, %v6321, %v6330
    %v6335 = vld [vmem:[%s4344] sm:$0xff]
    %v6336 = vld [vmem:[%s4344 + $0x8] sm:$0xff]
    %v6337 = vld [vmem:[%s4344 + $0x10] sm:$0xff]
    %v6338 = vld [vmem:[%s4344 + $0x18] sm:$0xff]
    %v6339 = vld [vmem:[%s1 + $0x8] sm:$0xff]
    %v6340 = vld [vmem:[%s2 + $0x8] sm:$0xff]
    %v6341 = vadd.f32 %v6335, %v6336
    %v6342 = vadd.f32 %v6341, %v6337
    %v6343 = vadd.f32 %v6342, %v6338
    %6344 = vadd.xlane.f32.xlu0 %v6343
    %v6345 = vpop.xlane.xlu0 %6344
    %v6346 = vmul.f32 %v6345, %v104
    %v6347 = vsub.f32 %v6335, %v6346
    %v6348 = vsub.f32 %v6336, %v6346
    %v6349 = vsub.f32 %v6337, %v6346
    %v6350 = vsub.f32 %v6338, %v6346
    %v6351 = vmul.f32 %v6347, %v6347
    %v6352 = vmul.f32 %v6348, %v6348
    %v6353 = vmul.f32 %v6349, %v6349
    %v6354 = vmul.f32 %v6350, %v6350
    %v6355 = vadd.f32 %v6351, %v6352
    %v6356 = vadd.f32 %v6355, %v6353
    %v6357 = vadd.f32 %v6356, %v6354
    %6358 = vadd.xlane.f32.xlu0 %v6357
    %v6359 = vpop.xlane.xlu0 %6358
    %v6360 = vmul.f32 %v6359, %v104
    %v6361 = vadd.f32 %v6360, 1e-05
    %v6362 = vrsqrt.pop %v6361
    %v6363 = vmul.f32 %v6347, %v6362
    %v6364 = vmul.f32 %v6348, %v6362
    %v6365 = vmul.f32 %v6349, %v6362
    %v6366 = vmul.f32 %v6350, %v6362
    %6368 = vset.pattern.permute.xlu0 6
    %6369 = vperm.xlu0 %6368, %v6339
    %v6370 = vpop.permute.xlu0 %6369
    %v6372 = vmul.f32 %v6363, %v6370
    %v6373 = vmul.f32 %v6364, %v6370
    %v6374 = vmul.f32 %v6365, %v6370
    %v6375 = vmul.f32 %v6366, %v6370
    %6377 = vset.pattern.permute.xlu0 6
    %6378 = vperm.xlu0 %6377, %v6340
    %v6379 = vpop.permute.xlu0 %6378
    %v6381 = vadd.f32 %v6372, %v6379
    %v6382 = vadd.f32 %v6373, %v6379
    %v6383 = vadd.f32 %v6374, %v6379
    %v6384 = vadd.f32 %v6375, %v6379
    %vm6385 = vcmp.ge.f32.partialorder %v6381, 0.0
    %vm6386 = vcmp.ge.f32.partialorder %v6382, 0.0
    %vm6387 = vcmp.ge.f32.partialorder %v6383, 0.0
    %vm6388 = vcmp.ge.f32.partialorder %v6384, 0.0
    %v6389 = vmul.f32 %v6326, %v6381
    %v6390 = vmul.f32 %v6326, %v6382
    %v6391 = vmul.f32 %v6326, %v6383
    %v6392 = vmul.f32 %v6326, %v6384
    %v6393 = vsel %vm6385, %v6381, %v6389
    %v6394 = vsel %vm6386, %v6382, %v6390
    %v6395 = vsel %vm6387, %v6383, %v6391
    %v6396 = vsel %vm6388, %v6384, %v6392
    %v6397 = vld [vmem:[%s1733] sm:$0xff]
    %v6398 = vld [vmem:[%s1733 + $0x8] sm:$0xff]
    %v6399 = vld [vmem:[%s1733 + $0x10] sm:$0xff]
    %v6400 = vld [vmem:[%s1733 + $0x18] sm:$0xff]
    %v6401 = vld [vmem:[%s1 + $0x10] sm:$0xff]
    %v6402 = vld [vmem:[%s2 + $0x10] sm:$0xff]
    %v6403 = vadd.f32 %v6397, %v6398
    %v6404 = vadd.f32 %v6403, %v6399
    %v6405 = vadd.f32 %v6404, %v6400
    %6406 = vadd.xlane.f32.xlu0 %v6405
    %v6407 = vpop.xlane.xlu0 %6406
    %v6408 = vmul.f32 %v6407, %v104
    %v6409 = vsub.f32 %v6397, %v6408
    %v6410 = vsub.f32 %v6398, %v6408
    %v6411 = vsub.f32 %v6399, %v6408
    %v6412 = vsub.f32 %v6400, %v6408
    %v6413 = vmul.f32 %v6409, %v6409
    %v6414 = vmul.f32 %v6410, %v6410
    %v6415 = vmul.f32 %v6411, %v6411
    %v6416 = vmul.f32 %v6412, %v6412
    %v6417 = vadd.f32 %v6413, %v6414
    %v6418 = vadd.f32 %v6417, %v6415
    %v6419 = vadd.f32 %v6418, %v6416
    %6420 = vadd.xlane.f32.xlu0 %v6419
    %v6421 = vpop.xlane.xlu0 %6420
    %v6422 = vmul.f32 %v6421, %v104
    %v6423 = vadd.f32 %v6422, 1e-05
    %v6424 = vrsqrt.pop %v6423
    %v6425 = vmul.f32 %v6409, %v6424
    %v6426 = vmul.f32 %v6410, %v6424
    %v6427 = vmul.f32 %v6411, %v6424
    %v6428 = vmul.f32 %v6412, %v6424
    %6430 = vset.pattern.permute.xlu0 6
    %6431 = vperm.xlu0 %6430, %v6401
    %v6432 = vpop.permute.xlu0 %6431
    %v6434 = vmul.f32 %v6425, %v6432
    %v6435 = vmul.f32 %v6426, %v6432
    %v6436 = vmul.f32 %v6427, %v6432
    %v6437 = vmul.f32 %v6428, %v6432
    %6439 = vset.pattern.permute.xlu0 6
    %6440 = vperm.xlu0 %6439, %v6402
    %v6441 = vpop.permute.xlu0 %6440
    %v6443 = vadd.f32 %v6434, %v6441
    %v6444 = vadd.f32 %v6435, %v6441
    %v6445 = vadd.f32 %v6436, %v6441
    %v6446 = vadd.f32 %v6437, %v6441
    %vm6447 = vcmp.ge.f32.partialorder %v6443, 0.0
    %vm6448 = vcmp.ge.f32.partialorder %v6444, 0.0
    %vm6449 = vcmp.ge.f32.partialorder %v6445, 0.0
    %vm6450 = vcmp.ge.f32.partialorder %v6446, 0.0
    %v6451 = vmul.f32 %v6326, %v6443
    %v6452 = vmul.f32 %v6326, %v6444
    %v6453 = vmul.f32 %v6326, %v6445
    %v6454 = vmul.f32 %v6326, %v6446
    %v6455 = vsel %vm6447, %v6443, %v6451
    %v6456 = vsel %vm6448, %v6444, %v6452
    %v6457 = vsel %vm6449, %v6445, %v6453
    %v6458 = vsel %vm6450, %v6446, %v6454
    %v6459 = vpack.c.bf16 %v6393, %v6331
    %v6460 = vpack.c.bf16 %v6394, %v6332
    %v6461 = vpack.c.bf16 %v6395, %v6333
    %v6462 = vpack.c.bf16 %v6396, %v6334
    %v6467 = vunpack.c.l.b16 %v6459
    %v6468 = vunpack.c.l.b16 %v6460
    %v6469 = vunpack.c.l.b16 %v6461
    %v6470 = vunpack.c.l.b16 %v6462
    %v6471 = vunpack.c.h.b16 %v6459
    %v6472 = vunpack.c.h.b16 %v6460
    %v6473 = vunpack.c.h.b16 %v6461
    %v6474 = vunpack.c.h.b16 %v6462
    %v6475 = vpack.c.b16 %v6468, %v6467
    %v6476 = vpack.c.b16 %v6470, %v6469
    %v6477 = vpack.c.b16 %v6472, %v6471
    %v6478 = vpack.c.b16 %v6474, %v6473
    %6483 = vst [vmem:[#allocation3] sm:$0xff] %v6475
    %6484 = vst [vmem:[#allocation3 + $0x8] sm:$0xff] %v6476
    %6485 = vst [vmem:[#allocation3 + $0x10] sm:$0xff] %v6477
    %6486 = vst [vmem:[#allocation3 + $0x18] sm:$0xff] %v6478
    %v6487 = vpack.c.bf16 %v6455, %v6455
    %v6488 = vpack.c.bf16 %v6456, %v6456
    %v6489 = vpack.c.bf16 %v6457, %v6457
    %v6490 = vpack.c.bf16 %v6458, %v6458
    %v6495 = vunpack.c.l.b16 %v6487
    %v6496 = vunpack.c.l.b16 %v6488
    %v6497 = vunpack.c.l.b16 %v6489
    %v6498 = vunpack.c.l.b16 %v6490
    %v6499 = vpack.c.b16 %v6496, %v6495
    %v6500 = vpack.c.b16 %v6498, %v6497
    %6503 = vst [vmem:[#allocation3 + $0x20] sm:$0xff] %v6499
    %6504 = vst [vmem:[#allocation3 + $0x28] sm:$0xff] %v6500
    %v6505 = vld [vmem:[%s12] sm:$0xf]
    %v6506 = vld [vmem:[#allocation3] sm:$0xff]
    %v6507 = vld [vmem:[#allocation3 + $0x8] sm:$0xff]
    %v6508 = vld [vmem:[#allocation3 + $0x10] sm:$0xff]
    %v6509 = vld [vmem:[#allocation3 + $0x18] sm:$0xff]
    %v6510 = vld [vmem:[#allocation3 + $0x20] sm:$0xff]
    %v6511 = vld [vmem:[#allocation3 + $0x28] sm:$0xff]
    %v6512 = vld [vmem:[%s4] sm:$0xff]
    %6514 = vset.pattern.permute.xlu0 6
    %6515 = vperm.xlu0 %6514, %v6512
    %v6516 = vpop.permute.xlu0 %6515
    %v6524 = vunpack.c.l.b16 %v6506
    %v6525 = vunpack.c.h.b16 %v6506
    %v6526 = vunpack.c.l.b16 %v6507
    %v6527 = vunpack.c.h.b16 %v6507
    %v6528 = vunpack.c.l.b16 %v6508
    %v6529 = vunpack.c.h.b16 %v6508
    %v6530 = vunpack.c.l.b16 %v6509
    %v6531 = vunpack.c.h.b16 %v6509
    %v6532 = vunpack.c.l.b16 %v6510
    %v6533 = vunpack.c.h.b16 %v6510
    %v6534 = vunpack.c.l.b16 %v6511
    %v6535 = vunpack.c.h.b16 %v6511
    %v6536 = vpack.c.b16 %v6528, %v6524
    %v6537 = vpack.c.b16 %v6529, %v6525
    %v6538 = vpack.c.b16 %v6530, %v6526
    %v6539 = vpack.c.b16 %v6531, %v6527
    %v6540 = vpack.c.b16 %v6532, %v6532
    %v6541 = vpack.c.b16 %v6533, %v6533
    %v6542 = vpack.c.b16 %v6534, %v6534
    %v6543 = vpack.c.b16 %v6535, %v6535
    %vm6548 = vcmask 195584
    %v6550 = vsel %vm6548, %v6505, 0
    %v6553 = vsel %vm94, %v6540, 0
    %v6556 = vsel %vm94, %v6541, 0
    %v6559 = vsel %vm94, %v6542, 0
    %v6562 = vsel %vm94, %v6543, 0
    %6564 = vmatprep.subr.bf16.mxu0 %v6537
    %6565 = vmatpush1.bf16.msra.mxu0 %v6536
    %6566 = vmatprep.subr.bf16.mxu0 %v6556
    %6567 = vmatpush1.bf16.msra.mxu0 %v6553
    %6568 = vmatprep.subr.bf16.mxu0 0
    %6569 = vmatpush1.bf16.msra.mxu0 0
    %6570 = vmatprep.subr.bf16.mxu0 0
    %6571 = vmatpush1.bf16.msra.mxu0 0
    %6572 = vmatprep.subr.bf16.mxu0 0
    %6573 = vmatpush1.bf16.msra.mxu0 0
    %6574 = vmatprep.subr.bf16.mxu0 0
    %6575 = vmatpush1.bf16.msra.mxu0 0
    %6576 = vmatprep.subr.bf16.mxu0 0
    %6577 = vmatpush1.bf16.msra.mxu0 0
    %6578 = vmatprep.subr.bf16.mxu0 0
    %6579 = vmatpush1.bf16.msra.mxu0 0
    %6580 = vmatprep.subr.bf16.mxu0 0
    %6581 = vmatpush1.bf16.msra.mxu0 0
    %6582 = vmatprep.subr.bf16.mxu0 0
    %6583 = vmatpush1.bf16.msra.mxu0 0
    %6584 = vmatprep.subr.bf16.mxu0 0
    %6585 = vmatpush1.bf16.msra.mxu0 0
    %6586 = vmatprep.subr.bf16.mxu0 0
    %6587 = vmatpush1.bf16.msra.mxu0 0
    %6588 = vmatprep.subr.bf16.mxu0 0
    %6589 = vmatpush1.bf16.msra.mxu0 0
    %6590 = vmatprep.subr.bf16.mxu0 0
    %6591 = vmatpush1.bf16.msra.mxu0 0
    %6592 = vmatprep.subr.bf16.mxu0 0
    %6593 = vmatpush1.bf16.msra.mxu0 0
    %6594 = vmatprep.subr.bf16.mxu0 0
    %6595 = vmatpush1.bf16.msra.mxu0 0
    %6596 = vmatprep.mubr.bf16.mxu0 0
    %6597 = vmatmul.mubr.bf16.gmra.mrb[0].mxu0 %v6550
    %v6598 = vpop.f32.mrb[0].mxu0
    %v6599 = vadd.f32 %v6516, %v6598
    %v6600 = vpop.f32.mrb[0].mxu0
    %v6601 = vadd.f32 %v6516, %v6600
    %v6602 = vpop.f32.mrb[0].mxu0
    %v6603 = vpop.f32.mrb[0].mxu0
    %6604 = vdwg.mxu0
    %6605 = vmatprep.subr.bf16.mxu0 %v6539
    %6606 = vmatpush1.bf16.msra.mxu0 %v6538
    %6607 = vmatprep.subr.bf16.mxu0 %v6562
    %6608 = vmatpush1.bf16.msra.mxu0 %v6559
    %6609 = vmatprep.subr.bf16.mxu0 0
    %6610 = vmatpush1.bf16.msra.mxu0 0
    %6611 = vmatprep.subr.bf16.mxu0 0
    %6612 = vmatpush1.bf16.msra.mxu0 0
    %6613 = vmatprep.subr.bf16.mxu0 0
    %6614 = vmatpush1.bf16.msra.mxu0 0
    %6615 = vmatprep.subr.bf16.mxu0 0
    %6616 = vmatpush1.bf16.msra.mxu0 0
    %6617 = vmatprep.subr.bf16.mxu0 0
    %6618 = vmatpush1.bf16.msra.mxu0 0
    %6619 = vmatprep.subr.bf16.mxu0 0
    %6620 = vmatpush1.bf16.msra.mxu0 0
    %6621 = vmatprep.subr.bf16.mxu0 0
    %6622 = vmatpush1.bf16.msra.mxu0 0
    %6623 = vmatprep.subr.bf16.mxu0 0
    %6624 = vmatpush1.bf16.msra.mxu0 0
    %6625 = vmatprep.subr.bf16.mxu0 0
    %6626 = vmatpush1.bf16.msra.mxu0 0
    %6627 = vmatprep.subr.bf16.mxu0 0
    %6628 = vmatpush1.bf16.msra.mxu0 0
    %6629 = vmatprep.subr.bf16.mxu0 0
    %6630 = vmatpush1.bf16.msra.mxu0 0
    %6631 = vmatprep.subr.bf16.mxu0 0
    %6632 = vmatpush1.bf16.msra.mxu0 0
    %6633 = vmatprep.subr.bf16.mxu0 0
    %6634 = vmatpush1.bf16.msra.mxu0 0
    %6635 = vmatprep.subr.bf16.mxu0 0
    %6636 = vmatpush1.bf16.msra.mxu0 0
    %6637 = vmatprep.mubr.bf16.mxu0 0
    %6638 = vmatmul.mubr.bf16.gmra.mrb[0].mxu0 %v6550
    %v6639 = vpop.f32.mrb[0].mxu0
    %v6640 = vadd.f32 %v6516, %v6639
    %v6641 = vpop.f32.mrb[0].mxu0
    %v6642 = vadd.f32 %v6516, %v6641
    %v6643 = vpop.f32.mrb[0].mxu0
    %v6644 = vpop.f32.mrb[0].mxu0
    %6645 = vdwg.mxu0
    %s6646 = scalar_lea.vmem [#allocation2], 192
    %6647 = vst [vmem:[%s6646] sm:$0xff] %v6599
    %6648 = vst [vmem:[%s6646 + $0x8] sm:$0xff] %v6601
    %6649 = vst [vmem:[%s6646 + $0x10] sm:$0xff] %v6640
    %6650 = vst [vmem:[%s6646 + $0x18] sm:$0xff] %v6642
    %v6651 = vld [vmem:[%s6646] sm:$0xff]
    %v6652 = vld [vmem:[%s6646 + $0x8] sm:$0xff]
    %v6653 = vld [vmem:[%s6646 + $0x10] sm:$0xff]
    %v6654 = vld [vmem:[%s6646 + $0x18] sm:$0xff]
    %v6655 = vld [vmem:[%s1] sm:$0xff]
    %v6656 = vld [vmem:[%s2] sm:$0xff]
    %s6657 = sld [smem:[#allocation4 + $0x7]]
    %v6658 = vadd.f32 %v6651, %v6652
    %v6659 = vadd.f32 %v6658, %v6653
    %v6660 = vadd.f32 %v6659, %v6654
    %6661 = vadd.xlane.f32.xlu0 %v6660
    %v6662 = vpop.xlane.xlu0 %6661
    %v6663 = vmul.f32 %v6662, %v104
    %v6664 = vsub.f32 %v6651, %v6663
    %v6665 = vsub.f32 %v6652, %v6663
    %v6666 = vsub.f32 %v6653, %v6663
    %v6667 = vsub.f32 %v6654, %v6663
    %v6668 = vmul.f32 %v6664, %v6664
    %v6669 = vmul.f32 %v6665, %v6665
    %v6670 = vmul.f32 %v6666, %v6666
    %v6671 = vmul.f32 %v6667, %v6667
    %v6672 = vadd.f32 %v6668, %v6669
    %v6673 = vadd.f32 %v6672, %v6670
    %v6674 = vadd.f32 %v6673, %v6671
    %6675 = vadd.xlane.f32.xlu0 %v6674
    %v6676 = vpop.xlane.xlu0 %6675
    %v6677 = vmul.f32 %v6676, %v104
    %v6678 = vadd.f32 %v6677, 1e-05
    %v6679 = vrsqrt.pop %v6678
    %v6680 = vmul.f32 %v6664, %v6679
    %v6681 = vmul.f32 %v6665, %v6679
    %v6682 = vmul.f32 %v6666, %v6679
    %v6683 = vmul.f32 %v6667, %v6679
    %6685 = vset.pattern.permute.xlu0 7
    %6686 = vperm.xlu0 %6685, %v6655
    %v6687 = vpop.permute.xlu0 %6686
    %v6689 = vmul.f32 %v6680, %v6687
    %v6690 = vmul.f32 %v6681, %v6687
    %v6691 = vmul.f32 %v6682, %v6687
    %v6692 = vmul.f32 %v6683, %v6687
    %6694 = vset.pattern.permute.xlu0 7
    %6695 = vperm.xlu0 %6694, %v6656
    %v6696 = vpop.permute.xlu0 %6695
    %v6698 = vadd.f32 %v6689, %v6696
    %v6699 = vadd.f32 %v6690, %v6696
    %v6700 = vadd.f32 %v6691, %v6696
    %v6701 = vadd.f32 %v6692, %v6696
    %vm6702 = vcmp.ge.f32.partialorder %v6698, 0.0
    %vm6703 = vcmp.ge.f32.partialorder %v6699, 0.0
    %vm6704 = vcmp.ge.f32.partialorder %v6700, 0.0
    %vm6705 = vcmp.ge.f32.partialorder %v6701, 0.0
    %v6706 = vstv %s6657
    %v6707 = vmul.f32 %v6706, %v6698
    %v6708 = vmul.f32 %v6706, %v6699
    %v6709 = vmul.f32 %v6706, %v6700
    %v6710 = vmul.f32 %v6706, %v6701
    %v6711 = vsel %vm6702, %v6698, %v6707
    %v6712 = vsel %vm6703, %v6699, %v6708
    %v6713 = vsel %vm6704, %v6700, %v6709
    %v6714 = vsel %vm6705, %v6701, %v6710
    %6715 = vrot.lane.b32.xlu0 %v6711, 127
    %v6716 = vpop.permute.xlu0 %6715
    %6717 = vrot.lane.b32.xlu0 %v6712, 127
    %v6718 = vpop.permute.xlu0 %6717
    %6719 = vrot.lane.b32.xlu0 %v6713, 127
    %v6720 = vpop.permute.xlu0 %6719
    %6721 = vrot.lane.b32.xlu0 %v6714, 127
    %v6722 = vpop.permute.xlu0 %6721
    %v6723 = vsel %vm418, %v6720, %v6722
    %v6724 = vsel %vm418, %v6718, %v6720
    %v6725 = vsel %vm418, %v6716, %v6718
    %v6726 = vsel %vm418, %v6722, %v6716
    %v6727 = vld [vmem:[%s423] ss:$8 sm:$0xf]
    %v6729 = vlaneseq
    %v6730 = vshrl.u32 %v6729, 7
    %v6731 = vsub.s32 0, %v6730
    %v6732 = vrot.slane %v6727, %v6731
    %v6733 = vlaneseq
    %v6734 = vshrl.u32 %v6733, 7
    %v6735 = vsub.s32 1, %v6734
    %v6736 = vrot.slane %v6727, %v6735
    %v6737 = vlaneseq
    %v6738 = vshrl.u32 %v6737, 7
    %v6739 = vsub.s32 2, %v6738
    %v6740 = vrot.slane %v6727, %v6739
    %v6741 = vlaneseq
    %v6742 = vshrl.u32 %v6741, 7
    %v6743 = vsub.s32 3, %v6742
    %v6744 = vrot.slane %v6727, %v6743
    %v6749 = vmul.f32 %v6725, %v6732
    %v6750 = vmul.f32 %v6724, %v6736
    %v6751 = vmul.f32 %v6723, %v6740
    %v6752 = vmul.f32 %v6726, %v6744
    %v6753 = vpack.c.bf16 %v6749, %v6711
    %v6754 = vpack.c.bf16 %v6750, %v6712
    %v6755 = vpack.c.bf16 %v6751, %v6713
    %v6756 = vpack.c.bf16 %v6752, %v6714
    %v6761 = vunpack.c.l.b16 %v6753
    %v6762 = vunpack.c.l.b16 %v6754
    %v6763 = vunpack.c.l.b16 %v6755
    %v6764 = vunpack.c.l.b16 %v6756
    %v6765 = vunpack.c.h.b16 %v6753
    %v6766 = vunpack.c.h.b16 %v6754
    %v6767 = vunpack.c.h.b16 %v6755
    %v6768 = vunpack.c.h.b16 %v6756
    %v6769 = vpack.c.b16 %v6762, %v6761
    %v6770 = vpack.c.b16 %v6764, %v6763
    %v6771 = vpack.c.b16 %v6766, %v6765
    %v6772 = vpack.c.b16 %v6768, %v6767
    %6777 = vst [vmem:[#allocation3] sm:$0xff] %v6769
    %6778 = vst [vmem:[#allocation3 + $0x8] sm:$0xff] %v6770
    %6779 = vst [vmem:[#allocation3 + $0x10] sm:$0xff] %v6771
    %6780 = vst [vmem:[#allocation3 + $0x18] sm:$0xff] %v6772
    %6781 = vrot.lane.b32.xlu0 %v6711, 112
    %v6782 = vpop.permute.xlu0 %6781
    %6783 = vrot.lane.b32.xlu0 %v6712, 112
    %v6784 = vpop.permute.xlu0 %6783
    %6785 = vrot.lane.b32.xlu0 %v6713, 112
    %v6786 = vpop.permute.xlu0 %6785
    %6787 = vrot.lane.b32.xlu0 %v6714, 112
    %v6788 = vpop.permute.xlu0 %6787
    %v6789 = vsel %vm498, %v6786, %v6788
    %v6790 = vsel %vm498, %v6784, %v6786
    %v6791 = vsel %vm498, %v6782, %v6784
    %v6792 = vsel %vm498, %v6788, %v6782
    %v6793 = vld [vmem:[%s503] ss:$8 sm:$0xf]
    %v6795 = vlaneseq
    %v6796 = vshrl.u32 %v6795, 7
    %v6797 = vsub.s32 0, %v6796
    %v6798 = vrot.slane %v6793, %v6797
    %v6799 = vlaneseq
    %v6800 = vshrl.u32 %v6799, 7
    %v6801 = vsub.s32 1, %v6800
    %v6802 = vrot.slane %v6793, %v6801
    %v6803 = vlaneseq
    %v6804 = vshrl.u32 %v6803, 7
    %v6805 = vsub.s32 2, %v6804
    %v6806 = vrot.slane %v6793, %v6805
    %v6807 = vlaneseq
    %v6808 = vshrl.u32 %v6807, 7
    %v6809 = vsub.s32 3, %v6808
    %v6810 = vrot.slane %v6793, %v6809
    %v6815 = vmul.f32 %v6791, %v6798
    %v6816 = vmul.f32 %v6790, %v6802
    %v6817 = vmul.f32 %v6789, %v6806
    %v6818 = vmul.f32 %v6792, %v6810
    %6819 = vrot.lane.b32.xlu0 %v6711, 111
    %v6820 = vpop.permute.xlu0 %6819
    %6821 = vrot.lane.b32.xlu0 %v6712, 111
    %v6822 = vpop.permute.xlu0 %6821
    %6823 = vrot.lane.b32.xlu0 %v6713, 111
    %v6824 = vpop.permute.xlu0 %6823
    %6825 = vrot.lane.b32.xlu0 %v6714, 111
    %v6826 = vpop.permute.xlu0 %6825
    %v6827 = vsel %vm598, %v6824, %v6826
    %v6828 = vsel %vm598, %v6822, %v6824
    %v6829 = vsel %vm598, %v6820, %v6822
    %v6830 = vsel %vm598, %v6826, %v6820
    %v6831 = vld [vmem:[%s603] ss:$8 sm:$0xf]
    %v6833 = vlaneseq
    %v6834 = vshrl.u32 %v6833, 7
    %v6835 = vsub.s32 0, %v6834
    %v6836 = vrot.slane %v6831, %v6835
    %v6837 = vlaneseq
    %v6838 = vshrl.u32 %v6837, 7
    %v6839 = vsub.s32 1, %v6838
    %v6840 = vrot.slane %v6831, %v6839
    %v6841 = vlaneseq
    %v6842 = vshrl.u32 %v6841, 7
    %v6843 = vsub.s32 2, %v6842
    %v6844 = vrot.slane %v6831, %v6843
    %v6845 = vlaneseq
    %v6846 = vshrl.u32 %v6845, 7
    %v6847 = vsub.s32 3, %v6846
    %v6848 = vrot.slane %v6831, %v6847
    %v6853 = vmul.f32 %v6829, %v6836
    %v6854 = vmul.f32 %v6828, %v6840
    %v6855 = vmul.f32 %v6827, %v6844
    %v6856 = vmul.f32 %v6830, %v6848
    %v6857 = vpack.c.bf16 %v6853, %v6815
    %v6858 = vpack.c.bf16 %v6854, %v6816
    %v6859 = vpack.c.bf16 %v6855, %v6817
    %v6860 = vpack.c.bf16 %v6856, %v6818
    %v6865 = vunpack.c.l.b16 %v6857
    %v6866 = vunpack.c.l.b16 %v6858
    %v6867 = vunpack.c.l.b16 %v6859
    %v6868 = vunpack.c.l.b16 %v6860
    %v6869 = vunpack.c.h.b16 %v6857
    %v6870 = vunpack.c.h.b16 %v6858
    %v6871 = vunpack.c.h.b16 %v6859
    %v6872 = vunpack.c.h.b16 %v6860
    %v6873 = vpack.c.b16 %v6866, %v6865
    %v6874 = vpack.c.b16 %v6868, %v6867
    %v6875 = vpack.c.b16 %v6870, %v6869
    %v6876 = vpack.c.b16 %v6872, %v6871
    %6881 = vst [vmem:[#allocation3 + $0x20] sm:$0xff] %v6873
    %6882 = vst [vmem:[#allocation3 + $0x28] sm:$0xff] %v6874
    %6883 = vst [vmem:[#allocation3 + $0x30] sm:$0xff] %v6875
    %6884 = vst [vmem:[#allocation3 + $0x38] sm:$0xff] %v6876
    %v6885 = vld [vmem:[%s13] sm:$0xf]
    %v6886 = vld [vmem:[#allocation3] sm:$0xff]
    %v6887 = vld [vmem:[#allocation3 + $0x8] sm:$0xff]
    %v6888 = vld [vmem:[#allocation3 + $0x10] sm:$0xff]
    %v6889 = vld [vmem:[#allocation3 + $0x18] sm:$0xff]
    %v6890 = vld [vmem:[#allocation3 + $0x20] sm:$0xff]
    %v6891 = vld [vmem:[#allocation3 + $0x28] sm:$0xff]
    %v6892 = vld [vmem:[#allocation3 + $0x30] sm:$0xff]
    %v6893 = vld [vmem:[#allocation3 + $0x38] sm:$0xff]
    %v6894 = vld [vmem:[%s4] sm:$0xff]
    %6896 = vset.pattern.permute.xlu0 7
    %6897 = vperm.xlu0 %6896, %v6894
    %v6898 = vpop.permute.xlu0 %6897
    %v6908 = vunpack.c.l.b16 %v6886
    %v6909 = vunpack.c.h.b16 %v6886
    %v6910 = vunpack.c.l.b16 %v6887
    %v6911 = vunpack.c.h.b16 %v6887
    %v6912 = vunpack.c.l.b16 %v6888
    %v6913 = vunpack.c.h.b16 %v6888
    %v6914 = vunpack.c.l.b16 %v6889
    %v6915 = vunpack.c.h.b16 %v6889
    %v6916 = vunpack.c.l.b16 %v6890
    %v6917 = vunpack.c.h.b16 %v6890
    %v6918 = vunpack.c.l.b16 %v6891
    %v6919 = vunpack.c.h.b16 %v6891
    %v6920 = vunpack.c.l.b16 %v6892
    %v6921 = vunpack.c.h.b16 %v6892
    %v6922 = vunpack.c.l.b16 %v6893
    %v6923 = vunpack.c.h.b16 %v6893
    %v6924 = vpack.c.b16 %v6912, %v6908
    %v6925 = vpack.c.b16 %v6913, %v6909
    %v6926 = vpack.c.b16 %v6914, %v6910
    %v6927 = vpack.c.b16 %v6915, %v6911
    %v6928 = vpack.c.b16 %v6920, %v6916
    %v6929 = vpack.c.b16 %v6921, %v6917
    %v6930 = vpack.c.b16 %v6922, %v6918
    %v6931 = vpack.c.b16 %v6923, %v6919
    %vm6940 = vcmask 261120
    %v6942 = vsel %vm6940, %v6885, 0
    %6944 = vmatprep.subr.bf16.mxu0 %v6925
    %6945 = vmatpush1.bf16.msra.mxu0 %v6924
    %6946 = vmatprep.subr.bf16.mxu0 %v6929
    %6947 = vmatpush1.bf16.msra.mxu0 %v6928
    %6948 = vmatprep.subr.bf16.mxu0 0
    %6949 = vmatpush1.bf16.msra.mxu0 0
    %6950 = vmatprep.subr.bf16.mxu0 0
    %6951 = vmatpush1.bf16.msra.mxu0 0
    %6952 = vmatprep.subr.bf16.mxu0 0
    %6953 = vmatpush1.bf16.msra.mxu0 0
    %6954 = vmatprep.subr.bf16.mxu0 0
    %6955 = vmatpush1.bf16.msra.mxu0 0
    %6956 = vmatprep.subr.bf16.mxu0 0
    %6957 = vmatpush1.bf16.msra.mxu0 0
    %6958 = vmatprep.subr.bf16.mxu0 0
    %6959 = vmatpush1.bf16.msra.mxu0 0
    %6960 = vmatprep.subr.bf16.mxu0 0
    %6961 = vmatpush1.bf16.msra.mxu0 0
    %6962 = vmatprep.subr.bf16.mxu0 0
    %6963 = vmatpush1.bf16.msra.mxu0 0
    %6964 = vmatprep.subr.bf16.mxu0 0
    %6965 = vmatpush1.bf16.msra.mxu0 0
    %6966 = vmatprep.subr.bf16.mxu0 0
    %6967 = vmatpush1.bf16.msra.mxu0 0
    %6968 = vmatprep.subr.bf16.mxu0 0
    %6969 = vmatpush1.bf16.msra.mxu0 0
    %6970 = vmatprep.subr.bf16.mxu0 0
    %6971 = vmatpush1.bf16.msra.mxu0 0
    %6972 = vmatprep.subr.bf16.mxu0 0
    %6973 = vmatpush1.bf16.msra.mxu0 0
    %6974 = vmatprep.subr.bf16.mxu0 0
    %6975 = vmatpush1.bf16.msra.mxu0 0
    %6976 = vmatprep.mubr.bf16.mxu0 0
    %6977 = vmatmul.mubr.bf16.gmra.mrb[0].mxu0 %v6942
    %v6978 = vpop.f32.mrb[0].mxu0
    %v6979 = vadd.f32 %v6898, %v6978
    %v6980 = vpop.f32.mrb[0].mxu0
    %v6981 = vadd.f32 %v6898, %v6980
    %v6982 = vpop.f32.mrb[0].mxu0
    %v6983 = vpop.f32.mrb[0].mxu0
    %6984 = vdwg.mxu0
    %6985 = vmatprep.subr.bf16.mxu0 %v6927
    %6986 = vmatpush1.bf16.msra.mxu0 %v6926
    %6987 = vmatprep.subr.bf16.mxu0 %v6931
    %6988 = vmatpush1.bf16.msra.mxu0 %v6930
    %6989 = vmatprep.subr.bf16.mxu0 0
    %6990 = vmatpush1.bf16.msra.mxu0 0
    %6991 = vmatprep.subr.bf16.mxu0 0
    %6992 = vmatpush1.bf16.msra.mxu0 0
    %6993 = vmatprep.subr.bf16.mxu0 0
    %6994 = vmatpush1.bf16.msra.mxu0 0
    %6995 = vmatprep.subr.bf16.mxu0 0
    %6996 = vmatpush1.bf16.msra.mxu0 0
    %6997 = vmatprep.subr.bf16.mxu0 0
    %6998 = vmatpush1.bf16.msra.mxu0 0
    %6999 = vmatprep.subr.bf16.mxu0 0
    %7000 = vmatpush1.bf16.msra.mxu0 0
    %7001 = vmatprep.subr.bf16.mxu0 0
    %7002 = vmatpush1.bf16.msra.mxu0 0
    %7003 = vmatprep.subr.bf16.mxu0 0
    %7004 = vmatpush1.bf16.msra.mxu0 0
    %7005 = vmatprep.subr.bf16.mxu0 0
    %7006 = vmatpush1.bf16.msra.mxu0 0
    %7007 = vmatprep.subr.bf16.mxu0 0
    %7008 = vmatpush1.bf16.msra.mxu0 0
    %7009 = vmatprep.subr.bf16.mxu0 0
    %7010 = vmatpush1.bf16.msra.mxu0 0
    %7011 = vmatprep.subr.bf16.mxu0 0
    %7012 = vmatpush1.bf16.msra.mxu0 0
    %7013 = vmatprep.subr.bf16.mxu0 0
    %7014 = vmatpush1.bf16.msra.mxu0 0
    %7015 = vmatprep.subr.bf16.mxu0 0
    %7016 = vmatpush1.bf16.msra.mxu0 0
    %7017 = vmatprep.mubr.bf16.mxu0 0
    %7018 = vmatmul.mubr.bf16.gmra.mrb[0].mxu0 %v6942
    %v7019 = vpop.f32.mrb[0].mxu0
    %v7020 = vadd.f32 %v6898, %v7019
    %v7021 = vpop.f32.mrb[0].mxu0
    %v7022 = vadd.f32 %v6898, %v7021
    %v7023 = vpop.f32.mrb[0].mxu0
    %v7024 = vpop.f32.mrb[0].mxu0
    %7025 = vdwg.mxu0
    %7026 = vst [vmem:[%s16] sm:$0xff] %v6979
    %7027 = vst [vmem:[%s16 + $0x8] sm:$0xff] %v6981
    %7028 = vst [vmem:[%s16 + $0x10] sm:$0xff] %v7020
    %7029 = vst [vmem:[%s16 + $0x18] sm:$0xff] %v7022
    %7030 = vrot.lane.b32.xlu0 %v6979, 127
    %v7031 = vpop.permute.xlu0 %7030
    %7032 = vrot.lane.b32.xlu0 %v6981, 127
    %v7033 = vpop.permute.xlu0 %7032
    %7034 = vrot.lane.b32.xlu0 %v7020, 127
    %v7035 = vpop.permute.xlu0 %7034
    %7036 = vrot.lane.b32.xlu0 %v7022, 127
    %v7037 = vpop.permute.xlu0 %7036
    %v7038 = vsel %vm418, %v7035, %v7037
    %v7039 = vsel %vm418, %v7033, %v7035
    %v7040 = vsel %vm418, %v7031, %v7033
    %v7041 = vsel %vm418, %v7037, %v7031
    %v7042 = vpack.c.bf16 %v7040, %v6979
    %v7043 = vpack.c.bf16 %v7039, %v6981
    %v7044 = vpack.c.bf16 %v7038, %v7020
    %v7045 = vpack.c.bf16 %v7041, %v7022
    %v7050 = vunpack.c.l.b16 %v7042
    %v7051 = vunpack.c.l.b16 %v7043
    %v7052 = vunpack.c.l.b16 %v7044
    %v7053 = vunpack.c.l.b16 %v7045
    %v7054 = vunpack.c.h.b16 %v7042
    %v7055 = vunpack.c.h.b16 %v7043
    %v7056 = vunpack.c.h.b16 %v7044
    %v7057 = vunpack.c.h.b16 %v7045
    %v7058 = vpack.c.b16 %v7051, %v7050
    %v7059 = vpack.c.b16 %v7053, %v7052
    %v7060 = vpack.c.b16 %v7055, %v7054
    %v7061 = vpack.c.b16 %v7057, %v7056
    %7066 = vst [vmem:[#allocation3] sm:$0xff] %v7058
    %7067 = vst [vmem:[#allocation3 + $0x8] sm:$0xff] %v7059
    %7068 = vst [vmem:[#allocation3 + $0x10] sm:$0xff] %v7060
    %7069 = vst [vmem:[#allocation3 + $0x18] sm:$0xff] %v7061
    %7070 = vrot.lane.b32.xlu0 %v6979, 112
    %v7071 = vpop.permute.xlu0 %7070
    %7072 = vrot.lane.b32.xlu0 %v6981, 112
    %v7073 = vpop.permute.xlu0 %7072
    %7074 = vrot.lane.b32.xlu0 %v7020, 112
    %v7075 = vpop.permute.xlu0 %7074
    %7076 = vrot.lane.b32.xlu0 %v7022, 112
    %v7077 = vpop.permute.xlu0 %7076
    %v7078 = vsel %vm498, %v7075, %v7077
    %v7079 = vsel %vm498, %v7073, %v7075
    %v7080 = vsel %vm498, %v7071, %v7073
    %v7081 = vsel %vm498, %v7077, %v7071
    %7082 = vrot.lane.b32.xlu0 %v6979, 111
    %v7083 = vpop.permute.xlu0 %7082
    %7084 = vrot.lane.b32.xlu0 %v6981, 111
    %v7085 = vpop.permute.xlu0 %7084
    %7086 = vrot.lane.b32.xlu0 %v7020, 111
    %v7087 = vpop.permute.xlu0 %7086
    %7088 = vrot.lane.b32.xlu0 %v7022, 111
    %v7089 = vpop.permute.xlu0 %7088
    %v7090 = vsel %vm598, %v7087, %v7089
    %v7091 = vsel %vm598, %v7085, %v7087
    %v7092 = vsel %vm598, %v7083, %v7085
    %v7093 = vsel %vm598, %v7089, %v7083
    %v7094 = vpack.c.bf16 %v7092, %v7080
    %v7095 = vpack.c.bf16 %v7091, %v7079
    %v7096 = vpack.c.bf16 %v7090, %v7078
    %v7097 = vpack.c.bf16 %v7093, %v7081
    %v7102 = vunpack.c.l.b16 %v7094
    %v7103 = vunpack.c.l.b16 %v7095
    %v7104 = vunpack.c.l.b16 %v7096
    %v7105 = vunpack.c.l.b16 %v7097
    %v7106 = vunpack.c.h.b16 %v7094
    %v7107 = vunpack.c.h.b16 %v7095
    %v7108 = vunpack.c.h.b16 %v7096
    %v7109 = vunpack.c.h.b16 %v7097
    %v7110 = vpack.c.b16 %v7103, %v7102
    %v7111 = vpack.c.b16 %v7105, %v7104
    %v7112 = vpack.c.b16 %v7107, %v7106
    %v7113 = vpack.c.b16 %v7109, %v7108
    %7118 = vst [vmem:[#allocation3 + $0x20] sm:$0xff] %v7110
    %7119 = vst [vmem:[#allocation3 + $0x28] sm:$0xff] %v7111
    %7120 = vst [vmem:[#allocation3 + $0x30] sm:$0xff] %v7112
    %7121 = vst [vmem:[#allocation3 + $0x38] sm:$0xff] %v7113
    %v7122 = vld [vmem:[%s14] sm:$0xf]
    %v7123 = vld [vmem:[#allocation3] sm:$0xff]
    %v7124 = vld [vmem:[#allocation3 + $0x8] sm:$0xff]
    %v7125 = vld [vmem:[#allocation3 + $0x10] sm:$0xff]
    %v7126 = vld [vmem:[#allocation3 + $0x18] sm:$0xff]
    %v7127 = vld [vmem:[#allocation3 + $0x20] sm:$0xff]
    %v7128 = vld [vmem:[#allocation3 + $0x28] sm:$0xff]
    %v7129 = vld [vmem:[#allocation3 + $0x30] sm:$0xff]
    %v7130 = vld [vmem:[#allocation3 + $0x38] sm:$0xff]
    %v7131 = vld [vmem:[%s4] sm:$0xff]
    %7133 = vset.pattern.permute.xlu0 8
    %7134 = vperm.xlu0 %7133, %v7131
    %v7135 = vpop.permute.xlu0 %7134
    %v7145 = vunpack.c.l.b16 %v7123
    %v7146 = vunpack.c.h.b16 %v7123
    %v7147 = vunpack.c.l.b16 %v7124
    %v7148 = vunpack.c.h.b16 %v7124
    %v7149 = vunpack.c.l.b16 %v7125
    %v7150 = vunpack.c.h.b16 %v7125
    %v7151 = vunpack.c.l.b16 %v7126
    %v7152 = vunpack.c.h.b16 %v7126
    %v7153 = vunpack.c.l.b16 %v7127
    %v7154 = vunpack.c.h.b16 %v7127
    %v7155 = vunpack.c.l.b16 %v7128
    %v7156 = vunpack.c.h.b16 %v7128
    %v7157 = vunpack.c.l.b16 %v7129
    %v7158 = vunpack.c.h.b16 %v7129
    %v7159 = vunpack.c.l.b16 %v7130
    %v7160 = vunpack.c.h.b16 %v7130
    %v7161 = vpack.c.b16 %v7149, %v7145
    %v7162 = vpack.c.b16 %v7150, %v7146
    %v7163 = vpack.c.b16 %v7151, %v7147
    %v7164 = vpack.c.b16 %v7152, %v7148
    %v7165 = vpack.c.b16 %v7157, %v7153
    %v7166 = vpack.c.b16 %v7158, %v7154
    %v7167 = vpack.c.b16 %v7159, %v7155
    %v7168 = vpack.c.b16 %v7160, %v7156
    %v7178 = vsel %vm6940, %v7122, 0
    %7180 = vmatprep.subr.bf16.mxu0 %v7162
    %7181 = vmatpush1.bf16.msra.mxu0 %v7161
    %7182 = vmatprep.subr.bf16.mxu0 %v7166
    %7183 = vmatpush1.bf16.msra.mxu0 %v7165
    %7184 = vmatprep.subr.bf16.mxu0 0
    %7185 = vmatpush1.bf16.msra.mxu0 0
    %7186 = vmatprep.subr.bf16.mxu0 0
    %7187 = vmatpush1.bf16.msra.mxu0 0
    %7188 = vmatprep.subr.bf16.mxu0 0
    %7189 = vmatpush1.bf16.msra.mxu0 0
    %7190 = vmatprep.subr.bf16.mxu0 0
    %7191 = vmatpush1.bf16.msra.mxu0 0
    %7192 = vmatprep.subr.bf16.mxu0 0
    %7193 = vmatpush1.bf16.msra.mxu0 0
    %7194 = vmatprep.subr.bf16.mxu0 0
    %7195 = vmatpush1.bf16.msra.mxu0 0
    %7196 = vmatprep.subr.bf16.mxu0 0
    %7197 = vmatpush1.bf16.msra.mxu0 0
    %7198 = vmatprep.subr.bf16.mxu0 0
    %7199 = vmatpush1.bf16.msra.mxu0 0
    %7200 = vmatprep.subr.bf16.mxu0 0
    %7201 = vmatpush1.bf16.msra.mxu0 0
    %7202 = vmatprep.subr.bf16.mxu0 0
    %7203 = vmatpush1.bf16.msra.mxu0 0
    %7204 = vmatprep.subr.bf16.mxu0 0
    %7205 = vmatpush1.bf16.msra.mxu0 0
    %7206 = vmatprep.subr.bf16.mxu0 0
    %7207 = vmatpush1.bf16.msra.mxu0 0
    %7208 = vmatprep.subr.bf16.mxu0 0
    %7209 = vmatpush1.bf16.msra.mxu0 0
    %7210 = vmatprep.subr.bf16.mxu0 0
    %7211 = vmatpush1.bf16.msra.mxu0 0
    %7212 = vmatprep.mubr.bf16.mxu0 0
    %7213 = vmatmul.mubr.bf16.gmra.mrb[0].mxu0 %v7178
    %v7214 = vpop.f32.mrb[0].mxu0
    %v7215 = vadd.f32 %v7135, %v7214
    %v7216 = vpop.f32.mrb[0].mxu0
    %v7217 = vadd.f32 %v7135, %v7216
    %v7218 = vpop.f32.mrb[0].mxu0
    %v7219 = vpop.f32.mrb[0].mxu0
    %7220 = vdwg.mxu0
    %7221 = vmatprep.subr.bf16.mxu0 %v7164
    %7222 = vmatpush1.bf16.msra.mxu0 %v7163
    %7223 = vmatprep.subr.bf16.mxu0 %v7168
    %7224 = vmatpush1.bf16.msra.mxu0 %v7167
    %7225 = vmatprep.subr.bf16.mxu0 0
    %7226 = vmatpush1.bf16.msra.mxu0 0
    %7227 = vmatprep.subr.bf16.mxu0 0
    %7228 = vmatpush1.bf16.msra.mxu0 0
    %7229 = vmatprep.subr.bf16.mxu0 0
    %7230 = vmatpush1.bf16.msra.mxu0 0
    %7231 = vmatprep.subr.bf16.mxu0 0
    %7232 = vmatpush1.bf16.msra.mxu0 0
    %7233 = vmatprep.subr.bf16.mxu0 0
    %7234 = vmatpush1.bf16.msra.mxu0 0
    %7235 = vmatprep.subr.bf16.mxu0 0
    %7236 = vmatpush1.bf16.msra.mxu0 0
    %7237 = vmatprep.subr.bf16.mxu0 0
    %7238 = vmatpush1.bf16.msra.mxu0 0
    %7239 = vmatprep.subr.bf16.mxu0 0
    %7240 = vmatpush1.bf16.msra.mxu0 0
    %7241 = vmatprep.subr.bf16.mxu0 0
    %7242 = vmatpush1.bf16.msra.mxu0 0
    %7243 = vmatprep.subr.bf16.mxu0 0
    %7244 = vmatpush1.bf16.msra.mxu0 0
    %7245 = vmatprep.subr.bf16.mxu0 0
    %7246 = vmatpush1.bf16.msra.mxu0 0
    %7247 = vmatprep.subr.bf16.mxu0 0
    %7248 = vmatpush1.bf16.msra.mxu0 0
    %7249 = vmatprep.subr.bf16.mxu0 0
    %7250 = vmatpush1.bf16.msra.mxu0 0
    %7251 = vmatprep.subr.bf16.mxu0 0
    %7252 = vmatpush1.bf16.msra.mxu0 0
    %7253 = vmatprep.mubr.bf16.mxu0 0
    %7254 = vmatmul.mubr.bf16.gmra.mrb[0].mxu0 %v7178
    %v7255 = vpop.f32.mrb[0].mxu0
    %v7256 = vadd.f32 %v7135, %v7255
    %v7257 = vpop.f32.mrb[0].mxu0
    %v7258 = vadd.f32 %v7135, %v7257
    %v7259 = vpop.f32.mrb[0].mxu0
    %v7260 = vpop.f32.mrb[0].mxu0
    %7261 = vdwg.mxu0
    %v7262 = vld [vmem:[#allocation7] sm:$0xff]
    %v7263 = vld [vmem:[#allocation7 + $0x8] sm:$0xff]
    %v7264 = vld [vmem:[#allocation7 + $0x10] sm:$0xff]
    %v7265 = vld [vmem:[#allocation7 + $0x18] sm:$0xff]
    %v7266 = vld [vmem:[#allocation7 + $0x20] sm:$0xff]
    %v7267 = vld [vmem:[#allocation7 + $0x28] sm:$0xff]
    %v7268 = vld [vmem:[#allocation7 + $0x30] sm:$0xff]
    %v7269 = vld [vmem:[#allocation7 + $0x38] sm:$0xff]
    %v7270 = vld [vmem:[#allocation7 + $0x40] sm:$0xff]
    %v7271 = vld [vmem:[#allocation7 + $0x48] sm:$0xff]
    %v7272 = vld [vmem:[#allocation7 + $0x50] sm:$0xff]
    %v7273 = vld [vmem:[#allocation7 + $0x58] sm:$0xff]
    %v7274 = vld [vmem:[#allocation7 + $0x60] sm:$0xff]
    %v7275 = vld [vmem:[#allocation7 + $0x68] sm:$0xff]
    %v7276 = vld [vmem:[#allocation7 + $0x70] sm:$0xff]
    %v7277 = vld [vmem:[#allocation7 + $0x78] sm:$0xff]
    %v7278 = vld [vmem:[#allocation7 + $0x80] sm:$0xff]
    %v7279 = vld [vmem:[#allocation7 + $0x88] sm:$0xff]
    %v7280 = vld [vmem:[#allocation7 + $0x90] sm:$0xff]
    %v7281 = vld [vmem:[#allocation7 + $0x98] sm:$0xff]
    %v7282 = vld [vmem:[#allocation7 + $0xa0] sm:$0xff]
    %v7283 = vld [vmem:[#allocation7 + $0xa8] sm:$0xff]
    %v7284 = vld [vmem:[#allocation7 + $0xb0] sm:$0xff]
    %v7285 = vld [vmem:[#allocation7 + $0xb8] sm:$0xff]
    %v7286 = vld [vmem:[#allocation7 + $0xc0] sm:$0xff]
    %v7287 = vld [vmem:[#allocation7 + $0xc8] sm:$0xff]
    %v7288 = vld [vmem:[#allocation7 + $0xd0] sm:$0xff]
    %v7289 = vld [vmem:[#allocation7 + $0xd8] sm:$0xff]
    %v7290 = vld [vmem:[#allocation7 + $0xe0] sm:$0xff]
    %v7291 = vld [vmem:[#allocation7 + $0xe8] sm:$0xff]
    %v7292 = vld [vmem:[#allocation7 + $0xf0] sm:$0xff]
    %v7293 = vld [vmem:[#allocation7 + $0xf8] sm:$0xff]
    %v7294 = vld [vmem:[#allocation7 + $0x100] sm:$0xff]
    %v7295 = vld [vmem:[#allocation7 + $0x108] sm:$0xff]
    %v7296 = vld [vmem:[#allocation7 + $0x110] sm:$0xff]
    %v7297 = vld [vmem:[#allocation7 + $0x118] sm:$0xff]
    %v7298 = vld [vmem:[#allocation7 + $0x120] sm:$0xff]
    %v7299 = vld [vmem:[#allocation7 + $0x128] sm:$0xff]
    %v7300 = vld [vmem:[#allocation7 + $0x130] sm:$0xff]
    %v7301 = vld [vmem:[#allocation7 + $0x138] sm:$0xff]
    %v7302 = vld [vmem:[#allocation7 + $0x140] sm:$0xff]
    %v7303 = vld [vmem:[#allocation7 + $0x148] sm:$0xff]
    %v7304 = vld [vmem:[#allocation7 + $0x150] sm:$0xff]
    %v7305 = vld [vmem:[#allocation7 + $0x158] sm:$0xff]
    %v7306 = vld [vmem:[#allocation7 + $0x160] sm:$0xff]
    %v7307 = vld [vmem:[#allocation7 + $0x168] sm:$0xff]
    %v7308 = vld [vmem:[#allocation7 + $0x170] sm:$0xff]
    %v7309 = vld [vmem:[#allocation7 + $0x178] sm:$0xff]
    %v7310 = vld [vmem:[#allocation7 + $0x180] sm:$0xff]
    %v7311 = vld [vmem:[#allocation7 + $0x188] sm:$0xff]
    %v7312 = vld [vmem:[#allocation7 + $0x190] sm:$0xff]
    %v7313 = vld [vmem:[#allocation7 + $0x198] sm:$0xff]
    %v7314 = vld [vmem:[#allocation7 + $0x1a0] sm:$0xff]
    %v7315 = vld [vmem:[#allocation7 + $0x1a8] sm:$0xff]
    %v7316 = vld [vmem:[#allocation7 + $0x1b0] sm:$0xff]
    %v7317 = vld [vmem:[#allocation7 + $0x1b8] sm:$0xff]
    %v7318 = vld [vmem:[#allocation7 + $0x1c0] sm:$0xff]
    %v7319 = vld [vmem:[#allocation7 + $0x1c8] sm:$0xff]
    %v7320 = vld [vmem:[#allocation7 + $0x1d0] sm:$0xff]
    %v7321 = vld [vmem:[#allocation7 + $0x1d8] sm:$0xff]
    %v7322 = vld [vmem:[#allocation7 + $0x1e0] sm:$0xff]
    %v7323 = vld [vmem:[#allocation7 + $0x1e8] sm:$0xff]
    %v7324 = vld [vmem:[#allocation7 + $0x1f0] sm:$0xff]
    %v7325 = vld [vmem:[#allocation7 + $0x1f8] sm:$0xff]
    %7326 = vmatprep.subr.mxu0 0.0
    %7327 = vmatpush1.msra.mxu0 %v7262
    %7328 = vmatprep.subr.mxu0 0.0
    %7329 = vmatpush1.msra.mxu0 %v7263
    %7330 = vmatprep.subr.mxu0 0.0
    %7331 = vmatpush1.msra.mxu0 %v7264
    %7332 = vmatprep.subr.mxu0 0.0
    %7333 = vmatpush1.msra.mxu0 %v7265
    %7334 = vmatprep.subr.mxu0 0.0
    %7335 = vmatpush1.msra.mxu0 %v7266
    %7336 = vmatprep.subr.mxu0 0.0
    %7337 = vmatpush1.msra.mxu0 %v7267
    %7338 = vmatprep.subr.mxu0 0.0
    %7339 = vmatpush1.msra.mxu0 %v7268
    %7340 = vmatprep.subr.mxu0 0.0
    %7341 = vmatpush1.msra.mxu0 %v7269
    %7342 = vmatprep.subr.mxu0 0.0
    %7343 = vmatpush1.msra.mxu0 %v7270
    %7344 = vmatprep.subr.mxu0 0.0
    %7345 = vmatpush1.msra.mxu0 %v7271
    %7346 = vmatprep.subr.mxu0 0.0
    %7347 = vmatpush1.msra.mxu0 %v7272
    %7348 = vmatprep.subr.mxu0 0.0
    %7349 = vmatpush1.msra.mxu0 %v7273
    %7350 = vmatprep.subr.mxu0 0.0
    %7351 = vmatpush1.msra.mxu0 %v7274
    %7352 = vmatprep.subr.mxu0 0.0
    %7353 = vmatpush1.msra.mxu0 %v7275
    %7354 = vmatprep.subr.mxu0 0.0
    %7355 = vmatpush1.msra.mxu0 %v7276
    %7356 = vmatprep.subr.mxu0 0.0
    %7357 = vmatpush1.msra.mxu0 %v7277
    %7358 = vmatprep.subr.mxu0 0.0
    %7359 = vmatpush1.msra.mxu0 %v7278
    %7360 = vmatprep.subr.mxu0 0.0
    %7361 = vmatpush1.msra.mxu0 %v7279
    %7362 = vmatprep.subr.mxu0 0.0
    %7363 = vmatpush1.msra.mxu0 %v7280
    %7364 = vmatprep.subr.mxu0 0.0
    %7365 = vmatpush1.msra.mxu0 %v7281
    %7366 = vmatprep.subr.mxu0 0.0
    %7367 = vmatpush1.msra.mxu0 %v7282
    %7368 = vmatprep.subr.mxu0 0.0
    %7369 = vmatpush1.msra.mxu0 %v7283
    %7370 = vmatprep.subr.mxu0 0.0
    %7371 = vmatpush1.msra.mxu0 %v7284
    %7372 = vmatprep.subr.mxu0 0.0
    %7373 = vmatpush1.msra.mxu0 %v7285
    %7374 = vmatprep.subr.mxu0 0.0
    %7375 = vmatpush1.msra.mxu0 %v7286
    %7376 = vmatprep.subr.mxu0 0.0
    %7377 = vmatpush1.msra.mxu0 %v7287
    %7378 = vmatprep.subr.mxu0 0.0
    %7379 = vmatpush1.msra.mxu0 %v7288
    %7380 = vmatprep.subr.mxu0 0.0
    %7381 = vmatpush1.msra.mxu0 %v7289
    %7382 = vmatprep.subr.mxu0 0.0
    %7383 = vmatpush1.msra.mxu0 %v7290
    %7384 = vmatprep.subr.mxu0 0.0
    %7385 = vmatpush1.msra.mxu0 %v7291
    %7386 = vmatprep.subr.mxu0 0.0
    %7387 = vmatpush1.msra.mxu0 %v7292
    %7388 = vmatprep.subr.mxu0 0.0
    %7389 = vmatpush1.msra.mxu0 %v7293
    %7390 = vmatprep.mubr.f32.mxu0 %v7217
    %7391 = vmatmul.mubr.f32.gmra.mrb[0].mxu0 %v7215
    %v7392 = vpop.f32.mrb[0].mxu0
    %v7393 = vadd.f32 0.0, %v7392
    %v7394 = vpop.f32.mrb[0].mxu0
    %7395 = vdwg.mxu0
    %7396 = vmatprep.subr.mxu0 0.0
    %7397 = vmatpush1.msra.mxu0 %v7294
    %7398 = vmatprep.subr.mxu0 0.0
    %7399 = vmatpush1.msra.mxu0 %v7295
    %7400 = vmatprep.subr.mxu0 0.0
    %7401 = vmatpush1.msra.mxu0 %v7296
    %7402 = vmatprep.subr.mxu0 0.0
    %7403 = vmatpush1.msra.mxu0 %v7297
    %7404 = vmatprep.subr.mxu0 0.0
    %7405 = vmatpush1.msra.mxu0 %v7298
    %7406 = vmatprep.subr.mxu0 0.0
    %7407 = vmatpush1.msra.mxu0 %v7299
    %7408 = vmatprep.subr.mxu0 0.0
    %7409 = vmatpush1.msra.mxu0 %v7300
    %7410 = vmatprep.subr.mxu0 0.0
    %7411 = vmatpush1.msra.mxu0 %v7301
    %7412 = vmatprep.subr.mxu0 0.0
    %7413 = vmatpush1.msra.mxu0 %v7302
    %7414 = vmatprep.subr.mxu0 0.0
    %7415 = vmatpush1.msra.mxu0 %v7303
    %7416 = vmatprep.subr.mxu0 0.0
    %7417 = vmatpush1.msra.mxu0 %v7304
    %7418 = vmatprep.subr.mxu0 0.0
    %7419 = vmatpush1.msra.mxu0 %v7305
    %7420 = vmatprep.subr.mxu0 0.0
    %7421 = vmatpush1.msra.mxu0 %v7306
    %7422 = vmatprep.subr.mxu0 0.0
    %7423 = vmatpush1.msra.mxu0 %v7307
    %7424 = vmatprep.subr.mxu0 0.0
    %7425 = vmatpush1.msra.mxu0 %v7308
    %7426 = vmatprep.subr.mxu0 0.0
    %7427 = vmatpush1.msra.mxu0 %v7309
    %7428 = vmatprep.subr.mxu0 0.0
    %7429 = vmatpush1.msra.mxu0 %v7310
    %7430 = vmatprep.subr.mxu0 0.0
    %7431 = vmatpush1.msra.mxu0 %v7311
    %7432 = vmatprep.subr.mxu0 0.0
    %7433 = vmatpush1.msra.mxu0 %v7312
    %7434 = vmatprep.subr.mxu0 0.0
    %7435 = vmatpush1.msra.mxu0 %v7313
    %7436 = vmatprep.subr.mxu0 0.0
    %7437 = vmatpush1.msra.mxu0 %v7314
    %7438 = vmatprep.subr.mxu0 0.0
    %7439 = vmatpush1.msra.mxu0 %v7315
    %7440 = vmatprep.subr.mxu0 0.0
    %7441 = vmatpush1.msra.mxu0 %v7316
    %7442 = vmatprep.subr.mxu0 0.0
    %7443 = vmatpush1.msra.mxu0 %v7317
    %7444 = vmatprep.subr.mxu0 0.0
    %7445 = vmatpush1.msra.mxu0 %v7318
    %7446 = vmatprep.subr.mxu0 0.0
    %7447 = vmatpush1.msra.mxu0 %v7319
    %7448 = vmatprep.subr.mxu0 0.0
    %7449 = vmatpush1.msra.mxu0 %v7320
    %7450 = vmatprep.subr.mxu0 0.0
    %7451 = vmatpush1.msra.mxu0 %v7321
    %7452 = vmatprep.subr.mxu0 0.0
    %7453 = vmatpush1.msra.mxu0 %v7322
    %7454 = vmatprep.subr.mxu0 0.0
    %7455 = vmatpush1.msra.mxu0 %v7323
    %7456 = vmatprep.subr.mxu0 0.0
    %7457 = vmatpush1.msra.mxu0 %v7324
    %7458 = vmatprep.subr.mxu0 0.0
    %7459 = vmatpush1.msra.mxu0 %v7325
    %7460 = vmatprep.mubr.f32.mxu0 %v7258
    %7461 = vmatmul.mubr.f32.gmra.mrb[0].mxu0 %v7256
    %v7462 = vpop.f32.mrb[0].mxu0
    %v7463 = vadd.f32 %v7393, %v7462
    %v7464 = vpop.f32.mrb[0].mxu0
    %7465 = vdwg.mxu0
    %7466 = vst [vmem:[%s17] sm:$0xff] %v7463
    // Predicated region
    $region74: #{_lambda_.1} parent=1 // pred_check
      _
    $region75: #{_lambda_.1} parent=1 // pred_check_branch
      %7468 = sbr.rel (0) target = $region77
    $region76: #{_lambda_.1} parent=1 // pred_region
      _
    $region77: #{_lambda_.1} parent=1 // pred_fallthru
      _
    // Predicated region
    $region78: #{_lambda_.1} parent=1 // pred_check
      _
    $region79: #{_lambda_.1} parent=1 // pred_check_branch
      %7470 = sbr.rel (0) target = $region81
    $region80: #{_lambda_.1} parent=1 // pred_region
      _
    $region81: #{_lambda_.1} parent=1 // pred_fallthru
      _
    // Predicated region
    $region82: #{_lambda_.1} parent=1 // pred_check
      _
    $region83: #{_lambda_.1} parent=1 // pred_check_branch
      %7472 = sbr.rel (0) target = $region85
    $region84: #{_lambda_.1} parent=1 // pred_region
      _
    $region85: #{_lambda_.1} parent=1 // pred_fallthru
      _
    // Predicated region
    $region86: #{_lambda_.1} parent=1 // pred_check
      _
    $region87: #{_lambda_.1} parent=1 // pred_check_branch
      %7474 = sbr.rel (0) target = $region89
    $region88: #{_lambda_.1} parent=1 // pred_region
      _
    $region89: #{_lambda_.1} parent=1 // pred_fallthru
      _
    %7475 = vsyncpa [#allocation5], 1
    %7476 = vsyncpa [#allocation6], 1

</llo_original>
